<compile_context>
chip_gen: v7x
topology: tpu7x:2x2x1
jax: 0.10.0
libtpu: 0.0.40
codegen_flags: <defaults>
</compile_context>

<pallas_src>
import jax
import jax.numpy as jnp
import numpy as np
from jax.experimental import pallas as pl
from jax.experimental.pallas import tpu as pltpu

# ---- problem sizes (small, consistent with an image-CNN forward) ----------
N, CIN, H, W = 2, 4, 16, 16
COUT = 8
KH = KW = 3
POOL = 2
HP, WP = H // POOL, W // POOL
FC_IN = COUT * HP * WP          # 8 * 8 * 8 = 512
FC_OUT = 32
PATCH = KH * KW * CIN           # 36


# ---------------------------- Pallas kernel ---------------------------------
def make_fused_kernel(emit_conv, emit_relu, emit_pool, emit_fc):
    """Fully fused conv3x3(pad=1) + ReLU + 2x2 avg-pool + fc, one invocation.

    Static output set (only the extracted layers leave VMEM):
        [conv1?] [relu1?] [pool1?] [fc?]     (activations in NHWC)
    Scratch: zero-padded input, im2col patch matrix, and (if fc is emitted)
    the lane-dense (N, FC_IN) flattened pooled activation.
    """
    need_pool = emit_pool or emit_fc
    need_relu = emit_relu or need_pool

    def kernel(*refs):
        i = 0
        x_ref = refs[i]; i += 1
        wim_ref = refs[i]; i += 1
        bconv_ref = refs[i]; i += 1
        wfc_ref = bfc_ref = None
        if emit_fc:
            wfc_ref = refs[i]; i += 1
            bfc_ref = refs[i]; i += 1

        conv_ref = relu_ref = pool_ref = fc_ref = None
        if emit_conv:
            conv_ref = refs[i]; i += 1
        if emit_relu:
            relu_ref = refs[i]; i += 1
        if emit_pool:
            pool_ref = refs[i]; i += 1
        if emit_fc:
            fc_ref = refs[i]; i += 1

        xpad_ref = refs[i]; i += 1
        patch_ref = refs[i]; i += 1
        flat_ref = refs[i] if emit_fc else None

        # -- halo padding handled in-kernel (no jnp.pad / HBM round-trip) ----
        xpad_ref[...] = jnp.zeros_like(xpad_ref)
        xpad_ref[:, 1:H + 1, 1:W + 1, :] = x_ref[...]
        xp = xpad_ref[...]                                  # (N, H+2, W+2, CIN)

        # -- im2col: assemble the (N*H*W, KH*KW*CIN) patch matrix in VMEM ----
        for kh in range(KH):
            for kw in range(KW):
                col = (kh * KW + kw) * CIN
                piece = xp[:, kh:kh + H, kw:kw + W, :].reshape(N * H * W, CIN)
                patch_ref[:, col:col + CIN] = piece

        # -- one MXU matmul for the whole convolution + bias -----------------
        conv = jnp.dot(patch_ref[...], wim_ref[...],
                       preferred_element_type=jnp.float32) + bconv_ref[...]
        if emit_conv:
            conv_ref[...] = conv.reshape(N, H, W, COUT)

        if not need_relu:
            return

        # -- ReLU (stays in vregs) --------------------------------------------
        relu = jnp.maximum(conv, 0.0)                       # (N*H*W, COUT)
        if emit_relu:
            relu_ref[...] = relu.reshape(N, H, W, COUT)

        if not need_pool:
            return

        # -- 2x2 average pool, batch folded into the row axis ------------------
        a = relu.reshape(N * HP, POOL, W, COUT)
        s1 = a[:, 0] + a[:, 1]                              # (N*HP, W, COUT)
        b = s1.reshape(N * HP, WP, POOL, COUT)
        pooled = (b[:, :, 0] + b[:, :, 1]) * 0.25           # (N*HP, WP, COUT)
        if emit_pool:
            pool_ref[...] = pooled.reshape(N, HP, WP, COUT)

        if not emit_fc:
            return

        # -- in-kernel flatten to (N, FC_IN), NHWC order (hp, wp, c) -----------
        # Sublane -> lane compaction via 64 static lane-slice stores; the fc
        # weight was permuted once at init to match this order, so the result
        # is numerically identical to torch's view(x.size(0), -1) + fc.
        p4 = pooled.reshape(N, HP, WP, COUT)                # leading-dim split
        for hp in range(HP):
            row = p4[:, hp]                                 # (N, WP, COUT)
            for wp in range(WP):
                colf = (hp * WP + wp) * COUT
                flat_ref[:, colf:colf + COUT] = row[:, wp]  # (N, COUT)

        fc_ref[...] = (jnp.dot(flat_ref[...], wfc_ref[...],
                               preferred_element_type=jnp.float32)
                       + bfc_ref[...])

    return kernel


# --------------------- FeatureExtractor equivalent --------------------------
class FeatureExtractorPallas:
    """Mirrors FeatureExtractor.forward: iterate submodule layers in order,
    flatten before 'fc', collect outputs of layers named in extracted_layers."""

    LAYERS = ("conv1", "relu1", "pool1", "fc")

    def __init__(self, params, extracted_layers):
        self.extracted_layers = list(extracted_layers)
        self.emit_conv = "conv1" in self.extracted_layers
        self.emit_relu = "relu1" in self.extracted_layers
        self.emit_pool = "pool1" in self.extracted_layers
        self.emit_fc = "fc" in self.extracted_layers
        self._any = (self.emit_conv or self.emit_relu
                     or self.emit_pool or self.emit_fc)

        # ---- one-time weight layout prep (host side, free at init) ---------
        # conv weight (KH,KW,CIN,COUT) -> im2col weight (KH*KW*CIN, COUT)
        self.w_im = jnp.asarray(params["conv_w"]).reshape(PATCH, COUT)
        self.b_conv = jnp.asarray(params["conv_b"])                 # (1, COUT)
        # fc weight rows are in torch NCHW-flat order (c, hp, wp); permute them
        # once to NHWC-flat order (hp, wp, c) so the kernel's in-VMEM flatten
        # can be consumed directly.
        w4 = jnp.asarray(params["fc_w"]).reshape(COUT, HP, WP, FC_OUT)
        self.w_fc = jnp.transpose(w4, (1, 2, 0, 3)).reshape(FC_IN, FC_OUT)
        self.b_fc = jnp.asarray(params["fc_b"])                     # (1, FC_OUT)

        if self._any:
            in_specs = [
                pl.BlockSpec((N, H, W, CIN), lambda: (0, 0, 0, 0)),
                pl.BlockSpec((PATCH, COUT), lambda: (0, 0)),
                pl.BlockSpec((1, COUT), lambda: (0, 0)),
            ]
            if self.emit_fc:
                in_specs += [
                    pl.BlockSpec((FC_IN, FC_OUT), lambda: (0, 0)),
                    pl.BlockSpec((1, FC_OUT), lambda: (0, 0)),
                ]

            out_shapes, out_specs = [], []
            if self.emit_conv:
                out_shapes.append(jax.ShapeDtypeStruct((N, H, W, COUT), jnp.float32))
                out_specs.append(pl.BlockSpec((N, H, W, COUT), lambda: (0, 0, 0, 0)))
            if self.emit_relu:
                out_shapes.append(jax.ShapeDtypeStruct((N, H, W, COUT), jnp.float32))
                out_specs.append(pl.BlockSpec((N, H, W, COUT), lambda: (0, 0, 0, 0)))
            if self.emit_pool:
                out_shapes.append(jax.ShapeDtypeStruct((N, HP, WP, COUT), jnp.float32))
                out_specs.append(pl.BlockSpec((N, HP, WP, COUT), lambda: (0, 0, 0, 0)))
            if self.emit_fc:
                out_shapes.append(jax.ShapeDtypeStruct((N, FC_OUT), jnp.float32))
                out_specs.append(pl.BlockSpec((N, FC_OUT), lambda: (0, 0)))

            scratch = [
                pltpu.VMEM((N, H + 2, W + 2, CIN), jnp.float32),  # padded input
                pltpu.VMEM((N * H * W, PATCH), jnp.float32),      # im2col patches
            ]
            if self.emit_fc:
                scratch.append(pltpu.VMEM((N, FC_IN), jnp.float32))  # flat pooled

            self._fused = pl.pallas_call(
                make_fused_kernel(self.emit_conv, self.emit_relu,
                                  self.emit_pool, self.emit_fc),
                out_shape=tuple(out_shapes),
                in_specs=in_specs,
                out_specs=tuple(out_specs),
                scratch_shapes=scratch,
            )

        self._fwd = jax.jit(self._forward)

    def _forward(self, x_nchw):
        if not self._any:                      # torch would return [] as well
            return []

        x = jnp.transpose(x_nchw, (0, 2, 3, 1))             # NCHW -> NHWC once
        args = [x, self.w_im, self.b_conv]
        if self.emit_fc:
            args += [self.w_fc, self.b_fc]
        res = self._fused(*args)
        res = res if isinstance(res, (tuple, list)) else (res,)

        vals, i = {}, 0
        for name, emit in (("conv1", self.emit_conv), ("relu1", self.emit_relu),
                           ("pool1", self.emit_pool), ("fc", self.emit_fc)):
            if emit:
                vals[name] = res[i]
                i += 1

        outputs = []
        for name in self.LAYERS:
            if name in self.extracted_layers:
                out = vals[name]
                if out.ndim == 4:                           # report in NCHW
                    out = jnp.transpose(out, (0, 3, 1, 2))
                outputs.append(out)
        return outputs

    def __call__(self, x_nchw):
        return self._fwd(x_nchw)


def init_params(key):
    k1, k2, k3, k4 = jax.random.split(key, 4)
    return {
        "conv_w": jax.random.normal(k1, (KH, KW, CIN, COUT), jnp.float32) * 0.1,
        "conv_b": jax.random.normal(k2, (1, COUT), jnp.float32) * 0.1,
        # fc_w rows are in torch NCHW-flatten order (c, hp, wp)
        "fc_w": jax.random.normal(k3, (FC_IN, FC_OUT), jnp.float32) * 0.05,
        "fc_b": jax.random.normal(k4, (1, FC_OUT), jnp.float32) * 0.05,
    }


def _reference_forward(x_nchw, params):
    """Pure-JAX reference matching the torch submodule semantics."""
    conv = jax.lax.conv_general_dilated(
        x_nchw, params["conv_w"], window_strides=(1, 1),
        padding=((1, 1), (1, 1)),
        dimension_numbers=("NCHW", "HWIO", "NCHW"))
    conv = conv + params["conv_b"].reshape(1, COUT, 1, 1)
    relu = jnp.maximum(conv, 0.0)
    pooled = relu.reshape(N, COUT, HP, POOL, WP, POOL).mean(axis=(3, 5))
    flat = pooled.reshape(N, -1)                            # torch NCHW flatten
    fc = flat @ params["fc_w"] + params["fc_b"]
    return {"conv1": conv, "relu1": relu, "pool1": pooled, "fc": fc}


if __name__ == "__main__":
    key = jax.random.PRNGKey(0)
    kx, kp = jax.random.split(key)
    x = jax.random.normal(kx, (N, CIN, H, W), jnp.float32)   # NCHW like torch
    params = init_params(kp)

    extractor = FeatureExtractorPallas(params, extracted_layers=["relu1", "fc"])
    outs = extractor(x)
    outs = jax.block_until_ready(outs)

    assert outs[0].shape == (N, COUT, H, W)     # relu1 output, NCHW
    assert outs[1].shape == (N, FC_OUT)         # fc output

    ref = _reference_forward(x, params)
    np.testing.assert_allclose(np.asarray(outs[0]), np.asarray(ref["relu1"]),
                               rtol=2e-2, atol=2e-2)
    np.testing.assert_allclose(np.asarray(outs[1]), np.asarray(ref["fc"]),
                               rtol=2e-2, atol=2e-2)

    print("KERNEL_OK")
</pallas_src>

<mosaic_0001>
module attributes {stable_mosaic.version = 11 : i64} {
  func.func @kernel(%arg0: memref<2x16x16x4xf32, #tpu.memory_space<vmem>>, %arg1: memref<36x8xf32, #tpu.memory_space<vmem>>, %arg2: memref<1x8xf32, #tpu.memory_space<vmem>>, %arg3: memref<512x32xf32, #tpu.memory_space<vmem>>, %arg4: memref<1x32xf32, #tpu.memory_space<vmem>>, %arg5: memref<2x16x16x8xf32, #tpu.memory_space<vmem>>, %arg6: memref<2x32xf32, #tpu.memory_space<vmem>>, %arg7: memref<2x18x18x4xf32, #tpu.memory_space<vmem>>, %arg8: memref<512x36xf32, #tpu.memory_space<vmem>>, %arg9: memref<2x512xf32, #tpu.memory_space<vmem>>) attributes {dimension_semantics = [], scalar_prefetch = 0 : i64, scratch_operands = 3 : i64, tpu.core_type = #tpu.core_type<tc>} {
    %cst = arith.constant 0.000000e+00 : f32
    %0 = vector.broadcast %cst : f32 to vector<2x18x18x4xf32>
    %c0 = arith.constant 0 : index
    %c0_0 = arith.constant 0 : index
    %c0_1 = arith.constant 0 : index
    %c0_2 = arith.constant 0 : index
    %1 = vector.load %arg7[%c0, %c0_0, %c0_1, %c0_2] : memref<2x18x18x4xf32, #tpu.memory_space<vmem>>, vector<2x18x18x4xf32>
    tpu.vector_store %arg7[%c0, %c0_0, %c0_1, %c0_2], %0 {strides = array<i32>} : memref<2x18x18x4xf32, #tpu.memory_space<vmem>>, vector<2x18x18x4xf32>,
    %c0_3 = arith.constant 0 : index
    %c0_4 = arith.constant 0 : index
    %c0_5 = arith.constant 0 : index
    %c0_6 = arith.constant 0 : index
    %2 = vector.load %arg0[%c0_3, %c0_4, %c0_5, %c0_6] : memref<2x16x16x4xf32, #tpu.memory_space<vmem>>, vector<2x16x16x4xf32>
    %c0_7 = arith.constant 0 : index
    %c1 = arith.constant 1 : index
    %c1_8 = arith.constant 1 : index
    %c0_9 = arith.constant 0 : index
    %3 = vector.load %arg7[%c0_7, %c1, %c1_8, %c0_9] : memref<2x18x18x4xf32, #tpu.memory_space<vmem>>, vector<2x16x16x4xf32>
    tpu.vector_store %arg7[%c0_7, %c1, %c1_8, %c0_9], %2 {strides = array<i32>} : memref<2x18x18x4xf32, #tpu.memory_space<vmem>>, vector<2x16x16x4xf32>,
    %c0_10 = arith.constant 0 : index
    %c0_11 = arith.constant 0 : index
    %c0_12 = arith.constant 0 : index
    %c0_13 = arith.constant 0 : index
    %4 = vector.load %arg7[%c0_10, %c0_11, %c0_12, %c0_13] : memref<2x18x18x4xf32, #tpu.memory_space<vmem>>, vector<2x18x18x4xf32>
    %5 = vector.extract_strided_slice %4 {offsets = [0, 0, 0, 0], sizes = [2, 16, 16, 4], strides = [1, 1, 1, 1]} : vector<2x18x18x4xf32> to vector<2x16x16x4xf32>
    %6 = vector.shape_cast %5 : vector<2x16x16x4xf32> to vector<512x4xf32>
    %c0_14 = arith.constant 0 : index
    %c0_15 = arith.constant 0 : index
    %7 = vector.load %arg8[%c0_14, %c0_15] : memref<512x36xf32, #tpu.memory_space<vmem>>, vector<512x4xf32>
    tpu.vector_store %arg8[%c0_14, %c0_15], %6 {strides = array<i32>} : memref<512x36xf32, #tpu.memory_space<vmem>>, vector<512x4xf32>,
    %8 = vector.extract_strided_slice %4 {offsets = [0, 0, 1, 0], sizes = [2, 16, 16, 4], strides = [1, 1, 1, 1]} : vector<2x18x18x4xf32> to vector<2x16x16x4xf32>
    %9 = vector.shape_cast %8 : vector<2x16x16x4xf32> to vector<512x4xf32>
    %c0_16 = arith.constant 0 : index
    %c4 = arith.constant 4 : index
    %10 = vector.load %arg8[%c0_16, %c4] : memref<512x36xf32, #tpu.memory_space<vmem>>, vector<512x4xf32>
    tpu.vector_store %arg8[%c0_16, %c4], %9 {strides = array<i32>} : memref<512x36xf32, #tpu.memory_space<vmem>>, vector<512x4xf32>,
    %11 = vector.extract_strided_slice %4 {offsets = [0, 0, 2, 0], sizes = [2, 16, 16, 4], strides = [1, 1, 1, 1]} : vector<2x18x18x4xf32> to vector<2x16x16x4xf32>
    %12 = vector.shape_cast %11 : vector<2x16x16x4xf32> to vector<512x4xf32>
    %c0_17 = arith.constant 0 : index
    %c8 = arith.constant 8 : index
    %13 = vector.load %arg8[%c0_17, %c8] : memref<512x36xf32, #tpu.memory_space<vmem>>, vector<512x4xf32>
    tpu.vector_store %arg8[%c0_17, %c8], %12 {strides = array<i32>} : memref<512x36xf32, #tpu.memory_space<vmem>>, vector<512x4xf32>,
    %14 = vector.extract_strided_slice %4 {offsets = [0, 1, 0, 0], sizes = [2, 16, 16, 4], strides = [1, 1, 1, 1]} : vector<2x18x18x4xf32> to vector<2x16x16x4xf32>
    %15 = vector.shape_cast %14 : vector<2x16x16x4xf32> to vector<512x4xf32>
    %c0_18 = arith.constant 0 : index
    %c12 = arith.constant 12 : index
    %16 = vector.load %arg8[%c0_18, %c12] : memref<512x36xf32, #tpu.memory_space<vmem>>, vector<512x4xf32>
    tpu.vector_store %arg8[%c0_18, %c12], %15 {strides = array<i32>} : memref<512x36xf32, #tpu.memory_space<vmem>>, vector<512x4xf32>,
    %17 = vector.extract_strided_slice %4 {offsets = [0, 1, 1, 0], sizes = [2, 16, 16, 4], strides = [1, 1, 1, 1]} : vector<2x18x18x4xf32> to vector<2x16x16x4xf32>
    %18 = vector.shape_cast %17 : vector<2x16x16x4xf32> to vector<512x4xf32>
    %c0_19 = arith.constant 0 : index
    %c16 = arith.constant 16 : index
    %19 = vector.load %arg8[%c0_19, %c16] : memref<512x36xf32, #tpu.memory_space<vmem>>, vector<512x4xf32>
    tpu.vector_store %arg8[%c0_19, %c16], %18 {strides = array<i32>} : memref<512x36xf32, #tpu.memory_space<vmem>>, vector<512x4xf32>,
    %20 = vector.extract_strided_slice %4 {offsets = [0, 1, 2, 0], sizes = [2, 16, 16, 4], strides = [1, 1, 1, 1]} : vector<2x18x18x4xf32> to vector<2x16x16x4xf32>
    %21 = vector.shape_cast %20 : vector<2x16x16x4xf32> to vector<512x4xf32>
    %c0_20 = arith.constant 0 : index
    %c20 = arith.constant 20 : index
    %22 = vector.load %arg8[%c0_20, %c20] : memref<512x36xf32, #tpu.memory_space<vmem>>, vector<512x4xf32>
    tpu.vector_store %arg8[%c0_20, %c20], %21 {strides = array<i32>} : memref<512x36xf32, #tpu.memory_space<vmem>>, vector<512x4xf32>,
    %23 = vector.extract_strided_slice %4 {offsets = [0, 2, 0, 0], sizes = [2, 16, 16, 4], strides = [1, 1, 1, 1]} : vector<2x18x18x4xf32> to vector<2x16x16x4xf32>
    %24 = vector.shape_cast %23 : vector<2x16x16x4xf32> to vector<512x4xf32>
    %c0_21 = arith.constant 0 : index
    %c24 = arith.constant 24 : index
    %25 = vector.load %arg8[%c0_21, %c24] : memref<512x36xf32, #tpu.memory_space<vmem>>, vector<512x4xf32>
    tpu.vector_store %arg8[%c0_21, %c24], %24 {strides = array<i32>} : memref<512x36xf32, #tpu.memory_space<vmem>>, vector<512x4xf32>,
    %26 = vector.extract_strided_slice %4 {offsets = [0, 2, 1, 0], sizes = [2, 16, 16, 4], strides = [1, 1, 1, 1]} : vector<2x18x18x4xf32> to vector<2x16x16x4xf32>
    %27 = vector.shape_cast %26 : vector<2x16x16x4xf32> to vector<512x4xf32>
    %c0_22 = arith.constant 0 : index
    %c28 = arith.constant 28 : index
    %28 = vector.load %arg8[%c0_22, %c28] : memref<512x36xf32, #tpu.memory_space<vmem>>, vector<512x4xf32>
    tpu.vector_store %arg8[%c0_22, %c28], %27 {strides = array<i32>} : memref<512x36xf32, #tpu.memory_space<vmem>>, vector<512x4xf32>,
    %29 = vector.extract_strided_slice %4 {offsets = [0, 2, 2, 0], sizes = [2, 16, 16, 4], strides = [1, 1, 1, 1]} : vector<2x18x18x4xf32> to vector<2x16x16x4xf32>
    %30 = vector.shape_cast %29 : vector<2x16x16x4xf32> to vector<512x4xf32>
    %c0_23 = arith.constant 0 : index
    %c32 = arith.constant 32 : index
    %31 = vector.load %arg8[%c0_23, %c32] : memref<512x36xf32, #tpu.memory_space<vmem>>, vector<512x4xf32>
    tpu.vector_store %arg8[%c0_23, %c32], %30 {strides = array<i32>} : memref<512x36xf32, #tpu.memory_space<vmem>>, vector<512x4xf32>,
    %c0_24 = arith.constant 0 : index
    %c0_25 = arith.constant 0 : index
    %32 = vector.load %arg8[%c0_24, %c0_25] : memref<512x36xf32, #tpu.memory_space<vmem>>, vector<512x36xf32>
    %c0_26 = arith.constant 0 : index
    %c0_27 = arith.constant 0 : index
    %33 = vector.load %arg1[%c0_26, %c0_27] : memref<36x8xf32, #tpu.memory_space<vmem>>, vector<36x8xf32>
    %cst_28 = arith.constant dense<0.000000e+00> : vector<512x8xf32>
    %34 = tpu.matmul %32, %33, %cst_28 {dimension_numbers = #tpu.dot_dimension_numbers<[1], [0], [0], [1], [0, 0, 1, 1], [], []>} : vector<512x36xf32>, vector<36x8xf32>, vector<512x8xf32> -> vector<512x8xf32>
    %c0_29 = arith.constant 0 : index
    %c0_30 = arith.constant 0 : index
    %35 = vector.load %arg2[%c0_29, %c0_30] : memref<1x8xf32, #tpu.memory_space<vmem>>, vector<1x8xf32>
    %36 = vector.broadcast %35 : vector<1x8xf32> to vector<512x8xf32>
    %37 = arith.addf %34, %36 : vector<512x8xf32>
    %cst_31 = arith.constant 0.000000e+00 : f32
    %38 = vector.broadcast %cst_31 : f32 to vector<512x8xf32>
    %39 = arith.maximumf %37, %38 : vector<512x8xf32>
    %40 = vector.shape_cast %39 : vector<512x8xf32> to vector<2x16x16x8xf32>
    %c0_32 = arith.constant 0 : index
    %c0_33 = arith.constant 0 : index
    %c0_34 = arith.constant 0 : index
    %c0_35 = arith.constant 0 : index
    %41 = vector.load %arg5[%c0_32, %c0_33, %c0_34, %c0_35] : memref<2x16x16x8xf32, #tpu.memory_space<vmem>>, vector<2x16x16x8xf32>
    tpu.vector_store %arg5[%c0_32, %c0_33, %c0_34, %c0_35], %40 {strides = array<i32>} : memref<2x16x16x8xf32, #tpu.memory_space<vmem>>, vector<2x16x16x8xf32>,
    %42 = vector.shape_cast %39 : vector<512x8xf32> to vector<16x2x16x8xf32>
    %43 = vector.extract_strided_slice %42 {offsets = [0, 0, 0, 0], sizes = [16, 1, 16, 8], strides = [1, 1, 1, 1]} : vector<16x2x16x8xf32> to vector<16x1x16x8xf32>
    %44 = vector.shape_cast %43 : vector<16x1x16x8xf32> to vector<16x16x8xf32>
    %45 = vector.extract_strided_slice %42 {offsets = [0, 1, 0, 0], sizes = [16, 1, 16, 8], strides = [1, 1, 1, 1]} : vector<16x2x16x8xf32> to vector<16x1x16x8xf32>
    %46 = vector.shape_cast %45 : vector<16x1x16x8xf32> to vector<16x16x8xf32>
    %47 = arith.addf %44, %46 : vector<16x16x8xf32>
    %48 = vector.shape_cast %47 : vector<16x16x8xf32> to vector<16x8x2x8xf32>
    %49 = vector.extract_strided_slice %48 {offsets = [0, 0, 0, 0], sizes = [16, 8, 1, 8], strides = [1, 1, 1, 1]} : vector<16x8x2x8xf32> to vector<16x8x1x8xf32>
    %50 = vector.shape_cast %49 : vector<16x8x1x8xf32> to vector<16x8x8xf32>
    %51 = vector.extract_strided_slice %48 {offsets = [0, 0, 1, 0], sizes = [16, 8, 1, 8], strides = [1, 1, 1, 1]} : vector<16x8x2x8xf32> to vector<16x8x1x8xf32>
    %52 = vector.shape_cast %51 : vector<16x8x1x8xf32> to vector<16x8x8xf32>
    %53 = arith.addf %50, %52 : vector<16x8x8xf32>
    %cst_36 = arith.constant 2.500000e-01 : f32
    %54 = vector.broadcast %cst_36 : f32 to vector<16x8x8xf32>
    %55 = arith.mulf %53, %54 : vector<16x8x8xf32>
    %56 = vector.shape_cast %55 : vector<16x8x8xf32> to vector<2x8x8x8xf32>
    %57 = vector.extract_strided_slice %56 {offsets = [0, 0, 0, 0], sizes = [2, 1, 8, 8], strides = [1, 1, 1, 1]} : vector<2x8x8x8xf32> to vector<2x1x8x8xf32>
    %58 = vector.shape_cast %57 : vector<2x1x8x8xf32> to vector<2x8x8xf32>
    %59 = vector.extract_strided_slice %58 {offsets = [0, 0, 0], sizes = [2, 1, 8], strides = [1, 1, 1]} : vector<2x8x8xf32> to vector<2x1x8xf32>
    %60 = vector.shape_cast %59 : vector<2x1x8xf32> to vector<2x8xf32>
    %c0_37 = arith.constant 0 : index
    %c0_38 = arith.constant 0 : index
    %61 = vector.load %arg9[%c0_37, %c0_38] : memref<2x512xf32, #tpu.memory_space<vmem>>, vector<2x8xf32>
    tpu.vector_store %arg9[%c0_37, %c0_38], %60 {strides = array<i32>} : memref<2x512xf32, #tpu.memory_space<vmem>>, vector<2x8xf32>,
    %62 = vector.extract_strided_slice %58 {offsets = [0, 1, 0], sizes = [2, 1, 8], strides = [1, 1, 1]} : vector<2x8x8xf32> to vector<2x1x8xf32>
    %63 = vector.shape_cast %62 : vector<2x1x8xf32> to vector<2x8xf32>
    %c0_39 = arith.constant 0 : index
    %c8_40 = arith.constant 8 : index
    %64 = vector.load %arg9[%c0_39, %c8_40] : memref<2x512xf32, #tpu.memory_space<vmem>>, vector<2x8xf32>
    tpu.vector_store %arg9[%c0_39, %c8_40], %63 {strides = array<i32>} : memref<2x512xf32, #tpu.memory_space<vmem>>, vector<2x8xf32>,
    %65 = vector.extract_strided_slice %58 {offsets = [0, 2, 0], sizes = [2, 1, 8], strides = [1, 1, 1]} : vector<2x8x8xf32> to vector<2x1x8xf32>
    %66 = vector.shape_cast %65 : vector<2x1x8xf32> to vector<2x8xf32>
    %c0_41 = arith.constant 0 : index
    %c16_42 = arith.constant 16 : index
    %67 = vector.load %arg9[%c0_41, %c16_42] : memref<2x512xf32, #tpu.memory_space<vmem>>, vector<2x8xf32>
    tpu.vector_store %arg9[%c0_41, %c16_42], %66 {strides = array<i32>} : memref<2x512xf32, #tpu.memory_space<vmem>>, vector<2x8xf32>,
    %68 = vector.extract_strided_slice %58 {offsets = [0, 3, 0], sizes = [2, 1, 8], strides = [1, 1, 1]} : vector<2x8x8xf32> to vector<2x1x8xf32>
    %69 = vector.shape_cast %68 : vector<2x1x8xf32> to vector<2x8xf32>
    %c0_43 = arith.constant 0 : index
    %c24_44 = arith.constant 24 : index
    %70 = vector.load %arg9[%c0_43, %c24_44] : memref<2x512xf32, #tpu.memory_space<vmem>>, vector<2x8xf32>
    tpu.vector_store %arg9[%c0_43, %c24_44], %69 {strides = array<i32>} : memref<2x512xf32, #tpu.memory_space<vmem>>, vector<2x8xf32>,
    %71 = vector.extract_strided_slice %58 {offsets = [0, 4, 0], sizes = [2, 1, 8], strides = [1, 1, 1]} : vector<2x8x8xf32> to vector<2x1x8xf32>
    %72 = vector.shape_cast %71 : vector<2x1x8xf32> to vector<2x8xf32>
    %c0_45 = arith.constant 0 : index
    %c32_46 = arith.constant 32 : index
    %73 = vector.load %arg9[%c0_45, %c32_46] : memref<2x512xf32, #tpu.memory_space<vmem>>, vector<2x8xf32>
    tpu.vector_store %arg9[%c0_45, %c32_46], %72 {strides = array<i32>} : memref<2x512xf32, #tpu.memory_space<vmem>>, vector<2x8xf32>,
    %74 = vector.extract_strided_slice %58 {offsets = [0, 5, 0], sizes = [2, 1, 8], strides = [1, 1, 1]} : vector<2x8x8xf32> to vector<2x1x8xf32>
    %75 = vector.shape_cast %74 : vector<2x1x8xf32> to vector<2x8xf32>
    %c0_47 = arith.constant 0 : index
    %c40 = arith.constant 40 : index
    %76 = vector.load %arg9[%c0_47, %c40] : memref<2x512xf32, #tpu.memory_space<vmem>>, vector<2x8xf32>
    tpu.vector_store %arg9[%c0_47, %c40], %75 {strides = array<i32>} : memref<2x512xf32, #tpu.memory_space<vmem>>, vector<2x8xf32>,
    %77 = vector.extract_strided_slice %58 {offsets = [0, 6, 0], sizes = [2, 1, 8], strides = [1, 1, 1]} : vector<2x8x8xf32> to vector<2x1x8xf32>
    %78 = vector.shape_cast %77 : vector<2x1x8xf32> to vector<2x8xf32>
    %c0_48 = arith.constant 0 : index
    %c48 = arith.constant 48 : index
    %79 = vector.load %arg9[%c0_48, %c48] : memref<2x512xf32, #tpu.memory_space<vmem>>, vector<2x8xf32>
    tpu.vector_store %arg9[%c0_48, %c48], %78 {strides = array<i32>} : memref<2x512xf32, #tpu.memory_space<vmem>>, vector<2x8xf32>,
    %80 = vector.extract_strided_slice %58 {offsets = [0, 7, 0], sizes = [2, 1, 8], strides = [1, 1, 1]} : vector<2x8x8xf32> to vector<2x1x8xf32>
    %81 = vector.shape_cast %80 : vector<2x1x8xf32> to vector<2x8xf32>
    %c0_49 = arith.constant 0 : index
    %c56 = arith.constant 56 : index
    %82 = vector.load %arg9[%c0_49, %c56] : memref<2x512xf32, #tpu.memory_space<vmem>>, vector<2x8xf32>
    tpu.vector_store %arg9[%c0_49, %c56], %81 {strides = array<i32>} : memref<2x512xf32, #tpu.memory_space<vmem>>, vector<2x8xf32>,
    %83 = vector.extract_strided_slice %56 {offsets = [0, 1, 0, 0], sizes = [2, 1, 8, 8], strides = [1, 1, 1, 1]} : vector<2x8x8x8xf32> to vector<2x1x8x8xf32>
    %84 = vector.shape_cast %83 : vector<2x1x8x8xf32> to vector<2x8x8xf32>
    %85 = vector.extract_strided_slice %84 {offsets = [0, 0, 0], sizes = [2, 1, 8], strides = [1, 1, 1]} : vector<2x8x8xf32> to vector<2x1x8xf32>
    %86 = vector.shape_cast %85 : vector<2x1x8xf32> to vector<2x8xf32>
    %c0_50 = arith.constant 0 : index
    %c64 = arith.constant 64 : index
    %87 = vector.load %arg9[%c0_50, %c64] : memref<2x512xf32, #tpu.memory_space<vmem>>, vector<2x8xf32>
    tpu.vector_store %arg9[%c0_50, %c64], %86 {strides = array<i32>} : memref<2x512xf32, #tpu.memory_space<vmem>>, vector<2x8xf32>,
    %88 = vector.extract_strided_slice %84 {offsets = [0, 1, 0], sizes = [2, 1, 8], strides = [1, 1, 1]} : vector<2x8x8xf32> to vector<2x1x8xf32>
    %89 = vector.shape_cast %88 : vector<2x1x8xf32> to vector<2x8xf32>
    %c0_51 = arith.constant 0 : index
    %c72 = arith.constant 72 : index
    %90 = vector.load %arg9[%c0_51, %c72] : memref<2x512xf32, #tpu.memory_space<vmem>>, vector<2x8xf32>
    tpu.vector_store %arg9[%c0_51, %c72], %89 {strides = array<i32>} : memref<2x512xf32, #tpu.memory_space<vmem>>, vector<2x8xf32>,
    %91 = vector.extract_strided_slice %84 {offsets = [0, 2, 0], sizes = [2, 1, 8], strides = [1, 1, 1]} : vector<2x8x8xf32> to vector<2x1x8xf32>
    %92 = vector.shape_cast %91 : vector<2x1x8xf32> to vector<2x8xf32>
    %c0_52 = arith.constant 0 : index
    %c80 = arith.constant 80 : index
    %93 = vector.load %arg9[%c0_52, %c80] : memref<2x512xf32, #tpu.memory_space<vmem>>, vector<2x8xf32>
    tpu.vector_store %arg9[%c0_52, %c80], %92 {strides = array<i32>} : memref<2x512xf32, #tpu.memory_space<vmem>>, vector<2x8xf32>,
    %94 = vector.extract_strided_slice %84 {offsets = [0, 3, 0], sizes = [2, 1, 8], strides = [1, 1, 1]} : vector<2x8x8xf32> to vector<2x1x8xf32>
    %95 = vector.shape_cast %94 : vector<2x1x8xf32> to vector<2x8xf32>
    %c0_53 = arith.constant 0 : index
    %c88 = arith.constant 88 : index
    %96 = vector.load %arg9[%c0_53, %c88] : memref<2x512xf32, #tpu.memory_space<vmem>>, vector<2x8xf32>
    tpu.vector_store %arg9[%c0_53, %c88], %95 {strides = array<i32>} : memref<2x512xf32, #tpu.memory_space<vmem>>, vector<2x8xf32>,
    %97 = vector.extract_strided_slice %84 {offsets = [0, 4, 0], sizes = [2, 1, 8], strides = [1, 1, 1]} : vector<2x8x8xf32> to vector<2x1x8xf32>
    %98 = vector.shape_cast %97 : vector<2x1x8xf32> to vector<2x8xf32>
    %c0_54 = arith.constant 0 : index
    %c96 = arith.constant 96 : index
    %99 = vector.load %arg9[%c0_54, %c96] : memref<2x512xf32, #tpu.memory_space<vmem>>, vector<2x8xf32>
    tpu.vector_store %arg9[%c0_54, %c96], %98 {strides = array<i32>} : memref<2x512xf32, #tpu.memory_space<vmem>>, vector<2x8xf32>,
    %100 = vector.extract_strided_slice %84 {offsets = [0, 5, 0], sizes = [2, 1, 8], strides = [1, 1, 1]} : vector<2x8x8xf32> to vector<2x1x8xf32>
    %101 = vector.shape_cast %100 : vector<2x1x8xf32> to vector<2x8xf32>
    %c0_55 = arith.constant 0 : index
    %c104 = arith.constant 104 : index
    %102 = vector.load %arg9[%c0_55, %c104] : memref<2x512xf32, #tpu.memory_space<vmem>>, vector<2x8xf32>
    tpu.vector_store %arg9[%c0_55, %c104], %101 {strides = array<i32>} : memref<2x512xf32, #tpu.memory_space<vmem>>, vector<2x8xf32>,
    %103 = vector.extract_strided_slice %84 {offsets = [0, 6, 0], sizes = [2, 1, 8], strides = [1, 1, 1]} : vector<2x8x8xf32> to vector<2x1x8xf32>
    %104 = vector.shape_cast %103 : vector<2x1x8xf32> to vector<2x8xf32>
    %c0_56 = arith.constant 0 : index
    %c112 = arith.constant 112 : index
    %105 = vector.load %arg9[%c0_56, %c112] : memref<2x512xf32, #tpu.memory_space<vmem>>, vector<2x8xf32>
    tpu.vector_store %arg9[%c0_56, %c112], %104 {strides = array<i32>} : memref<2x512xf32, #tpu.memory_space<vmem>>, vector<2x8xf32>,
    %106 = vector.extract_strided_slice %84 {offsets = [0, 7, 0], sizes = [2, 1, 8], strides = [1, 1, 1]} : vector<2x8x8xf32> to vector<2x1x8xf32>
    %107 = vector.shape_cast %106 : vector<2x1x8xf32> to vector<2x8xf32>
    %c0_57 = arith.constant 0 : index
    %c120 = arith.constant 120 : index
    %108 = vector.load %arg9[%c0_57, %c120] : memref<2x512xf32, #tpu.memory_space<vmem>>, vector<2x8xf32>
    tpu.vector_store %arg9[%c0_57, %c120], %107 {strides = array<i32>} : memref<2x512xf32, #tpu.memory_space<vmem>>, vector<2x8xf32>,
    %109 = vector.extract_strided_slice %56 {offsets = [0, 2, 0, 0], sizes = [2, 1, 8, 8], strides = [1, 1, 1, 1]} : vector<2x8x8x8xf32> to vector<2x1x8x8xf32>
    %110 = vector.shape_cast %109 : vector<2x1x8x8xf32> to vector<2x8x8xf32>
    %111 = vector.extract_strided_slice %110 {offsets = [0, 0, 0], sizes = [2, 1, 8], strides = [1, 1, 1]} : vector<2x8x8xf32> to vector<2x1x8xf32>
    %112 = vector.shape_cast %111 : vector<2x1x8xf32> to vector<2x8xf32>
    %c0_58 = arith.constant 0 : index
    %c128 = arith.constant 128 : index
    %113 = vector.load %arg9[%c0_58, %c128] : memref<2x512xf32, #tpu.memory_space<vmem>>, vector<2x8xf32>
    tpu.vector_store %arg9[%c0_58, %c128], %112 {strides = array<i32>} : memref<2x512xf32, #tpu.memory_space<vmem>>, vector<2x8xf32>,
    %114 = vector.extract_strided_slice %110 {offsets = [0, 1, 0], sizes = [2, 1, 8], strides = [1, 1, 1]} : vector<2x8x8xf32> to vector<2x1x8xf32>
    %115 = vector.shape_cast %114 : vector<2x1x8xf32> to vector<2x8xf32>
    %c0_59 = arith.constant 0 : index
    %c136 = arith.constant 136 : index
    %116 = vector.load %arg9[%c0_59, %c136] : memref<2x512xf32, #tpu.memory_space<vmem>>, vector<2x8xf32>
    tpu.vector_store %arg9[%c0_59, %c136], %115 {strides = array<i32>} : memref<2x512xf32, #tpu.memory_space<vmem>>, vector<2x8xf32>,
    %117 = vector.extract_strided_slice %110 {offsets = [0, 2, 0], sizes = [2, 1, 8], strides = [1, 1, 1]} : vector<2x8x8xf32> to vector<2x1x8xf32>
    %118 = vector.shape_cast %117 : vector<2x1x8xf32> to vector<2x8xf32>
    %c0_60 = arith.constant 0 : index
    %c144 = arith.constant 144 : index
    %119 = vector.load %arg9[%c0_60, %c144] : memref<2x512xf32, #tpu.memory_space<vmem>>, vector<2x8xf32>
    tpu.vector_store %arg9[%c0_60, %c144], %118 {strides = array<i32>} : memref<2x512xf32, #tpu.memory_space<vmem>>, vector<2x8xf32>,
    %120 = vector.extract_strided_slice %110 {offsets = [0, 3, 0], sizes = [2, 1, 8], strides = [1, 1, 1]} : vector<2x8x8xf32> to vector<2x1x8xf32>
    %121 = vector.shape_cast %120 : vector<2x1x8xf32> to vector<2x8xf32>
    %c0_61 = arith.constant 0 : index
    %c152 = arith.constant 152 : index
    %122 = vector.load %arg9[%c0_61, %c152] : memref<2x512xf32, #tpu.memory_space<vmem>>, vector<2x8xf32>
    tpu.vector_store %arg9[%c0_61, %c152], %121 {strides = array<i32>} : memref<2x512xf32, #tpu.memory_space<vmem>>, vector<2x8xf32>,
    %123 = vector.extract_strided_slice %110 {offsets = [0, 4, 0], sizes = [2, 1, 8], strides = [1, 1, 1]} : vector<2x8x8xf32> to vector<2x1x8xf32>
    %124 = vector.shape_cast %123 : vector<2x1x8xf32> to vector<2x8xf32>
    %c0_62 = arith.constant 0 : index
    %c160 = arith.constant 160 : index
    %125 = vector.load %arg9[%c0_62, %c160] : memref<2x512xf32, #tpu.memory_space<vmem>>, vector<2x8xf32>
    tpu.vector_store %arg9[%c0_62, %c160], %124 {strides = array<i32>} : memref<2x512xf32, #tpu.memory_space<vmem>>, vector<2x8xf32>,
    %126 = vector.extract_strided_slice %110 {offsets = [0, 5, 0], sizes = [2, 1, 8], strides = [1, 1, 1]} : vector<2x8x8xf32> to vector<2x1x8xf32>
    %127 = vector.shape_cast %126 : vector<2x1x8xf32> to vector<2x8xf32>
    %c0_63 = arith.constant 0 : index
    %c168 = arith.constant 168 : index
    %128 = vector.load %arg9[%c0_63, %c168] : memref<2x512xf32, #tpu.memory_space<vmem>>, vector<2x8xf32>
    tpu.vector_store %arg9[%c0_63, %c168], %127 {strides = array<i32>} : memref<2x512xf32, #tpu.memory_space<vmem>>, vector<2x8xf32>,
    %129 = vector.extract_strided_slice %110 {offsets = [0, 6, 0], sizes = [2, 1, 8], strides = [1, 1, 1]} : vector<2x8x8xf32> to vector<2x1x8xf32>
    %130 = vector.shape_cast %129 : vector<2x1x8xf32> to vector<2x8xf32>
    %c0_64 = arith.constant 0 : index
    %c176 = arith.constant 176 : index
    %131 = vector.load %arg9[%c0_64, %c176] : memref<2x512xf32, #tpu.memory_space<vmem>>, vector<2x8xf32>
    tpu.vector_store %arg9[%c0_64, %c176], %130 {strides = array<i32>} : memref<2x512xf32, #tpu.memory_space<vmem>>, vector<2x8xf32>,
    %132 = vector.extract_strided_slice %110 {offsets = [0, 7, 0], sizes = [2, 1, 8], strides = [1, 1, 1]} : vector<2x8x8xf32> to vector<2x1x8xf32>
    %133 = vector.shape_cast %132 : vector<2x1x8xf32> to vector<2x8xf32>
    %c0_65 = arith.constant 0 : index
    %c184 = arith.constant 184 : index
    %134 = vector.load %arg9[%c0_65, %c184] : memref<2x512xf32, #tpu.memory_space<vmem>>, vector<2x8xf32>
    tpu.vector_store %arg9[%c0_65, %c184], %133 {strides = array<i32>} : memref<2x512xf32, #tpu.memory_space<vmem>>, vector<2x8xf32>,
    %135 = vector.extract_strided_slice %56 {offsets = [0, 3, 0, 0], sizes = [2, 1, 8, 8], strides = [1, 1, 1, 1]} : vector<2x8x8x8xf32> to vector<2x1x8x8xf32>
    %136 = vector.shape_cast %135 : vector<2x1x8x8xf32> to vector<2x8x8xf32>
    %137 = vector.extract_strided_slice %136 {offsets = [0, 0, 0], sizes = [2, 1, 8], strides = [1, 1, 1]} : vector<2x8x8xf32> to vector<2x1x8xf32>
    %138 = vector.shape_cast %137 : vector<2x1x8xf32> to vector<2x8xf32>
    %c0_66 = arith.constant 0 : index
    %c192 = arith.constant 192 : index
    %139 = vector.load %arg9[%c0_66, %c192] : memref<2x512xf32, #tpu.memory_space<vmem>>, vector<2x8xf32>
    tpu.vector_store %arg9[%c0_66, %c192], %138 {strides = array<i32>} : memref<2x512xf32, #tpu.memory_space<vmem>>, vector<2x8xf32>,
    %140 = vector.extract_strided_slice %136 {offsets = [0, 1, 0], sizes = [2, 1, 8], strides = [1, 1, 1]} : vector<2x8x8xf32> to vector<2x1x8xf32>
    %141 = vector.shape_cast %140 : vector<2x1x8xf32> to vector<2x8xf32>
    %c0_67 = arith.constant 0 : index
    %c200 = arith.constant 200 : index
    %142 = vector.load %arg9[%c0_67, %c200] : memref<2x512xf32, #tpu.memory_space<vmem>>, vector<2x8xf32>
    tpu.vector_store %arg9[%c0_67, %c200], %141 {strides = array<i32>} : memref<2x512xf32, #tpu.memory_space<vmem>>, vector<2x8xf32>,
    %143 = vector.extract_strided_slice %136 {offsets = [0, 2, 0], sizes = [2, 1, 8], strides = [1, 1, 1]} : vector<2x8x8xf32> to vector<2x1x8xf32>
    %144 = vector.shape_cast %143 : vector<2x1x8xf32> to vector<2x8xf32>
    %c0_68 = arith.constant 0 : index
    %c208 = arith.constant 208 : index
    %145 = vector.load %arg9[%c0_68, %c208] : memref<2x512xf32, #tpu.memory_space<vmem>>, vector<2x8xf32>
    tpu.vector_store %arg9[%c0_68, %c208], %144 {strides = array<i32>} : memref<2x512xf32, #tpu.memory_space<vmem>>, vector<2x8xf32>,
    %146 = vector.extract_strided_slice %136 {offsets = [0, 3, 0], sizes = [2, 1, 8], strides = [1, 1, 1]} : vector<2x8x8xf32> to vector<2x1x8xf32>
    %147 = vector.shape_cast %146 : vector<2x1x8xf32> to vector<2x8xf32>
    %c0_69 = arith.constant 0 : index
    %c216 = arith.constant 216 : index
    %148 = vector.load %arg9[%c0_69, %c216] : memref<2x512xf32, #tpu.memory_space<vmem>>, vector<2x8xf32>
    tpu.vector_store %arg9[%c0_69, %c216], %147 {strides = array<i32>} : memref<2x512xf32, #tpu.memory_space<vmem>>, vector<2x8xf32>,
    %149 = vector.extract_strided_slice %136 {offsets = [0, 4, 0], sizes = [2, 1, 8], strides = [1, 1, 1]} : vector<2x8x8xf32> to vector<2x1x8xf32>
    %150 = vector.shape_cast %149 : vector<2x1x8xf32> to vector<2x8xf32>
    %c0_70 = arith.constant 0 : index
    %c224 = arith.constant 224 : index
    %151 = vector.load %arg9[%c0_70, %c224] : memref<2x512xf32, #tpu.memory_space<vmem>>, vector<2x8xf32>
    tpu.vector_store %arg9[%c0_70, %c224], %150 {strides = array<i32>} : memref<2x512xf32, #tpu.memory_space<vmem>>, vector<2x8xf32>,
    %152 = vector.extract_strided_slice %136 {offsets = [0, 5, 0], sizes = [2, 1, 8], strides = [1, 1, 1]} : vector<2x8x8xf32> to vector<2x1x8xf32>
    %153 = vector.shape_cast %152 : vector<2x1x8xf32> to vector<2x8xf32>
    %c0_71 = arith.constant 0 : index
    %c232 = arith.constant 232 : index
    %154 = vector.load %arg9[%c0_71, %c232] : memref<2x512xf32, #tpu.memory_space<vmem>>, vector<2x8xf32>
    tpu.vector_store %arg9[%c0_71, %c232], %153 {strides = array<i32>} : memref<2x512xf32, #tpu.memory_space<vmem>>, vector<2x8xf32>,
    %155 = vector.extract_strided_slice %136 {offsets = [0, 6, 0], sizes = [2, 1, 8], strides = [1, 1, 1]} : vector<2x8x8xf32> to vector<2x1x8xf32>
    %156 = vector.shape_cast %155 : vector<2x1x8xf32> to vector<2x8xf32>
    %c0_72 = arith.constant 0 : index
    %c240 = arith.constant 240 : index
    %157 = vector.load %arg9[%c0_72, %c240] : memref<2x512xf32, #tpu.memory_space<vmem>>, vector<2x8xf32>
    tpu.vector_store %arg9[%c0_72, %c240], %156 {strides = array<i32>} : memref<2x512xf32, #tpu.memory_space<vmem>>, vector<2x8xf32>,
    %158 = vector.extract_strided_slice %136 {offsets = [0, 7, 0], sizes = [2, 1, 8], strides = [1, 1, 1]} : vector<2x8x8xf32> to vector<2x1x8xf32>
    %159 = vector.shape_cast %158 : vector<2x1x8xf32> to vector<2x8xf32>
    %c0_73 = arith.constant 0 : index
    %c248 = arith.constant 248 : index
    %160 = vector.load %arg9[%c0_73, %c248] : memref<2x512xf32, #tpu.memory_space<vmem>>, vector<2x8xf32>
    tpu.vector_store %arg9[%c0_73, %c248], %159 {strides = array<i32>} : memref<2x512xf32, #tpu.memory_space<vmem>>, vector<2x8xf32>,
    %161 = vector.extract_strided_slice %56 {offsets = [0, 4, 0, 0], sizes = [2, 1, 8, 8], strides = [1, 1, 1, 1]} : vector<2x8x8x8xf32> to vector<2x1x8x8xf32>
    %162 = vector.shape_cast %161 : vector<2x1x8x8xf32> to vector<2x8x8xf32>
    %163 = vector.extract_strided_slice %162 {offsets = [0, 0, 0], sizes = [2, 1, 8], strides = [1, 1, 1]} : vector<2x8x8xf32> to vector<2x1x8xf32>
    %164 = vector.shape_cast %163 : vector<2x1x8xf32> to vector<2x8xf32>
    %c0_74 = arith.constant 0 : index
    %c256 = arith.constant 256 : index
    %165 = vector.load %arg9[%c0_74, %c256] : memref<2x512xf32, #tpu.memory_space<vmem>>, vector<2x8xf32>
    tpu.vector_store %arg9[%c0_74, %c256], %164 {strides = array<i32>} : memref<2x512xf32, #tpu.memory_space<vmem>>, vector<2x8xf32>,
    %166 = vector.extract_strided_slice %162 {offsets = [0, 1, 0], sizes = [2, 1, 8], strides = [1, 1, 1]} : vector<2x8x8xf32> to vector<2x1x8xf32>
    %167 = vector.shape_cast %166 : vector<2x1x8xf32> to vector<2x8xf32>
    %c0_75 = arith.constant 0 : index
    %c264 = arith.constant 264 : index
    %168 = vector.load %arg9[%c0_75, %c264] : memref<2x512xf32, #tpu.memory_space<vmem>>, vector<2x8xf32>
    tpu.vector_store %arg9[%c0_75, %c264], %167 {strides = array<i32>} : memref<2x512xf32, #tpu.memory_space<vmem>>, vector<2x8xf32>,
    %169 = vector.extract_strided_slice %162 {offsets = [0, 2, 0], sizes = [2, 1, 8], strides = [1, 1, 1]} : vector<2x8x8xf32> to vector<2x1x8xf32>
    %170 = vector.shape_cast %169 : vector<2x1x8xf32> to vector<2x8xf32>
    %c0_76 = arith.constant 0 : index
    %c272 = arith.constant 272 : index
    %171 = vector.load %arg9[%c0_76, %c272] : memref<2x512xf32, #tpu.memory_space<vmem>>, vector<2x8xf32>
    tpu.vector_store %arg9[%c0_76, %c272], %170 {strides = array<i32>} : memref<2x512xf32, #tpu.memory_space<vmem>>, vector<2x8xf32>,
    %172 = vector.extract_strided_slice %162 {offsets = [0, 3, 0], sizes = [2, 1, 8], strides = [1, 1, 1]} : vector<2x8x8xf32> to vector<2x1x8xf32>
    %173 = vector.shape_cast %172 : vector<2x1x8xf32> to vector<2x8xf32>
    %c0_77 = arith.constant 0 : index
    %c280 = arith.constant 280 : index
    %174 = vector.load %arg9[%c0_77, %c280] : memref<2x512xf32, #tpu.memory_space<vmem>>, vector<2x8xf32>
    tpu.vector_store %arg9[%c0_77, %c280], %173 {strides = array<i32>} : memref<2x512xf32, #tpu.memory_space<vmem>>, vector<2x8xf32>,
    %175 = vector.extract_strided_slice %162 {offsets = [0, 4, 0], sizes = [2, 1, 8], strides = [1, 1, 1]} : vector<2x8x8xf32> to vector<2x1x8xf32>
    %176 = vector.shape_cast %175 : vector<2x1x8xf32> to vector<2x8xf32>
    %c0_78 = arith.constant 0 : index
    %c288 = arith.constant 288 : index
    %177 = vector.load %arg9[%c0_78, %c288] : memref<2x512xf32, #tpu.memory_space<vmem>>, vector<2x8xf32>
    tpu.vector_store %arg9[%c0_78, %c288], %176 {strides = array<i32>} : memref<2x512xf32, #tpu.memory_space<vmem>>, vector<2x8xf32>,
    %178 = vector.extract_strided_slice %162 {offsets = [0, 5, 0], sizes = [2, 1, 8], strides = [1, 1, 1]} : vector<2x8x8xf32> to vector<2x1x8xf32>
    %179 = vector.shape_cast %178 : vector<2x1x8xf32> to vector<2x8xf32>
    %c0_79 = arith.constant 0 : index
    %c296 = arith.constant 296 : index
    %180 = vector.load %arg9[%c0_79, %c296] : memref<2x512xf32, #tpu.memory_space<vmem>>, vector<2x8xf32>
    tpu.vector_store %arg9[%c0_79, %c296], %179 {strides = array<i32>} : memref<2x512xf32, #tpu.memory_space<vmem>>, vector<2x8xf32>,
    %181 = vector.extract_strided_slice %162 {offsets = [0, 6, 0], sizes = [2, 1, 8], strides = [1, 1, 1]} : vector<2x8x8xf32> to vector<2x1x8xf32>
    %182 = vector.shape_cast %181 : vector<2x1x8xf32> to vector<2x8xf32>
    %c0_80 = arith.constant 0 : index
    %c304 = arith.constant 304 : index
    %183 = vector.load %arg9[%c0_80, %c304] : memref<2x512xf32, #tpu.memory_space<vmem>>, vector<2x8xf32>
    tpu.vector_store %arg9[%c0_80, %c304], %182 {strides = array<i32>} : memref<2x512xf32, #tpu.memory_space<vmem>>, vector<2x8xf32>,
    %184 = vector.extract_strided_slice %162 {offsets = [0, 7, 0], sizes = [2, 1, 8], strides = [1, 1, 1]} : vector<2x8x8xf32> to vector<2x1x8xf32>
    %185 = vector.shape_cast %184 : vector<2x1x8xf32> to vector<2x8xf32>
    %c0_81 = arith.constant 0 : index
    %c312 = arith.constant 312 : index
    %186 = vector.load %arg9[%c0_81, %c312] : memref<2x512xf32, #tpu.memory_space<vmem>>, vector<2x8xf32>
    tpu.vector_store %arg9[%c0_81, %c312], %185 {strides = array<i32>} : memref<2x512xf32, #tpu.memory_space<vmem>>, vector<2x8xf32>,
    %187 = vector.extract_strided_slice %56 {offsets = [0, 5, 0, 0], sizes = [2, 1, 8, 8], strides = [1, 1, 1, 1]} : vector<2x8x8x8xf32> to vector<2x1x8x8xf32>
    %188 = vector.shape_cast %187 : vector<2x1x8x8xf32> to vector<2x8x8xf32>
    %189 = vector.extract_strided_slice %188 {offsets = [0, 0, 0], sizes = [2, 1, 8], strides = [1, 1, 1]} : vector<2x8x8xf32> to vector<2x1x8xf32>
    %190 = vector.shape_cast %189 : vector<2x1x8xf32> to vector<2x8xf32>
    %c0_82 = arith.constant 0 : index
    %c320 = arith.constant 320 : index
    %191 = vector.load %arg9[%c0_82, %c320] : memref<2x512xf32, #tpu.memory_space<vmem>>, vector<2x8xf32>
    tpu.vector_store %arg9[%c0_82, %c320], %190 {strides = array<i32>} : memref<2x512xf32, #tpu.memory_space<vmem>>, vector<2x8xf32>,
    %192 = vector.extract_strided_slice %188 {offsets = [0, 1, 0], sizes = [2, 1, 8], strides = [1, 1, 1]} : vector<2x8x8xf32> to vector<2x1x8xf32>
    %193 = vector.shape_cast %192 : vector<2x1x8xf32> to vector<2x8xf32>
    %c0_83 = arith.constant 0 : index
    %c328 = arith.constant 328 : index
    %194 = vector.load %arg9[%c0_83, %c328] : memref<2x512xf32, #tpu.memory_space<vmem>>, vector<2x8xf32>
    tpu.vector_store %arg9[%c0_83, %c328], %193 {strides = array<i32>} : memref<2x512xf32, #tpu.memory_space<vmem>>, vector<2x8xf32>,
    %195 = vector.extract_strided_slice %188 {offsets = [0, 2, 0], sizes = [2, 1, 8], strides = [1, 1, 1]} : vector<2x8x8xf32> to vector<2x1x8xf32>
    %196 = vector.shape_cast %195 : vector<2x1x8xf32> to vector<2x8xf32>
    %c0_84 = arith.constant 0 : index
    %c336 = arith.constant 336 : index
    %197 = vector.load %arg9[%c0_84, %c336] : memref<2x512xf32, #tpu.memory_space<vmem>>, vector<2x8xf32>
    tpu.vector_store %arg9[%c0_84, %c336], %196 {strides = array<i32>} : memref<2x512xf32, #tpu.memory_space<vmem>>, vector<2x8xf32>,
    %198 = vector.extract_strided_slice %188 {offsets = [0, 3, 0], sizes = [2, 1, 8], strides = [1, 1, 1]} : vector<2x8x8xf32> to vector<2x1x8xf32>
    %199 = vector.shape_cast %198 : vector<2x1x8xf32> to vector<2x8xf32>
    %c0_85 = arith.constant 0 : index
    %c344 = arith.constant 344 : index
    %200 = vector.load %arg9[%c0_85, %c344] : memref<2x512xf32, #tpu.memory_space<vmem>>, vector<2x8xf32>
    tpu.vector_store %arg9[%c0_85, %c344], %199 {strides = array<i32>} : memref<2x512xf32, #tpu.memory_space<vmem>>, vector<2x8xf32>,
    %201 = vector.extract_strided_slice %188 {offsets = [0, 4, 0], sizes = [2, 1, 8], strides = [1, 1, 1]} : vector<2x8x8xf32> to vector<2x1x8xf32>
    %202 = vector.shape_cast %201 : vector<2x1x8xf32> to vector<2x8xf32>
    %c0_86 = arith.constant 0 : index
    %c352 = arith.constant 352 : index
    %203 = vector.load %arg9[%c0_86, %c352] : memref<2x512xf32, #tpu.memory_space<vmem>>, vector<2x8xf32>
    tpu.vector_store %arg9[%c0_86, %c352], %202 {strides = array<i32>} : memref<2x512xf32, #tpu.memory_space<vmem>>, vector<2x8xf32>,
    %204 = vector.extract_strided_slice %188 {offsets = [0, 5, 0], sizes = [2, 1, 8], strides = [1, 1, 1]} : vector<2x8x8xf32> to vector<2x1x8xf32>
    %205 = vector.shape_cast %204 : vector<2x1x8xf32> to vector<2x8xf32>
    %c0_87 = arith.constant 0 : index
    %c360 = arith.constant 360 : index
    %206 = vector.load %arg9[%c0_87, %c360] : memref<2x512xf32, #tpu.memory_space<vmem>>, vector<2x8xf32>
    tpu.vector_store %arg9[%c0_87, %c360], %205 {strides = array<i32>} : memref<2x512xf32, #tpu.memory_space<vmem>>, vector<2x8xf32>,
    %207 = vector.extract_strided_slice %188 {offsets = [0, 6, 0], sizes = [2, 1, 8], strides = [1, 1, 1]} : vector<2x8x8xf32> to vector<2x1x8xf32>
    %208 = vector.shape_cast %207 : vector<2x1x8xf32> to vector<2x8xf32>
    %c0_88 = arith.constant 0 : index
    %c368 = arith.constant 368 : index
    %209 = vector.load %arg9[%c0_88, %c368] : memref<2x512xf32, #tpu.memory_space<vmem>>, vector<2x8xf32>
    tpu.vector_store %arg9[%c0_88, %c368], %208 {strides = array<i32>} : memref<2x512xf32, #tpu.memory_space<vmem>>, vector<2x8xf32>,
    %210 = vector.extract_strided_slice %188 {offsets = [0, 7, 0], sizes = [2, 1, 8], strides = [1, 1, 1]} : vector<2x8x8xf32> to vector<2x1x8xf32>
    %211 = vector.shape_cast %210 : vector<2x1x8xf32> to vector<2x8xf32>
    %c0_89 = arith.constant 0 : index
    %c376 = arith.constant 376 : index
    %212 = vector.load %arg9[%c0_89, %c376] : memref<2x512xf32, #tpu.memory_space<vmem>>, vector<2x8xf32>
    tpu.vector_store %arg9[%c0_89, %c376], %211 {strides = array<i32>} : memref<2x512xf32, #tpu.memory_space<vmem>>, vector<2x8xf32>,
    %213 = vector.extract_strided_slice %56 {offsets = [0, 6, 0, 0], sizes = [2, 1, 8, 8], strides = [1, 1, 1, 1]} : vector<2x8x8x8xf32> to vector<2x1x8x8xf32>
    %214 = vector.shape_cast %213 : vector<2x1x8x8xf32> to vector<2x8x8xf32>
    %215 = vector.extract_strided_slice %214 {offsets = [0, 0, 0], sizes = [2, 1, 8], strides = [1, 1, 1]} : vector<2x8x8xf32> to vector<2x1x8xf32>
    %216 = vector.shape_cast %215 : vector<2x1x8xf32> to vector<2x8xf32>
    %c0_90 = arith.constant 0 : index
    %c384 = arith.constant 384 : index
    %217 = vector.load %arg9[%c0_90, %c384] : memref<2x512xf32, #tpu.memory_space<vmem>>, vector<2x8xf32>
    tpu.vector_store %arg9[%c0_90, %c384], %216 {strides = array<i32>} : memref<2x512xf32, #tpu.memory_space<vmem>>, vector<2x8xf32>,
    %218 = vector.extract_strided_slice %214 {offsets = [0, 1, 0], sizes = [2, 1, 8], strides = [1, 1, 1]} : vector<2x8x8xf32> to vector<2x1x8xf32>
    %219 = vector.shape_cast %218 : vector<2x1x8xf32> to vector<2x8xf32>
    %c0_91 = arith.constant 0 : index
    %c392 = arith.constant 392 : index
    %220 = vector.load %arg9[%c0_91, %c392] : memref<2x512xf32, #tpu.memory_space<vmem>>, vector<2x8xf32>
    tpu.vector_store %arg9[%c0_91, %c392], %219 {strides = array<i32>} : memref<2x512xf32, #tpu.memory_space<vmem>>, vector<2x8xf32>,
    %221 = vector.extract_strided_slice %214 {offsets = [0, 2, 0], sizes = [2, 1, 8], strides = [1, 1, 1]} : vector<2x8x8xf32> to vector<2x1x8xf32>
    %222 = vector.shape_cast %221 : vector<2x1x8xf32> to vector<2x8xf32>
    %c0_92 = arith.constant 0 : index
    %c400 = arith.constant 400 : index
    %223 = vector.load %arg9[%c0_92, %c400] : memref<2x512xf32, #tpu.memory_space<vmem>>, vector<2x8xf32>
    tpu.vector_store %arg9[%c0_92, %c400], %222 {strides = array<i32>} : memref<2x512xf32, #tpu.memory_space<vmem>>, vector<2x8xf32>,
    %224 = vector.extract_strided_slice %214 {offsets = [0, 3, 0], sizes = [2, 1, 8], strides = [1, 1, 1]} : vector<2x8x8xf32> to vector<2x1x8xf32>
    %225 = vector.shape_cast %224 : vector<2x1x8xf32> to vector<2x8xf32>
    %c0_93 = arith.constant 0 : index
    %c408 = arith.constant 408 : index
    %226 = vector.load %arg9[%c0_93, %c408] : memref<2x512xf32, #tpu.memory_space<vmem>>, vector<2x8xf32>
    tpu.vector_store %arg9[%c0_93, %c408], %225 {strides = array<i32>} : memref<2x512xf32, #tpu.memory_space<vmem>>, vector<2x8xf32>,
    %227 = vector.extract_strided_slice %214 {offsets = [0, 4, 0], sizes = [2, 1, 8], strides = [1, 1, 1]} : vector<2x8x8xf32> to vector<2x1x8xf32>
    %228 = vector.shape_cast %227 : vector<2x1x8xf32> to vector<2x8xf32>
    %c0_94 = arith.constant 0 : index
    %c416 = arith.constant 416 : index
    %229 = vector.load %arg9[%c0_94, %c416] : memref<2x512xf32, #tpu.memory_space<vmem>>, vector<2x8xf32>
    tpu.vector_store %arg9[%c0_94, %c416], %228 {strides = array<i32>} : memref<2x512xf32, #tpu.memory_space<vmem>>, vector<2x8xf32>,
    %230 = vector.extract_strided_slice %214 {offsets = [0, 5, 0], sizes = [2, 1, 8], strides = [1, 1, 1]} : vector<2x8x8xf32> to vector<2x1x8xf32>
    %231 = vector.shape_cast %230 : vector<2x1x8xf32> to vector<2x8xf32>
    %c0_95 = arith.constant 0 : index
    %c424 = arith.constant 424 : index
    %232 = vector.load %arg9[%c0_95, %c424] : memref<2x512xf32, #tpu.memory_space<vmem>>, vector<2x8xf32>
    tpu.vector_store %arg9[%c0_95, %c424], %231 {strides = array<i32>} : memref<2x512xf32, #tpu.memory_space<vmem>>, vector<2x8xf32>,
    %233 = vector.extract_strided_slice %214 {offsets = [0, 6, 0], sizes = [2, 1, 8], strides = [1, 1, 1]} : vector<2x8x8xf32> to vector<2x1x8xf32>
    %234 = vector.shape_cast %233 : vector<2x1x8xf32> to vector<2x8xf32>
    %c0_96 = arith.constant 0 : index
    %c432 = arith.constant 432 : index
    %235 = vector.load %arg9[%c0_96, %c432] : memref<2x512xf32, #tpu.memory_space<vmem>>, vector<2x8xf32>
    tpu.vector_store %arg9[%c0_96, %c432], %234 {strides = array<i32>} : memref<2x512xf32, #tpu.memory_space<vmem>>, vector<2x8xf32>,
    %236 = vector.extract_strided_slice %214 {offsets = [0, 7, 0], sizes = [2, 1, 8], strides = [1, 1, 1]} : vector<2x8x8xf32> to vector<2x1x8xf32>
    %237 = vector.shape_cast %236 : vector<2x1x8xf32> to vector<2x8xf32>
    %c0_97 = arith.constant 0 : index
    %c440 = arith.constant 440 : index
    %238 = vector.load %arg9[%c0_97, %c440] : memref<2x512xf32, #tpu.memory_space<vmem>>, vector<2x8xf32>
    tpu.vector_store %arg9[%c0_97, %c440], %237 {strides = array<i32>} : memref<2x512xf32, #tpu.memory_space<vmem>>, vector<2x8xf32>,
    %239 = vector.extract_strided_slice %56 {offsets = [0, 7, 0, 0], sizes = [2, 1, 8, 8], strides = [1, 1, 1, 1]} : vector<2x8x8x8xf32> to vector<2x1x8x8xf32>
    %240 = vector.shape_cast %239 : vector<2x1x8x8xf32> to vector<2x8x8xf32>
    %241 = vector.extract_strided_slice %240 {offsets = [0, 0, 0], sizes = [2, 1, 8], strides = [1, 1, 1]} : vector<2x8x8xf32> to vector<2x1x8xf32>
    %242 = vector.shape_cast %241 : vector<2x1x8xf32> to vector<2x8xf32>
    %c0_98 = arith.constant 0 : index
    %c448 = arith.constant 448 : index
    %243 = vector.load %arg9[%c0_98, %c448] : memref<2x512xf32, #tpu.memory_space<vmem>>, vector<2x8xf32>
    tpu.vector_store %arg9[%c0_98, %c448], %242 {strides = array<i32>} : memref<2x512xf32, #tpu.memory_space<vmem>>, vector<2x8xf32>,
    %244 = vector.extract_strided_slice %240 {offsets = [0, 1, 0], sizes = [2, 1, 8], strides = [1, 1, 1]} : vector<2x8x8xf32> to vector<2x1x8xf32>
    %245 = vector.shape_cast %244 : vector<2x1x8xf32> to vector<2x8xf32>
    %c0_99 = arith.constant 0 : index
    %c456 = arith.constant 456 : index
    %246 = vector.load %arg9[%c0_99, %c456] : memref<2x512xf32, #tpu.memory_space<vmem>>, vector<2x8xf32>
    tpu.vector_store %arg9[%c0_99, %c456], %245 {strides = array<i32>} : memref<2x512xf32, #tpu.memory_space<vmem>>, vector<2x8xf32>,
    %247 = vector.extract_strided_slice %240 {offsets = [0, 2, 0], sizes = [2, 1, 8], strides = [1, 1, 1]} : vector<2x8x8xf32> to vector<2x1x8xf32>
    %248 = vector.shape_cast %247 : vector<2x1x8xf32> to vector<2x8xf32>
    %c0_100 = arith.constant 0 : index
    %c464 = arith.constant 464 : index
    %249 = vector.load %arg9[%c0_100, %c464] : memref<2x512xf32, #tpu.memory_space<vmem>>, vector<2x8xf32>
    tpu.vector_store %arg9[%c0_100, %c464], %248 {strides = array<i32>} : memref<2x512xf32, #tpu.memory_space<vmem>>, vector<2x8xf32>,
    %250 = vector.extract_strided_slice %240 {offsets = [0, 3, 0], sizes = [2, 1, 8], strides = [1, 1, 1]} : vector<2x8x8xf32> to vector<2x1x8xf32>
    %251 = vector.shape_cast %250 : vector<2x1x8xf32> to vector<2x8xf32>
    %c0_101 = arith.constant 0 : index
    %c472 = arith.constant 472 : index
    %252 = vector.load %arg9[%c0_101, %c472] : memref<2x512xf32, #tpu.memory_space<vmem>>, vector<2x8xf32>
    tpu.vector_store %arg9[%c0_101, %c472], %251 {strides = array<i32>} : memref<2x512xf32, #tpu.memory_space<vmem>>, vector<2x8xf32>,
    %253 = vector.extract_strided_slice %240 {offsets = [0, 4, 0], sizes = [2, 1, 8], strides = [1, 1, 1]} : vector<2x8x8xf32> to vector<2x1x8xf32>
    %254 = vector.shape_cast %253 : vector<2x1x8xf32> to vector<2x8xf32>
    %c0_102 = arith.constant 0 : index
    %c480 = arith.constant 480 : index
    %255 = vector.load %arg9[%c0_102, %c480] : memref<2x512xf32, #tpu.memory_space<vmem>>, vector<2x8xf32>
    tpu.vector_store %arg9[%c0_102, %c480], %254 {strides = array<i32>} : memref<2x512xf32, #tpu.memory_space<vmem>>, vector<2x8xf32>,
    %256 = vector.extract_strided_slice %240 {offsets = [0, 5, 0], sizes = [2, 1, 8], strides = [1, 1, 1]} : vector<2x8x8xf32> to vector<2x1x8xf32>
    %257 = vector.shape_cast %256 : vector<2x1x8xf32> to vector<2x8xf32>
    %c0_103 = arith.constant 0 : index
    %c488 = arith.constant 488 : index
    %258 = vector.load %arg9[%c0_103, %c488] : memref<2x512xf32, #tpu.memory_space<vmem>>, vector<2x8xf32>
    tpu.vector_store %arg9[%c0_103, %c488], %257 {strides = array<i32>} : memref<2x512xf32, #tpu.memory_space<vmem>>, vector<2x8xf32>,
    %259 = vector.extract_strided_slice %240 {offsets = [0, 6, 0], sizes = [2, 1, 8], strides = [1, 1, 1]} : vector<2x8x8xf32> to vector<2x1x8xf32>
    %260 = vector.shape_cast %259 : vector<2x1x8xf32> to vector<2x8xf32>
    %c0_104 = arith.constant 0 : index
    %c496 = arith.constant 496 : index
    %261 = vector.load %arg9[%c0_104, %c496] : memref<2x512xf32, #tpu.memory_space<vmem>>, vector<2x8xf32>
    tpu.vector_store %arg9[%c0_104, %c496], %260 {strides = array<i32>} : memref<2x512xf32, #tpu.memory_space<vmem>>, vector<2x8xf32>,
    %262 = vector.extract_strided_slice %240 {offsets = [0, 7, 0], sizes = [2, 1, 8], strides = [1, 1, 1]} : vector<2x8x8xf32> to vector<2x1x8xf32>
    %263 = vector.shape_cast %262 : vector<2x1x8xf32> to vector<2x8xf32>
    %c0_105 = arith.constant 0 : index
    %c504 = arith.constant 504 : index
    %264 = vector.load %arg9[%c0_105, %c504] : memref<2x512xf32, #tpu.memory_space<vmem>>, vector<2x8xf32>
    tpu.vector_store %arg9[%c0_105, %c504], %263 {strides = array<i32>} : memref<2x512xf32, #tpu.memory_space<vmem>>, vector<2x8xf32>,
    %c0_106 = arith.constant 0 : index
    %c0_107 = arith.constant 0 : index
    %265 = vector.load %arg9[%c0_106, %c0_107] : memref<2x512xf32, #tpu.memory_space<vmem>>, vector<2x512xf32>
    %c0_108 = arith.constant 0 : index
    %c0_109 = arith.constant 0 : index
    %266 = vector.load %arg3[%c0_108, %c0_109] : memref<512x32xf32, #tpu.memory_space<vmem>>, vector<512x32xf32>
    %cst_110 = arith.constant dense<0.000000e+00> : vector<2x32xf32>
    %267 = tpu.matmul %265, %266, %cst_110 {dimension_numbers = #tpu.dot_dimension_numbers<[1], [0], [0], [1], [0, 0, 1, 1], [], []>} : vector<2x512xf32>, vector<512x32xf32>, vector<2x32xf32> -> vector<2x32xf32>
    %c0_111 = arith.constant 0 : index
    %c0_112 = arith.constant 0 : index
    %268 = vector.load %arg4[%c0_111, %c0_112] : memref<1x32xf32, #tpu.memory_space<vmem>>, vector<1x32xf32>
    %269 = vector.broadcast %268 : vector<1x32xf32> to vector<2x32xf32>
    %270 = arith.addf %267, %269 : vector<2x32xf32>
    %c0_113 = arith.constant 0 : index
    %c0_114 = arith.constant 0 : index
    %271 = vector.load %arg6[%c0_113, %c0_114] : memref<2x32xf32, #tpu.memory_space<vmem>>, vector<2x32xf32>
    tpu.vector_store %arg6[%c0_113, %c0_114], %270 {strides = array<i32>} : memref<2x32xf32, #tpu.memory_space<vmem>>, vector<2x32xf32>,
    return
  }
}

</mosaic_0001>

<llo_original>
// kernel: _forward.1
$region0: #{_forward.1}
  #allocation0 [shape = 'u32[]', space=smem, size = 0x4, offset = 0x4, fixed_abs, tag = 'smem constant byte address 0x4 - core index']
  #allocation1 [shape = 'u32[144,128]{1,0:T(1,128)}', space=vmem, size = 0x12000, scoped, tag = 'internal scratch']
  #allocation2 [shape = 'f32[2,18,18,4]{3,2,1,0:T(8,128)}', space=vmem, size = 0x6c000, scoped, tag = 'scratch operand']
  #allocation3 [shape = 'f32[512,36]{1,0:T(8,128)}', space=vmem, size = 0x40000, scoped, tag = 'scratch operand']
  #allocation4 [shape = 'f32[2,512]{1,0:T(2,128)}', space=vmem, size = 0x1000, scoped, tag = 'scratch operand']
  %s0 = inlined_call_operand.vmem [shape: f32[2,16,16,4], index: 0, kind: input, shape index: {}]
  %s1 = inlined_call_operand.vmem [shape: f32[36,8], index: 1, kind: input, shape index: {}]
  %s2 = inlined_call_operand.vmem [shape: f32[1,8], index: 2, kind: input, shape index: {}]
  %s3 = inlined_call_operand.vmem [shape: f32[512,32], index: 3, kind: input, shape index: {}]
  %s4 = inlined_call_operand.vmem [shape: f32[1,32], index: 4, kind: input, shape index: {}]
  %s5 = inlined_call_operand.vmem [shape: f32[2,16,16,8], index: 5, kind: output, shape index: {0}]
  %s6 = inlined_call_operand.hbm [shape: f32[2,32], index: 6, kind: output, shape index: {1}]
  %7 = xla_tuple %s5, %s6
  %s8 = sld [smem:[#allocation0]]
  $region38: #{_forward.1} parent=0
    _
  %s10 = ssub.s32 1, %s8
  %s11 = scalar_select 0, %s10, %s8
  $region1: #{_forward.1} parent=0
    #allocation5 [shape = 'u8[1024]{0}', space=vmem, size = 0x400, scoped, tag = 'output window, operand 1, single buffered']
    #allocation6 [shape = 's32[1]{0}', space=sflag, size = 0x4, scoped, tag = 'scoped memory for _forward.1']
    %12 = vsyncpa [#allocation6], 0
    // Predicated region
    $region2: #{_forward.1} parent=1 // pred_check
      _
    $region3: #{_forward.1} parent=1 // pred_check_branch
      %14 = sbr.rel (0) target = $region5
    $region4: #{_forward.1} parent=1 // pred_region
      _
    $region5: #{_forward.1} parent=1 // pred_fallthru
      _
    // Predicated region
    $region6: #{_forward.1} parent=1 // pred_check
      _
    $region7: #{_forward.1} parent=1 // pred_check_branch
      %16 = sbr.rel (0) target = $region9
    $region8: #{_forward.1} parent=1 // pred_region
      _
    $region9: #{_forward.1} parent=1 // pred_fallthru
      _
    // Predicated region
    $region10: #{_forward.1} parent=1 // pred_check
      _
    $region11: #{_forward.1} parent=1 // pred_check_branch
      %18 = sbr.rel (0) target = $region13
    $region12: #{_forward.1} parent=1 // pred_region
      _
    $region13: #{_forward.1} parent=1 // pred_fallthru
      _
    // Predicated region
    $region14: #{_forward.1} parent=1 // pred_check
      _
    $region15: #{_forward.1} parent=1 // pred_check_branch
      %20 = sbr.rel (0) target = $region17
    $region16: #{_forward.1} parent=1 // pred_region
      _
    $region17: #{_forward.1} parent=1 // pred_fallthru
      _
    // Predicated region
    $region18: #{_forward.1} parent=1 // pred_check
      _
    $region19: #{_forward.1} parent=1 // pred_check_branch
      %22 = sbr.rel (0) target = $region21
    $region20: #{_forward.1} parent=1 // pred_region
      _
    $region21: #{_forward.1} parent=1 // pred_fallthru
      _
    %vm23 = vcmask 31744
    %24 = vst.msk [vmem:[#allocation2] sm:$0xff] %vm23, 0.0
    %25 = vst.msk [vmem:[#allocation2 + $0x8] sm:$0xff] %vm23, 0.0
    %vm26 = vcmask 25600
    %27 = vst.msk [vmem:[#allocation2 + $0x10] sm:$0x3] %vm26, 0.0
    %28 = vst.msk [vmem:[#allocation2 + $0x18] sm:$0xff] %vm23, 0.0
    %29 = vst.msk [vmem:[#allocation2 + $0x20] sm:$0xff] %vm23, 0.0
    %30 = vst.msk [vmem:[#allocation2 + $0x28] sm:$0x3] %vm26, 0.0
    %31 = vst.msk [vmem:[#allocation2 + $0x30] sm:$0xff] %vm23, 0.0
    %32 = vst.msk [vmem:[#allocation2 + $0x38] sm:$0xff] %vm23, 0.0
    %33 = vst.msk [vmem:[#allocation2 + $0x40] sm:$0x3] %vm26, 0.0
    %34 = vst.msk [vmem:[#allocation2 + $0x48] sm:$0xff] %vm23, 0.0
    %35 = vst.msk [vmem:[#allocation2 + $0x50] sm:$0xff] %vm23, 0.0
    %36 = vst.msk [vmem:[#allocation2 + $0x58] sm:$0x3] %vm26, 0.0
    %37 = vst.msk [vmem:[#allocation2 + $0x60] sm:$0xff] %vm23, 0.0
    %38 = vst.msk [vmem:[#allocation2 + $0x68] sm:$0xff] %vm23, 0.0
    %39 = vst.msk [vmem:[#allocation2 + $0x70] sm:$0x3] %vm26, 0.0
    %40 = vst.msk [vmem:[#allocation2 + $0x78] sm:$0xff] %vm23, 0.0
    %41 = vst.msk [vmem:[#allocation2 + $0x80] sm:$0xff] %vm23, 0.0
    %42 = vst.msk [vmem:[#allocation2 + $0x88] sm:$0x3] %vm26, 0.0
    %43 = vst.msk [vmem:[#allocation2 + $0x90] sm:$0xff] %vm23, 0.0
    %44 = vst.msk [vmem:[#allocation2 + $0x98] sm:$0xff] %vm23, 0.0
    %45 = vst.msk [vmem:[#allocation2 + $0xa0] sm:$0x3] %vm26, 0.0
    %46 = vst.msk [vmem:[#allocation2 + $0xa8] sm:$0xff] %vm23, 0.0
    %47 = vst.msk [vmem:[#allocation2 + $0xb0] sm:$0xff] %vm23, 0.0
    %48 = vst.msk [vmem:[#allocation2 + $0xb8] sm:$0x3] %vm26, 0.0
    %49 = vst.msk [vmem:[#allocation2 + $0xc0] sm:$0xff] %vm23, 0.0
    %50 = vst.msk [vmem:[#allocation2 + $0xc8] sm:$0xff] %vm23, 0.0
    %51 = vst.msk [vmem:[#allocation2 + $0xd0] sm:$0x3] %vm26, 0.0
    %52 = vst.msk [vmem:[#allocation2 + $0xd8] sm:$0xff] %vm23, 0.0
    %53 = vst.msk [vmem:[#allocation2 + $0xe0] sm:$0xff] %vm23, 0.0
    %54 = vst.msk [vmem:[#allocation2 + $0xe8] sm:$0x3] %vm26, 0.0
    %55 = vst.msk [vmem:[#allocation2 + $0xf0] sm:$0xff] %vm23, 0.0
    %56 = vst.msk [vmem:[#allocation2 + $0xf8] sm:$0xff] %vm23, 0.0
    %57 = vst.msk [vmem:[#allocation2 + $0x100] sm:$0x3] %vm26, 0.0
    %58 = vst.msk [vmem:[#allocation2 + $0x108] sm:$0xff] %vm23, 0.0
    %59 = vst.msk [vmem:[#allocation2 + $0x110] sm:$0xff] %vm23, 0.0
    %60 = vst.msk [vmem:[#allocation2 + $0x118] sm:$0x3] %vm26, 0.0
    %61 = vst.msk [vmem:[#allocation2 + $0x120] sm:$0xff] %vm23, 0.0
    %62 = vst.msk [vmem:[#allocation2 + $0x128] sm:$0xff] %vm23, 0.0
    %63 = vst.msk [vmem:[#allocation2 + $0x130] sm:$0x3] %vm26, 0.0
    %64 = vst.msk [vmem:[#allocation2 + $0x138] sm:$0xff] %vm23, 0.0
    %65 = vst.msk [vmem:[#allocation2 + $0x140] sm:$0xff] %vm23, 0.0
    %66 = vst.msk [vmem:[#allocation2 + $0x148] sm:$0x3] %vm26, 0.0
    %67 = vst.msk [vmem:[#allocation2 + $0x150] sm:$0xff] %vm23, 0.0
    %68 = vst.msk [vmem:[#allocation2 + $0x158] sm:$0xff] %vm23, 0.0
    %69 = vst.msk [vmem:[#allocation2 + $0x160] sm:$0x3] %vm26, 0.0
    %70 = vst.msk [vmem:[#allocation2 + $0x168] sm:$0xff] %vm23, 0.0
    %71 = vst.msk [vmem:[#allocation2 + $0x170] sm:$0xff] %vm23, 0.0
    %72 = vst.msk [vmem:[#allocation2 + $0x178] sm:$0x3] %vm26, 0.0
    %73 = vst.msk [vmem:[#allocation2 + $0x180] sm:$0xff] %vm23, 0.0
    %74 = vst.msk [vmem:[#allocation2 + $0x188] sm:$0xff] %vm23, 0.0
    %75 = vst.msk [vmem:[#allocation2 + $0x190] sm:$0x3] %vm26, 0.0
    %76 = vst.msk [vmem:[#allocation2 + $0x198] sm:$0xff] %vm23, 0.0
    %77 = vst.msk [vmem:[#allocation2 + $0x1a0] sm:$0xff] %vm23, 0.0
    %78 = vst.msk [vmem:[#allocation2 + $0x1a8] sm:$0x3] %vm26, 0.0
    %79 = vst.msk [vmem:[#allocation2 + $0x1b0] sm:$0xff] %vm23, 0.0
    %80 = vst.msk [vmem:[#allocation2 + $0x1b8] sm:$0xff] %vm23, 0.0
    %81 = vst.msk [vmem:[#allocation2 + $0x1c0] sm:$0x3] %vm26, 0.0
    %82 = vst.msk [vmem:[#allocation2 + $0x1c8] sm:$0xff] %vm23, 0.0
    %83 = vst.msk [vmem:[#allocation2 + $0x1d0] sm:$0xff] %vm23, 0.0
    %84 = vst.msk [vmem:[#allocation2 + $0x1d8] sm:$0x3] %vm26, 0.0
    %85 = vst.msk [vmem:[#allocation2 + $0x1e0] sm:$0xff] %vm23, 0.0
    %86 = vst.msk [vmem:[#allocation2 + $0x1e8] sm:$0xff] %vm23, 0.0
    %87 = vst.msk [vmem:[#allocation2 + $0x1f0] sm:$0x3] %vm26, 0.0
    %88 = vst.msk [vmem:[#allocation2 + $0x1f8] sm:$0xff] %vm23, 0.0
    %89 = vst.msk [vmem:[#allocation2 + $0x200] sm:$0xff] %vm23, 0.0
    %90 = vst.msk [vmem:[#allocation2 + $0x208] sm:$0x3] %vm26, 0.0
    %91 = vst.msk [vmem:[#allocation2 + $0x210] sm:$0xff] %vm23, 0.0
    %92 = vst.msk [vmem:[#allocation2 + $0x218] sm:$0xff] %vm23, 0.0
    %93 = vst.msk [vmem:[#allocation2 + $0x220] sm:$0x3] %vm26, 0.0
    %94 = vst.msk [vmem:[#allocation2 + $0x228] sm:$0xff] %vm23, 0.0
    %95 = vst.msk [vmem:[#allocation2 + $0x230] sm:$0xff] %vm23, 0.0
    %96 = vst.msk [vmem:[#allocation2 + $0x238] sm:$0x3] %vm26, 0.0
    %97 = vst.msk [vmem:[#allocation2 + $0x240] sm:$0xff] %vm23, 0.0
    %98 = vst.msk [vmem:[#allocation2 + $0x248] sm:$0xff] %vm23, 0.0
    %99 = vst.msk [vmem:[#allocation2 + $0x250] sm:$0x3] %vm26, 0.0
    %100 = vst.msk [vmem:[#allocation2 + $0x258] sm:$0xff] %vm23, 0.0
    %101 = vst.msk [vmem:[#allocation2 + $0x260] sm:$0xff] %vm23, 0.0
    %102 = vst.msk [vmem:[#allocation2 + $0x268] sm:$0x3] %vm26, 0.0
    %103 = vst.msk [vmem:[#allocation2 + $0x270] sm:$0xff] %vm23, 0.0
    %104 = vst.msk [vmem:[#allocation2 + $0x278] sm:$0xff] %vm23, 0.0
    %105 = vst.msk [vmem:[#allocation2 + $0x280] sm:$0x3] %vm26, 0.0
    %106 = vst.msk [vmem:[#allocation2 + $0x288] sm:$0xff] %vm23, 0.0
    %107 = vst.msk [vmem:[#allocation2 + $0x290] sm:$0xff] %vm23, 0.0
    %108 = vst.msk [vmem:[#allocation2 + $0x298] sm:$0x3] %vm26, 0.0
    %109 = vst.msk [vmem:[#allocation2 + $0x2a0] sm:$0xff] %vm23, 0.0
    %110 = vst.msk [vmem:[#allocation2 + $0x2a8] sm:$0xff] %vm23, 0.0
    %111 = vst.msk [vmem:[#allocation2 + $0x2b0] sm:$0x3] %vm26, 0.0
    %112 = vst.msk [vmem:[#allocation2 + $0x2b8] sm:$0xff] %vm23, 0.0
    %113 = vst.msk [vmem:[#allocation2 + $0x2c0] sm:$0xff] %vm23, 0.0
    %114 = vst.msk [vmem:[#allocation2 + $0x2c8] sm:$0x3] %vm26, 0.0
    %115 = vst.msk [vmem:[#allocation2 + $0x2d0] sm:$0xff] %vm23, 0.0
    %116 = vst.msk [vmem:[#allocation2 + $0x2d8] sm:$0xff] %vm23, 0.0
    %117 = vst.msk [vmem:[#allocation2 + $0x2e0] sm:$0x3] %vm26, 0.0
    %118 = vst.msk [vmem:[#allocation2 + $0x2e8] sm:$0xff] %vm23, 0.0
    %119 = vst.msk [vmem:[#allocation2 + $0x2f0] sm:$0xff] %vm23, 0.0
    %120 = vst.msk [vmem:[#allocation2 + $0x2f8] sm:$0x3] %vm26, 0.0
    %121 = vst.msk [vmem:[#allocation2 + $0x300] sm:$0xff] %vm23, 0.0
    %122 = vst.msk [vmem:[#allocation2 + $0x308] sm:$0xff] %vm23, 0.0
    %123 = vst.msk [vmem:[#allocation2 + $0x310] sm:$0x3] %vm26, 0.0
    %124 = vst.msk [vmem:[#allocation2 + $0x318] sm:$0xff] %vm23, 0.0
    %125 = vst.msk [vmem:[#allocation2 + $0x320] sm:$0xff] %vm23, 0.0
    %126 = vst.msk [vmem:[#allocation2 + $0x328] sm:$0x3] %vm26, 0.0
    %127 = vst.msk [vmem:[#allocation2 + $0x330] sm:$0xff] %vm23, 0.0
    %128 = vst.msk [vmem:[#allocation2 + $0x338] sm:$0xff] %vm23, 0.0
    %129 = vst.msk [vmem:[#allocation2 + $0x340] sm:$0x3] %vm26, 0.0
    %130 = vst.msk [vmem:[#allocation2 + $0x348] sm:$0xff] %vm23, 0.0
    %131 = vst.msk [vmem:[#allocation2 + $0x350] sm:$0xff] %vm23, 0.0
    %132 = vst.msk [vmem:[#allocation2 + $0x358] sm:$0x3] %vm26, 0.0
    %v133 = vld [vmem:[%s0] sm:$0xff]
    %v134 = vld [vmem:[%s0 + $0x8] sm:$0xff]
    %v135 = vld [vmem:[%s0 + $0x10] sm:$0xff]
    %v136 = vld [vmem:[%s0 + $0x18] sm:$0xff]
    %v137 = vld [vmem:[%s0 + $0x20] sm:$0xff]
    %v138 = vld [vmem:[%s0 + $0x28] sm:$0xff]
    %v139 = vld [vmem:[%s0 + $0x30] sm:$0xff]
    %v140 = vld [vmem:[%s0 + $0x38] sm:$0xff]
    %v141 = vld [vmem:[%s0 + $0x40] sm:$0xff]
    %v142 = vld [vmem:[%s0 + $0x48] sm:$0xff]
    %v143 = vld [vmem:[%s0 + $0x50] sm:$0xff]
    %v144 = vld [vmem:[%s0 + $0x58] sm:$0xff]
    %v145 = vld [vmem:[%s0 + $0x60] sm:$0xff]
    %v146 = vld [vmem:[%s0 + $0x68] sm:$0xff]
    %v147 = vld [vmem:[%s0 + $0x70] sm:$0xff]
    %v148 = vld [vmem:[%s0 + $0x78] sm:$0xff]
    %v149 = vld [vmem:[%s0 + $0x80] sm:$0xff]
    %v150 = vld [vmem:[%s0 + $0x88] sm:$0xff]
    %v151 = vld [vmem:[%s0 + $0x90] sm:$0xff]
    %v152 = vld [vmem:[%s0 + $0x98] sm:$0xff]
    %v153 = vld [vmem:[%s0 + $0xa0] sm:$0xff]
    %v154 = vld [vmem:[%s0 + $0xa8] sm:$0xff]
    %v155 = vld [vmem:[%s0 + $0xb0] sm:$0xff]
    %v156 = vld [vmem:[%s0 + $0xb8] sm:$0xff]
    %v157 = vld [vmem:[%s0 + $0xc0] sm:$0xff]
    %v158 = vld [vmem:[%s0 + $0xc8] sm:$0xff]
    %v159 = vld [vmem:[%s0 + $0xd0] sm:$0xff]
    %v160 = vld [vmem:[%s0 + $0xd8] sm:$0xff]
    %v161 = vld [vmem:[%s0 + $0xe0] sm:$0xff]
    %v162 = vld [vmem:[%s0 + $0xe8] sm:$0xff]
    %v163 = vld [vmem:[%s0 + $0xf0] sm:$0xff]
    %v164 = vld [vmem:[%s0 + $0xf8] sm:$0xff]
    %v165 = vld [vmem:[%s0 + $0x100] sm:$0xff]
    %v166 = vld [vmem:[%s0 + $0x108] sm:$0xff]
    %v167 = vld [vmem:[%s0 + $0x110] sm:$0xff]
    %v168 = vld [vmem:[%s0 + $0x118] sm:$0xff]
    %v169 = vld [vmem:[%s0 + $0x120] sm:$0xff]
    %v170 = vld [vmem:[%s0 + $0x128] sm:$0xff]
    %v171 = vld [vmem:[%s0 + $0x130] sm:$0xff]
    %v172 = vld [vmem:[%s0 + $0x138] sm:$0xff]
    %v173 = vld [vmem:[%s0 + $0x140] sm:$0xff]
    %v174 = vld [vmem:[%s0 + $0x148] sm:$0xff]
    %v175 = vld [vmem:[%s0 + $0x150] sm:$0xff]
    %v176 = vld [vmem:[%s0 + $0x158] sm:$0xff]
    %v177 = vld [vmem:[%s0 + $0x160] sm:$0xff]
    %v178 = vld [vmem:[%s0 + $0x168] sm:$0xff]
    %v179 = vld [vmem:[%s0 + $0x170] sm:$0xff]
    %v180 = vld [vmem:[%s0 + $0x178] sm:$0xff]
    %v181 = vld [vmem:[%s0 + $0x180] sm:$0xff]
    %v182 = vld [vmem:[%s0 + $0x188] sm:$0xff]
    %v183 = vld [vmem:[%s0 + $0x190] sm:$0xff]
    %v184 = vld [vmem:[%s0 + $0x198] sm:$0xff]
    %v185 = vld [vmem:[%s0 + $0x1a0] sm:$0xff]
    %v186 = vld [vmem:[%s0 + $0x1a8] sm:$0xff]
    %v187 = vld [vmem:[%s0 + $0x1b0] sm:$0xff]
    %v188 = vld [vmem:[%s0 + $0x1b8] sm:$0xff]
    %v189 = vld [vmem:[%s0 + $0x1c0] sm:$0xff]
    %v190 = vld [vmem:[%s0 + $0x1c8] sm:$0xff]
    %v191 = vld [vmem:[%s0 + $0x1d0] sm:$0xff]
    %v192 = vld [vmem:[%s0 + $0x1d8] sm:$0xff]
    %v193 = vld [vmem:[%s0 + $0x1e0] sm:$0xff]
    %v194 = vld [vmem:[%s0 + $0x1e8] sm:$0xff]
    %v195 = vld [vmem:[%s0 + $0x1f0] sm:$0xff]
    %v196 = vld [vmem:[%s0 + $0x1f8] sm:$0xff]
    %s197 = scalar_lea.vmem [#allocation2], 24
    %198 = vst.msk [vmem:[%s197 + $0x1] sm:$0xff] %vm23, %v133
    %199 = vst.msk [vmem:[%s197 + $0x9] sm:$0xff] %vm23, %v134
    %200 = vst.msk [vmem:[%s197 + $0x19] sm:$0xff] %vm23, %v135
    %201 = vst.msk [vmem:[%s197 + $0x21] sm:$0xff] %vm23, %v136
    %202 = vst.msk [vmem:[%s197 + $0x31] sm:$0xff] %vm23, %v137
    %203 = vst.msk [vmem:[%s197 + $0x39] sm:$0xff] %vm23, %v138
    %204 = vst.msk [vmem:[%s197 + $0x49] sm:$0xff] %vm23, %v139
    %205 = vst.msk [vmem:[%s197 + $0x51] sm:$0xff] %vm23, %v140
    %206 = vst.msk [vmem:[%s197 + $0x61] sm:$0xff] %vm23, %v141
    %207 = vst.msk [vmem:[%s197 + $0x69] sm:$0xff] %vm23, %v142
    %208 = vst.msk [vmem:[%s197 + $0x79] sm:$0xff] %vm23, %v143
    %209 = vst.msk [vmem:[%s197 + $0x81] sm:$0xff] %vm23, %v144
    %210 = vst.msk [vmem:[%s197 + $0x91] sm:$0xff] %vm23, %v145
    %211 = vst.msk [vmem:[%s197 + $0x99] sm:$0xff] %vm23, %v146
    %212 = vst.msk [vmem:[%s197 + $0xa9] sm:$0xff] %vm23, %v147
    %213 = vst.msk [vmem:[%s197 + $0xb1] sm:$0xff] %vm23, %v148
    %214 = vst.msk [vmem:[%s197 + $0xc1] sm:$0xff] %vm23, %v149
    %215 = vst.msk [vmem:[%s197 + $0xc9] sm:$0xff] %vm23, %v150
    %216 = vst.msk [vmem:[%s197 + $0xd9] sm:$0xff] %vm23, %v151
    %217 = vst.msk [vmem:[%s197 + $0xe1] sm:$0xff] %vm23, %v152
    %218 = vst.msk [vmem:[%s197 + $0xf1] sm:$0xff] %vm23, %v153
    %219 = vst.msk [vmem:[%s197 + $0xf9] sm:$0xff] %vm23, %v154
    %220 = vst.msk [vmem:[%s197 + $0x109] sm:$0xff] %vm23, %v155
    %221 = vst.msk [vmem:[%s197 + $0x111] sm:$0xff] %vm23, %v156
    %222 = vst.msk [vmem:[%s197 + $0x121] sm:$0xff] %vm23, %v157
    %223 = vst.msk [vmem:[%s197 + $0x129] sm:$0xff] %vm23, %v158
    %224 = vst.msk [vmem:[%s197 + $0x139] sm:$0xff] %vm23, %v159
    %225 = vst.msk [vmem:[%s197 + $0x141] sm:$0xff] %vm23, %v160
    %226 = vst.msk [vmem:[%s197 + $0x151] sm:$0xff] %vm23, %v161
    %227 = vst.msk [vmem:[%s197 + $0x159] sm:$0xff] %vm23, %v162
    %228 = vst.msk [vmem:[%s197 + $0x169] sm:$0xff] %vm23, %v163
    %229 = vst.msk [vmem:[%s197 + $0x171] sm:$0xff] %vm23, %v164
    %230 = vst.msk [vmem:[%s197 + $0x1b1] sm:$0xff] %vm23, %v165
    %231 = vst.msk [vmem:[%s197 + $0x1b9] sm:$0xff] %vm23, %v166
    %232 = vst.msk [vmem:[%s197 + $0x1c9] sm:$0xff] %vm23, %v167
    %233 = vst.msk [vmem:[%s197 + $0x1d1] sm:$0xff] %vm23, %v168
    %234 = vst.msk [vmem:[%s197 + $0x1e1] sm:$0xff] %vm23, %v169
    %235 = vst.msk [vmem:[%s197 + $0x1e9] sm:$0xff] %vm23, %v170
    %236 = vst.msk [vmem:[%s197 + $0x1f9] sm:$0xff] %vm23, %v171
    %237 = vst.msk [vmem:[%s197 + $0x201] sm:$0xff] %vm23, %v172
    %238 = vst.msk [vmem:[%s197 + $0x211] sm:$0xff] %vm23, %v173
    %239 = vst.msk [vmem:[%s197 + $0x219] sm:$0xff] %vm23, %v174
    %240 = vst.msk [vmem:[%s197 + $0x229] sm:$0xff] %vm23, %v175
    %241 = vst.msk [vmem:[%s197 + $0x231] sm:$0xff] %vm23, %v176
    %242 = vst.msk [vmem:[%s197 + $0x241] sm:$0xff] %vm23, %v177
    %243 = vst.msk [vmem:[%s197 + $0x249] sm:$0xff] %vm23, %v178
    %244 = vst.msk [vmem:[%s197 + $0x259] sm:$0xff] %vm23, %v179
    %245 = vst.msk [vmem:[%s197 + $0x261] sm:$0xff] %vm23, %v180
    %246 = vst.msk [vmem:[%s197 + $0x271] sm:$0xff] %vm23, %v181
    %247 = vst.msk [vmem:[%s197 + $0x279] sm:$0xff] %vm23, %v182
    %248 = vst.msk [vmem:[%s197 + $0x289] sm:$0xff] %vm23, %v183
    %249 = vst.msk [vmem:[%s197 + $0x291] sm:$0xff] %vm23, %v184
    %250 = vst.msk [vmem:[%s197 + $0x2a1] sm:$0xff] %vm23, %v185
    %251 = vst.msk [vmem:[%s197 + $0x2a9] sm:$0xff] %vm23, %v186
    %252 = vst.msk [vmem:[%s197 + $0x2b9] sm:$0xff] %vm23, %v187
    %253 = vst.msk [vmem:[%s197 + $0x2c1] sm:$0xff] %vm23, %v188
    %254 = vst.msk [vmem:[%s197 + $0x2d1] sm:$0xff] %vm23, %v189
    %255 = vst.msk [vmem:[%s197 + $0x2d9] sm:$0xff] %vm23, %v190
    %256 = vst.msk [vmem:[%s197 + $0x2e9] sm:$0xff] %vm23, %v191
    %257 = vst.msk [vmem:[%s197 + $0x2f1] sm:$0xff] %vm23, %v192
    %258 = vst.msk [vmem:[%s197 + $0x301] sm:$0xff] %vm23, %v193
    %259 = vst.msk [vmem:[%s197 + $0x309] sm:$0xff] %vm23, %v194
    %260 = vst.msk [vmem:[%s197 + $0x319] sm:$0xff] %vm23, %v195
    %261 = vst.msk [vmem:[%s197 + $0x321] sm:$0xff] %vm23, %v196
    %v262 = vld [vmem:[#allocation2] sm:$0xff]
    %v263 = vld [vmem:[#allocation2 + $0x8] sm:$0xff]
    %v264 = vld [vmem:[#allocation2 + $0x10] sm:$0x3]
    %v265 = vld [vmem:[#allocation2 + $0x18] sm:$0xff]
    %v266 = vld [vmem:[#allocation2 + $0x20] sm:$0xff]
    %v267 = vld [vmem:[#allocation2 + $0x28] sm:$0x3]
    %v268 = vld [vmem:[#allocation2 + $0x30] sm:$0xff]
    %v269 = vld [vmem:[#allocation2 + $0x38] sm:$0xff]
    %v270 = vld [vmem:[#allocation2 + $0x40] sm:$0x3]
    %v271 = vld [vmem:[#allocation2 + $0x48] sm:$0xff]
    %v272 = vld [vmem:[#allocation2 + $0x50] sm:$0xff]
    %v273 = vld [vmem:[#allocation2 + $0x58] sm:$0x3]
    %v274 = vld [vmem:[#allocation2 + $0x60] sm:$0xff]
    %v275 = vld [vmem:[#allocation2 + $0x68] sm:$0xff]
    %v276 = vld [vmem:[#allocation2 + $0x70] sm:$0x3]
    %v277 = vld [vmem:[#allocation2 + $0x78] sm:$0xff]
    %v278 = vld [vmem:[#allocation2 + $0x80] sm:$0xff]
    %v279 = vld [vmem:[#allocation2 + $0x88] sm:$0x3]
    %v280 = vld [vmem:[#allocation2 + $0x90] sm:$0xff]
    %v281 = vld [vmem:[#allocation2 + $0x98] sm:$0xff]
    %v282 = vld [vmem:[#allocation2 + $0xa0] sm:$0x3]
    %v283 = vld [vmem:[#allocation2 + $0xa8] sm:$0xff]
    %v284 = vld [vmem:[#allocation2 + $0xb0] sm:$0xff]
    %v285 = vld [vmem:[#allocation2 + $0xb8] sm:$0x3]
    %v286 = vld [vmem:[#allocation2 + $0xc0] sm:$0xff]
    %v287 = vld [vmem:[#allocation2 + $0xc8] sm:$0xff]
    %v288 = vld [vmem:[#allocation2 + $0xd0] sm:$0x3]
    %v289 = vld [vmem:[#allocation2 + $0xd8] sm:$0xff]
    %v290 = vld [vmem:[#allocation2 + $0xe0] sm:$0xff]
    %v291 = vld [vmem:[#allocation2 + $0xe8] sm:$0x3]
    %v292 = vld [vmem:[#allocation2 + $0xf0] sm:$0xff]
    %v293 = vld [vmem:[#allocation2 + $0xf8] sm:$0xff]
    %v294 = vld [vmem:[#allocation2 + $0x100] sm:$0x3]
    %v295 = vld [vmem:[#allocation2 + $0x108] sm:$0xff]
    %v296 = vld [vmem:[#allocation2 + $0x110] sm:$0xff]
    %v297 = vld [vmem:[#allocation2 + $0x118] sm:$0x3]
    %v298 = vld [vmem:[#allocation2 + $0x120] sm:$0xff]
    %v299 = vld [vmem:[#allocation2 + $0x128] sm:$0xff]
    %v300 = vld [vmem:[#allocation2 + $0x130] sm:$0x3]
    %v301 = vld [vmem:[#allocation2 + $0x138] sm:$0xff]
    %v302 = vld [vmem:[#allocation2 + $0x140] sm:$0xff]
    %v303 = vld [vmem:[#allocation2 + $0x148] sm:$0x3]
    %v304 = vld [vmem:[#allocation2 + $0x150] sm:$0xff]
    %v305 = vld [vmem:[#allocation2 + $0x158] sm:$0xff]
    %v306 = vld [vmem:[#allocation2 + $0x160] sm:$0x3]
    %v307 = vld [vmem:[#allocation2 + $0x168] sm:$0xff]
    %v308 = vld [vmem:[#allocation2 + $0x170] sm:$0xff]
    %v309 = vld [vmem:[#allocation2 + $0x178] sm:$0x3]
    %v310 = vld [vmem:[#allocation2 + $0x180] sm:$0xff]
    %v311 = vld [vmem:[#allocation2 + $0x188] sm:$0xff]
    %v312 = vld [vmem:[#allocation2 + $0x190] sm:$0x3]
    %v313 = vld [vmem:[#allocation2 + $0x198] sm:$0xff]
    %v314 = vld [vmem:[#allocation2 + $0x1a0] sm:$0xff]
    %v315 = vld [vmem:[#allocation2 + $0x1a8] sm:$0x3]
    %v316 = vld [vmem:[#allocation2 + $0x1b0] sm:$0xff]
    %v317 = vld [vmem:[#allocation2 + $0x1b8] sm:$0xff]
    %v318 = vld [vmem:[#allocation2 + $0x1c0] sm:$0x3]
    %v319 = vld [vmem:[#allocation2 + $0x1c8] sm:$0xff]
    %v320 = vld [vmem:[#allocation2 + $0x1d0] sm:$0xff]
    %v321 = vld [vmem:[#allocation2 + $0x1d8] sm:$0x3]
    %v322 = vld [vmem:[#allocation2 + $0x1e0] sm:$0xff]
    %v323 = vld [vmem:[#allocation2 + $0x1e8] sm:$0xff]
    %v324 = vld [vmem:[#allocation2 + $0x1f0] sm:$0x3]
    %v325 = vld [vmem:[#allocation2 + $0x1f8] sm:$0xff]
    %v326 = vld [vmem:[#allocation2 + $0x200] sm:$0xff]
    %v327 = vld [vmem:[#allocation2 + $0x208] sm:$0x3]
    %v328 = vld [vmem:[#allocation2 + $0x210] sm:$0xff]
    %v329 = vld [vmem:[#allocation2 + $0x218] sm:$0xff]
    %v330 = vld [vmem:[#allocation2 + $0x220] sm:$0x3]
    %v331 = vld [vmem:[#allocation2 + $0x228] sm:$0xff]
    %v332 = vld [vmem:[#allocation2 + $0x230] sm:$0xff]
    %v333 = vld [vmem:[#allocation2 + $0x238] sm:$0x3]
    %v334 = vld [vmem:[#allocation2 + $0x240] sm:$0xff]
    %v335 = vld [vmem:[#allocation2 + $0x248] sm:$0xff]
    %v336 = vld [vmem:[#allocation2 + $0x250] sm:$0x3]
    %v337 = vld [vmem:[#allocation2 + $0x258] sm:$0xff]
    %v338 = vld [vmem:[#allocation2 + $0x260] sm:$0xff]
    %v339 = vld [vmem:[#allocation2 + $0x268] sm:$0x3]
    %v340 = vld [vmem:[#allocation2 + $0x270] sm:$0xff]
    %v341 = vld [vmem:[#allocation2 + $0x278] sm:$0xff]
    %v342 = vld [vmem:[#allocation2 + $0x280] sm:$0x3]
    %v343 = vld [vmem:[#allocation2 + $0x288] sm:$0xff]
    %v344 = vld [vmem:[#allocation2 + $0x290] sm:$0xff]
    %v345 = vld [vmem:[#allocation2 + $0x298] sm:$0x3]
    %v346 = vld [vmem:[#allocation2 + $0x2a0] sm:$0xff]
    %v347 = vld [vmem:[#allocation2 + $0x2a8] sm:$0xff]
    %v348 = vld [vmem:[#allocation2 + $0x2b0] sm:$0x3]
    %v349 = vld [vmem:[#allocation2 + $0x2b8] sm:$0xff]
    %v350 = vld [vmem:[#allocation2 + $0x2c0] sm:$0xff]
    %v351 = vld [vmem:[#allocation2 + $0x2c8] sm:$0x3]
    %v352 = vld [vmem:[#allocation2 + $0x2d0] sm:$0xff]
    %v353 = vld [vmem:[#allocation2 + $0x2d8] sm:$0xff]
    %v354 = vld [vmem:[#allocation2 + $0x2e0] sm:$0x3]
    %v355 = vld [vmem:[#allocation2 + $0x2e8] sm:$0xff]
    %v356 = vld [vmem:[#allocation2 + $0x2f0] sm:$0xff]
    %v357 = vld [vmem:[#allocation2 + $0x2f8] sm:$0x3]
    %v358 = vld [vmem:[#allocation2 + $0x300] sm:$0xff]
    %v359 = vld [vmem:[#allocation2 + $0x308] sm:$0xff]
    %v360 = vld [vmem:[#allocation2 + $0x310] sm:$0x3]
    %v361 = vld [vmem:[#allocation2 + $0x318] sm:$0xff]
    %v362 = vld [vmem:[#allocation2 + $0x320] sm:$0xff]
    %v363 = vld [vmem:[#allocation2 + $0x328] sm:$0x3]
    %v364 = vld [vmem:[#allocation2 + $0x330] sm:$0xff]
    %v365 = vld [vmem:[#allocation2 + $0x338] sm:$0xff]
    %v366 = vld [vmem:[#allocation2 + $0x340] sm:$0x3]
    %v367 = vld [vmem:[#allocation2 + $0x348] sm:$0xff]
    %v368 = vld [vmem:[#allocation2 + $0x350] sm:$0xff]
    %v369 = vld [vmem:[#allocation2 + $0x358] sm:$0x3]
    %370 = vst.msk [vmem:[#allocation3] sm:$0xff] %vm23, %v262
    %371 = vst.msk [vmem:[#allocation3 + $0x8] sm:$0xff] %vm23, %v263
    %372 = vst.msk [vmem:[#allocation3 + $0x10] sm:$0xff] %vm23, %v265
    %373 = vst.msk [vmem:[#allocation3 + $0x18] sm:$0xff] %vm23, %v266
    %374 = vst.msk [vmem:[#allocation3 + $0x20] sm:$0xff] %vm23, %v268
    %375 = vst.msk [vmem:[#allocation3 + $0x28] sm:$0xff] %vm23, %v269
    %376 = vst.msk [vmem:[#allocation3 + $0x30] sm:$0xff] %vm23, %v271
    %377 = vst.msk [vmem:[#allocation3 + $0x38] sm:$0xff] %vm23, %v272
    %378 = vst.msk [vmem:[#allocation3 + $0x40] sm:$0xff] %vm23, %v274
    %379 = vst.msk [vmem:[#allocation3 + $0x48] sm:$0xff] %vm23, %v275
    %380 = vst.msk [vmem:[#allocation3 + $0x50] sm:$0xff] %vm23, %v277
    %381 = vst.msk [vmem:[#allocation3 + $0x58] sm:$0xff] %vm23, %v278
    %382 = vst.msk [vmem:[#allocation3 + $0x60] sm:$0xff] %vm23, %v280
    %383 = vst.msk [vmem:[#allocation3 + $0x68] sm:$0xff] %vm23, %v281
    %384 = vst.msk [vmem:[#allocation3 + $0x70] sm:$0xff] %vm23, %v283
    %385 = vst.msk [vmem:[#allocation3 + $0x78] sm:$0xff] %vm23, %v284
    %386 = vst.msk [vmem:[#allocation3 + $0x80] sm:$0xff] %vm23, %v286
    %387 = vst.msk [vmem:[#allocation3 + $0x88] sm:$0xff] %vm23, %v287
    %388 = vst.msk [vmem:[#allocation3 + $0x90] sm:$0xff] %vm23, %v289
    %389 = vst.msk [vmem:[#allocation3 + $0x98] sm:$0xff] %vm23, %v290
    %390 = vst.msk [vmem:[#allocation3 + $0xa0] sm:$0xff] %vm23, %v292
    %391 = vst.msk [vmem:[#allocation3 + $0xa8] sm:$0xff] %vm23, %v293
    %392 = vst.msk [vmem:[#allocation3 + $0xb0] sm:$0xff] %vm23, %v295
    %393 = vst.msk [vmem:[#allocation3 + $0xb8] sm:$0xff] %vm23, %v296
    %394 = vst.msk [vmem:[#allocation3 + $0xc0] sm:$0xff] %vm23, %v298
    %395 = vst.msk [vmem:[#allocation3 + $0xc8] sm:$0xff] %vm23, %v299
    %396 = vst.msk [vmem:[#allocation3 + $0xd0] sm:$0xff] %vm23, %v301
    %397 = vst.msk [vmem:[#allocation3 + $0xd8] sm:$0xff] %vm23, %v302
    %398 = vst.msk [vmem:[#allocation3 + $0xe0] sm:$0xff] %vm23, %v304
    %399 = vst.msk [vmem:[#allocation3 + $0xe8] sm:$0xff] %vm23, %v305
    %400 = vst.msk [vmem:[#allocation3 + $0xf0] sm:$0xff] %vm23, %v307
    %401 = vst.msk [vmem:[#allocation3 + $0xf8] sm:$0xff] %vm23, %v308
    %402 = vst.msk [vmem:[#allocation3 + $0x100] sm:$0xff] %vm23, %v316
    %403 = vst.msk [vmem:[#allocation3 + $0x108] sm:$0xff] %vm23, %v317
    %404 = vst.msk [vmem:[#allocation3 + $0x110] sm:$0xff] %vm23, %v319
    %405 = vst.msk [vmem:[#allocation3 + $0x118] sm:$0xff] %vm23, %v320
    %406 = vst.msk [vmem:[#allocation3 + $0x120] sm:$0xff] %vm23, %v322
    %407 = vst.msk [vmem:[#allocation3 + $0x128] sm:$0xff] %vm23, %v323
    %408 = vst.msk [vmem:[#allocation3 + $0x130] sm:$0xff] %vm23, %v325
    %409 = vst.msk [vmem:[#allocation3 + $0x138] sm:$0xff] %vm23, %v326
    %410 = vst.msk [vmem:[#allocation3 + $0x140] sm:$0xff] %vm23, %v328
    %411 = vst.msk [vmem:[#allocation3 + $0x148] sm:$0xff] %vm23, %v329
    %412 = vst.msk [vmem:[#allocation3 + $0x150] sm:$0xff] %vm23, %v331
    %413 = vst.msk [vmem:[#allocation3 + $0x158] sm:$0xff] %vm23, %v332
    %414 = vst.msk [vmem:[#allocation3 + $0x160] sm:$0xff] %vm23, %v334
    %415 = vst.msk [vmem:[#allocation3 + $0x168] sm:$0xff] %vm23, %v335
    %416 = vst.msk [vmem:[#allocation3 + $0x170] sm:$0xff] %vm23, %v337
    %417 = vst.msk [vmem:[#allocation3 + $0x178] sm:$0xff] %vm23, %v338
    %418 = vst.msk [vmem:[#allocation3 + $0x180] sm:$0xff] %vm23, %v340
    %419 = vst.msk [vmem:[#allocation3 + $0x188] sm:$0xff] %vm23, %v341
    %420 = vst.msk [vmem:[#allocation3 + $0x190] sm:$0xff] %vm23, %v343
    %421 = vst.msk [vmem:[#allocation3 + $0x198] sm:$0xff] %vm23, %v344
    %422 = vst.msk [vmem:[#allocation3 + $0x1a0] sm:$0xff] %vm23, %v346
    %423 = vst.msk [vmem:[#allocation3 + $0x1a8] sm:$0xff] %vm23, %v347
    %424 = vst.msk [vmem:[#allocation3 + $0x1b0] sm:$0xff] %vm23, %v349
    %425 = vst.msk [vmem:[#allocation3 + $0x1b8] sm:$0xff] %vm23, %v350
    %426 = vst.msk [vmem:[#allocation3 + $0x1c0] sm:$0xff] %vm23, %v352
    %427 = vst.msk [vmem:[#allocation3 + $0x1c8] sm:$0xff] %vm23, %v353
    %428 = vst.msk [vmem:[#allocation3 + $0x1d0] sm:$0xff] %vm23, %v355
    %429 = vst.msk [vmem:[#allocation3 + $0x1d8] sm:$0xff] %vm23, %v356
    %430 = vst.msk [vmem:[#allocation3 + $0x1e0] sm:$0xff] %vm23, %v358
    %431 = vst.msk [vmem:[#allocation3 + $0x1e8] sm:$0xff] %vm23, %v359
    %432 = vst.msk [vmem:[#allocation3 + $0x1f0] sm:$0xff] %vm23, %v361
    %433 = vst.msk [vmem:[#allocation3 + $0x1f8] sm:$0xff] %vm23, %v362
    %vm530 = vcmask 1046528
    %v531 = vrot.slane %v262, 1
    %v532 = vrot.slane %v263, 1
    %v533 = vsel %vm530, %v531, %v532
    %v534 = vrot.slane %v264, 1
    %v535 = vsel %vm530, %v532, %v534
    %v536 = vrot.slane %v265, 1
    %v537 = vrot.slane %v266, 1
    %v538 = vsel %vm530, %v536, %v537
    %v539 = vrot.slane %v267, 1
    %v540 = vsel %vm530, %v537, %v539
    %v541 = vrot.slane %v268, 1
    %v542 = vrot.slane %v269, 1
    %v543 = vsel %vm530, %v541, %v542
    %v544 = vrot.slane %v270, 1
    %v545 = vsel %vm530, %v542, %v544
    %v546 = vrot.slane %v271, 1
    %v547 = vrot.slane %v272, 1
    %v548 = vsel %vm530, %v546, %v547
    %v549 = vrot.slane %v273, 1
    %v550 = vsel %vm530, %v547, %v549
    %v551 = vrot.slane %v274, 1
    %v552 = vrot.slane %v275, 1
    %v553 = vsel %vm530, %v551, %v552
    %v554 = vrot.slane %v276, 1
    %v555 = vsel %vm530, %v552, %v554
    %v556 = vrot.slane %v277, 1
    %v557 = vrot.slane %v278, 1
    %v558 = vsel %vm530, %v556, %v557
    %v559 = vrot.slane %v279, 1
    %v560 = vsel %vm530, %v557, %v559
    %v561 = vrot.slane %v280, 1
    %v562 = vrot.slane %v281, 1
    %v563 = vsel %vm530, %v561, %v562
    %v564 = vrot.slane %v282, 1
    %v565 = vsel %vm530, %v562, %v564
    %v566 = vrot.slane %v283, 1
    %v567 = vrot.slane %v284, 1
    %v568 = vsel %vm530, %v566, %v567
    %v569 = vrot.slane %v285, 1
    %v570 = vsel %vm530, %v567, %v569
    %v571 = vrot.slane %v286, 1
    %v572 = vrot.slane %v287, 1
    %v573 = vsel %vm530, %v571, %v572
    %v574 = vrot.slane %v288, 1
    %v575 = vsel %vm530, %v572, %v574
    %v576 = vrot.slane %v289, 1
    %v577 = vrot.slane %v290, 1
    %v578 = vsel %vm530, %v576, %v577
    %v579 = vrot.slane %v291, 1
    %v580 = vsel %vm530, %v577, %v579
    %v581 = vrot.slane %v292, 1
    %v582 = vrot.slane %v293, 1
    %v583 = vsel %vm530, %v581, %v582
    %v584 = vrot.slane %v294, 1
    %v585 = vsel %vm530, %v582, %v584
    %v586 = vrot.slane %v295, 1
    %v587 = vrot.slane %v296, 1
    %v588 = vsel %vm530, %v586, %v587
    %v589 = vrot.slane %v297, 1
    %v590 = vsel %vm530, %v587, %v589
    %v591 = vrot.slane %v298, 1
    %v592 = vrot.slane %v299, 1
    %v593 = vsel %vm530, %v591, %v592
    %v594 = vrot.slane %v300, 1
    %v595 = vsel %vm530, %v592, %v594
    %v596 = vrot.slane %v301, 1
    %v597 = vrot.slane %v302, 1
    %v598 = vsel %vm530, %v596, %v597
    %v599 = vrot.slane %v303, 1
    %v600 = vsel %vm530, %v597, %v599
    %v601 = vrot.slane %v304, 1
    %v602 = vrot.slane %v305, 1
    %v603 = vsel %vm530, %v601, %v602
    %v604 = vrot.slane %v306, 1
    %v605 = vsel %vm530, %v602, %v604
    %v606 = vrot.slane %v307, 1
    %v607 = vrot.slane %v308, 1
    %v608 = vsel %vm530, %v606, %v607
    %v609 = vrot.slane %v309, 1
    %v610 = vsel %vm530, %v607, %v609
    %v611 = vrot.slane %v316, 1
    %v612 = vrot.slane %v317, 1
    %v613 = vsel %vm530, %v611, %v612
    %v614 = vrot.slane %v318, 1
    %v615 = vsel %vm530, %v612, %v614
    %v616 = vrot.slane %v319, 1
    %v617 = vrot.slane %v320, 1
    %v618 = vsel %vm530, %v616, %v617
    %v619 = vrot.slane %v321, 1
    %v620 = vsel %vm530, %v617, %v619
    %v621 = vrot.slane %v322, 1
    %v622 = vrot.slane %v323, 1
    %v623 = vsel %vm530, %v621, %v622
    %v624 = vrot.slane %v324, 1
    %v625 = vsel %vm530, %v622, %v624
    %v626 = vrot.slane %v325, 1
    %v627 = vrot.slane %v326, 1
    %v628 = vsel %vm530, %v626, %v627
    %v629 = vrot.slane %v327, 1
    %v630 = vsel %vm530, %v627, %v629
    %v631 = vrot.slane %v328, 1
    %v632 = vrot.slane %v329, 1
    %v633 = vsel %vm530, %v631, %v632
    %v634 = vrot.slane %v330, 1
    %v635 = vsel %vm530, %v632, %v634
    %v636 = vrot.slane %v331, 1
    %v637 = vrot.slane %v332, 1
    %v638 = vsel %vm530, %v636, %v637
    %v639 = vrot.slane %v333, 1
    %v640 = vsel %vm530, %v637, %v639
    %v641 = vrot.slane %v334, 1
    %v642 = vrot.slane %v335, 1
    %v643 = vsel %vm530, %v641, %v642
    %v644 = vrot.slane %v336, 1
    %v645 = vsel %vm530, %v642, %v644
    %v646 = vrot.slane %v337, 1
    %v647 = vrot.slane %v338, 1
    %v648 = vsel %vm530, %v646, %v647
    %v649 = vrot.slane %v339, 1
    %v650 = vsel %vm530, %v647, %v649
    %v651 = vrot.slane %v340, 1
    %v652 = vrot.slane %v341, 1
    %v653 = vsel %vm530, %v651, %v652
    %v654 = vrot.slane %v342, 1
    %v655 = vsel %vm530, %v652, %v654
    %v656 = vrot.slane %v343, 1
    %v657 = vrot.slane %v344, 1
    %v658 = vsel %vm530, %v656, %v657
    %v659 = vrot.slane %v345, 1
    %v660 = vsel %vm530, %v657, %v659
    %v661 = vrot.slane %v346, 1
    %v662 = vrot.slane %v347, 1
    %v663 = vsel %vm530, %v661, %v662
    %v664 = vrot.slane %v348, 1
    %v665 = vsel %vm530, %v662, %v664
    %v666 = vrot.slane %v349, 1
    %v667 = vrot.slane %v350, 1
    %v668 = vsel %vm530, %v666, %v667
    %v669 = vrot.slane %v351, 1
    %v670 = vsel %vm530, %v667, %v669
    %v671 = vrot.slane %v352, 1
    %v672 = vrot.slane %v353, 1
    %v673 = vsel %vm530, %v671, %v672
    %v674 = vrot.slane %v354, 1
    %v675 = vsel %vm530, %v672, %v674
    %v676 = vrot.slane %v355, 1
    %v677 = vrot.slane %v356, 1
    %v678 = vsel %vm530, %v676, %v677
    %v679 = vrot.slane %v357, 1
    %v680 = vsel %vm530, %v677, %v679
    %v681 = vrot.slane %v358, 1
    %v682 = vrot.slane %v359, 1
    %v683 = vsel %vm530, %v681, %v682
    %v684 = vrot.slane %v360, 1
    %v685 = vsel %vm530, %v682, %v684
    %v686 = vrot.slane %v361, 1
    %v687 = vrot.slane %v362, 1
    %v688 = vsel %vm530, %v686, %v687
    %v689 = vrot.slane %v363, 1
    %v690 = vsel %vm530, %v687, %v689
    %691 = vrot.lane.b32.xlu0 %v533, 4
    %v692 = vpop.permute.xlu0 %691
    %693 = vrot.lane.b32.xlu0 %v535, 4
    %v694 = vpop.permute.xlu0 %693
    %695 = vrot.lane.b32.xlu0 %v538, 4
    %v696 = vpop.permute.xlu0 %695
    %697 = vrot.lane.b32.xlu0 %v540, 4
    %v698 = vpop.permute.xlu0 %697
    %699 = vrot.lane.b32.xlu0 %v543, 4
    %v700 = vpop.permute.xlu0 %699
    %701 = vrot.lane.b32.xlu0 %v545, 4
    %v702 = vpop.permute.xlu0 %701
    %703 = vrot.lane.b32.xlu0 %v548, 4
    %v704 = vpop.permute.xlu0 %703
    %705 = vrot.lane.b32.xlu0 %v550, 4
    %v706 = vpop.permute.xlu0 %705
    %707 = vrot.lane.b32.xlu0 %v553, 4
    %v708 = vpop.permute.xlu0 %707
    %709 = vrot.lane.b32.xlu0 %v555, 4
    %v710 = vpop.permute.xlu0 %709
    %711 = vrot.lane.b32.xlu0 %v558, 4
    %v712 = vpop.permute.xlu0 %711
    %713 = vrot.lane.b32.xlu0 %v560, 4
    %v714 = vpop.permute.xlu0 %713
    %715 = vrot.lane.b32.xlu0 %v563, 4
    %v716 = vpop.permute.xlu0 %715
    %717 = vrot.lane.b32.xlu0 %v565, 4
    %v718 = vpop.permute.xlu0 %717
    %719 = vrot.lane.b32.xlu0 %v568, 4
    %v720 = vpop.permute.xlu0 %719
    %721 = vrot.lane.b32.xlu0 %v570, 4
    %v722 = vpop.permute.xlu0 %721
    %723 = vrot.lane.b32.xlu0 %v573, 4
    %v724 = vpop.permute.xlu0 %723
    %725 = vrot.lane.b32.xlu0 %v575, 4
    %v726 = vpop.permute.xlu0 %725
    %727 = vrot.lane.b32.xlu0 %v578, 4
    %v728 = vpop.permute.xlu0 %727
    %729 = vrot.lane.b32.xlu0 %v580, 4
    %v730 = vpop.permute.xlu0 %729
    %731 = vrot.lane.b32.xlu0 %v583, 4
    %v732 = vpop.permute.xlu0 %731
    %733 = vrot.lane.b32.xlu0 %v585, 4
    %v734 = vpop.permute.xlu0 %733
    %735 = vrot.lane.b32.xlu0 %v588, 4
    %v736 = vpop.permute.xlu0 %735
    %737 = vrot.lane.b32.xlu0 %v590, 4
    %v738 = vpop.permute.xlu0 %737
    %739 = vrot.lane.b32.xlu0 %v593, 4
    %v740 = vpop.permute.xlu0 %739
    %741 = vrot.lane.b32.xlu0 %v595, 4
    %v742 = vpop.permute.xlu0 %741
    %743 = vrot.lane.b32.xlu0 %v598, 4
    %v744 = vpop.permute.xlu0 %743
    %745 = vrot.lane.b32.xlu0 %v600, 4
    %v746 = vpop.permute.xlu0 %745
    %747 = vrot.lane.b32.xlu0 %v603, 4
    %v748 = vpop.permute.xlu0 %747
    %749 = vrot.lane.b32.xlu0 %v605, 4
    %v750 = vpop.permute.xlu0 %749
    %751 = vrot.lane.b32.xlu0 %v608, 4
    %v752 = vpop.permute.xlu0 %751
    %753 = vrot.lane.b32.xlu0 %v610, 4
    %v754 = vpop.permute.xlu0 %753
    %755 = vrot.lane.b32.xlu0 %v613, 4
    %v756 = vpop.permute.xlu0 %755
    %757 = vrot.lane.b32.xlu0 %v615, 4
    %v758 = vpop.permute.xlu0 %757
    %759 = vrot.lane.b32.xlu0 %v618, 4
    %v760 = vpop.permute.xlu0 %759
    %761 = vrot.lane.b32.xlu0 %v620, 4
    %v762 = vpop.permute.xlu0 %761
    %763 = vrot.lane.b32.xlu0 %v623, 4
    %v764 = vpop.permute.xlu0 %763
    %765 = vrot.lane.b32.xlu0 %v625, 4
    %v766 = vpop.permute.xlu0 %765
    %767 = vrot.lane.b32.xlu0 %v628, 4
    %v768 = vpop.permute.xlu0 %767
    %769 = vrot.lane.b32.xlu0 %v630, 4
    %v770 = vpop.permute.xlu0 %769
    %771 = vrot.lane.b32.xlu0 %v633, 4
    %v772 = vpop.permute.xlu0 %771
    %773 = vrot.lane.b32.xlu0 %v635, 4
    %v774 = vpop.permute.xlu0 %773
    %775 = vrot.lane.b32.xlu0 %v638, 4
    %v776 = vpop.permute.xlu0 %775
    %777 = vrot.lane.b32.xlu0 %v640, 4
    %v778 = vpop.permute.xlu0 %777
    %779 = vrot.lane.b32.xlu0 %v643, 4
    %v780 = vpop.permute.xlu0 %779
    %781 = vrot.lane.b32.xlu0 %v645, 4
    %v782 = vpop.permute.xlu0 %781
    %783 = vrot.lane.b32.xlu0 %v648, 4
    %v784 = vpop.permute.xlu0 %783
    %785 = vrot.lane.b32.xlu0 %v650, 4
    %v786 = vpop.permute.xlu0 %785
    %787 = vrot.lane.b32.xlu0 %v653, 4
    %v788 = vpop.permute.xlu0 %787
    %789 = vrot.lane.b32.xlu0 %v655, 4
    %v790 = vpop.permute.xlu0 %789
    %791 = vrot.lane.b32.xlu0 %v658, 4
    %v792 = vpop.permute.xlu0 %791
    %793 = vrot.lane.b32.xlu0 %v660, 4
    %v794 = vpop.permute.xlu0 %793
    %795 = vrot.lane.b32.xlu0 %v663, 4
    %v796 = vpop.permute.xlu0 %795
    %797 = vrot.lane.b32.xlu0 %v665, 4
    %v798 = vpop.permute.xlu0 %797
    %799 = vrot.lane.b32.xlu0 %v668, 4
    %v800 = vpop.permute.xlu0 %799
    %801 = vrot.lane.b32.xlu0 %v670, 4
    %v802 = vpop.permute.xlu0 %801
    %803 = vrot.lane.b32.xlu0 %v673, 4
    %v804 = vpop.permute.xlu0 %803
    %805 = vrot.lane.b32.xlu0 %v675, 4
    %v806 = vpop.permute.xlu0 %805
    %807 = vrot.lane.b32.xlu0 %v678, 4
    %v808 = vpop.permute.xlu0 %807
    %809 = vrot.lane.b32.xlu0 %v680, 4
    %v810 = vpop.permute.xlu0 %809
    %811 = vrot.lane.b32.xlu0 %v683, 4
    %v812 = vpop.permute.xlu0 %811
    %813 = vrot.lane.b32.xlu0 %v685, 4
    %v814 = vpop.permute.xlu0 %813
    %815 = vrot.lane.b32.xlu0 %v688, 4
    %v816 = vpop.permute.xlu0 %815
    %817 = vrot.lane.b32.xlu0 %v690, 4
    %v818 = vpop.permute.xlu0 %817
    %vm883 = vcmask 64544
    %884 = vst.msk [vmem:[#allocation3] sm:$0xff] %vm883, %v692
    %885 = vst.msk [vmem:[#allocation3 + $0x8] sm:$0xff] %vm883, %v694
    %886 = vst.msk [vmem:[#allocation3 + $0x10] sm:$0xff] %vm883, %v696
    %887 = vst.msk [vmem:[#allocation3 + $0x18] sm:$0xff] %vm883, %v698
    %888 = vst.msk [vmem:[#allocation3 + $0x20] sm:$0xff] %vm883, %v700
    %889 = vst.msk [vmem:[#allocation3 + $0x28] sm:$0xff] %vm883, %v702
    %890 = vst.msk [vmem:[#allocation3 + $0x30] sm:$0xff] %vm883, %v704
    %891 = vst.msk [vmem:[#allocation3 + $0x38] sm:$0xff] %vm883, %v706
    %892 = vst.msk [vmem:[#allocation3 + $0x40] sm:$0xff] %vm883, %v708
    %893 = vst.msk [vmem:[#allocation3 + $0x48] sm:$0xff] %vm883, %v710
    %894 = vst.msk [vmem:[#allocation3 + $0x50] sm:$0xff] %vm883, %v712
    %895 = vst.msk [vmem:[#allocation3 + $0x58] sm:$0xff] %vm883, %v714
    %896 = vst.msk [vmem:[#allocation3 + $0x60] sm:$0xff] %vm883, %v716
    %897 = vst.msk [vmem:[#allocation3 + $0x68] sm:$0xff] %vm883, %v718
    %898 = vst.msk [vmem:[#allocation3 + $0x70] sm:$0xff] %vm883, %v720
    %899 = vst.msk [vmem:[#allocation3 + $0x78] sm:$0xff] %vm883, %v722
    %900 = vst.msk [vmem:[#allocation3 + $0x80] sm:$0xff] %vm883, %v724
    %901 = vst.msk [vmem:[#allocation3 + $0x88] sm:$0xff] %vm883, %v726
    %902 = vst.msk [vmem:[#allocation3 + $0x90] sm:$0xff] %vm883, %v728
    %903 = vst.msk [vmem:[#allocation3 + $0x98] sm:$0xff] %vm883, %v730
    %904 = vst.msk [vmem:[#allocation3 + $0xa0] sm:$0xff] %vm883, %v732
    %905 = vst.msk [vmem:[#allocation3 + $0xa8] sm:$0xff] %vm883, %v734
    %906 = vst.msk [vmem:[#allocation3 + $0xb0] sm:$0xff] %vm883, %v736
    %907 = vst.msk [vmem:[#allocation3 + $0xb8] sm:$0xff] %vm883, %v738
    %908 = vst.msk [vmem:[#allocation3 + $0xc0] sm:$0xff] %vm883, %v740
    %909 = vst.msk [vmem:[#allocation3 + $0xc8] sm:$0xff] %vm883, %v742
    %910 = vst.msk [vmem:[#allocation3 + $0xd0] sm:$0xff] %vm883, %v744
    %911 = vst.msk [vmem:[#allocation3 + $0xd8] sm:$0xff] %vm883, %v746
    %912 = vst.msk [vmem:[#allocation3 + $0xe0] sm:$0xff] %vm883, %v748
    %913 = vst.msk [vmem:[#allocation3 + $0xe8] sm:$0xff] %vm883, %v750
    %914 = vst.msk [vmem:[#allocation3 + $0xf0] sm:$0xff] %vm883, %v752
    %915 = vst.msk [vmem:[#allocation3 + $0xf8] sm:$0xff] %vm883, %v754
    %916 = vst.msk [vmem:[#allocation3 + $0x100] sm:$0xff] %vm883, %v756
    %917 = vst.msk [vmem:[#allocation3 + $0x108] sm:$0xff] %vm883, %v758
    %918 = vst.msk [vmem:[#allocation3 + $0x110] sm:$0xff] %vm883, %v760
    %919 = vst.msk [vmem:[#allocation3 + $0x118] sm:$0xff] %vm883, %v762
    %920 = vst.msk [vmem:[#allocation3 + $0x120] sm:$0xff] %vm883, %v764
    %921 = vst.msk [vmem:[#allocation3 + $0x128] sm:$0xff] %vm883, %v766
    %922 = vst.msk [vmem:[#allocation3 + $0x130] sm:$0xff] %vm883, %v768
    %923 = vst.msk [vmem:[#allocation3 + $0x138] sm:$0xff] %vm883, %v770
    %924 = vst.msk [vmem:[#allocation3 + $0x140] sm:$0xff] %vm883, %v772
    %925 = vst.msk [vmem:[#allocation3 + $0x148] sm:$0xff] %vm883, %v774
    %926 = vst.msk [vmem:[#allocation3 + $0x150] sm:$0xff] %vm883, %v776
    %927 = vst.msk [vmem:[#allocation3 + $0x158] sm:$0xff] %vm883, %v778
    %928 = vst.msk [vmem:[#allocation3 + $0x160] sm:$0xff] %vm883, %v780
    %929 = vst.msk [vmem:[#allocation3 + $0x168] sm:$0xff] %vm883, %v782
    %930 = vst.msk [vmem:[#allocation3 + $0x170] sm:$0xff] %vm883, %v784
    %931 = vst.msk [vmem:[#allocation3 + $0x178] sm:$0xff] %vm883, %v786
    %932 = vst.msk [vmem:[#allocation3 + $0x180] sm:$0xff] %vm883, %v788
    %933 = vst.msk [vmem:[#allocation3 + $0x188] sm:$0xff] %vm883, %v790
    %934 = vst.msk [vmem:[#allocation3 + $0x190] sm:$0xff] %vm883, %v792
    %935 = vst.msk [vmem:[#allocation3 + $0x198] sm:$0xff] %vm883, %v794
    %936 = vst.msk [vmem:[#allocation3 + $0x1a0] sm:$0xff] %vm883, %v796
    %937 = vst.msk [vmem:[#allocation3 + $0x1a8] sm:$0xff] %vm883, %v798
    %938 = vst.msk [vmem:[#allocation3 + $0x1b0] sm:$0xff] %vm883, %v800
    %939 = vst.msk [vmem:[#allocation3 + $0x1b8] sm:$0xff] %vm883, %v802
    %940 = vst.msk [vmem:[#allocation3 + $0x1c0] sm:$0xff] %vm883, %v804
    %941 = vst.msk [vmem:[#allocation3 + $0x1c8] sm:$0xff] %vm883, %v806
    %942 = vst.msk [vmem:[#allocation3 + $0x1d0] sm:$0xff] %vm883, %v808
    %943 = vst.msk [vmem:[#allocation3 + $0x1d8] sm:$0xff] %vm883, %v810
    %944 = vst.msk [vmem:[#allocation3 + $0x1e0] sm:$0xff] %vm883, %v812
    %945 = vst.msk [vmem:[#allocation3 + $0x1e8] sm:$0xff] %vm883, %v814
    %946 = vst.msk [vmem:[#allocation3 + $0x1f0] sm:$0xff] %vm883, %v816
    %947 = vst.msk [vmem:[#allocation3 + $0x1f8] sm:$0xff] %vm883, %v818
    %vm948 = vcmask 1045504
    %v949 = vrot.slane %v262, 2
    %v950 = vrot.slane %v263, 2
    %v951 = vsel %vm948, %v949, %v950
    %v952 = vrot.slane %v264, 2
    %v953 = vsel %vm948, %v950, %v952
    %v954 = vrot.slane %v265, 2
    %v955 = vrot.slane %v266, 2
    %v956 = vsel %vm948, %v954, %v955
    %v957 = vrot.slane %v267, 2
    %v958 = vsel %vm948, %v955, %v957
    %v959 = vrot.slane %v268, 2
    %v960 = vrot.slane %v269, 2
    %v961 = vsel %vm948, %v959, %v960
    %v962 = vrot.slane %v270, 2
    %v963 = vsel %vm948, %v960, %v962
    %v964 = vrot.slane %v271, 2
    %v965 = vrot.slane %v272, 2
    %v966 = vsel %vm948, %v964, %v965
    %v967 = vrot.slane %v273, 2
    %v968 = vsel %vm948, %v965, %v967
    %v969 = vrot.slane %v274, 2
    %v970 = vrot.slane %v275, 2
    %v971 = vsel %vm948, %v969, %v970
    %v972 = vrot.slane %v276, 2
    %v973 = vsel %vm948, %v970, %v972
    %v974 = vrot.slane %v277, 2
    %v975 = vrot.slane %v278, 2
    %v976 = vsel %vm948, %v974, %v975
    %v977 = vrot.slane %v279, 2
    %v978 = vsel %vm948, %v975, %v977
    %v979 = vrot.slane %v280, 2
    %v980 = vrot.slane %v281, 2
    %v981 = vsel %vm948, %v979, %v980
    %v982 = vrot.slane %v282, 2
    %v983 = vsel %vm948, %v980, %v982
    %v984 = vrot.slane %v283, 2
    %v985 = vrot.slane %v284, 2
    %v986 = vsel %vm948, %v984, %v985
    %v987 = vrot.slane %v285, 2
    %v988 = vsel %vm948, %v985, %v987
    %v989 = vrot.slane %v286, 2
    %v990 = vrot.slane %v287, 2
    %v991 = vsel %vm948, %v989, %v990
    %v992 = vrot.slane %v288, 2
    %v993 = vsel %vm948, %v990, %v992
    %v994 = vrot.slane %v289, 2
    %v995 = vrot.slane %v290, 2
    %v996 = vsel %vm948, %v994, %v995
    %v997 = vrot.slane %v291, 2
    %v998 = vsel %vm948, %v995, %v997
    %v999 = vrot.slane %v292, 2
    %v1000 = vrot.slane %v293, 2
    %v1001 = vsel %vm948, %v999, %v1000
    %v1002 = vrot.slane %v294, 2
    %v1003 = vsel %vm948, %v1000, %v1002
    %v1004 = vrot.slane %v295, 2
    %v1005 = vrot.slane %v296, 2
    %v1006 = vsel %vm948, %v1004, %v1005
    %v1007 = vrot.slane %v297, 2
    %v1008 = vsel %vm948, %v1005, %v1007
    %v1009 = vrot.slane %v298, 2
    %v1010 = vrot.slane %v299, 2
    %v1011 = vsel %vm948, %v1009, %v1010
    %v1012 = vrot.slane %v300, 2
    %v1013 = vsel %vm948, %v1010, %v1012
    %v1014 = vrot.slane %v301, 2
    %v1015 = vrot.slane %v302, 2
    %v1016 = vsel %vm948, %v1014, %v1015
    %v1017 = vrot.slane %v303, 2
    %v1018 = vsel %vm948, %v1015, %v1017
    %v1019 = vrot.slane %v304, 2
    %v1020 = vrot.slane %v305, 2
    %v1021 = vsel %vm948, %v1019, %v1020
    %v1022 = vrot.slane %v306, 2
    %v1023 = vsel %vm948, %v1020, %v1022
    %v1024 = vrot.slane %v307, 2
    %v1025 = vrot.slane %v308, 2
    %v1026 = vsel %vm948, %v1024, %v1025
    %v1027 = vrot.slane %v309, 2
    %v1028 = vsel %vm948, %v1025, %v1027
    %v1029 = vrot.slane %v316, 2
    %v1030 = vrot.slane %v317, 2
    %v1031 = vsel %vm948, %v1029, %v1030
    %v1032 = vrot.slane %v318, 2
    %v1033 = vsel %vm948, %v1030, %v1032
    %v1034 = vrot.slane %v319, 2
    %v1035 = vrot.slane %v320, 2
    %v1036 = vsel %vm948, %v1034, %v1035
    %v1037 = vrot.slane %v321, 2
    %v1038 = vsel %vm948, %v1035, %v1037
    %v1039 = vrot.slane %v322, 2
    %v1040 = vrot.slane %v323, 2
    %v1041 = vsel %vm948, %v1039, %v1040
    %v1042 = vrot.slane %v324, 2
    %v1043 = vsel %vm948, %v1040, %v1042
    %v1044 = vrot.slane %v325, 2
    %v1045 = vrot.slane %v326, 2
    %v1046 = vsel %vm948, %v1044, %v1045
    %v1047 = vrot.slane %v327, 2
    %v1048 = vsel %vm948, %v1045, %v1047
    %v1049 = vrot.slane %v328, 2
    %v1050 = vrot.slane %v329, 2
    %v1051 = vsel %vm948, %v1049, %v1050
    %v1052 = vrot.slane %v330, 2
    %v1053 = vsel %vm948, %v1050, %v1052
    %v1054 = vrot.slane %v331, 2
    %v1055 = vrot.slane %v332, 2
    %v1056 = vsel %vm948, %v1054, %v1055
    %v1057 = vrot.slane %v333, 2
    %v1058 = vsel %vm948, %v1055, %v1057
    %v1059 = vrot.slane %v334, 2
    %v1060 = vrot.slane %v335, 2
    %v1061 = vsel %vm948, %v1059, %v1060
    %v1062 = vrot.slane %v336, 2
    %v1063 = vsel %vm948, %v1060, %v1062
    %v1064 = vrot.slane %v337, 2
    %v1065 = vrot.slane %v338, 2
    %v1066 = vsel %vm948, %v1064, %v1065
    %v1067 = vrot.slane %v339, 2
    %v1068 = vsel %vm948, %v1065, %v1067
    %v1069 = vrot.slane %v340, 2
    %v1070 = vrot.slane %v341, 2
    %v1071 = vsel %vm948, %v1069, %v1070
    %v1072 = vrot.slane %v342, 2
    %v1073 = vsel %vm948, %v1070, %v1072
    %v1074 = vrot.slane %v343, 2
    %v1075 = vrot.slane %v344, 2
    %v1076 = vsel %vm948, %v1074, %v1075
    %v1077 = vrot.slane %v345, 2
    %v1078 = vsel %vm948, %v1075, %v1077
    %v1079 = vrot.slane %v346, 2
    %v1080 = vrot.slane %v347, 2
    %v1081 = vsel %vm948, %v1079, %v1080
    %v1082 = vrot.slane %v348, 2
    %v1083 = vsel %vm948, %v1080, %v1082
    %v1084 = vrot.slane %v349, 2
    %v1085 = vrot.slane %v350, 2
    %v1086 = vsel %vm948, %v1084, %v1085
    %v1087 = vrot.slane %v351, 2
    %v1088 = vsel %vm948, %v1085, %v1087
    %v1089 = vrot.slane %v352, 2
    %v1090 = vrot.slane %v353, 2
    %v1091 = vsel %vm948, %v1089, %v1090
    %v1092 = vrot.slane %v354, 2
    %v1093 = vsel %vm948, %v1090, %v1092
    %v1094 = vrot.slane %v355, 2
    %v1095 = vrot.slane %v356, 2
    %v1096 = vsel %vm948, %v1094, %v1095
    %v1097 = vrot.slane %v357, 2
    %v1098 = vsel %vm948, %v1095, %v1097
    %v1099 = vrot.slane %v358, 2
    %v1100 = vrot.slane %v359, 2
    %v1101 = vsel %vm948, %v1099, %v1100
    %v1102 = vrot.slane %v360, 2
    %v1103 = vsel %vm948, %v1100, %v1102
    %v1104 = vrot.slane %v361, 2
    %v1105 = vrot.slane %v362, 2
    %v1106 = vsel %vm948, %v1104, %v1105
    %v1107 = vrot.slane %v363, 2
    %v1108 = vsel %vm948, %v1105, %v1107
    %1109 = vrot.lane.b32.xlu0 %v951, 8
    %v1110 = vpop.permute.xlu0 %1109
    %1111 = vrot.lane.b32.xlu0 %v953, 8
    %v1112 = vpop.permute.xlu0 %1111
    %1113 = vrot.lane.b32.xlu0 %v956, 8
    %v1114 = vpop.permute.xlu0 %1113
    %1115 = vrot.lane.b32.xlu0 %v958, 8
    %v1116 = vpop.permute.xlu0 %1115
    %1117 = vrot.lane.b32.xlu0 %v961, 8
    %v1118 = vpop.permute.xlu0 %1117
    %1119 = vrot.lane.b32.xlu0 %v963, 8
    %v1120 = vpop.permute.xlu0 %1119
    %1121 = vrot.lane.b32.xlu0 %v966, 8
    %v1122 = vpop.permute.xlu0 %1121
    %1123 = vrot.lane.b32.xlu0 %v968, 8
    %v1124 = vpop.permute.xlu0 %1123
    %1125 = vrot.lane.b32.xlu0 %v971, 8
    %v1126 = vpop.permute.xlu0 %1125
    %1127 = vrot.lane.b32.xlu0 %v973, 8
    %v1128 = vpop.permute.xlu0 %1127
    %1129 = vrot.lane.b32.xlu0 %v976, 8
    %v1130 = vpop.permute.xlu0 %1129
    %1131 = vrot.lane.b32.xlu0 %v978, 8
    %v1132 = vpop.permute.xlu0 %1131
    %1133 = vrot.lane.b32.xlu0 %v981, 8
    %v1134 = vpop.permute.xlu0 %1133
    %1135 = vrot.lane.b32.xlu0 %v983, 8
    %v1136 = vpop.permute.xlu0 %1135
    %1137 = vrot.lane.b32.xlu0 %v986, 8
    %v1138 = vpop.permute.xlu0 %1137
    %1139 = vrot.lane.b32.xlu0 %v988, 8
    %v1140 = vpop.permute.xlu0 %1139
    %1141 = vrot.lane.b32.xlu0 %v991, 8
    %v1142 = vpop.permute.xlu0 %1141
    %1143 = vrot.lane.b32.xlu0 %v993, 8
    %v1144 = vpop.permute.xlu0 %1143
    %1145 = vrot.lane.b32.xlu0 %v996, 8
    %v1146 = vpop.permute.xlu0 %1145
    %1147 = vrot.lane.b32.xlu0 %v998, 8
    %v1148 = vpop.permute.xlu0 %1147
    %1149 = vrot.lane.b32.xlu0 %v1001, 8
    %v1150 = vpop.permute.xlu0 %1149
    %1151 = vrot.lane.b32.xlu0 %v1003, 8
    %v1152 = vpop.permute.xlu0 %1151
    %1153 = vrot.lane.b32.xlu0 %v1006, 8
    %v1154 = vpop.permute.xlu0 %1153
    %1155 = vrot.lane.b32.xlu0 %v1008, 8
    %v1156 = vpop.permute.xlu0 %1155
    %1157 = vrot.lane.b32.xlu0 %v1011, 8
    %v1158 = vpop.permute.xlu0 %1157
    %1159 = vrot.lane.b32.xlu0 %v1013, 8
    %v1160 = vpop.permute.xlu0 %1159
    %1161 = vrot.lane.b32.xlu0 %v1016, 8
    %v1162 = vpop.permute.xlu0 %1161
    %1163 = vrot.lane.b32.xlu0 %v1018, 8
    %v1164 = vpop.permute.xlu0 %1163
    %1165 = vrot.lane.b32.xlu0 %v1021, 8
    %v1166 = vpop.permute.xlu0 %1165
    %1167 = vrot.lane.b32.xlu0 %v1023, 8
    %v1168 = vpop.permute.xlu0 %1167
    %1169 = vrot.lane.b32.xlu0 %v1026, 8
    %v1170 = vpop.permute.xlu0 %1169
    %1171 = vrot.lane.b32.xlu0 %v1028, 8
    %v1172 = vpop.permute.xlu0 %1171
    %1173 = vrot.lane.b32.xlu0 %v1031, 8
    %v1174 = vpop.permute.xlu0 %1173
    %1175 = vrot.lane.b32.xlu0 %v1033, 8
    %v1176 = vpop.permute.xlu0 %1175
    %1177 = vrot.lane.b32.xlu0 %v1036, 8
    %v1178 = vpop.permute.xlu0 %1177
    %1179 = vrot.lane.b32.xlu0 %v1038, 8
    %v1180 = vpop.permute.xlu0 %1179
    %1181 = vrot.lane.b32.xlu0 %v1041, 8
    %v1182 = vpop.permute.xlu0 %1181
    %1183 = vrot.lane.b32.xlu0 %v1043, 8
    %v1184 = vpop.permute.xlu0 %1183
    %1185 = vrot.lane.b32.xlu0 %v1046, 8
    %v1186 = vpop.permute.xlu0 %1185
    %1187 = vrot.lane.b32.xlu0 %v1048, 8
    %v1188 = vpop.permute.xlu0 %1187
    %1189 = vrot.lane.b32.xlu0 %v1051, 8
    %v1190 = vpop.permute.xlu0 %1189
    %1191 = vrot.lane.b32.xlu0 %v1053, 8
    %v1192 = vpop.permute.xlu0 %1191
    %1193 = vrot.lane.b32.xlu0 %v1056, 8
    %v1194 = vpop.permute.xlu0 %1193
    %1195 = vrot.lane.b32.xlu0 %v1058, 8
    %v1196 = vpop.permute.xlu0 %1195
    %1197 = vrot.lane.b32.xlu0 %v1061, 8
    %v1198 = vpop.permute.xlu0 %1197
    %1199 = vrot.lane.b32.xlu0 %v1063, 8
    %v1200 = vpop.permute.xlu0 %1199
    %1201 = vrot.lane.b32.xlu0 %v1066, 8
    %v1202 = vpop.permute.xlu0 %1201
    %1203 = vrot.lane.b32.xlu0 %v1068, 8
    %v1204 = vpop.permute.xlu0 %1203
    %1205 = vrot.lane.b32.xlu0 %v1071, 8
    %v1206 = vpop.permute.xlu0 %1205
    %1207 = vrot.lane.b32.xlu0 %v1073, 8
    %v1208 = vpop.permute.xlu0 %1207
    %1209 = vrot.lane.b32.xlu0 %v1076, 8
    %v1210 = vpop.permute.xlu0 %1209
    %1211 = vrot.lane.b32.xlu0 %v1078, 8
    %v1212 = vpop.permute.xlu0 %1211
    %1213 = vrot.lane.b32.xlu0 %v1081, 8
    %v1214 = vpop.permute.xlu0 %1213
    %1215 = vrot.lane.b32.xlu0 %v1083, 8
    %v1216 = vpop.permute.xlu0 %1215
    %1217 = vrot.lane.b32.xlu0 %v1086, 8
    %v1218 = vpop.permute.xlu0 %1217
    %1219 = vrot.lane.b32.xlu0 %v1088, 8
    %v1220 = vpop.permute.xlu0 %1219
    %1221 = vrot.lane.b32.xlu0 %v1091, 8
    %v1222 = vpop.permute.xlu0 %1221
    %1223 = vrot.lane.b32.xlu0 %v1093, 8
    %v1224 = vpop.permute.xlu0 %1223
    %1225 = vrot.lane.b32.xlu0 %v1096, 8
    %v1226 = vpop.permute.xlu0 %1225
    %1227 = vrot.lane.b32.xlu0 %v1098, 8
    %v1228 = vpop.permute.xlu0 %1227
    %1229 = vrot.lane.b32.xlu0 %v1101, 8
    %v1230 = vpop.permute.xlu0 %1229
    %1231 = vrot.lane.b32.xlu0 %v1103, 8
    %v1232 = vpop.permute.xlu0 %1231
    %1233 = vrot.lane.b32.xlu0 %v1106, 8
    %v1234 = vpop.permute.xlu0 %1233
    %1235 = vrot.lane.b32.xlu0 %v1108, 8
    %v1236 = vpop.permute.xlu0 %1235
    %vm1301 = vcmask 97344
    %1302 = vst.msk [vmem:[#allocation3] sm:$0xff] %vm1301, %v1110
    %1303 = vst.msk [vmem:[#allocation3 + $0x8] sm:$0xff] %vm1301, %v1112
    %1304 = vst.msk [vmem:[#allocation3 + $0x10] sm:$0xff] %vm1301, %v1114
    %1305 = vst.msk [vmem:[#allocation3 + $0x18] sm:$0xff] %vm1301, %v1116
    %1306 = vst.msk [vmem:[#allocation3 + $0x20] sm:$0xff] %vm1301, %v1118
    %1307 = vst.msk [vmem:[#allocation3 + $0x28] sm:$0xff] %vm1301, %v1120
    %1308 = vst.msk [vmem:[#allocation3 + $0x30] sm:$0xff] %vm1301, %v1122
    %1309 = vst.msk [vmem:[#allocation3 + $0x38] sm:$0xff] %vm1301, %v1124
    %1310 = vst.msk [vmem:[#allocation3 + $0x40] sm:$0xff] %vm1301, %v1126
    %1311 = vst.msk [vmem:[#allocation3 + $0x48] sm:$0xff] %vm1301, %v1128
    %1312 = vst.msk [vmem:[#allocation3 + $0x50] sm:$0xff] %vm1301, %v1130
    %1313 = vst.msk [vmem:[#allocation3 + $0x58] sm:$0xff] %vm1301, %v1132
    %1314 = vst.msk [vmem:[#allocation3 + $0x60] sm:$0xff] %vm1301, %v1134
    %1315 = vst.msk [vmem:[#allocation3 + $0x68] sm:$0xff] %vm1301, %v1136
    %1316 = vst.msk [vmem:[#allocation3 + $0x70] sm:$0xff] %vm1301, %v1138
    %1317 = vst.msk [vmem:[#allocation3 + $0x78] sm:$0xff] %vm1301, %v1140
    %1318 = vst.msk [vmem:[#allocation3 + $0x80] sm:$0xff] %vm1301, %v1142
    %1319 = vst.msk [vmem:[#allocation3 + $0x88] sm:$0xff] %vm1301, %v1144
    %1320 = vst.msk [vmem:[#allocation3 + $0x90] sm:$0xff] %vm1301, %v1146
    %1321 = vst.msk [vmem:[#allocation3 + $0x98] sm:$0xff] %vm1301, %v1148
    %1322 = vst.msk [vmem:[#allocation3 + $0xa0] sm:$0xff] %vm1301, %v1150
    %1323 = vst.msk [vmem:[#allocation3 + $0xa8] sm:$0xff] %vm1301, %v1152
    %1324 = vst.msk [vmem:[#allocation3 + $0xb0] sm:$0xff] %vm1301, %v1154
    %1325 = vst.msk [vmem:[#allocation3 + $0xb8] sm:$0xff] %vm1301, %v1156
    %1326 = vst.msk [vmem:[#allocation3 + $0xc0] sm:$0xff] %vm1301, %v1158
    %1327 = vst.msk [vmem:[#allocation3 + $0xc8] sm:$0xff] %vm1301, %v1160
    %1328 = vst.msk [vmem:[#allocation3 + $0xd0] sm:$0xff] %vm1301, %v1162
    %1329 = vst.msk [vmem:[#allocation3 + $0xd8] sm:$0xff] %vm1301, %v1164
    %1330 = vst.msk [vmem:[#allocation3 + $0xe0] sm:$0xff] %vm1301, %v1166
    %1331 = vst.msk [vmem:[#allocation3 + $0xe8] sm:$0xff] %vm1301, %v1168
    %1332 = vst.msk [vmem:[#allocation3 + $0xf0] sm:$0xff] %vm1301, %v1170
    %1333 = vst.msk [vmem:[#allocation3 + $0xf8] sm:$0xff] %vm1301, %v1172
    %1334 = vst.msk [vmem:[#allocation3 + $0x100] sm:$0xff] %vm1301, %v1174
    %1335 = vst.msk [vmem:[#allocation3 + $0x108] sm:$0xff] %vm1301, %v1176
    %1336 = vst.msk [vmem:[#allocation3 + $0x110] sm:$0xff] %vm1301, %v1178
    %1337 = vst.msk [vmem:[#allocation3 + $0x118] sm:$0xff] %vm1301, %v1180
    %1338 = vst.msk [vmem:[#allocation3 + $0x120] sm:$0xff] %vm1301, %v1182
    %1339 = vst.msk [vmem:[#allocation3 + $0x128] sm:$0xff] %vm1301, %v1184
    %1340 = vst.msk [vmem:[#allocation3 + $0x130] sm:$0xff] %vm1301, %v1186
    %1341 = vst.msk [vmem:[#allocation3 + $0x138] sm:$0xff] %vm1301, %v1188
    %1342 = vst.msk [vmem:[#allocation3 + $0x140] sm:$0xff] %vm1301, %v1190
    %1343 = vst.msk [vmem:[#allocation3 + $0x148] sm:$0xff] %vm1301, %v1192
    %1344 = vst.msk [vmem:[#allocation3 + $0x150] sm:$0xff] %vm1301, %v1194
    %1345 = vst.msk [vmem:[#allocation3 + $0x158] sm:$0xff] %vm1301, %v1196
    %1346 = vst.msk [vmem:[#allocation3 + $0x160] sm:$0xff] %vm1301, %v1198
    %1347 = vst.msk [vmem:[#allocation3 + $0x168] sm:$0xff] %vm1301, %v1200
    %1348 = vst.msk [vmem:[#allocation3 + $0x170] sm:$0xff] %vm1301, %v1202
    %1349 = vst.msk [vmem:[#allocation3 + $0x178] sm:$0xff] %vm1301, %v1204
    %1350 = vst.msk [vmem:[#allocation3 + $0x180] sm:$0xff] %vm1301, %v1206
    %1351 = vst.msk [vmem:[#allocation3 + $0x188] sm:$0xff] %vm1301, %v1208
    %1352 = vst.msk [vmem:[#allocation3 + $0x190] sm:$0xff] %vm1301, %v1210
    %1353 = vst.msk [vmem:[#allocation3 + $0x198] sm:$0xff] %vm1301, %v1212
    %1354 = vst.msk [vmem:[#allocation3 + $0x1a0] sm:$0xff] %vm1301, %v1214
    %1355 = vst.msk [vmem:[#allocation3 + $0x1a8] sm:$0xff] %vm1301, %v1216
    %1356 = vst.msk [vmem:[#allocation3 + $0x1b0] sm:$0xff] %vm1301, %v1218
    %1357 = vst.msk [vmem:[#allocation3 + $0x1b8] sm:$0xff] %vm1301, %v1220
    %1358 = vst.msk [vmem:[#allocation3 + $0x1c0] sm:$0xff] %vm1301, %v1222
    %1359 = vst.msk [vmem:[#allocation3 + $0x1c8] sm:$0xff] %vm1301, %v1224
    %1360 = vst.msk [vmem:[#allocation3 + $0x1d0] sm:$0xff] %vm1301, %v1226
    %1361 = vst.msk [vmem:[#allocation3 + $0x1d8] sm:$0xff] %vm1301, %v1228
    %1362 = vst.msk [vmem:[#allocation3 + $0x1e0] sm:$0xff] %vm1301, %v1230
    %1363 = vst.msk [vmem:[#allocation3 + $0x1e8] sm:$0xff] %vm1301, %v1232
    %1364 = vst.msk [vmem:[#allocation3 + $0x1f0] sm:$0xff] %vm1301, %v1234
    %1365 = vst.msk [vmem:[#allocation3 + $0x1f8] sm:$0xff] %vm1301, %v1236
    %1370 = vrot.lane.b32.xlu0 %v265, 12
    %v1371 = vpop.permute.xlu0 %1370
    %1372 = vrot.lane.b32.xlu0 %v266, 12
    %v1373 = vpop.permute.xlu0 %1372
    %1374 = vrot.lane.b32.xlu0 %v268, 12
    %v1375 = vpop.permute.xlu0 %1374
    %1376 = vrot.lane.b32.xlu0 %v269, 12
    %v1377 = vpop.permute.xlu0 %1376
    %1378 = vrot.lane.b32.xlu0 %v271, 12
    %v1379 = vpop.permute.xlu0 %1378
    %1380 = vrot.lane.b32.xlu0 %v272, 12
    %v1381 = vpop.permute.xlu0 %1380
    %1382 = vrot.lane.b32.xlu0 %v274, 12
    %v1383 = vpop.permute.xlu0 %1382
    %1384 = vrot.lane.b32.xlu0 %v275, 12
    %v1385 = vpop.permute.xlu0 %1384
    %1386 = vrot.lane.b32.xlu0 %v277, 12
    %v1387 = vpop.permute.xlu0 %1386
    %1388 = vrot.lane.b32.xlu0 %v278, 12
    %v1389 = vpop.permute.xlu0 %1388
    %1390 = vrot.lane.b32.xlu0 %v280, 12
    %v1391 = vpop.permute.xlu0 %1390
    %1392 = vrot.lane.b32.xlu0 %v281, 12
    %v1393 = vpop.permute.xlu0 %1392
    %1394 = vrot.lane.b32.xlu0 %v283, 12
    %v1395 = vpop.permute.xlu0 %1394
    %1396 = vrot.lane.b32.xlu0 %v284, 12
    %v1397 = vpop.permute.xlu0 %1396
    %1398 = vrot.lane.b32.xlu0 %v286, 12
    %v1399 = vpop.permute.xlu0 %1398
    %1400 = vrot.lane.b32.xlu0 %v287, 12
    %v1401 = vpop.permute.xlu0 %1400
    %1402 = vrot.lane.b32.xlu0 %v289, 12
    %v1403 = vpop.permute.xlu0 %1402
    %1404 = vrot.lane.b32.xlu0 %v290, 12
    %v1405 = vpop.permute.xlu0 %1404
    %1406 = vrot.lane.b32.xlu0 %v292, 12
    %v1407 = vpop.permute.xlu0 %1406
    %1408 = vrot.lane.b32.xlu0 %v293, 12
    %v1409 = vpop.permute.xlu0 %1408
    %1410 = vrot.lane.b32.xlu0 %v295, 12
    %v1411 = vpop.permute.xlu0 %1410
    %1412 = vrot.lane.b32.xlu0 %v296, 12
    %v1413 = vpop.permute.xlu0 %1412
    %1414 = vrot.lane.b32.xlu0 %v298, 12
    %v1415 = vpop.permute.xlu0 %1414
    %1416 = vrot.lane.b32.xlu0 %v299, 12
    %v1417 = vpop.permute.xlu0 %1416
    %1418 = vrot.lane.b32.xlu0 %v301, 12
    %v1419 = vpop.permute.xlu0 %1418
    %1420 = vrot.lane.b32.xlu0 %v302, 12
    %v1421 = vpop.permute.xlu0 %1420
    %1422 = vrot.lane.b32.xlu0 %v304, 12
    %v1423 = vpop.permute.xlu0 %1422
    %1424 = vrot.lane.b32.xlu0 %v305, 12
    %v1425 = vpop.permute.xlu0 %1424
    %1426 = vrot.lane.b32.xlu0 %v307, 12
    %v1427 = vpop.permute.xlu0 %1426
    %1428 = vrot.lane.b32.xlu0 %v308, 12
    %v1429 = vpop.permute.xlu0 %1428
    %1430 = vrot.lane.b32.xlu0 %v310, 12
    %v1431 = vpop.permute.xlu0 %1430
    %1432 = vrot.lane.b32.xlu0 %v311, 12
    %v1433 = vpop.permute.xlu0 %1432
    %1434 = vrot.lane.b32.xlu0 %v319, 12
    %v1435 = vpop.permute.xlu0 %1434
    %1436 = vrot.lane.b32.xlu0 %v320, 12
    %v1437 = vpop.permute.xlu0 %1436
    %1438 = vrot.lane.b32.xlu0 %v322, 12
    %v1439 = vpop.permute.xlu0 %1438
    %1440 = vrot.lane.b32.xlu0 %v323, 12
    %v1441 = vpop.permute.xlu0 %1440
    %1442 = vrot.lane.b32.xlu0 %v325, 12
    %v1443 = vpop.permute.xlu0 %1442
    %1444 = vrot.lane.b32.xlu0 %v326, 12
    %v1445 = vpop.permute.xlu0 %1444
    %1446 = vrot.lane.b32.xlu0 %v328, 12
    %v1447 = vpop.permute.xlu0 %1446
    %1448 = vrot.lane.b32.xlu0 %v329, 12
    %v1449 = vpop.permute.xlu0 %1448
    %1450 = vrot.lane.b32.xlu0 %v331, 12
    %v1451 = vpop.permute.xlu0 %1450
    %1452 = vrot.lane.b32.xlu0 %v332, 12
    %v1453 = vpop.permute.xlu0 %1452
    %1454 = vrot.lane.b32.xlu0 %v334, 12
    %v1455 = vpop.permute.xlu0 %1454
    %1456 = vrot.lane.b32.xlu0 %v335, 12
    %v1457 = vpop.permute.xlu0 %1456
    %1458 = vrot.lane.b32.xlu0 %v337, 12
    %v1459 = vpop.permute.xlu0 %1458
    %1460 = vrot.lane.b32.xlu0 %v338, 12
    %v1461 = vpop.permute.xlu0 %1460
    %1462 = vrot.lane.b32.xlu0 %v340, 12
    %v1463 = vpop.permute.xlu0 %1462
    %1464 = vrot.lane.b32.xlu0 %v341, 12
    %v1465 = vpop.permute.xlu0 %1464
    %1466 = vrot.lane.b32.xlu0 %v343, 12
    %v1467 = vpop.permute.xlu0 %1466
    %1468 = vrot.lane.b32.xlu0 %v344, 12
    %v1469 = vpop.permute.xlu0 %1468
    %1470 = vrot.lane.b32.xlu0 %v346, 12
    %v1471 = vpop.permute.xlu0 %1470
    %1472 = vrot.lane.b32.xlu0 %v347, 12
    %v1473 = vpop.permute.xlu0 %1472
    %1474 = vrot.lane.b32.xlu0 %v349, 12
    %v1475 = vpop.permute.xlu0 %1474
    %1476 = vrot.lane.b32.xlu0 %v350, 12
    %v1477 = vpop.permute.xlu0 %1476
    %1478 = vrot.lane.b32.xlu0 %v352, 12
    %v1479 = vpop.permute.xlu0 %1478
    %1480 = vrot.lane.b32.xlu0 %v353, 12
    %v1481 = vpop.permute.xlu0 %1480
    %1482 = vrot.lane.b32.xlu0 %v355, 12
    %v1483 = vpop.permute.xlu0 %1482
    %1484 = vrot.lane.b32.xlu0 %v356, 12
    %v1485 = vpop.permute.xlu0 %1484
    %1486 = vrot.lane.b32.xlu0 %v358, 12
    %v1487 = vpop.permute.xlu0 %1486
    %1488 = vrot.lane.b32.xlu0 %v359, 12
    %v1489 = vpop.permute.xlu0 %1488
    %1490 = vrot.lane.b32.xlu0 %v361, 12
    %v1491 = vpop.permute.xlu0 %1490
    %1492 = vrot.lane.b32.xlu0 %v362, 12
    %v1493 = vpop.permute.xlu0 %1492
    %1494 = vrot.lane.b32.xlu0 %v364, 12
    %v1495 = vpop.permute.xlu0 %1494
    %1496 = vrot.lane.b32.xlu0 %v365, 12
    %v1497 = vpop.permute.xlu0 %1496
    %vm1562 = vcmask 130144
    %1563 = vst.msk [vmem:[#allocation3] sm:$0xff] %vm1562, %v1371
    %1564 = vst.msk [vmem:[#allocation3 + $0x8] sm:$0xff] %vm1562, %v1373
    %1565 = vst.msk [vmem:[#allocation3 + $0x10] sm:$0xff] %vm1562, %v1375
    %1566 = vst.msk [vmem:[#allocation3 + $0x18] sm:$0xff] %vm1562, %v1377
    %1567 = vst.msk [vmem:[#allocation3 + $0x20] sm:$0xff] %vm1562, %v1379
    %1568 = vst.msk [vmem:[#allocation3 + $0x28] sm:$0xff] %vm1562, %v1381
    %1569 = vst.msk [vmem:[#allocation3 + $0x30] sm:$0xff] %vm1562, %v1383
    %1570 = vst.msk [vmem:[#allocation3 + $0x38] sm:$0xff] %vm1562, %v1385
    %1571 = vst.msk [vmem:[#allocation3 + $0x40] sm:$0xff] %vm1562, %v1387
    %1572 = vst.msk [vmem:[#allocation3 + $0x48] sm:$0xff] %vm1562, %v1389
    %1573 = vst.msk [vmem:[#allocation3 + $0x50] sm:$0xff] %vm1562, %v1391
    %1574 = vst.msk [vmem:[#allocation3 + $0x58] sm:$0xff] %vm1562, %v1393
    %1575 = vst.msk [vmem:[#allocation3 + $0x60] sm:$0xff] %vm1562, %v1395
    %1576 = vst.msk [vmem:[#allocation3 + $0x68] sm:$0xff] %vm1562, %v1397
    %1577 = vst.msk [vmem:[#allocation3 + $0x70] sm:$0xff] %vm1562, %v1399
    %1578 = vst.msk [vmem:[#allocation3 + $0x78] sm:$0xff] %vm1562, %v1401
    %1579 = vst.msk [vmem:[#allocation3 + $0x80] sm:$0xff] %vm1562, %v1403
    %1580 = vst.msk [vmem:[#allocation3 + $0x88] sm:$0xff] %vm1562, %v1405
    %1581 = vst.msk [vmem:[#allocation3 + $0x90] sm:$0xff] %vm1562, %v1407
    %1582 = vst.msk [vmem:[#allocation3 + $0x98] sm:$0xff] %vm1562, %v1409
    %1583 = vst.msk [vmem:[#allocation3 + $0xa0] sm:$0xff] %vm1562, %v1411
    %1584 = vst.msk [vmem:[#allocation3 + $0xa8] sm:$0xff] %vm1562, %v1413
    %1585 = vst.msk [vmem:[#allocation3 + $0xb0] sm:$0xff] %vm1562, %v1415
    %1586 = vst.msk [vmem:[#allocation3 + $0xb8] sm:$0xff] %vm1562, %v1417
    %1587 = vst.msk [vmem:[#allocation3 + $0xc0] sm:$0xff] %vm1562, %v1419
    %1588 = vst.msk [vmem:[#allocation3 + $0xc8] sm:$0xff] %vm1562, %v1421
    %1589 = vst.msk [vmem:[#allocation3 + $0xd0] sm:$0xff] %vm1562, %v1423
    %1590 = vst.msk [vmem:[#allocation3 + $0xd8] sm:$0xff] %vm1562, %v1425
    %1591 = vst.msk [vmem:[#allocation3 + $0xe0] sm:$0xff] %vm1562, %v1427
    %1592 = vst.msk [vmem:[#allocation3 + $0xe8] sm:$0xff] %vm1562, %v1429
    %1593 = vst.msk [vmem:[#allocation3 + $0xf0] sm:$0xff] %vm1562, %v1431
    %1594 = vst.msk [vmem:[#allocation3 + $0xf8] sm:$0xff] %vm1562, %v1433
    %1595 = vst.msk [vmem:[#allocation3 + $0x100] sm:$0xff] %vm1562, %v1435
    %1596 = vst.msk [vmem:[#allocation3 + $0x108] sm:$0xff] %vm1562, %v1437
    %1597 = vst.msk [vmem:[#allocation3 + $0x110] sm:$0xff] %vm1562, %v1439
    %1598 = vst.msk [vmem:[#allocation3 + $0x118] sm:$0xff] %vm1562, %v1441
    %1599 = vst.msk [vmem:[#allocation3 + $0x120] sm:$0xff] %vm1562, %v1443
    %1600 = vst.msk [vmem:[#allocation3 + $0x128] sm:$0xff] %vm1562, %v1445
    %1601 = vst.msk [vmem:[#allocation3 + $0x130] sm:$0xff] %vm1562, %v1447
    %1602 = vst.msk [vmem:[#allocation3 + $0x138] sm:$0xff] %vm1562, %v1449
    %1603 = vst.msk [vmem:[#allocation3 + $0x140] sm:$0xff] %vm1562, %v1451
    %1604 = vst.msk [vmem:[#allocation3 + $0x148] sm:$0xff] %vm1562, %v1453
    %1605 = vst.msk [vmem:[#allocation3 + $0x150] sm:$0xff] %vm1562, %v1455
    %1606 = vst.msk [vmem:[#allocation3 + $0x158] sm:$0xff] %vm1562, %v1457
    %1607 = vst.msk [vmem:[#allocation3 + $0x160] sm:$0xff] %vm1562, %v1459
    %1608 = vst.msk [vmem:[#allocation3 + $0x168] sm:$0xff] %vm1562, %v1461
    %1609 = vst.msk [vmem:[#allocation3 + $0x170] sm:$0xff] %vm1562, %v1463
    %1610 = vst.msk [vmem:[#allocation3 + $0x178] sm:$0xff] %vm1562, %v1465
    %1611 = vst.msk [vmem:[#allocation3 + $0x180] sm:$0xff] %vm1562, %v1467
    %1612 = vst.msk [vmem:[#allocation3 + $0x188] sm:$0xff] %vm1562, %v1469
    %1613 = vst.msk [vmem:[#allocation3 + $0x190] sm:$0xff] %vm1562, %v1471
    %1614 = vst.msk [vmem:[#allocation3 + $0x198] sm:$0xff] %vm1562, %v1473
    %1615 = vst.msk [vmem:[#allocation3 + $0x1a0] sm:$0xff] %vm1562, %v1475
    %1616 = vst.msk [vmem:[#allocation3 + $0x1a8] sm:$0xff] %vm1562, %v1477
    %1617 = vst.msk [vmem:[#allocation3 + $0x1b0] sm:$0xff] %vm1562, %v1479
    %1618 = vst.msk [vmem:[#allocation3 + $0x1b8] sm:$0xff] %vm1562, %v1481
    %1619 = vst.msk [vmem:[#allocation3 + $0x1c0] sm:$0xff] %vm1562, %v1483
    %1620 = vst.msk [vmem:[#allocation3 + $0x1c8] sm:$0xff] %vm1562, %v1485
    %1621 = vst.msk [vmem:[#allocation3 + $0x1d0] sm:$0xff] %vm1562, %v1487
    %1622 = vst.msk [vmem:[#allocation3 + $0x1d8] sm:$0xff] %vm1562, %v1489
    %1623 = vst.msk [vmem:[#allocation3 + $0x1e0] sm:$0xff] %vm1562, %v1491
    %1624 = vst.msk [vmem:[#allocation3 + $0x1e8] sm:$0xff] %vm1562, %v1493
    %1625 = vst.msk [vmem:[#allocation3 + $0x1f0] sm:$0xff] %vm1562, %v1495
    %1626 = vst.msk [vmem:[#allocation3 + $0x1f8] sm:$0xff] %vm1562, %v1497
    %v1629 = vrot.slane %v310, 1
    %v1630 = vrot.slane %v311, 1
    %v1631 = vsel %vm530, %v1629, %v1630
    %v1632 = vrot.slane %v312, 1
    %v1633 = vsel %vm530, %v1630, %v1632
    %v1634 = vrot.slane %v364, 1
    %v1635 = vrot.slane %v365, 1
    %v1636 = vsel %vm530, %v1634, %v1635
    %v1637 = vrot.slane %v366, 1
    %v1638 = vsel %vm530, %v1635, %v1637
    %1639 = vrot.lane.b32.xlu0 %v538, 16
    %v1640 = vpop.permute.xlu0 %1639
    %1641 = vrot.lane.b32.xlu0 %v540, 16
    %v1642 = vpop.permute.xlu0 %1641
    %1643 = vrot.lane.b32.xlu0 %v543, 16
    %v1644 = vpop.permute.xlu0 %1643
    %1645 = vrot.lane.b32.xlu0 %v545, 16
    %v1646 = vpop.permute.xlu0 %1645
    %1647 = vrot.lane.b32.xlu0 %v548, 16
    %v1648 = vpop.permute.xlu0 %1647
    %1649 = vrot.lane.b32.xlu0 %v550, 16
    %v1650 = vpop.permute.xlu0 %1649
    %1651 = vrot.lane.b32.xlu0 %v553, 16
    %v1652 = vpop.permute.xlu0 %1651
    %1653 = vrot.lane.b32.xlu0 %v555, 16
    %v1654 = vpop.permute.xlu0 %1653
    %1655 = vrot.lane.b32.xlu0 %v558, 16
    %v1656 = vpop.permute.xlu0 %1655
    %1657 = vrot.lane.b32.xlu0 %v560, 16
    %v1658 = vpop.permute.xlu0 %1657
    %1659 = vrot.lane.b32.xlu0 %v563, 16
    %v1660 = vpop.permute.xlu0 %1659
    %1661 = vrot.lane.b32.xlu0 %v565, 16
    %v1662 = vpop.permute.xlu0 %1661
    %1663 = vrot.lane.b32.xlu0 %v568, 16
    %v1664 = vpop.permute.xlu0 %1663
    %1665 = vrot.lane.b32.xlu0 %v570, 16
    %v1666 = vpop.permute.xlu0 %1665
    %1667 = vrot.lane.b32.xlu0 %v573, 16
    %v1668 = vpop.permute.xlu0 %1667
    %1669 = vrot.lane.b32.xlu0 %v575, 16
    %v1670 = vpop.permute.xlu0 %1669
    %1671 = vrot.lane.b32.xlu0 %v578, 16
    %v1672 = vpop.permute.xlu0 %1671
    %1673 = vrot.lane.b32.xlu0 %v580, 16
    %v1674 = vpop.permute.xlu0 %1673
    %1675 = vrot.lane.b32.xlu0 %v583, 16
    %v1676 = vpop.permute.xlu0 %1675
    %1677 = vrot.lane.b32.xlu0 %v585, 16
    %v1678 = vpop.permute.xlu0 %1677
    %1679 = vrot.lane.b32.xlu0 %v588, 16
    %v1680 = vpop.permute.xlu0 %1679
    %1681 = vrot.lane.b32.xlu0 %v590, 16
    %v1682 = vpop.permute.xlu0 %1681
    %1683 = vrot.lane.b32.xlu0 %v593, 16
    %v1684 = vpop.permute.xlu0 %1683
    %1685 = vrot.lane.b32.xlu0 %v595, 16
    %v1686 = vpop.permute.xlu0 %1685
    %1687 = vrot.lane.b32.xlu0 %v598, 16
    %v1688 = vpop.permute.xlu0 %1687
    %1689 = vrot.lane.b32.xlu0 %v600, 16
    %v1690 = vpop.permute.xlu0 %1689
    %1691 = vrot.lane.b32.xlu0 %v603, 16
    %v1692 = vpop.permute.xlu0 %1691
    %1693 = vrot.lane.b32.xlu0 %v605, 16
    %v1694 = vpop.permute.xlu0 %1693
    %1695 = vrot.lane.b32.xlu0 %v608, 16
    %v1696 = vpop.permute.xlu0 %1695
    %1697 = vrot.lane.b32.xlu0 %v610, 16
    %v1698 = vpop.permute.xlu0 %1697
    %1699 = vrot.lane.b32.xlu0 %v1631, 16
    %v1700 = vpop.permute.xlu0 %1699
    %1701 = vrot.lane.b32.xlu0 %v1633, 16
    %v1702 = vpop.permute.xlu0 %1701
    %1703 = vrot.lane.b32.xlu0 %v618, 16
    %v1704 = vpop.permute.xlu0 %1703
    %1705 = vrot.lane.b32.xlu0 %v620, 16
    %v1706 = vpop.permute.xlu0 %1705
    %1707 = vrot.lane.b32.xlu0 %v623, 16
    %v1708 = vpop.permute.xlu0 %1707
    %1709 = vrot.lane.b32.xlu0 %v625, 16
    %v1710 = vpop.permute.xlu0 %1709
    %1711 = vrot.lane.b32.xlu0 %v628, 16
    %v1712 = vpop.permute.xlu0 %1711
    %1713 = vrot.lane.b32.xlu0 %v630, 16
    %v1714 = vpop.permute.xlu0 %1713
    %1715 = vrot.lane.b32.xlu0 %v633, 16
    %v1716 = vpop.permute.xlu0 %1715
    %1717 = vrot.lane.b32.xlu0 %v635, 16
    %v1718 = vpop.permute.xlu0 %1717
    %1719 = vrot.lane.b32.xlu0 %v638, 16
    %v1720 = vpop.permute.xlu0 %1719
    %1721 = vrot.lane.b32.xlu0 %v640, 16
    %v1722 = vpop.permute.xlu0 %1721
    %1723 = vrot.lane.b32.xlu0 %v643, 16
    %v1724 = vpop.permute.xlu0 %1723
    %1725 = vrot.lane.b32.xlu0 %v645, 16
    %v1726 = vpop.permute.xlu0 %1725
    %1727 = vrot.lane.b32.xlu0 %v648, 16
    %v1728 = vpop.permute.xlu0 %1727
    %1729 = vrot.lane.b32.xlu0 %v650, 16
    %v1730 = vpop.permute.xlu0 %1729
    %1731 = vrot.lane.b32.xlu0 %v653, 16
    %v1732 = vpop.permute.xlu0 %1731
    %1733 = vrot.lane.b32.xlu0 %v655, 16
    %v1734 = vpop.permute.xlu0 %1733
    %1735 = vrot.lane.b32.xlu0 %v658, 16
    %v1736 = vpop.permute.xlu0 %1735
    %1737 = vrot.lane.b32.xlu0 %v660, 16
    %v1738 = vpop.permute.xlu0 %1737
    %1739 = vrot.lane.b32.xlu0 %v663, 16
    %v1740 = vpop.permute.xlu0 %1739
    %1741 = vrot.lane.b32.xlu0 %v665, 16
    %v1742 = vpop.permute.xlu0 %1741
    %1743 = vrot.lane.b32.xlu0 %v668, 16
    %v1744 = vpop.permute.xlu0 %1743
    %1745 = vrot.lane.b32.xlu0 %v670, 16
    %v1746 = vpop.permute.xlu0 %1745
    %1747 = vrot.lane.b32.xlu0 %v673, 16
    %v1748 = vpop.permute.xlu0 %1747
    %1749 = vrot.lane.b32.xlu0 %v675, 16
    %v1750 = vpop.permute.xlu0 %1749
    %1751 = vrot.lane.b32.xlu0 %v678, 16
    %v1752 = vpop.permute.xlu0 %1751
    %1753 = vrot.lane.b32.xlu0 %v680, 16
    %v1754 = vpop.permute.xlu0 %1753
    %1755 = vrot.lane.b32.xlu0 %v683, 16
    %v1756 = vpop.permute.xlu0 %1755
    %1757 = vrot.lane.b32.xlu0 %v685, 16
    %v1758 = vpop.permute.xlu0 %1757
    %1759 = vrot.lane.b32.xlu0 %v688, 16
    %v1760 = vpop.permute.xlu0 %1759
    %1761 = vrot.lane.b32.xlu0 %v690, 16
    %v1762 = vpop.permute.xlu0 %1761
    %1763 = vrot.lane.b32.xlu0 %v1636, 16
    %v1764 = vpop.permute.xlu0 %1763
    %1765 = vrot.lane.b32.xlu0 %v1638, 16
    %v1766 = vpop.permute.xlu0 %1765
    %vm1831 = vcmask 162944
    %1832 = vst.msk [vmem:[#allocation3] sm:$0xff] %vm1831, %v1640
    %1833 = vst.msk [vmem:[#allocation3 + $0x8] sm:$0xff] %vm1831, %v1642
    %1834 = vst.msk [vmem:[#allocation3 + $0x10] sm:$0xff] %vm1831, %v1644
    %1835 = vst.msk [vmem:[#allocation3 + $0x18] sm:$0xff] %vm1831, %v1646
    %1836 = vst.msk [vmem:[#allocation3 + $0x20] sm:$0xff] %vm1831, %v1648
    %1837 = vst.msk [vmem:[#allocation3 + $0x28] sm:$0xff] %vm1831, %v1650
    %1838 = vst.msk [vmem:[#allocation3 + $0x30] sm:$0xff] %vm1831, %v1652
    %1839 = vst.msk [vmem:[#allocation3 + $0x38] sm:$0xff] %vm1831, %v1654
    %1840 = vst.msk [vmem:[#allocation3 + $0x40] sm:$0xff] %vm1831, %v1656
    %1841 = vst.msk [vmem:[#allocation3 + $0x48] sm:$0xff] %vm1831, %v1658
    %1842 = vst.msk [vmem:[#allocation3 + $0x50] sm:$0xff] %vm1831, %v1660
    %1843 = vst.msk [vmem:[#allocation3 + $0x58] sm:$0xff] %vm1831, %v1662
    %1844 = vst.msk [vmem:[#allocation3 + $0x60] sm:$0xff] %vm1831, %v1664
    %1845 = vst.msk [vmem:[#allocation3 + $0x68] sm:$0xff] %vm1831, %v1666
    %1846 = vst.msk [vmem:[#allocation3 + $0x70] sm:$0xff] %vm1831, %v1668
    %1847 = vst.msk [vmem:[#allocation3 + $0x78] sm:$0xff] %vm1831, %v1670
    %1848 = vst.msk [vmem:[#allocation3 + $0x80] sm:$0xff] %vm1831, %v1672
    %1849 = vst.msk [vmem:[#allocation3 + $0x88] sm:$0xff] %vm1831, %v1674
    %1850 = vst.msk [vmem:[#allocation3 + $0x90] sm:$0xff] %vm1831, %v1676
    %1851 = vst.msk [vmem:[#allocation3 + $0x98] sm:$0xff] %vm1831, %v1678
    %1852 = vst.msk [vmem:[#allocation3 + $0xa0] sm:$0xff] %vm1831, %v1680
    %1853 = vst.msk [vmem:[#allocation3 + $0xa8] sm:$0xff] %vm1831, %v1682
    %1854 = vst.msk [vmem:[#allocation3 + $0xb0] sm:$0xff] %vm1831, %v1684
    %1855 = vst.msk [vmem:[#allocation3 + $0xb8] sm:$0xff] %vm1831, %v1686
    %1856 = vst.msk [vmem:[#allocation3 + $0xc0] sm:$0xff] %vm1831, %v1688
    %1857 = vst.msk [vmem:[#allocation3 + $0xc8] sm:$0xff] %vm1831, %v1690
    %1858 = vst.msk [vmem:[#allocation3 + $0xd0] sm:$0xff] %vm1831, %v1692
    %1859 = vst.msk [vmem:[#allocation3 + $0xd8] sm:$0xff] %vm1831, %v1694
    %1860 = vst.msk [vmem:[#allocation3 + $0xe0] sm:$0xff] %vm1831, %v1696
    %1861 = vst.msk [vmem:[#allocation3 + $0xe8] sm:$0xff] %vm1831, %v1698
    %1862 = vst.msk [vmem:[#allocation3 + $0xf0] sm:$0xff] %vm1831, %v1700
    %1863 = vst.msk [vmem:[#allocation3 + $0xf8] sm:$0xff] %vm1831, %v1702
    %1864 = vst.msk [vmem:[#allocation3 + $0x100] sm:$0xff] %vm1831, %v1704
    %1865 = vst.msk [vmem:[#allocation3 + $0x108] sm:$0xff] %vm1831, %v1706
    %1866 = vst.msk [vmem:[#allocation3 + $0x110] sm:$0xff] %vm1831, %v1708
    %1867 = vst.msk [vmem:[#allocation3 + $0x118] sm:$0xff] %vm1831, %v1710
    %1868 = vst.msk [vmem:[#allocation3 + $0x120] sm:$0xff] %vm1831, %v1712
    %1869 = vst.msk [vmem:[#allocation3 + $0x128] sm:$0xff] %vm1831, %v1714
    %1870 = vst.msk [vmem:[#allocation3 + $0x130] sm:$0xff] %vm1831, %v1716
    %1871 = vst.msk [vmem:[#allocation3 + $0x138] sm:$0xff] %vm1831, %v1718
    %1872 = vst.msk [vmem:[#allocation3 + $0x140] sm:$0xff] %vm1831, %v1720
    %1873 = vst.msk [vmem:[#allocation3 + $0x148] sm:$0xff] %vm1831, %v1722
    %1874 = vst.msk [vmem:[#allocation3 + $0x150] sm:$0xff] %vm1831, %v1724
    %1875 = vst.msk [vmem:[#allocation3 + $0x158] sm:$0xff] %vm1831, %v1726
    %1876 = vst.msk [vmem:[#allocation3 + $0x160] sm:$0xff] %vm1831, %v1728
    %1877 = vst.msk [vmem:[#allocation3 + $0x168] sm:$0xff] %vm1831, %v1730
    %1878 = vst.msk [vmem:[#allocation3 + $0x170] sm:$0xff] %vm1831, %v1732
    %1879 = vst.msk [vmem:[#allocation3 + $0x178] sm:$0xff] %vm1831, %v1734
    %1880 = vst.msk [vmem:[#allocation3 + $0x180] sm:$0xff] %vm1831, %v1736
    %1881 = vst.msk [vmem:[#allocation3 + $0x188] sm:$0xff] %vm1831, %v1738
    %1882 = vst.msk [vmem:[#allocation3 + $0x190] sm:$0xff] %vm1831, %v1740
    %1883 = vst.msk [vmem:[#allocation3 + $0x198] sm:$0xff] %vm1831, %v1742
    %1884 = vst.msk [vmem:[#allocation3 + $0x1a0] sm:$0xff] %vm1831, %v1744
    %1885 = vst.msk [vmem:[#allocation3 + $0x1a8] sm:$0xff] %vm1831, %v1746
    %1886 = vst.msk [vmem:[#allocation3 + $0x1b0] sm:$0xff] %vm1831, %v1748
    %1887 = vst.msk [vmem:[#allocation3 + $0x1b8] sm:$0xff] %vm1831, %v1750
    %1888 = vst.msk [vmem:[#allocation3 + $0x1c0] sm:$0xff] %vm1831, %v1752
    %1889 = vst.msk [vmem:[#allocation3 + $0x1c8] sm:$0xff] %vm1831, %v1754
    %1890 = vst.msk [vmem:[#allocation3 + $0x1d0] sm:$0xff] %vm1831, %v1756
    %1891 = vst.msk [vmem:[#allocation3 + $0x1d8] sm:$0xff] %vm1831, %v1758
    %1892 = vst.msk [vmem:[#allocation3 + $0x1e0] sm:$0xff] %vm1831, %v1760
    %1893 = vst.msk [vmem:[#allocation3 + $0x1e8] sm:$0xff] %vm1831, %v1762
    %1894 = vst.msk [vmem:[#allocation3 + $0x1f0] sm:$0xff] %vm1831, %v1764
    %1895 = vst.msk [vmem:[#allocation3 + $0x1f8] sm:$0xff] %vm1831, %v1766
    %v1896 = vrot.slane %v310, 2
    %v1897 = vrot.slane %v311, 2
    %v1898 = vsel %vm948, %v1896, %v1897
    %v1899 = vrot.slane %v312, 2
    %v1900 = vsel %vm948, %v1897, %v1899
    %v1901 = vrot.slane %v364, 2
    %v1902 = vrot.slane %v365, 2
    %v1903 = vsel %vm948, %v1901, %v1902
    %v1904 = vrot.slane %v366, 2
    %v1905 = vsel %vm948, %v1902, %v1904
    %1906 = vrot.lane.b32.xlu0 %v956, 20
    %v1907 = vpop.permute.xlu0 %1906
    %1908 = vrot.lane.b32.xlu0 %v958, 20
    %v1909 = vpop.permute.xlu0 %1908
    %1910 = vrot.lane.b32.xlu0 %v961, 20
    %v1911 = vpop.permute.xlu0 %1910
    %1912 = vrot.lane.b32.xlu0 %v963, 20
    %v1913 = vpop.permute.xlu0 %1912
    %1914 = vrot.lane.b32.xlu0 %v966, 20
    %v1915 = vpop.permute.xlu0 %1914
    %1916 = vrot.lane.b32.xlu0 %v968, 20
    %v1917 = vpop.permute.xlu0 %1916
    %1918 = vrot.lane.b32.xlu0 %v971, 20
    %v1919 = vpop.permute.xlu0 %1918
    %1920 = vrot.lane.b32.xlu0 %v973, 20
    %v1921 = vpop.permute.xlu0 %1920
    %1922 = vrot.lane.b32.xlu0 %v976, 20
    %v1923 = vpop.permute.xlu0 %1922
    %1924 = vrot.lane.b32.xlu0 %v978, 20
    %v1925 = vpop.permute.xlu0 %1924
    %1926 = vrot.lane.b32.xlu0 %v981, 20
    %v1927 = vpop.permute.xlu0 %1926
    %1928 = vrot.lane.b32.xlu0 %v983, 20
    %v1929 = vpop.permute.xlu0 %1928
    %1930 = vrot.lane.b32.xlu0 %v986, 20
    %v1931 = vpop.permute.xlu0 %1930
    %1932 = vrot.lane.b32.xlu0 %v988, 20
    %v1933 = vpop.permute.xlu0 %1932
    %1934 = vrot.lane.b32.xlu0 %v991, 20
    %v1935 = vpop.permute.xlu0 %1934
    %1936 = vrot.lane.b32.xlu0 %v993, 20
    %v1937 = vpop.permute.xlu0 %1936
    %1938 = vrot.lane.b32.xlu0 %v996, 20
    %v1939 = vpop.permute.xlu0 %1938
    %1940 = vrot.lane.b32.xlu0 %v998, 20
    %v1941 = vpop.permute.xlu0 %1940
    %1942 = vrot.lane.b32.xlu0 %v1001, 20
    %v1943 = vpop.permute.xlu0 %1942
    %1944 = vrot.lane.b32.xlu0 %v1003, 20
    %v1945 = vpop.permute.xlu0 %1944
    %1946 = vrot.lane.b32.xlu0 %v1006, 20
    %v1947 = vpop.permute.xlu0 %1946
    %1948 = vrot.lane.b32.xlu0 %v1008, 20
    %v1949 = vpop.permute.xlu0 %1948
    %1950 = vrot.lane.b32.xlu0 %v1011, 20
    %v1951 = vpop.permute.xlu0 %1950
    %1952 = vrot.lane.b32.xlu0 %v1013, 20
    %v1953 = vpop.permute.xlu0 %1952
    %1954 = vrot.lane.b32.xlu0 %v1016, 20
    %v1955 = vpop.permute.xlu0 %1954
    %1956 = vrot.lane.b32.xlu0 %v1018, 20
    %v1957 = vpop.permute.xlu0 %1956
    %1958 = vrot.lane.b32.xlu0 %v1021, 20
    %v1959 = vpop.permute.xlu0 %1958
    %1960 = vrot.lane.b32.xlu0 %v1023, 20
    %v1961 = vpop.permute.xlu0 %1960
    %1962 = vrot.lane.b32.xlu0 %v1026, 20
    %v1963 = vpop.permute.xlu0 %1962
    %1964 = vrot.lane.b32.xlu0 %v1028, 20
    %v1965 = vpop.permute.xlu0 %1964
    %1966 = vrot.lane.b32.xlu0 %v1898, 20
    %v1967 = vpop.permute.xlu0 %1966
    %1968 = vrot.lane.b32.xlu0 %v1900, 20
    %v1969 = vpop.permute.xlu0 %1968
    %1970 = vrot.lane.b32.xlu0 %v1036, 20
    %v1971 = vpop.permute.xlu0 %1970
    %1972 = vrot.lane.b32.xlu0 %v1038, 20
    %v1973 = vpop.permute.xlu0 %1972
    %1974 = vrot.lane.b32.xlu0 %v1041, 20
    %v1975 = vpop.permute.xlu0 %1974
    %1976 = vrot.lane.b32.xlu0 %v1043, 20
    %v1977 = vpop.permute.xlu0 %1976
    %1978 = vrot.lane.b32.xlu0 %v1046, 20
    %v1979 = vpop.permute.xlu0 %1978
    %1980 = vrot.lane.b32.xlu0 %v1048, 20
    %v1981 = vpop.permute.xlu0 %1980
    %1982 = vrot.lane.b32.xlu0 %v1051, 20
    %v1983 = vpop.permute.xlu0 %1982
    %1984 = vrot.lane.b32.xlu0 %v1053, 20
    %v1985 = vpop.permute.xlu0 %1984
    %1986 = vrot.lane.b32.xlu0 %v1056, 20
    %v1987 = vpop.permute.xlu0 %1986
    %1988 = vrot.lane.b32.xlu0 %v1058, 20
    %v1989 = vpop.permute.xlu0 %1988
    %1990 = vrot.lane.b32.xlu0 %v1061, 20
    %v1991 = vpop.permute.xlu0 %1990
    %1992 = vrot.lane.b32.xlu0 %v1063, 20
    %v1993 = vpop.permute.xlu0 %1992
    %1994 = vrot.lane.b32.xlu0 %v1066, 20
    %v1995 = vpop.permute.xlu0 %1994
    %1996 = vrot.lane.b32.xlu0 %v1068, 20
    %v1997 = vpop.permute.xlu0 %1996
    %1998 = vrot.lane.b32.xlu0 %v1071, 20
    %v1999 = vpop.permute.xlu0 %1998
    %2000 = vrot.lane.b32.xlu0 %v1073, 20
    %v2001 = vpop.permute.xlu0 %2000
    %2002 = vrot.lane.b32.xlu0 %v1076, 20
    %v2003 = vpop.permute.xlu0 %2002
    %2004 = vrot.lane.b32.xlu0 %v1078, 20
    %v2005 = vpop.permute.xlu0 %2004
    %2006 = vrot.lane.b32.xlu0 %v1081, 20
    %v2007 = vpop.permute.xlu0 %2006
    %2008 = vrot.lane.b32.xlu0 %v1083, 20
    %v2009 = vpop.permute.xlu0 %2008
    %2010 = vrot.lane.b32.xlu0 %v1086, 20
    %v2011 = vpop.permute.xlu0 %2010
    %2012 = vrot.lane.b32.xlu0 %v1088, 20
    %v2013 = vpop.permute.xlu0 %2012
    %2014 = vrot.lane.b32.xlu0 %v1091, 20
    %v2015 = vpop.permute.xlu0 %2014
    %2016 = vrot.lane.b32.xlu0 %v1093, 20
    %v2017 = vpop.permute.xlu0 %2016
    %2018 = vrot.lane.b32.xlu0 %v1096, 20
    %v2019 = vpop.permute.xlu0 %2018
    %2020 = vrot.lane.b32.xlu0 %v1098, 20
    %v2021 = vpop.permute.xlu0 %2020
    %2022 = vrot.lane.b32.xlu0 %v1101, 20
    %v2023 = vpop.permute.xlu0 %2022
    %2024 = vrot.lane.b32.xlu0 %v1103, 20
    %v2025 = vpop.permute.xlu0 %2024
    %2026 = vrot.lane.b32.xlu0 %v1106, 20
    %v2027 = vpop.permute.xlu0 %2026
    %2028 = vrot.lane.b32.xlu0 %v1108, 20
    %v2029 = vpop.permute.xlu0 %2028
    %2030 = vrot.lane.b32.xlu0 %v1903, 20
    %v2031 = vpop.permute.xlu0 %2030
    %2032 = vrot.lane.b32.xlu0 %v1905, 20
    %v2033 = vpop.permute.xlu0 %2032
    %vm2098 = vcmask 195744
    %2099 = vst.msk [vmem:[#allocation3] sm:$0xff] %vm2098, %v1907
    %2100 = vst.msk [vmem:[#allocation3 + $0x8] sm:$0xff] %vm2098, %v1909
    %2101 = vst.msk [vmem:[#allocation3 + $0x10] sm:$0xff] %vm2098, %v1911
    %2102 = vst.msk [vmem:[#allocation3 + $0x18] sm:$0xff] %vm2098, %v1913
    %2103 = vst.msk [vmem:[#allocation3 + $0x20] sm:$0xff] %vm2098, %v1915
    %2104 = vst.msk [vmem:[#allocation3 + $0x28] sm:$0xff] %vm2098, %v1917
    %2105 = vst.msk [vmem:[#allocation3 + $0x30] sm:$0xff] %vm2098, %v1919
    %2106 = vst.msk [vmem:[#allocation3 + $0x38] sm:$0xff] %vm2098, %v1921
    %2107 = vst.msk [vmem:[#allocation3 + $0x40] sm:$0xff] %vm2098, %v1923
    %2108 = vst.msk [vmem:[#allocation3 + $0x48] sm:$0xff] %vm2098, %v1925
    %2109 = vst.msk [vmem:[#allocation3 + $0x50] sm:$0xff] %vm2098, %v1927
    %2110 = vst.msk [vmem:[#allocation3 + $0x58] sm:$0xff] %vm2098, %v1929
    %2111 = vst.msk [vmem:[#allocation3 + $0x60] sm:$0xff] %vm2098, %v1931
    %2112 = vst.msk [vmem:[#allocation3 + $0x68] sm:$0xff] %vm2098, %v1933
    %2113 = vst.msk [vmem:[#allocation3 + $0x70] sm:$0xff] %vm2098, %v1935
    %2114 = vst.msk [vmem:[#allocation3 + $0x78] sm:$0xff] %vm2098, %v1937
    %2115 = vst.msk [vmem:[#allocation3 + $0x80] sm:$0xff] %vm2098, %v1939
    %2116 = vst.msk [vmem:[#allocation3 + $0x88] sm:$0xff] %vm2098, %v1941
    %2117 = vst.msk [vmem:[#allocation3 + $0x90] sm:$0xff] %vm2098, %v1943
    %2118 = vst.msk [vmem:[#allocation3 + $0x98] sm:$0xff] %vm2098, %v1945
    %2119 = vst.msk [vmem:[#allocation3 + $0xa0] sm:$0xff] %vm2098, %v1947
    %2120 = vst.msk [vmem:[#allocation3 + $0xa8] sm:$0xff] %vm2098, %v1949
    %2121 = vst.msk [vmem:[#allocation3 + $0xb0] sm:$0xff] %vm2098, %v1951
    %2122 = vst.msk [vmem:[#allocation3 + $0xb8] sm:$0xff] %vm2098, %v1953
    %2123 = vst.msk [vmem:[#allocation3 + $0xc0] sm:$0xff] %vm2098, %v1955
    %2124 = vst.msk [vmem:[#allocation3 + $0xc8] sm:$0xff] %vm2098, %v1957
    %2125 = vst.msk [vmem:[#allocation3 + $0xd0] sm:$0xff] %vm2098, %v1959
    %2126 = vst.msk [vmem:[#allocation3 + $0xd8] sm:$0xff] %vm2098, %v1961
    %2127 = vst.msk [vmem:[#allocation3 + $0xe0] sm:$0xff] %vm2098, %v1963
    %2128 = vst.msk [vmem:[#allocation3 + $0xe8] sm:$0xff] %vm2098, %v1965
    %2129 = vst.msk [vmem:[#allocation3 + $0xf0] sm:$0xff] %vm2098, %v1967
    %2130 = vst.msk [vmem:[#allocation3 + $0xf8] sm:$0xff] %vm2098, %v1969
    %2131 = vst.msk [vmem:[#allocation3 + $0x100] sm:$0xff] %vm2098, %v1971
    %2132 = vst.msk [vmem:[#allocation3 + $0x108] sm:$0xff] %vm2098, %v1973
    %2133 = vst.msk [vmem:[#allocation3 + $0x110] sm:$0xff] %vm2098, %v1975
    %2134 = vst.msk [vmem:[#allocation3 + $0x118] sm:$0xff] %vm2098, %v1977
    %2135 = vst.msk [vmem:[#allocation3 + $0x120] sm:$0xff] %vm2098, %v1979
    %2136 = vst.msk [vmem:[#allocation3 + $0x128] sm:$0xff] %vm2098, %v1981
    %2137 = vst.msk [vmem:[#allocation3 + $0x130] sm:$0xff] %vm2098, %v1983
    %2138 = vst.msk [vmem:[#allocation3 + $0x138] sm:$0xff] %vm2098, %v1985
    %2139 = vst.msk [vmem:[#allocation3 + $0x140] sm:$0xff] %vm2098, %v1987
    %2140 = vst.msk [vmem:[#allocation3 + $0x148] sm:$0xff] %vm2098, %v1989
    %2141 = vst.msk [vmem:[#allocation3 + $0x150] sm:$0xff] %vm2098, %v1991
    %2142 = vst.msk [vmem:[#allocation3 + $0x158] sm:$0xff] %vm2098, %v1993
    %2143 = vst.msk [vmem:[#allocation3 + $0x160] sm:$0xff] %vm2098, %v1995
    %2144 = vst.msk [vmem:[#allocation3 + $0x168] sm:$0xff] %vm2098, %v1997
    %2145 = vst.msk [vmem:[#allocation3 + $0x170] sm:$0xff] %vm2098, %v1999
    %2146 = vst.msk [vmem:[#allocation3 + $0x178] sm:$0xff] %vm2098, %v2001
    %2147 = vst.msk [vmem:[#allocation3 + $0x180] sm:$0xff] %vm2098, %v2003
    %2148 = vst.msk [vmem:[#allocation3 + $0x188] sm:$0xff] %vm2098, %v2005
    %2149 = vst.msk [vmem:[#allocation3 + $0x190] sm:$0xff] %vm2098, %v2007
    %2150 = vst.msk [vmem:[#allocation3 + $0x198] sm:$0xff] %vm2098, %v2009
    %2151 = vst.msk [vmem:[#allocation3 + $0x1a0] sm:$0xff] %vm2098, %v2011
    %2152 = vst.msk [vmem:[#allocation3 + $0x1a8] sm:$0xff] %vm2098, %v2013
    %2153 = vst.msk [vmem:[#allocation3 + $0x1b0] sm:$0xff] %vm2098, %v2015
    %2154 = vst.msk [vmem:[#allocation3 + $0x1b8] sm:$0xff] %vm2098, %v2017
    %2155 = vst.msk [vmem:[#allocation3 + $0x1c0] sm:$0xff] %vm2098, %v2019
    %2156 = vst.msk [vmem:[#allocation3 + $0x1c8] sm:$0xff] %vm2098, %v2021
    %2157 = vst.msk [vmem:[#allocation3 + $0x1d0] sm:$0xff] %vm2098, %v2023
    %2158 = vst.msk [vmem:[#allocation3 + $0x1d8] sm:$0xff] %vm2098, %v2025
    %2159 = vst.msk [vmem:[#allocation3 + $0x1e0] sm:$0xff] %vm2098, %v2027
    %2160 = vst.msk [vmem:[#allocation3 + $0x1e8] sm:$0xff] %vm2098, %v2029
    %2161 = vst.msk [vmem:[#allocation3 + $0x1f0] sm:$0xff] %vm2098, %v2031
    %2162 = vst.msk [vmem:[#allocation3 + $0x1f8] sm:$0xff] %vm2098, %v2033
    %2167 = vrot.lane.b32.xlu0 %v268, 24
    %v2168 = vpop.permute.xlu0 %2167
    %2169 = vrot.lane.b32.xlu0 %v269, 24
    %v2170 = vpop.permute.xlu0 %2169
    %2171 = vrot.lane.b32.xlu0 %v271, 24
    %v2172 = vpop.permute.xlu0 %2171
    %2173 = vrot.lane.b32.xlu0 %v272, 24
    %v2174 = vpop.permute.xlu0 %2173
    %2175 = vrot.lane.b32.xlu0 %v274, 24
    %v2176 = vpop.permute.xlu0 %2175
    %2177 = vrot.lane.b32.xlu0 %v275, 24
    %v2178 = vpop.permute.xlu0 %2177
    %2179 = vrot.lane.b32.xlu0 %v277, 24
    %v2180 = vpop.permute.xlu0 %2179
    %2181 = vrot.lane.b32.xlu0 %v278, 24
    %v2182 = vpop.permute.xlu0 %2181
    %2183 = vrot.lane.b32.xlu0 %v280, 24
    %v2184 = vpop.permute.xlu0 %2183
    %2185 = vrot.lane.b32.xlu0 %v281, 24
    %v2186 = vpop.permute.xlu0 %2185
    %2187 = vrot.lane.b32.xlu0 %v283, 24
    %v2188 = vpop.permute.xlu0 %2187
    %2189 = vrot.lane.b32.xlu0 %v284, 24
    %v2190 = vpop.permute.xlu0 %2189
    %2191 = vrot.lane.b32.xlu0 %v286, 24
    %v2192 = vpop.permute.xlu0 %2191
    %2193 = vrot.lane.b32.xlu0 %v287, 24
    %v2194 = vpop.permute.xlu0 %2193
    %2195 = vrot.lane.b32.xlu0 %v289, 24
    %v2196 = vpop.permute.xlu0 %2195
    %2197 = vrot.lane.b32.xlu0 %v290, 24
    %v2198 = vpop.permute.xlu0 %2197
    %2199 = vrot.lane.b32.xlu0 %v292, 24
    %v2200 = vpop.permute.xlu0 %2199
    %2201 = vrot.lane.b32.xlu0 %v293, 24
    %v2202 = vpop.permute.xlu0 %2201
    %2203 = vrot.lane.b32.xlu0 %v295, 24
    %v2204 = vpop.permute.xlu0 %2203
    %2205 = vrot.lane.b32.xlu0 %v296, 24
    %v2206 = vpop.permute.xlu0 %2205
    %2207 = vrot.lane.b32.xlu0 %v298, 24
    %v2208 = vpop.permute.xlu0 %2207
    %2209 = vrot.lane.b32.xlu0 %v299, 24
    %v2210 = vpop.permute.xlu0 %2209
    %2211 = vrot.lane.b32.xlu0 %v301, 24
    %v2212 = vpop.permute.xlu0 %2211
    %2213 = vrot.lane.b32.xlu0 %v302, 24
    %v2214 = vpop.permute.xlu0 %2213
    %2215 = vrot.lane.b32.xlu0 %v304, 24
    %v2216 = vpop.permute.xlu0 %2215
    %2217 = vrot.lane.b32.xlu0 %v305, 24
    %v2218 = vpop.permute.xlu0 %2217
    %2219 = vrot.lane.b32.xlu0 %v307, 24
    %v2220 = vpop.permute.xlu0 %2219
    %2221 = vrot.lane.b32.xlu0 %v308, 24
    %v2222 = vpop.permute.xlu0 %2221
    %2223 = vrot.lane.b32.xlu0 %v310, 24
    %v2224 = vpop.permute.xlu0 %2223
    %2225 = vrot.lane.b32.xlu0 %v311, 24
    %v2226 = vpop.permute.xlu0 %2225
    %2227 = vrot.lane.b32.xlu0 %v313, 24
    %v2228 = vpop.permute.xlu0 %2227
    %2229 = vrot.lane.b32.xlu0 %v314, 24
    %v2230 = vpop.permute.xlu0 %2229
    %2231 = vrot.lane.b32.xlu0 %v322, 24
    %v2232 = vpop.permute.xlu0 %2231
    %2233 = vrot.lane.b32.xlu0 %v323, 24
    %v2234 = vpop.permute.xlu0 %2233
    %2235 = vrot.lane.b32.xlu0 %v325, 24
    %v2236 = vpop.permute.xlu0 %2235
    %2237 = vrot.lane.b32.xlu0 %v326, 24
    %v2238 = vpop.permute.xlu0 %2237
    %2239 = vrot.lane.b32.xlu0 %v328, 24
    %v2240 = vpop.permute.xlu0 %2239
    %2241 = vrot.lane.b32.xlu0 %v329, 24
    %v2242 = vpop.permute.xlu0 %2241
    %2243 = vrot.lane.b32.xlu0 %v331, 24
    %v2244 = vpop.permute.xlu0 %2243
    %2245 = vrot.lane.b32.xlu0 %v332, 24
    %v2246 = vpop.permute.xlu0 %2245
    %2247 = vrot.lane.b32.xlu0 %v334, 24
    %v2248 = vpop.permute.xlu0 %2247
    %2249 = vrot.lane.b32.xlu0 %v335, 24
    %v2250 = vpop.permute.xlu0 %2249
    %2251 = vrot.lane.b32.xlu0 %v337, 24
    %v2252 = vpop.permute.xlu0 %2251
    %2253 = vrot.lane.b32.xlu0 %v338, 24
    %v2254 = vpop.permute.xlu0 %2253
    %2255 = vrot.lane.b32.xlu0 %v340, 24
    %v2256 = vpop.permute.xlu0 %2255
    %2257 = vrot.lane.b32.xlu0 %v341, 24
    %v2258 = vpop.permute.xlu0 %2257
    %2259 = vrot.lane.b32.xlu0 %v343, 24
    %v2260 = vpop.permute.xlu0 %2259
    %2261 = vrot.lane.b32.xlu0 %v344, 24
    %v2262 = vpop.permute.xlu0 %2261
    %2263 = vrot.lane.b32.xlu0 %v346, 24
    %v2264 = vpop.permute.xlu0 %2263
    %2265 = vrot.lane.b32.xlu0 %v347, 24
    %v2266 = vpop.permute.xlu0 %2265
    %2267 = vrot.lane.b32.xlu0 %v349, 24
    %v2268 = vpop.permute.xlu0 %2267
    %2269 = vrot.lane.b32.xlu0 %v350, 24
    %v2270 = vpop.permute.xlu0 %2269
    %2271 = vrot.lane.b32.xlu0 %v352, 24
    %v2272 = vpop.permute.xlu0 %2271
    %2273 = vrot.lane.b32.xlu0 %v353, 24
    %v2274 = vpop.permute.xlu0 %2273
    %2275 = vrot.lane.b32.xlu0 %v355, 24
    %v2276 = vpop.permute.xlu0 %2275
    %2277 = vrot.lane.b32.xlu0 %v356, 24
    %v2278 = vpop.permute.xlu0 %2277
    %2279 = vrot.lane.b32.xlu0 %v358, 24
    %v2280 = vpop.permute.xlu0 %2279
    %2281 = vrot.lane.b32.xlu0 %v359, 24
    %v2282 = vpop.permute.xlu0 %2281
    %2283 = vrot.lane.b32.xlu0 %v361, 24
    %v2284 = vpop.permute.xlu0 %2283
    %2285 = vrot.lane.b32.xlu0 %v362, 24
    %v2286 = vpop.permute.xlu0 %2285
    %2287 = vrot.lane.b32.xlu0 %v364, 24
    %v2288 = vpop.permute.xlu0 %2287
    %2289 = vrot.lane.b32.xlu0 %v365, 24
    %v2290 = vpop.permute.xlu0 %2289
    %2291 = vrot.lane.b32.xlu0 %v367, 24
    %v2292 = vpop.permute.xlu0 %2291
    %2293 = vrot.lane.b32.xlu0 %v368, 24
    %v2294 = vpop.permute.xlu0 %2293
    %vm2359 = vcmask 228544
    %2360 = vst.msk [vmem:[#allocation3] sm:$0xff] %vm2359, %v2168
    %2361 = vst.msk [vmem:[#allocation3 + $0x8] sm:$0xff] %vm2359, %v2170
    %2362 = vst.msk [vmem:[#allocation3 + $0x10] sm:$0xff] %vm2359, %v2172
    %2363 = vst.msk [vmem:[#allocation3 + $0x18] sm:$0xff] %vm2359, %v2174
    %2364 = vst.msk [vmem:[#allocation3 + $0x20] sm:$0xff] %vm2359, %v2176
    %2365 = vst.msk [vmem:[#allocation3 + $0x28] sm:$0xff] %vm2359, %v2178
    %2366 = vst.msk [vmem:[#allocation3 + $0x30] sm:$0xff] %vm2359, %v2180
    %2367 = vst.msk [vmem:[#allocation3 + $0x38] sm:$0xff] %vm2359, %v2182
    %2368 = vst.msk [vmem:[#allocation3 + $0x40] sm:$0xff] %vm2359, %v2184
    %2369 = vst.msk [vmem:[#allocation3 + $0x48] sm:$0xff] %vm2359, %v2186
    %2370 = vst.msk [vmem:[#allocation3 + $0x50] sm:$0xff] %vm2359, %v2188
    %2371 = vst.msk [vmem:[#allocation3 + $0x58] sm:$0xff] %vm2359, %v2190
    %2372 = vst.msk [vmem:[#allocation3 + $0x60] sm:$0xff] %vm2359, %v2192
    %2373 = vst.msk [vmem:[#allocation3 + $0x68] sm:$0xff] %vm2359, %v2194
    %2374 = vst.msk [vmem:[#allocation3 + $0x70] sm:$0xff] %vm2359, %v2196
    %2375 = vst.msk [vmem:[#allocation3 + $0x78] sm:$0xff] %vm2359, %v2198
    %2376 = vst.msk [vmem:[#allocation3 + $0x80] sm:$0xff] %vm2359, %v2200
    %2377 = vst.msk [vmem:[#allocation3 + $0x88] sm:$0xff] %vm2359, %v2202
    %2378 = vst.msk [vmem:[#allocation3 + $0x90] sm:$0xff] %vm2359, %v2204
    %2379 = vst.msk [vmem:[#allocation3 + $0x98] sm:$0xff] %vm2359, %v2206
    %2380 = vst.msk [vmem:[#allocation3 + $0xa0] sm:$0xff] %vm2359, %v2208
    %2381 = vst.msk [vmem:[#allocation3 + $0xa8] sm:$0xff] %vm2359, %v2210
    %2382 = vst.msk [vmem:[#allocation3 + $0xb0] sm:$0xff] %vm2359, %v2212
    %2383 = vst.msk [vmem:[#allocation3 + $0xb8] sm:$0xff] %vm2359, %v2214
    %2384 = vst.msk [vmem:[#allocation3 + $0xc0] sm:$0xff] %vm2359, %v2216
    %2385 = vst.msk [vmem:[#allocation3 + $0xc8] sm:$0xff] %vm2359, %v2218
    %2386 = vst.msk [vmem:[#allocation3 + $0xd0] sm:$0xff] %vm2359, %v2220
    %2387 = vst.msk [vmem:[#allocation3 + $0xd8] sm:$0xff] %vm2359, %v2222
    %2388 = vst.msk [vmem:[#allocation3 + $0xe0] sm:$0xff] %vm2359, %v2224
    %2389 = vst.msk [vmem:[#allocation3 + $0xe8] sm:$0xff] %vm2359, %v2226
    %2390 = vst.msk [vmem:[#allocation3 + $0xf0] sm:$0xff] %vm2359, %v2228
    %2391 = vst.msk [vmem:[#allocation3 + $0xf8] sm:$0xff] %vm2359, %v2230
    %2392 = vst.msk [vmem:[#allocation3 + $0x100] sm:$0xff] %vm2359, %v2232
    %2393 = vst.msk [vmem:[#allocation3 + $0x108] sm:$0xff] %vm2359, %v2234
    %2394 = vst.msk [vmem:[#allocation3 + $0x110] sm:$0xff] %vm2359, %v2236
    %2395 = vst.msk [vmem:[#allocation3 + $0x118] sm:$0xff] %vm2359, %v2238
    %2396 = vst.msk [vmem:[#allocation3 + $0x120] sm:$0xff] %vm2359, %v2240
    %2397 = vst.msk [vmem:[#allocation3 + $0x128] sm:$0xff] %vm2359, %v2242
    %2398 = vst.msk [vmem:[#allocation3 + $0x130] sm:$0xff] %vm2359, %v2244
    %2399 = vst.msk [vmem:[#allocation3 + $0x138] sm:$0xff] %vm2359, %v2246
    %2400 = vst.msk [vmem:[#allocation3 + $0x140] sm:$0xff] %vm2359, %v2248
    %2401 = vst.msk [vmem:[#allocation3 + $0x148] sm:$0xff] %vm2359, %v2250
    %2402 = vst.msk [vmem:[#allocation3 + $0x150] sm:$0xff] %vm2359, %v2252
    %2403 = vst.msk [vmem:[#allocation3 + $0x158] sm:$0xff] %vm2359, %v2254
    %2404 = vst.msk [vmem:[#allocation3 + $0x160] sm:$0xff] %vm2359, %v2256
    %2405 = vst.msk [vmem:[#allocation3 + $0x168] sm:$0xff] %vm2359, %v2258
    %2406 = vst.msk [vmem:[#allocation3 + $0x170] sm:$0xff] %vm2359, %v2260
    %2407 = vst.msk [vmem:[#allocation3 + $0x178] sm:$0xff] %vm2359, %v2262
    %2408 = vst.msk [vmem:[#allocation3 + $0x180] sm:$0xff] %vm2359, %v2264
    %2409 = vst.msk [vmem:[#allocation3 + $0x188] sm:$0xff] %vm2359, %v2266
    %2410 = vst.msk [vmem:[#allocation3 + $0x190] sm:$0xff] %vm2359, %v2268
    %2411 = vst.msk [vmem:[#allocation3 + $0x198] sm:$0xff] %vm2359, %v2270
    %2412 = vst.msk [vmem:[#allocation3 + $0x1a0] sm:$0xff] %vm2359, %v2272
    %2413 = vst.msk [vmem:[#allocation3 + $0x1a8] sm:$0xff] %vm2359, %v2274
    %2414 = vst.msk [vmem:[#allocation3 + $0x1b0] sm:$0xff] %vm2359, %v2276
    %2415 = vst.msk [vmem:[#allocation3 + $0x1b8] sm:$0xff] %vm2359, %v2278
    %2416 = vst.msk [vmem:[#allocation3 + $0x1c0] sm:$0xff] %vm2359, %v2280
    %2417 = vst.msk [vmem:[#allocation3 + $0x1c8] sm:$0xff] %vm2359, %v2282
    %2418 = vst.msk [vmem:[#allocation3 + $0x1d0] sm:$0xff] %vm2359, %v2284
    %2419 = vst.msk [vmem:[#allocation3 + $0x1d8] sm:$0xff] %vm2359, %v2286
    %2420 = vst.msk [vmem:[#allocation3 + $0x1e0] sm:$0xff] %vm2359, %v2288
    %2421 = vst.msk [vmem:[#allocation3 + $0x1e8] sm:$0xff] %vm2359, %v2290
    %2422 = vst.msk [vmem:[#allocation3 + $0x1f0] sm:$0xff] %vm2359, %v2292
    %2423 = vst.msk [vmem:[#allocation3 + $0x1f8] sm:$0xff] %vm2359, %v2294
    %v2426 = vrot.slane %v313, 1
    %v2427 = vrot.slane %v314, 1
    %v2428 = vsel %vm530, %v2426, %v2427
    %v2429 = vrot.slane %v315, 1
    %v2430 = vsel %vm530, %v2427, %v2429
    %v2431 = vrot.slane %v367, 1
    %v2432 = vrot.slane %v368, 1
    %v2433 = vsel %vm530, %v2431, %v2432
    %v2434 = vrot.slane %v369, 1
    %v2435 = vsel %vm530, %v2432, %v2434
    %2436 = vrot.lane.b32.xlu0 %v543, 28
    %v2437 = vpop.permute.xlu0 %2436
    %2438 = vrot.lane.b32.xlu0 %v545, 28
    %v2439 = vpop.permute.xlu0 %2438
    %2440 = vrot.lane.b32.xlu0 %v548, 28
    %v2441 = vpop.permute.xlu0 %2440
    %2442 = vrot.lane.b32.xlu0 %v550, 28
    %v2443 = vpop.permute.xlu0 %2442
    %2444 = vrot.lane.b32.xlu0 %v553, 28
    %v2445 = vpop.permute.xlu0 %2444
    %2446 = vrot.lane.b32.xlu0 %v555, 28
    %v2447 = vpop.permute.xlu0 %2446
    %2448 = vrot.lane.b32.xlu0 %v558, 28
    %v2449 = vpop.permute.xlu0 %2448
    %2450 = vrot.lane.b32.xlu0 %v560, 28
    %v2451 = vpop.permute.xlu0 %2450
    %2452 = vrot.lane.b32.xlu0 %v563, 28
    %v2453 = vpop.permute.xlu0 %2452
    %2454 = vrot.lane.b32.xlu0 %v565, 28
    %v2455 = vpop.permute.xlu0 %2454
    %2456 = vrot.lane.b32.xlu0 %v568, 28
    %v2457 = vpop.permute.xlu0 %2456
    %2458 = vrot.lane.b32.xlu0 %v570, 28
    %v2459 = vpop.permute.xlu0 %2458
    %2460 = vrot.lane.b32.xlu0 %v573, 28
    %v2461 = vpop.permute.xlu0 %2460
    %2462 = vrot.lane.b32.xlu0 %v575, 28
    %v2463 = vpop.permute.xlu0 %2462
    %2464 = vrot.lane.b32.xlu0 %v578, 28
    %v2465 = vpop.permute.xlu0 %2464
    %2466 = vrot.lane.b32.xlu0 %v580, 28
    %v2467 = vpop.permute.xlu0 %2466
    %2468 = vrot.lane.b32.xlu0 %v583, 28
    %v2469 = vpop.permute.xlu0 %2468
    %2470 = vrot.lane.b32.xlu0 %v585, 28
    %v2471 = vpop.permute.xlu0 %2470
    %2472 = vrot.lane.b32.xlu0 %v588, 28
    %v2473 = vpop.permute.xlu0 %2472
    %2474 = vrot.lane.b32.xlu0 %v590, 28
    %v2475 = vpop.permute.xlu0 %2474
    %2476 = vrot.lane.b32.xlu0 %v593, 28
    %v2477 = vpop.permute.xlu0 %2476
    %2478 = vrot.lane.b32.xlu0 %v595, 28
    %v2479 = vpop.permute.xlu0 %2478
    %2480 = vrot.lane.b32.xlu0 %v598, 28
    %v2481 = vpop.permute.xlu0 %2480
    %2482 = vrot.lane.b32.xlu0 %v600, 28
    %v2483 = vpop.permute.xlu0 %2482
    %2484 = vrot.lane.b32.xlu0 %v603, 28
    %v2485 = vpop.permute.xlu0 %2484
    %2486 = vrot.lane.b32.xlu0 %v605, 28
    %v2487 = vpop.permute.xlu0 %2486
    %2488 = vrot.lane.b32.xlu0 %v608, 28
    %v2489 = vpop.permute.xlu0 %2488
    %2490 = vrot.lane.b32.xlu0 %v610, 28
    %v2491 = vpop.permute.xlu0 %2490
    %2492 = vrot.lane.b32.xlu0 %v1631, 28
    %v2493 = vpop.permute.xlu0 %2492
    %2494 = vrot.lane.b32.xlu0 %v1633, 28
    %v2495 = vpop.permute.xlu0 %2494
    %2496 = vrot.lane.b32.xlu0 %v2428, 28
    %v2497 = vpop.permute.xlu0 %2496
    %2498 = vrot.lane.b32.xlu0 %v2430, 28
    %v2499 = vpop.permute.xlu0 %2498
    %2500 = vrot.lane.b32.xlu0 %v623, 28
    %v2501 = vpop.permute.xlu0 %2500
    %2502 = vrot.lane.b32.xlu0 %v625, 28
    %v2503 = vpop.permute.xlu0 %2502
    %2504 = vrot.lane.b32.xlu0 %v628, 28
    %v2505 = vpop.permute.xlu0 %2504
    %2506 = vrot.lane.b32.xlu0 %v630, 28
    %v2507 = vpop.permute.xlu0 %2506
    %2508 = vrot.lane.b32.xlu0 %v633, 28
    %v2509 = vpop.permute.xlu0 %2508
    %2510 = vrot.lane.b32.xlu0 %v635, 28
    %v2511 = vpop.permute.xlu0 %2510
    %2512 = vrot.lane.b32.xlu0 %v638, 28
    %v2513 = vpop.permute.xlu0 %2512
    %2514 = vrot.lane.b32.xlu0 %v640, 28
    %v2515 = vpop.permute.xlu0 %2514
    %2516 = vrot.lane.b32.xlu0 %v643, 28
    %v2517 = vpop.permute.xlu0 %2516
    %2518 = vrot.lane.b32.xlu0 %v645, 28
    %v2519 = vpop.permute.xlu0 %2518
    %2520 = vrot.lane.b32.xlu0 %v648, 28
    %v2521 = vpop.permute.xlu0 %2520
    %2522 = vrot.lane.b32.xlu0 %v650, 28
    %v2523 = vpop.permute.xlu0 %2522
    %2524 = vrot.lane.b32.xlu0 %v653, 28
    %v2525 = vpop.permute.xlu0 %2524
    %2526 = vrot.lane.b32.xlu0 %v655, 28
    %v2527 = vpop.permute.xlu0 %2526
    %2528 = vrot.lane.b32.xlu0 %v658, 28
    %v2529 = vpop.permute.xlu0 %2528
    %2530 = vrot.lane.b32.xlu0 %v660, 28
    %v2531 = vpop.permute.xlu0 %2530
    %2532 = vrot.lane.b32.xlu0 %v663, 28
    %v2533 = vpop.permute.xlu0 %2532
    %2534 = vrot.lane.b32.xlu0 %v665, 28
    %v2535 = vpop.permute.xlu0 %2534
    %2536 = vrot.lane.b32.xlu0 %v668, 28
    %v2537 = vpop.permute.xlu0 %2536
    %2538 = vrot.lane.b32.xlu0 %v670, 28
    %v2539 = vpop.permute.xlu0 %2538
    %2540 = vrot.lane.b32.xlu0 %v673, 28
    %v2541 = vpop.permute.xlu0 %2540
    %2542 = vrot.lane.b32.xlu0 %v675, 28
    %v2543 = vpop.permute.xlu0 %2542
    %2544 = vrot.lane.b32.xlu0 %v678, 28
    %v2545 = vpop.permute.xlu0 %2544
    %2546 = vrot.lane.b32.xlu0 %v680, 28
    %v2547 = vpop.permute.xlu0 %2546
    %2548 = vrot.lane.b32.xlu0 %v683, 28
    %v2549 = vpop.permute.xlu0 %2548
    %2550 = vrot.lane.b32.xlu0 %v685, 28
    %v2551 = vpop.permute.xlu0 %2550
    %2552 = vrot.lane.b32.xlu0 %v688, 28
    %v2553 = vpop.permute.xlu0 %2552
    %2554 = vrot.lane.b32.xlu0 %v690, 28
    %v2555 = vpop.permute.xlu0 %2554
    %2556 = vrot.lane.b32.xlu0 %v1636, 28
    %v2557 = vpop.permute.xlu0 %2556
    %2558 = vrot.lane.b32.xlu0 %v1638, 28
    %v2559 = vpop.permute.xlu0 %2558
    %2560 = vrot.lane.b32.xlu0 %v2433, 28
    %v2561 = vpop.permute.xlu0 %2560
    %2562 = vrot.lane.b32.xlu0 %v2435, 28
    %v2563 = vpop.permute.xlu0 %2562
    %vm2628 = vcmask 261344
    %2629 = vst.msk [vmem:[#allocation3] sm:$0xff] %vm2628, %v2437
    %2630 = vst.msk [vmem:[#allocation3 + $0x8] sm:$0xff] %vm2628, %v2439
    %2631 = vst.msk [vmem:[#allocation3 + $0x10] sm:$0xff] %vm2628, %v2441
    %2632 = vst.msk [vmem:[#allocation3 + $0x18] sm:$0xff] %vm2628, %v2443
    %2633 = vst.msk [vmem:[#allocation3 + $0x20] sm:$0xff] %vm2628, %v2445
    %2634 = vst.msk [vmem:[#allocation3 + $0x28] sm:$0xff] %vm2628, %v2447
    %2635 = vst.msk [vmem:[#allocation3 + $0x30] sm:$0xff] %vm2628, %v2449
    %2636 = vst.msk [vmem:[#allocation3 + $0x38] sm:$0xff] %vm2628, %v2451
    %2637 = vst.msk [vmem:[#allocation3 + $0x40] sm:$0xff] %vm2628, %v2453
    %2638 = vst.msk [vmem:[#allocation3 + $0x48] sm:$0xff] %vm2628, %v2455
    %2639 = vst.msk [vmem:[#allocation3 + $0x50] sm:$0xff] %vm2628, %v2457
    %2640 = vst.msk [vmem:[#allocation3 + $0x58] sm:$0xff] %vm2628, %v2459
    %2641 = vst.msk [vmem:[#allocation3 + $0x60] sm:$0xff] %vm2628, %v2461
    %2642 = vst.msk [vmem:[#allocation3 + $0x68] sm:$0xff] %vm2628, %v2463
    %2643 = vst.msk [vmem:[#allocation3 + $0x70] sm:$0xff] %vm2628, %v2465
    %2644 = vst.msk [vmem:[#allocation3 + $0x78] sm:$0xff] %vm2628, %v2467
    %2645 = vst.msk [vmem:[#allocation3 + $0x80] sm:$0xff] %vm2628, %v2469
    %2646 = vst.msk [vmem:[#allocation3 + $0x88] sm:$0xff] %vm2628, %v2471
    %2647 = vst.msk [vmem:[#allocation3 + $0x90] sm:$0xff] %vm2628, %v2473
    %2648 = vst.msk [vmem:[#allocation3 + $0x98] sm:$0xff] %vm2628, %v2475
    %2649 = vst.msk [vmem:[#allocation3 + $0xa0] sm:$0xff] %vm2628, %v2477
    %2650 = vst.msk [vmem:[#allocation3 + $0xa8] sm:$0xff] %vm2628, %v2479
    %2651 = vst.msk [vmem:[#allocation3 + $0xb0] sm:$0xff] %vm2628, %v2481
    %2652 = vst.msk [vmem:[#allocation3 + $0xb8] sm:$0xff] %vm2628, %v2483
    %2653 = vst.msk [vmem:[#allocation3 + $0xc0] sm:$0xff] %vm2628, %v2485
    %2654 = vst.msk [vmem:[#allocation3 + $0xc8] sm:$0xff] %vm2628, %v2487
    %2655 = vst.msk [vmem:[#allocation3 + $0xd0] sm:$0xff] %vm2628, %v2489
    %2656 = vst.msk [vmem:[#allocation3 + $0xd8] sm:$0xff] %vm2628, %v2491
    %2657 = vst.msk [vmem:[#allocation3 + $0xe0] sm:$0xff] %vm2628, %v2493
    %2658 = vst.msk [vmem:[#allocation3 + $0xe8] sm:$0xff] %vm2628, %v2495
    %2659 = vst.msk [vmem:[#allocation3 + $0xf0] sm:$0xff] %vm2628, %v2497
    %2660 = vst.msk [vmem:[#allocation3 + $0xf8] sm:$0xff] %vm2628, %v2499
    %2661 = vst.msk [vmem:[#allocation3 + $0x100] sm:$0xff] %vm2628, %v2501
    %2662 = vst.msk [vmem:[#allocation3 + $0x108] sm:$0xff] %vm2628, %v2503
    %2663 = vst.msk [vmem:[#allocation3 + $0x110] sm:$0xff] %vm2628, %v2505
    %2664 = vst.msk [vmem:[#allocation3 + $0x118] sm:$0xff] %vm2628, %v2507
    %2665 = vst.msk [vmem:[#allocation3 + $0x120] sm:$0xff] %vm2628, %v2509
    %2666 = vst.msk [vmem:[#allocation3 + $0x128] sm:$0xff] %vm2628, %v2511
    %2667 = vst.msk [vmem:[#allocation3 + $0x130] sm:$0xff] %vm2628, %v2513
    %2668 = vst.msk [vmem:[#allocation3 + $0x138] sm:$0xff] %vm2628, %v2515
    %2669 = vst.msk [vmem:[#allocation3 + $0x140] sm:$0xff] %vm2628, %v2517
    %2670 = vst.msk [vmem:[#allocation3 + $0x148] sm:$0xff] %vm2628, %v2519
    %2671 = vst.msk [vmem:[#allocation3 + $0x150] sm:$0xff] %vm2628, %v2521
    %2672 = vst.msk [vmem:[#allocation3 + $0x158] sm:$0xff] %vm2628, %v2523
    %2673 = vst.msk [vmem:[#allocation3 + $0x160] sm:$0xff] %vm2628, %v2525
    %2674 = vst.msk [vmem:[#allocation3 + $0x168] sm:$0xff] %vm2628, %v2527
    %2675 = vst.msk [vmem:[#allocation3 + $0x170] sm:$0xff] %vm2628, %v2529
    %2676 = vst.msk [vmem:[#allocation3 + $0x178] sm:$0xff] %vm2628, %v2531
    %2677 = vst.msk [vmem:[#allocation3 + $0x180] sm:$0xff] %vm2628, %v2533
    %2678 = vst.msk [vmem:[#allocation3 + $0x188] sm:$0xff] %vm2628, %v2535
    %2679 = vst.msk [vmem:[#allocation3 + $0x190] sm:$0xff] %vm2628, %v2537
    %2680 = vst.msk [vmem:[#allocation3 + $0x198] sm:$0xff] %vm2628, %v2539
    %2681 = vst.msk [vmem:[#allocation3 + $0x1a0] sm:$0xff] %vm2628, %v2541
    %2682 = vst.msk [vmem:[#allocation3 + $0x1a8] sm:$0xff] %vm2628, %v2543
    %2683 = vst.msk [vmem:[#allocation3 + $0x1b0] sm:$0xff] %vm2628, %v2545
    %2684 = vst.msk [vmem:[#allocation3 + $0x1b8] sm:$0xff] %vm2628, %v2547
    %2685 = vst.msk [vmem:[#allocation3 + $0x1c0] sm:$0xff] %vm2628, %v2549
    %2686 = vst.msk [vmem:[#allocation3 + $0x1c8] sm:$0xff] %vm2628, %v2551
    %2687 = vst.msk [vmem:[#allocation3 + $0x1d0] sm:$0xff] %vm2628, %v2553
    %2688 = vst.msk [vmem:[#allocation3 + $0x1d8] sm:$0xff] %vm2628, %v2555
    %2689 = vst.msk [vmem:[#allocation3 + $0x1e0] sm:$0xff] %vm2628, %v2557
    %2690 = vst.msk [vmem:[#allocation3 + $0x1e8] sm:$0xff] %vm2628, %v2559
    %2691 = vst.msk [vmem:[#allocation3 + $0x1f0] sm:$0xff] %vm2628, %v2561
    %2692 = vst.msk [vmem:[#allocation3 + $0x1f8] sm:$0xff] %vm2628, %v2563
    %v2693 = vrot.slane %v313, 2
    %v2694 = vrot.slane %v314, 2
    %v2695 = vsel %vm948, %v2693, %v2694
    %v2696 = vrot.slane %v315, 2
    %v2697 = vsel %vm948, %v2694, %v2696
    %v2698 = vrot.slane %v367, 2
    %v2699 = vrot.slane %v368, 2
    %v2700 = vsel %vm948, %v2698, %v2699
    %v2701 = vrot.slane %v369, 2
    %v2702 = vsel %vm948, %v2699, %v2701
    %2703 = vrot.lane.b32.xlu0 %v961, 32
    %v2704 = vpop.permute.xlu0 %2703
    %2705 = vrot.lane.b32.xlu0 %v963, 32
    %v2706 = vpop.permute.xlu0 %2705
    %2707 = vrot.lane.b32.xlu0 %v966, 32
    %v2708 = vpop.permute.xlu0 %2707
    %2709 = vrot.lane.b32.xlu0 %v968, 32
    %v2710 = vpop.permute.xlu0 %2709
    %2711 = vrot.lane.b32.xlu0 %v971, 32
    %v2712 = vpop.permute.xlu0 %2711
    %2713 = vrot.lane.b32.xlu0 %v973, 32
    %v2714 = vpop.permute.xlu0 %2713
    %2715 = vrot.lane.b32.xlu0 %v976, 32
    %v2716 = vpop.permute.xlu0 %2715
    %2717 = vrot.lane.b32.xlu0 %v978, 32
    %v2718 = vpop.permute.xlu0 %2717
    %2719 = vrot.lane.b32.xlu0 %v981, 32
    %v2720 = vpop.permute.xlu0 %2719
    %2721 = vrot.lane.b32.xlu0 %v983, 32
    %v2722 = vpop.permute.xlu0 %2721
    %2723 = vrot.lane.b32.xlu0 %v986, 32
    %v2724 = vpop.permute.xlu0 %2723
    %2725 = vrot.lane.b32.xlu0 %v988, 32
    %v2726 = vpop.permute.xlu0 %2725
    %2727 = vrot.lane.b32.xlu0 %v991, 32
    %v2728 = vpop.permute.xlu0 %2727
    %2729 = vrot.lane.b32.xlu0 %v993, 32
    %v2730 = vpop.permute.xlu0 %2729
    %2731 = vrot.lane.b32.xlu0 %v996, 32
    %v2732 = vpop.permute.xlu0 %2731
    %2733 = vrot.lane.b32.xlu0 %v998, 32
    %v2734 = vpop.permute.xlu0 %2733
    %2735 = vrot.lane.b32.xlu0 %v1001, 32
    %v2736 = vpop.permute.xlu0 %2735
    %2737 = vrot.lane.b32.xlu0 %v1003, 32
    %v2738 = vpop.permute.xlu0 %2737
    %2739 = vrot.lane.b32.xlu0 %v1006, 32
    %v2740 = vpop.permute.xlu0 %2739
    %2741 = vrot.lane.b32.xlu0 %v1008, 32
    %v2742 = vpop.permute.xlu0 %2741
    %2743 = vrot.lane.b32.xlu0 %v1011, 32
    %v2744 = vpop.permute.xlu0 %2743
    %2745 = vrot.lane.b32.xlu0 %v1013, 32
    %v2746 = vpop.permute.xlu0 %2745
    %2747 = vrot.lane.b32.xlu0 %v1016, 32
    %v2748 = vpop.permute.xlu0 %2747
    %2749 = vrot.lane.b32.xlu0 %v1018, 32
    %v2750 = vpop.permute.xlu0 %2749
    %2751 = vrot.lane.b32.xlu0 %v1021, 32
    %v2752 = vpop.permute.xlu0 %2751
    %2753 = vrot.lane.b32.xlu0 %v1023, 32
    %v2754 = vpop.permute.xlu0 %2753
    %2755 = vrot.lane.b32.xlu0 %v1026, 32
    %v2756 = vpop.permute.xlu0 %2755
    %2757 = vrot.lane.b32.xlu0 %v1028, 32
    %v2758 = vpop.permute.xlu0 %2757
    %2759 = vrot.lane.b32.xlu0 %v1898, 32
    %v2760 = vpop.permute.xlu0 %2759
    %2761 = vrot.lane.b32.xlu0 %v1900, 32
    %v2762 = vpop.permute.xlu0 %2761
    %2763 = vrot.lane.b32.xlu0 %v2695, 32
    %v2764 = vpop.permute.xlu0 %2763
    %2765 = vrot.lane.b32.xlu0 %v2697, 32
    %v2766 = vpop.permute.xlu0 %2765
    %2767 = vrot.lane.b32.xlu0 %v1041, 32
    %v2768 = vpop.permute.xlu0 %2767
    %2769 = vrot.lane.b32.xlu0 %v1043, 32
    %v2770 = vpop.permute.xlu0 %2769
    %2771 = vrot.lane.b32.xlu0 %v1046, 32
    %v2772 = vpop.permute.xlu0 %2771
    %2773 = vrot.lane.b32.xlu0 %v1048, 32
    %v2774 = vpop.permute.xlu0 %2773
    %2775 = vrot.lane.b32.xlu0 %v1051, 32
    %v2776 = vpop.permute.xlu0 %2775
    %2777 = vrot.lane.b32.xlu0 %v1053, 32
    %v2778 = vpop.permute.xlu0 %2777
    %2779 = vrot.lane.b32.xlu0 %v1056, 32
    %v2780 = vpop.permute.xlu0 %2779
    %2781 = vrot.lane.b32.xlu0 %v1058, 32
    %v2782 = vpop.permute.xlu0 %2781
    %2783 = vrot.lane.b32.xlu0 %v1061, 32
    %v2784 = vpop.permute.xlu0 %2783
    %2785 = vrot.lane.b32.xlu0 %v1063, 32
    %v2786 = vpop.permute.xlu0 %2785
    %2787 = vrot.lane.b32.xlu0 %v1066, 32
    %v2788 = vpop.permute.xlu0 %2787
    %2789 = vrot.lane.b32.xlu0 %v1068, 32
    %v2790 = vpop.permute.xlu0 %2789
    %2791 = vrot.lane.b32.xlu0 %v1071, 32
    %v2792 = vpop.permute.xlu0 %2791
    %2793 = vrot.lane.b32.xlu0 %v1073, 32
    %v2794 = vpop.permute.xlu0 %2793
    %2795 = vrot.lane.b32.xlu0 %v1076, 32
    %v2796 = vpop.permute.xlu0 %2795
    %2797 = vrot.lane.b32.xlu0 %v1078, 32
    %v2798 = vpop.permute.xlu0 %2797
    %2799 = vrot.lane.b32.xlu0 %v1081, 32
    %v2800 = vpop.permute.xlu0 %2799
    %2801 = vrot.lane.b32.xlu0 %v1083, 32
    %v2802 = vpop.permute.xlu0 %2801
    %2803 = vrot.lane.b32.xlu0 %v1086, 32
    %v2804 = vpop.permute.xlu0 %2803
    %2805 = vrot.lane.b32.xlu0 %v1088, 32
    %v2806 = vpop.permute.xlu0 %2805
    %2807 = vrot.lane.b32.xlu0 %v1091, 32
    %v2808 = vpop.permute.xlu0 %2807
    %2809 = vrot.lane.b32.xlu0 %v1093, 32
    %v2810 = vpop.permute.xlu0 %2809
    %2811 = vrot.lane.b32.xlu0 %v1096, 32
    %v2812 = vpop.permute.xlu0 %2811
    %2813 = vrot.lane.b32.xlu0 %v1098, 32
    %v2814 = vpop.permute.xlu0 %2813
    %2815 = vrot.lane.b32.xlu0 %v1101, 32
    %v2816 = vpop.permute.xlu0 %2815
    %2817 = vrot.lane.b32.xlu0 %v1103, 32
    %v2818 = vpop.permute.xlu0 %2817
    %2819 = vrot.lane.b32.xlu0 %v1106, 32
    %v2820 = vpop.permute.xlu0 %2819
    %2821 = vrot.lane.b32.xlu0 %v1108, 32
    %v2822 = vpop.permute.xlu0 %2821
    %2823 = vrot.lane.b32.xlu0 %v1903, 32
    %v2824 = vpop.permute.xlu0 %2823
    %2825 = vrot.lane.b32.xlu0 %v1905, 32
    %v2826 = vpop.permute.xlu0 %2825
    %2827 = vrot.lane.b32.xlu0 %v2700, 32
    %v2828 = vpop.permute.xlu0 %2827
    %2829 = vrot.lane.b32.xlu0 %v2702, 32
    %v2830 = vpop.permute.xlu0 %2829
    %vm2895 = vcmask 294144
    %2896 = vst.msk [vmem:[#allocation3] sm:$0xff] %vm2895, %v2704
    %2897 = vst.msk [vmem:[#allocation3 + $0x8] sm:$0xff] %vm2895, %v2706
    %2898 = vst.msk [vmem:[#allocation3 + $0x10] sm:$0xff] %vm2895, %v2708
    %2899 = vst.msk [vmem:[#allocation3 + $0x18] sm:$0xff] %vm2895, %v2710
    %2900 = vst.msk [vmem:[#allocation3 + $0x20] sm:$0xff] %vm2895, %v2712
    %2901 = vst.msk [vmem:[#allocation3 + $0x28] sm:$0xff] %vm2895, %v2714
    %2902 = vst.msk [vmem:[#allocation3 + $0x30] sm:$0xff] %vm2895, %v2716
    %2903 = vst.msk [vmem:[#allocation3 + $0x38] sm:$0xff] %vm2895, %v2718
    %2904 = vst.msk [vmem:[#allocation3 + $0x40] sm:$0xff] %vm2895, %v2720
    %2905 = vst.msk [vmem:[#allocation3 + $0x48] sm:$0xff] %vm2895, %v2722
    %2906 = vst.msk [vmem:[#allocation3 + $0x50] sm:$0xff] %vm2895, %v2724
    %2907 = vst.msk [vmem:[#allocation3 + $0x58] sm:$0xff] %vm2895, %v2726
    %2908 = vst.msk [vmem:[#allocation3 + $0x60] sm:$0xff] %vm2895, %v2728
    %2909 = vst.msk [vmem:[#allocation3 + $0x68] sm:$0xff] %vm2895, %v2730
    %2910 = vst.msk [vmem:[#allocation3 + $0x70] sm:$0xff] %vm2895, %v2732
    %2911 = vst.msk [vmem:[#allocation3 + $0x78] sm:$0xff] %vm2895, %v2734
    %2912 = vst.msk [vmem:[#allocation3 + $0x80] sm:$0xff] %vm2895, %v2736
    %2913 = vst.msk [vmem:[#allocation3 + $0x88] sm:$0xff] %vm2895, %v2738
    %2914 = vst.msk [vmem:[#allocation3 + $0x90] sm:$0xff] %vm2895, %v2740
    %2915 = vst.msk [vmem:[#allocation3 + $0x98] sm:$0xff] %vm2895, %v2742
    %2916 = vst.msk [vmem:[#allocation3 + $0xa0] sm:$0xff] %vm2895, %v2744
    %2917 = vst.msk [vmem:[#allocation3 + $0xa8] sm:$0xff] %vm2895, %v2746
    %2918 = vst.msk [vmem:[#allocation3 + $0xb0] sm:$0xff] %vm2895, %v2748
    %2919 = vst.msk [vmem:[#allocation3 + $0xb8] sm:$0xff] %vm2895, %v2750
    %2920 = vst.msk [vmem:[#allocation3 + $0xc0] sm:$0xff] %vm2895, %v2752
    %2921 = vst.msk [vmem:[#allocation3 + $0xc8] sm:$0xff] %vm2895, %v2754
    %2922 = vst.msk [vmem:[#allocation3 + $0xd0] sm:$0xff] %vm2895, %v2756
    %2923 = vst.msk [vmem:[#allocation3 + $0xd8] sm:$0xff] %vm2895, %v2758
    %2924 = vst.msk [vmem:[#allocation3 + $0xe0] sm:$0xff] %vm2895, %v2760
    %2925 = vst.msk [vmem:[#allocation3 + $0xe8] sm:$0xff] %vm2895, %v2762
    %2926 = vst.msk [vmem:[#allocation3 + $0xf0] sm:$0xff] %vm2895, %v2764
    %2927 = vst.msk [vmem:[#allocation3 + $0xf8] sm:$0xff] %vm2895, %v2766
    %2928 = vst.msk [vmem:[#allocation3 + $0x100] sm:$0xff] %vm2895, %v2768
    %2929 = vst.msk [vmem:[#allocation3 + $0x108] sm:$0xff] %vm2895, %v2770
    %2930 = vst.msk [vmem:[#allocation3 + $0x110] sm:$0xff] %vm2895, %v2772
    %2931 = vst.msk [vmem:[#allocation3 + $0x118] sm:$0xff] %vm2895, %v2774
    %2932 = vst.msk [vmem:[#allocation3 + $0x120] sm:$0xff] %vm2895, %v2776
    %2933 = vst.msk [vmem:[#allocation3 + $0x128] sm:$0xff] %vm2895, %v2778
    %2934 = vst.msk [vmem:[#allocation3 + $0x130] sm:$0xff] %vm2895, %v2780
    %2935 = vst.msk [vmem:[#allocation3 + $0x138] sm:$0xff] %vm2895, %v2782
    %2936 = vst.msk [vmem:[#allocation3 + $0x140] sm:$0xff] %vm2895, %v2784
    %2937 = vst.msk [vmem:[#allocation3 + $0x148] sm:$0xff] %vm2895, %v2786
    %2938 = vst.msk [vmem:[#allocation3 + $0x150] sm:$0xff] %vm2895, %v2788
    %2939 = vst.msk [vmem:[#allocation3 + $0x158] sm:$0xff] %vm2895, %v2790
    %2940 = vst.msk [vmem:[#allocation3 + $0x160] sm:$0xff] %vm2895, %v2792
    %2941 = vst.msk [vmem:[#allocation3 + $0x168] sm:$0xff] %vm2895, %v2794
    %2942 = vst.msk [vmem:[#allocation3 + $0x170] sm:$0xff] %vm2895, %v2796
    %2943 = vst.msk [vmem:[#allocation3 + $0x178] sm:$0xff] %vm2895, %v2798
    %2944 = vst.msk [vmem:[#allocation3 + $0x180] sm:$0xff] %vm2895, %v2800
    %2945 = vst.msk [vmem:[#allocation3 + $0x188] sm:$0xff] %vm2895, %v2802
    %2946 = vst.msk [vmem:[#allocation3 + $0x190] sm:$0xff] %vm2895, %v2804
    %2947 = vst.msk [vmem:[#allocation3 + $0x198] sm:$0xff] %vm2895, %v2806
    %2948 = vst.msk [vmem:[#allocation3 + $0x1a0] sm:$0xff] %vm2895, %v2808
    %2949 = vst.msk [vmem:[#allocation3 + $0x1a8] sm:$0xff] %vm2895, %v2810
    %2950 = vst.msk [vmem:[#allocation3 + $0x1b0] sm:$0xff] %vm2895, %v2812
    %2951 = vst.msk [vmem:[#allocation3 + $0x1b8] sm:$0xff] %vm2895, %v2814
    %2952 = vst.msk [vmem:[#allocation3 + $0x1c0] sm:$0xff] %vm2895, %v2816
    %2953 = vst.msk [vmem:[#allocation3 + $0x1c8] sm:$0xff] %vm2895, %v2818
    %2954 = vst.msk [vmem:[#allocation3 + $0x1d0] sm:$0xff] %vm2895, %v2820
    %2955 = vst.msk [vmem:[#allocation3 + $0x1d8] sm:$0xff] %vm2895, %v2822
    %2956 = vst.msk [vmem:[#allocation3 + $0x1e0] sm:$0xff] %vm2895, %v2824
    %2957 = vst.msk [vmem:[#allocation3 + $0x1e8] sm:$0xff] %vm2895, %v2826
    %2958 = vst.msk [vmem:[#allocation3 + $0x1f0] sm:$0xff] %vm2895, %v2828
    %2959 = vst.msk [vmem:[#allocation3 + $0x1f8] sm:$0xff] %vm2895, %v2830
    %v2960 = vld [vmem:[#allocation3] sm:$0xff]
    %v2961 = vld [vmem:[#allocation3 + $0x8] sm:$0xff]
    %v2962 = vld [vmem:[#allocation3 + $0x10] sm:$0xff]
    %v2963 = vld [vmem:[#allocation3 + $0x18] sm:$0xff]
    %v2964 = vld [vmem:[#allocation3 + $0x20] sm:$0xff]
    %v2965 = vld [vmem:[#allocation3 + $0x28] sm:$0xff]
    %v2966 = vld [vmem:[#allocation3 + $0x30] sm:$0xff]
    %v2967 = vld [vmem:[#allocation3 + $0x38] sm:$0xff]
    %v2968 = vld [vmem:[#allocation3 + $0x40] sm:$0xff]
    %v2969 = vld [vmem:[#allocation3 + $0x48] sm:$0xff]
    %v2970 = vld [vmem:[#allocation3 + $0x50] sm:$0xff]
    %v2971 = vld [vmem:[#allocation3 + $0x58] sm:$0xff]
    %v2972 = vld [vmem:[#allocation3 + $0x60] sm:$0xff]
    %v2973 = vld [vmem:[#allocation3 + $0x68] sm:$0xff]
    %v2974 = vld [vmem:[#allocation3 + $0x70] sm:$0xff]
    %v2975 = vld [vmem:[#allocation3 + $0x78] sm:$0xff]
    %v2976 = vld [vmem:[#allocation3 + $0x80] sm:$0xff]
    %v2977 = vld [vmem:[#allocation3 + $0x88] sm:$0xff]
    %v2978 = vld [vmem:[#allocation3 + $0x90] sm:$0xff]
    %v2979 = vld [vmem:[#allocation3 + $0x98] sm:$0xff]
    %v2980 = vld [vmem:[#allocation3 + $0xa0] sm:$0xff]
    %v2981 = vld [vmem:[#allocation3 + $0xa8] sm:$0xff]
    %v2982 = vld [vmem:[#allocation3 + $0xb0] sm:$0xff]
    %v2983 = vld [vmem:[#allocation3 + $0xb8] sm:$0xff]
    %v2984 = vld [vmem:[#allocation3 + $0xc0] sm:$0xff]
    %v2985 = vld [vmem:[#allocation3 + $0xc8] sm:$0xff]
    %v2986 = vld [vmem:[#allocation3 + $0xd0] sm:$0xff]
    %v2987 = vld [vmem:[#allocation3 + $0xd8] sm:$0xff]
    %v2988 = vld [vmem:[#allocation3 + $0xe0] sm:$0xff]
    %v2989 = vld [vmem:[#allocation3 + $0xe8] sm:$0xff]
    %v2990 = vld [vmem:[#allocation3 + $0xf0] sm:$0xff]
    %v2991 = vld [vmem:[#allocation3 + $0xf8] sm:$0xff]
    %v2992 = vld [vmem:[#allocation3 + $0x100] sm:$0xff]
    %v2993 = vld [vmem:[#allocation3 + $0x108] sm:$0xff]
    %v2994 = vld [vmem:[#allocation3 + $0x110] sm:$0xff]
    %v2995 = vld [vmem:[#allocation3 + $0x118] sm:$0xff]
    %v2996 = vld [vmem:[#allocation3 + $0x120] sm:$0xff]
    %v2997 = vld [vmem:[#allocation3 + $0x128] sm:$0xff]
    %v2998 = vld [vmem:[#allocation3 + $0x130] sm:$0xff]
    %v2999 = vld [vmem:[#allocation3 + $0x138] sm:$0xff]
    %v3000 = vld [vmem:[#allocation3 + $0x140] sm:$0xff]
    %v3001 = vld [vmem:[#allocation3 + $0x148] sm:$0xff]
    %v3002 = vld [vmem:[#allocation3 + $0x150] sm:$0xff]
    %v3003 = vld [vmem:[#allocation3 + $0x158] sm:$0xff]
    %v3004 = vld [vmem:[#allocation3 + $0x160] sm:$0xff]
    %v3005 = vld [vmem:[#allocation3 + $0x168] sm:$0xff]
    %v3006 = vld [vmem:[#allocation3 + $0x170] sm:$0xff]
    %v3007 = vld [vmem:[#allocation3 + $0x178] sm:$0xff]
    %v3008 = vld [vmem:[#allocation3 + $0x180] sm:$0xff]
    %v3009 = vld [vmem:[#allocation3 + $0x188] sm:$0xff]
    %v3010 = vld [vmem:[#allocation3 + $0x190] sm:$0xff]
    %v3011 = vld [vmem:[#allocation3 + $0x198] sm:$0xff]
    %v3012 = vld [vmem:[#allocation3 + $0x1a0] sm:$0xff]
    %v3013 = vld [vmem:[#allocation3 + $0x1a8] sm:$0xff]
    %v3014 = vld [vmem:[#allocation3 + $0x1b0] sm:$0xff]
    %v3015 = vld [vmem:[#allocation3 + $0x1b8] sm:$0xff]
    %v3016 = vld [vmem:[#allocation3 + $0x1c0] sm:$0xff]
    %v3017 = vld [vmem:[#allocation3 + $0x1c8] sm:$0xff]
    %v3018 = vld [vmem:[#allocation3 + $0x1d0] sm:$0xff]
    %v3019 = vld [vmem:[#allocation3 + $0x1d8] sm:$0xff]
    %v3020 = vld [vmem:[#allocation3 + $0x1e0] sm:$0xff]
    %v3021 = vld [vmem:[#allocation3 + $0x1e8] sm:$0xff]
    %v3022 = vld [vmem:[#allocation3 + $0x1f0] sm:$0xff]
    %v3023 = vld [vmem:[#allocation3 + $0x1f8] sm:$0xff]
    %v3024 = vld [vmem:[%s1] sm:$0xff]
    %v3025 = vld [vmem:[%s1 + $0x8] sm:$0xff]
    %v3026 = vld [vmem:[%s1 + $0x10] sm:$0xff]
    %v3027 = vld [vmem:[%s1 + $0x18] sm:$0xff]
    %v3028 = vld [vmem:[%s1 + $0x20] sm:$0xf]
    %v3029 = vld [vmem:[%s2] sm:$0x1]
    %v3031 = vlaneseq
    %v3032 = vshrl.u32 %v3031, 7
    %v3033 = vsub.s32 0, %v3032
    %v3034 = vrot.slane %v3029, %v3033
    %vm3036 = vcmask 293888
    %v3038 = vsel %vm3036, %v2960, 0
    %v3041 = vsel %vm3036, %v2961, 0
    %v3044 = vsel %vm3036, %v2962, 0
    %v3047 = vsel %vm3036, %v2963, 0
    %v3050 = vsel %vm3036, %v2964, 0
    %v3053 = vsel %vm3036, %v2965, 0
    %v3056 = vsel %vm3036, %v2966, 0
    %v3059 = vsel %vm3036, %v2967, 0
    %v3062 = vsel %vm3036, %v2968, 0
    %v3065 = vsel %vm3036, %v2969, 0
    %v3068 = vsel %vm3036, %v2970, 0
    %v3071 = vsel %vm3036, %v2971, 0
    %v3074 = vsel %vm3036, %v2972, 0
    %v3077 = vsel %vm3036, %v2973, 0
    %v3080 = vsel %vm3036, %v2974, 0
    %v3083 = vsel %vm3036, %v2975, 0
    %v3086 = vsel %vm3036, %v2976, 0
    %v3089 = vsel %vm3036, %v2977, 0
    %v3092 = vsel %vm3036, %v2978, 0
    %v3095 = vsel %vm3036, %v2979, 0
    %v3098 = vsel %vm3036, %v2980, 0
    %v3101 = vsel %vm3036, %v2981, 0
    %v3104 = vsel %vm3036, %v2982, 0
    %v3107 = vsel %vm3036, %v2983, 0
    %v3110 = vsel %vm3036, %v2984, 0
    %v3113 = vsel %vm3036, %v2985, 0
    %v3116 = vsel %vm3036, %v2986, 0
    %v3119 = vsel %vm3036, %v2987, 0
    %v3122 = vsel %vm3036, %v2988, 0
    %v3125 = vsel %vm3036, %v2989, 0
    %v3128 = vsel %vm3036, %v2990, 0
    %v3131 = vsel %vm3036, %v2991, 0
    %v3134 = vsel %vm3036, %v2992, 0
    %v3137 = vsel %vm3036, %v2993, 0
    %v3140 = vsel %vm3036, %v2994, 0
    %v3143 = vsel %vm3036, %v2995, 0
    %v3146 = vsel %vm3036, %v2996, 0
    %v3149 = vsel %vm3036, %v2997, 0
    %v3152 = vsel %vm3036, %v2998, 0
    %v3155 = vsel %vm3036, %v2999, 0
    %v3158 = vsel %vm3036, %v3000, 0
    %v3161 = vsel %vm3036, %v3001, 0
    %v3164 = vsel %vm3036, %v3002, 0
    %v3167 = vsel %vm3036, %v3003, 0
    %v3170 = vsel %vm3036, %v3004, 0
    %v3173 = vsel %vm3036, %v3005, 0
    %v3176 = vsel %vm3036, %v3006, 0
    %v3179 = vsel %vm3036, %v3007, 0
    %v3182 = vsel %vm3036, %v3008, 0
    %v3185 = vsel %vm3036, %v3009, 0
    %v3188 = vsel %vm3036, %v3010, 0
    %v3191 = vsel %vm3036, %v3011, 0
    %v3194 = vsel %vm3036, %v3012, 0
    %v3197 = vsel %vm3036, %v3013, 0
    %v3200 = vsel %vm3036, %v3014, 0
    %v3203 = vsel %vm3036, %v3015, 0
    %v3206 = vsel %vm3036, %v3016, 0
    %v3209 = vsel %vm3036, %v3017, 0
    %v3212 = vsel %vm3036, %v3018, 0
    %v3215 = vsel %vm3036, %v3019, 0
    %v3218 = vsel %vm3036, %v3020, 0
    %v3221 = vsel %vm3036, %v3021, 0
    %v3224 = vsel %vm3036, %v3022, 0
    %v3227 = vsel %vm3036, %v3023, 0
    %vm3229 = vcmask 1043456
    %v3231 = vsel %vm3229, %v3028, 0
    %3233 = vmatprep.subr.mxu0 0.0
    %3234 = vmatpush1.msra.mxu0 %v3024
    %3235 = vmatprep.subr.mxu0 0.0
    %3236 = vmatpush1.msra.mxu0 %v3025
    %3237 = vmatprep.subr.mxu0 0.0
    %3238 = vmatpush1.msra.mxu0 %v3026
    %3239 = vmatprep.subr.mxu0 0.0
    %3240 = vmatpush1.msra.mxu0 %v3027
    %3241 = vmatprep.subr.mxu0 0.0
    %3242 = vmatpush1.msra.mxu0 %v3231
    %3243 = vmatprep.subr.mxu0 0.0
    %3244 = vmatpush1.msra.mxu0 0.0
    %3245 = vmatprep.subr.mxu0 0.0
    %3246 = vmatpush1.msra.mxu0 0.0
    %3247 = vmatprep.subr.mxu0 0.0
    %3248 = vmatpush1.msra.mxu0 0.0
    %3249 = vmatprep.subr.mxu0 0.0
    %3250 = vmatpush1.msra.mxu0 0.0
    %3251 = vmatprep.subr.mxu0 0.0
    %3252 = vmatpush1.msra.mxu0 0.0
    %3253 = vmatprep.subr.mxu0 0.0
    %3254 = vmatpush1.msra.mxu0 0.0
    %3255 = vmatprep.subr.mxu0 0.0
    %3256 = vmatpush1.msra.mxu0 0.0
    %3257 = vmatprep.subr.mxu0 0.0
    %3258 = vmatpush1.msra.mxu0 0.0
    %3259 = vmatprep.subr.mxu0 0.0
    %3260 = vmatpush1.msra.mxu0 0.0
    %3261 = vmatprep.subr.mxu0 0.0
    %3262 = vmatpush1.msra.mxu0 0.0
    %3263 = vmatprep.subr.mxu0 0.0
    %3264 = vmatpush1.msra.mxu0 0.0
    %3265 = vmatprep.subr.mxu0 0.0
    %3266 = vmatpush1.msra.mxu0 0.0
    %3267 = vmatprep.subr.mxu0 0.0
    %3268 = vmatpush1.msra.mxu0 0.0
    %3269 = vmatprep.subr.mxu0 0.0
    %3270 = vmatpush1.msra.mxu0 0.0
    %3271 = vmatprep.subr.mxu0 0.0
    %3272 = vmatpush1.msra.mxu0 0.0
    %3273 = vmatprep.subr.mxu0 0.0
    %3274 = vmatpush1.msra.mxu0 0.0
    %3275 = vmatprep.subr.mxu0 0.0
    %3276 = vmatpush1.msra.mxu0 0.0
    %3277 = vmatprep.subr.mxu0 0.0
    %3278 = vmatpush1.msra.mxu0 0.0
    %3279 = vmatprep.subr.mxu0 0.0
    %3280 = vmatpush1.msra.mxu0 0.0
    %3281 = vmatprep.subr.mxu0 0.0
    %3282 = vmatpush1.msra.mxu0 0.0
    %3283 = vmatprep.subr.mxu0 0.0
    %3284 = vmatpush1.msra.mxu0 0.0
    %3285 = vmatprep.subr.mxu0 0.0
    %3286 = vmatpush1.msra.mxu0 0.0
    %3287 = vmatprep.subr.mxu0 0.0
    %3288 = vmatpush1.msra.mxu0 0.0
    %3289 = vmatprep.subr.mxu0 0.0
    %3290 = vmatpush1.msra.mxu0 0.0
    %3291 = vmatprep.subr.mxu0 0.0
    %3292 = vmatpush1.msra.mxu0 0.0
    %3293 = vmatprep.subr.mxu0 0.0
    %3294 = vmatpush1.msra.mxu0 0.0
    %3295 = vmatprep.subr.mxu0 0.0
    %3296 = vmatpush1.msra.mxu0 0.0
    %3297 = vmatprep.mubr.f32.mxu0 0.0
    %3298 = vmatmul.mubr.f32.gmra.mrb[0].mxu0 %v3038
    %v3299 = vpop.f32.mrb[0].mxu0
    %v3300 = vadd.f32 %v3034, %v3299
    %v3301 = vpop.f32.mrb[0].mxu0
    %3302 = vmatprep.mubr.f32.mxu0 0.0
    %3303 = vmatmul.mubr.f32.gmra.mrb[0].mxu0 %v3041
    %v3304 = vpop.f32.mrb[0].mxu0
    %v3305 = vadd.f32 %v3034, %v3304
    %v3306 = vpop.f32.mrb[0].mxu0
    %3307 = vmatprep.mubr.f32.mxu0 0.0
    %3308 = vmatmul.mubr.f32.gmra.mrb[0].mxu0 %v3044
    %v3309 = vpop.f32.mrb[0].mxu0
    %v3310 = vadd.f32 %v3034, %v3309
    %v3311 = vpop.f32.mrb[0].mxu0
    %3312 = vmatprep.mubr.f32.mxu0 0.0
    %3313 = vmatmul.mubr.f32.gmra.mrb[0].mxu0 %v3047
    %v3314 = vpop.f32.mrb[0].mxu0
    %v3315 = vadd.f32 %v3034, %v3314
    %v3316 = vpop.f32.mrb[0].mxu0
    %3317 = vmatprep.mubr.f32.mxu0 0.0
    %3318 = vmatmul.mubr.f32.gmra.mrb[0].mxu0 %v3050
    %v3319 = vpop.f32.mrb[0].mxu0
    %v3320 = vadd.f32 %v3034, %v3319
    %v3321 = vpop.f32.mrb[0].mxu0
    %3322 = vmatprep.mubr.f32.mxu0 0.0
    %3323 = vmatmul.mubr.f32.gmra.mrb[0].mxu0 %v3053
    %v3324 = vpop.f32.mrb[0].mxu0
    %v3325 = vadd.f32 %v3034, %v3324
    %v3326 = vpop.f32.mrb[0].mxu0
    %3327 = vmatprep.mubr.f32.mxu0 0.0
    %3328 = vmatmul.mubr.f32.gmra.mrb[0].mxu0 %v3056
    %v3329 = vpop.f32.mrb[0].mxu0
    %v3330 = vadd.f32 %v3034, %v3329
    %v3331 = vpop.f32.mrb[0].mxu0
    %3332 = vmatprep.mubr.f32.mxu0 0.0
    %3333 = vmatmul.mubr.f32.gmra.mrb[0].mxu0 %v3059
    %v3334 = vpop.f32.mrb[0].mxu0
    %v3335 = vadd.f32 %v3034, %v3334
    %v3336 = vpop.f32.mrb[0].mxu0
    %3337 = vmatprep.mubr.f32.mxu0 0.0
    %3338 = vmatmul.mubr.f32.gmra.mrb[0].mxu0 %v3062
    %v3339 = vpop.f32.mrb[0].mxu0
    %v3340 = vadd.f32 %v3034, %v3339
    %v3341 = vpop.f32.mrb[0].mxu0
    %3342 = vmatprep.mubr.f32.mxu0 0.0
    %3343 = vmatmul.mubr.f32.gmra.mrb[0].mxu0 %v3065
    %v3344 = vpop.f32.mrb[0].mxu0
    %v3345 = vadd.f32 %v3034, %v3344
    %v3346 = vpop.f32.mrb[0].mxu0
    %3347 = vmatprep.mubr.f32.mxu0 0.0
    %3348 = vmatmul.mubr.f32.gmra.mrb[0].mxu0 %v3068
    %v3349 = vpop.f32.mrb[0].mxu0
    %v3350 = vadd.f32 %v3034, %v3349
    %v3351 = vpop.f32.mrb[0].mxu0
    %3352 = vmatprep.mubr.f32.mxu0 0.0
    %3353 = vmatmul.mubr.f32.gmra.mrb[0].mxu0 %v3071
    %v3354 = vpop.f32.mrb[0].mxu0
    %v3355 = vadd.f32 %v3034, %v3354
    %v3356 = vpop.f32.mrb[0].mxu0
    %3357 = vmatprep.mubr.f32.mxu0 0.0
    %3358 = vmatmul.mubr.f32.gmra.mrb[0].mxu0 %v3074
    %v3359 = vpop.f32.mrb[0].mxu0
    %v3360 = vadd.f32 %v3034, %v3359
    %v3361 = vpop.f32.mrb[0].mxu0
    %3362 = vmatprep.mubr.f32.mxu0 0.0
    %3363 = vmatmul.mubr.f32.gmra.mrb[0].mxu0 %v3077
    %v3364 = vpop.f32.mrb[0].mxu0
    %v3365 = vadd.f32 %v3034, %v3364
    %v3366 = vpop.f32.mrb[0].mxu0
    %3367 = vmatprep.mubr.f32.mxu0 0.0
    %3368 = vmatmul.mubr.f32.gmra.mrb[0].mxu0 %v3080
    %v3369 = vpop.f32.mrb[0].mxu0
    %v3370 = vadd.f32 %v3034, %v3369
    %v3371 = vpop.f32.mrb[0].mxu0
    %3372 = vmatprep.mubr.f32.mxu0 0.0
    %3373 = vmatmul.mubr.f32.gmra.mrb[0].mxu0 %v3083
    %v3374 = vpop.f32.mrb[0].mxu0
    %v3375 = vadd.f32 %v3034, %v3374
    %v3376 = vpop.f32.mrb[0].mxu0
    %3377 = vmatprep.mubr.f32.mxu0 0.0
    %3378 = vmatmul.mubr.f32.gmra.mrb[0].mxu0 %v3086
    %v3379 = vpop.f32.mrb[0].mxu0
    %v3380 = vadd.f32 %v3034, %v3379
    %v3381 = vpop.f32.mrb[0].mxu0
    %3382 = vmatprep.mubr.f32.mxu0 0.0
    %3383 = vmatmul.mubr.f32.gmra.mrb[0].mxu0 %v3089
    %v3384 = vpop.f32.mrb[0].mxu0
    %v3385 = vadd.f32 %v3034, %v3384
    %v3386 = vpop.f32.mrb[0].mxu0
    %3387 = vmatprep.mubr.f32.mxu0 0.0
    %3388 = vmatmul.mubr.f32.gmra.mrb[0].mxu0 %v3092
    %v3389 = vpop.f32.mrb[0].mxu0
    %v3390 = vadd.f32 %v3034, %v3389
    %v3391 = vpop.f32.mrb[0].mxu0
    %3392 = vmatprep.mubr.f32.mxu0 0.0
    %3393 = vmatmul.mubr.f32.gmra.mrb[0].mxu0 %v3095
    %v3394 = vpop.f32.mrb[0].mxu0
    %v3395 = vadd.f32 %v3034, %v3394
    %v3396 = vpop.f32.mrb[0].mxu0
    %3397 = vmatprep.mubr.f32.mxu0 0.0
    %3398 = vmatmul.mubr.f32.gmra.mrb[0].mxu0 %v3098
    %v3399 = vpop.f32.mrb[0].mxu0
    %v3400 = vadd.f32 %v3034, %v3399
    %v3401 = vpop.f32.mrb[0].mxu0
    %3402 = vmatprep.mubr.f32.mxu0 0.0
    %3403 = vmatmul.mubr.f32.gmra.mrb[0].mxu0 %v3101
    %v3404 = vpop.f32.mrb[0].mxu0
    %v3405 = vadd.f32 %v3034, %v3404
    %v3406 = vpop.f32.mrb[0].mxu0
    %3407 = vmatprep.mubr.f32.mxu0 0.0
    %3408 = vmatmul.mubr.f32.gmra.mrb[0].mxu0 %v3104
    %v3409 = vpop.f32.mrb[0].mxu0
    %v3410 = vadd.f32 %v3034, %v3409
    %v3411 = vpop.f32.mrb[0].mxu0
    %3412 = vmatprep.mubr.f32.mxu0 0.0
    %3413 = vmatmul.mubr.f32.gmra.mrb[0].mxu0 %v3107
    %v3414 = vpop.f32.mrb[0].mxu0
    %v3415 = vadd.f32 %v3034, %v3414
    %v3416 = vpop.f32.mrb[0].mxu0
    %3417 = vmatprep.mubr.f32.mxu0 0.0
    %3418 = vmatmul.mubr.f32.gmra.mrb[0].mxu0 %v3110
    %v3419 = vpop.f32.mrb[0].mxu0
    %v3420 = vadd.f32 %v3034, %v3419
    %v3421 = vpop.f32.mrb[0].mxu0
    %3422 = vmatprep.mubr.f32.mxu0 0.0
    %3423 = vmatmul.mubr.f32.gmra.mrb[0].mxu0 %v3113
    %v3424 = vpop.f32.mrb[0].mxu0
    %v3425 = vadd.f32 %v3034, %v3424
    %v3426 = vpop.f32.mrb[0].mxu0
    %3427 = vmatprep.mubr.f32.mxu0 0.0
    %3428 = vmatmul.mubr.f32.gmra.mrb[0].mxu0 %v3116
    %v3429 = vpop.f32.mrb[0].mxu0
    %v3430 = vadd.f32 %v3034, %v3429
    %v3431 = vpop.f32.mrb[0].mxu0
    %3432 = vmatprep.mubr.f32.mxu0 0.0
    %3433 = vmatmul.mubr.f32.gmra.mrb[0].mxu0 %v3119
    %v3434 = vpop.f32.mrb[0].mxu0
    %v3435 = vadd.f32 %v3034, %v3434
    %v3436 = vpop.f32.mrb[0].mxu0
    %3437 = vmatprep.mubr.f32.mxu0 0.0
    %3438 = vmatmul.mubr.f32.gmra.mrb[0].mxu0 %v3122
    %v3439 = vpop.f32.mrb[0].mxu0
    %v3440 = vadd.f32 %v3034, %v3439
    %v3441 = vpop.f32.mrb[0].mxu0
    %3442 = vmatprep.mubr.f32.mxu0 0.0
    %3443 = vmatmul.mubr.f32.gmra.mrb[0].mxu0 %v3125
    %v3444 = vpop.f32.mrb[0].mxu0
    %v3445 = vadd.f32 %v3034, %v3444
    %v3446 = vpop.f32.mrb[0].mxu0
    %3447 = vmatprep.mubr.f32.mxu0 0.0
    %3448 = vmatmul.mubr.f32.gmra.mrb[0].mxu0 %v3128
    %v3449 = vpop.f32.mrb[0].mxu0
    %v3450 = vadd.f32 %v3034, %v3449
    %v3451 = vpop.f32.mrb[0].mxu0
    %3452 = vmatprep.mubr.f32.mxu0 0.0
    %3453 = vmatmul.mubr.f32.gmra.mrb[0].mxu0 %v3131
    %v3454 = vpop.f32.mrb[0].mxu0
    %v3455 = vadd.f32 %v3034, %v3454
    %v3456 = vpop.f32.mrb[0].mxu0
    %3457 = vmatprep.mubr.f32.mxu0 0.0
    %3458 = vmatmul.mubr.f32.gmra.mrb[0].mxu0 %v3134
    %v3459 = vpop.f32.mrb[0].mxu0
    %v3460 = vadd.f32 %v3034, %v3459
    %v3461 = vpop.f32.mrb[0].mxu0
    %3462 = vmatprep.mubr.f32.mxu0 0.0
    %3463 = vmatmul.mubr.f32.gmra.mrb[0].mxu0 %v3137
    %v3464 = vpop.f32.mrb[0].mxu0
    %v3465 = vadd.f32 %v3034, %v3464
    %v3466 = vpop.f32.mrb[0].mxu0
    %3467 = vmatprep.mubr.f32.mxu0 0.0
    %3468 = vmatmul.mubr.f32.gmra.mrb[0].mxu0 %v3140
    %v3469 = vpop.f32.mrb[0].mxu0
    %v3470 = vadd.f32 %v3034, %v3469
    %v3471 = vpop.f32.mrb[0].mxu0
    %3472 = vmatprep.mubr.f32.mxu0 0.0
    %3473 = vmatmul.mubr.f32.gmra.mrb[0].mxu0 %v3143
    %v3474 = vpop.f32.mrb[0].mxu0
    %v3475 = vadd.f32 %v3034, %v3474
    %v3476 = vpop.f32.mrb[0].mxu0
    %3477 = vmatprep.mubr.f32.mxu0 0.0
    %3478 = vmatmul.mubr.f32.gmra.mrb[0].mxu0 %v3146
    %v3479 = vpop.f32.mrb[0].mxu0
    %v3480 = vadd.f32 %v3034, %v3479
    %v3481 = vpop.f32.mrb[0].mxu0
    %3482 = vmatprep.mubr.f32.mxu0 0.0
    %3483 = vmatmul.mubr.f32.gmra.mrb[0].mxu0 %v3149
    %v3484 = vpop.f32.mrb[0].mxu0
    %v3485 = vadd.f32 %v3034, %v3484
    %v3486 = vpop.f32.mrb[0].mxu0
    %3487 = vmatprep.mubr.f32.mxu0 0.0
    %3488 = vmatmul.mubr.f32.gmra.mrb[0].mxu0 %v3152
    %v3489 = vpop.f32.mrb[0].mxu0
    %v3490 = vadd.f32 %v3034, %v3489
    %v3491 = vpop.f32.mrb[0].mxu0
    %3492 = vmatprep.mubr.f32.mxu0 0.0
    %3493 = vmatmul.mubr.f32.gmra.mrb[0].mxu0 %v3155
    %v3494 = vpop.f32.mrb[0].mxu0
    %v3495 = vadd.f32 %v3034, %v3494
    %v3496 = vpop.f32.mrb[0].mxu0
    %3497 = vmatprep.mubr.f32.mxu0 0.0
    %3498 = vmatmul.mubr.f32.gmra.mrb[0].mxu0 %v3158
    %v3499 = vpop.f32.mrb[0].mxu0
    %v3500 = vadd.f32 %v3034, %v3499
    %v3501 = vpop.f32.mrb[0].mxu0
    %3502 = vmatprep.mubr.f32.mxu0 0.0
    %3503 = vmatmul.mubr.f32.gmra.mrb[0].mxu0 %v3161
    %v3504 = vpop.f32.mrb[0].mxu0
    %v3505 = vadd.f32 %v3034, %v3504
    %v3506 = vpop.f32.mrb[0].mxu0
    %3507 = vmatprep.mubr.f32.mxu0 0.0
    %3508 = vmatmul.mubr.f32.gmra.mrb[0].mxu0 %v3164
    %v3509 = vpop.f32.mrb[0].mxu0
    %v3510 = vadd.f32 %v3034, %v3509
    %v3511 = vpop.f32.mrb[0].mxu0
    %3512 = vmatprep.mubr.f32.mxu0 0.0
    %3513 = vmatmul.mubr.f32.gmra.mrb[0].mxu0 %v3167
    %v3514 = vpop.f32.mrb[0].mxu0
    %v3515 = vadd.f32 %v3034, %v3514
    %v3516 = vpop.f32.mrb[0].mxu0
    %3517 = vmatprep.mubr.f32.mxu0 0.0
    %3518 = vmatmul.mubr.f32.gmra.mrb[0].mxu0 %v3170
    %v3519 = vpop.f32.mrb[0].mxu0
    %v3520 = vadd.f32 %v3034, %v3519
    %v3521 = vpop.f32.mrb[0].mxu0
    %3522 = vmatprep.mubr.f32.mxu0 0.0
    %3523 = vmatmul.mubr.f32.gmra.mrb[0].mxu0 %v3173
    %v3524 = vpop.f32.mrb[0].mxu0
    %v3525 = vadd.f32 %v3034, %v3524
    %v3526 = vpop.f32.mrb[0].mxu0
    %3527 = vmatprep.mubr.f32.mxu0 0.0
    %3528 = vmatmul.mubr.f32.gmra.mrb[0].mxu0 %v3176
    %v3529 = vpop.f32.mrb[0].mxu0
    %v3530 = vadd.f32 %v3034, %v3529
    %v3531 = vpop.f32.mrb[0].mxu0
    %3532 = vmatprep.mubr.f32.mxu0 0.0
    %3533 = vmatmul.mubr.f32.gmra.mrb[0].mxu0 %v3179
    %v3534 = vpop.f32.mrb[0].mxu0
    %v3535 = vadd.f32 %v3034, %v3534
    %v3536 = vpop.f32.mrb[0].mxu0
    %3537 = vmatprep.mubr.f32.mxu0 0.0
    %3538 = vmatmul.mubr.f32.gmra.mrb[0].mxu0 %v3182
    %v3539 = vpop.f32.mrb[0].mxu0
    %v3540 = vadd.f32 %v3034, %v3539
    %v3541 = vpop.f32.mrb[0].mxu0
    %3542 = vmatprep.mubr.f32.mxu0 0.0
    %3543 = vmatmul.mubr.f32.gmra.mrb[0].mxu0 %v3185
    %v3544 = vpop.f32.mrb[0].mxu0
    %v3545 = vadd.f32 %v3034, %v3544
    %v3546 = vpop.f32.mrb[0].mxu0
    %3547 = vmatprep.mubr.f32.mxu0 0.0
    %3548 = vmatmul.mubr.f32.gmra.mrb[0].mxu0 %v3188
    %v3549 = vpop.f32.mrb[0].mxu0
    %v3550 = vadd.f32 %v3034, %v3549
    %v3551 = vpop.f32.mrb[0].mxu0
    %3552 = vmatprep.mubr.f32.mxu0 0.0
    %3553 = vmatmul.mubr.f32.gmra.mrb[0].mxu0 %v3191
    %v3554 = vpop.f32.mrb[0].mxu0
    %v3555 = vadd.f32 %v3034, %v3554
    %v3556 = vpop.f32.mrb[0].mxu0
    %3557 = vmatprep.mubr.f32.mxu0 0.0
    %3558 = vmatmul.mubr.f32.gmra.mrb[0].mxu0 %v3194
    %v3559 = vpop.f32.mrb[0].mxu0
    %v3560 = vadd.f32 %v3034, %v3559
    %v3561 = vpop.f32.mrb[0].mxu0
    %3562 = vmatprep.mubr.f32.mxu0 0.0
    %3563 = vmatmul.mubr.f32.gmra.mrb[0].mxu0 %v3197
    %v3564 = vpop.f32.mrb[0].mxu0
    %v3565 = vadd.f32 %v3034, %v3564
    %v3566 = vpop.f32.mrb[0].mxu0
    %3567 = vmatprep.mubr.f32.mxu0 0.0
    %3568 = vmatmul.mubr.f32.gmra.mrb[0].mxu0 %v3200
    %v3569 = vpop.f32.mrb[0].mxu0
    %v3570 = vadd.f32 %v3034, %v3569
    %v3571 = vpop.f32.mrb[0].mxu0
    %3572 = vmatprep.mubr.f32.mxu0 0.0
    %3573 = vmatmul.mubr.f32.gmra.mrb[0].mxu0 %v3203
    %v3574 = vpop.f32.mrb[0].mxu0
    %v3575 = vadd.f32 %v3034, %v3574
    %v3576 = vpop.f32.mrb[0].mxu0
    %3577 = vmatprep.mubr.f32.mxu0 0.0
    %3578 = vmatmul.mubr.f32.gmra.mrb[0].mxu0 %v3206
    %v3579 = vpop.f32.mrb[0].mxu0
    %v3580 = vadd.f32 %v3034, %v3579
    %v3581 = vpop.f32.mrb[0].mxu0
    %3582 = vmatprep.mubr.f32.mxu0 0.0
    %3583 = vmatmul.mubr.f32.gmra.mrb[0].mxu0 %v3209
    %v3584 = vpop.f32.mrb[0].mxu0
    %v3585 = vadd.f32 %v3034, %v3584
    %v3586 = vpop.f32.mrb[0].mxu0
    %3587 = vmatprep.mubr.f32.mxu0 0.0
    %3588 = vmatmul.mubr.f32.gmra.mrb[0].mxu0 %v3212
    %v3589 = vpop.f32.mrb[0].mxu0
    %v3590 = vadd.f32 %v3034, %v3589
    %v3591 = vpop.f32.mrb[0].mxu0
    %3592 = vmatprep.mubr.f32.mxu0 0.0
    %3593 = vmatmul.mubr.f32.gmra.mrb[0].mxu0 %v3215
    %v3594 = vpop.f32.mrb[0].mxu0
    %v3595 = vadd.f32 %v3034, %v3594
    %v3596 = vpop.f32.mrb[0].mxu0
    %3597 = vmatprep.mubr.f32.mxu0 0.0
    %3598 = vmatmul.mubr.f32.gmra.mrb[0].mxu0 %v3218
    %v3599 = vpop.f32.mrb[0].mxu0
    %v3600 = vadd.f32 %v3034, %v3599
    %v3601 = vpop.f32.mrb[0].mxu0
    %3602 = vmatprep.mubr.f32.mxu0 0.0
    %3603 = vmatmul.mubr.f32.gmra.mrb[0].mxu0 %v3221
    %v3604 = vpop.f32.mrb[0].mxu0
    %v3605 = vadd.f32 %v3034, %v3604
    %v3606 = vpop.f32.mrb[0].mxu0
    %3607 = vmatprep.mubr.f32.mxu0 0.0
    %3608 = vmatmul.mubr.f32.gmra.mrb[0].mxu0 %v3224
    %v3609 = vpop.f32.mrb[0].mxu0
    %v3610 = vadd.f32 %v3034, %v3609
    %v3611 = vpop.f32.mrb[0].mxu0
    %3612 = vmatprep.mubr.f32.mxu0 0.0
    %3613 = vmatmul.mubr.f32.gmra.mrb[0].mxu0 %v3227
    %v3614 = vpop.f32.mrb[0].mxu0
    %v3615 = vadd.f32 %v3034, %v3614
    %v3616 = vpop.f32.mrb[0].mxu0
    %3617 = vdwg.mxu0
    %v3618 = vmax.f32 %v3300, 0.0
    %v3619 = vmax.f32 %v3305, 0.0
    %v3620 = vmax.f32 %v3310, 0.0
    %v3621 = vmax.f32 %v3315, 0.0
    %v3622 = vmax.f32 %v3320, 0.0
    %v3623 = vmax.f32 %v3325, 0.0
    %v3624 = vmax.f32 %v3330, 0.0
    %v3625 = vmax.f32 %v3335, 0.0
    %v3626 = vmax.f32 %v3340, 0.0
    %v3627 = vmax.f32 %v3345, 0.0
    %v3628 = vmax.f32 %v3350, 0.0
    %v3629 = vmax.f32 %v3355, 0.0
    %v3630 = vmax.f32 %v3360, 0.0
    %v3631 = vmax.f32 %v3365, 0.0
    %v3632 = vmax.f32 %v3370, 0.0
    %v3633 = vmax.f32 %v3375, 0.0
    %v3634 = vmax.f32 %v3380, 0.0
    %v3635 = vmax.f32 %v3385, 0.0
    %v3636 = vmax.f32 %v3390, 0.0
    %v3637 = vmax.f32 %v3395, 0.0
    %v3638 = vmax.f32 %v3400, 0.0
    %v3639 = vmax.f32 %v3405, 0.0
    %v3640 = vmax.f32 %v3410, 0.0
    %v3641 = vmax.f32 %v3415, 0.0
    %v3642 = vmax.f32 %v3420, 0.0
    %v3643 = vmax.f32 %v3425, 0.0
    %v3644 = vmax.f32 %v3430, 0.0
    %v3645 = vmax.f32 %v3435, 0.0
    %v3646 = vmax.f32 %v3440, 0.0
    %v3647 = vmax.f32 %v3445, 0.0
    %v3648 = vmax.f32 %v3450, 0.0
    %v3649 = vmax.f32 %v3455, 0.0
    %v3650 = vmax.f32 %v3460, 0.0
    %v3651 = vmax.f32 %v3465, 0.0
    %v3652 = vmax.f32 %v3470, 0.0
    %v3653 = vmax.f32 %v3475, 0.0
    %v3654 = vmax.f32 %v3480, 0.0
    %v3655 = vmax.f32 %v3485, 0.0
    %v3656 = vmax.f32 %v3490, 0.0
    %v3657 = vmax.f32 %v3495, 0.0
    %v3658 = vmax.f32 %v3500, 0.0
    %v3659 = vmax.f32 %v3505, 0.0
    %v3660 = vmax.f32 %v3510, 0.0
    %v3661 = vmax.f32 %v3515, 0.0
    %v3662 = vmax.f32 %v3520, 0.0
    %v3663 = vmax.f32 %v3525, 0.0
    %v3664 = vmax.f32 %v3530, 0.0
    %v3665 = vmax.f32 %v3535, 0.0
    %v3666 = vmax.f32 %v3540, 0.0
    %v3667 = vmax.f32 %v3545, 0.0
    %v3668 = vmax.f32 %v3550, 0.0
    %v3669 = vmax.f32 %v3555, 0.0
    %v3670 = vmax.f32 %v3560, 0.0
    %v3671 = vmax.f32 %v3565, 0.0
    %v3672 = vmax.f32 %v3570, 0.0
    %v3673 = vmax.f32 %v3575, 0.0
    %v3674 = vmax.f32 %v3580, 0.0
    %v3675 = vmax.f32 %v3585, 0.0
    %v3676 = vmax.f32 %v3590, 0.0
    %v3677 = vmax.f32 %v3595, 0.0
    %v3678 = vmax.f32 %v3600, 0.0
    %v3679 = vmax.f32 %v3605, 0.0
    %v3680 = vmax.f32 %v3610, 0.0
    %v3681 = vmax.f32 %v3615, 0.0
    %vm3682 = vcmask 64512
    %3683 = vst.msk [vmem:[%s5] sm:$0xff] %vm3682, %v3618
    %3684 = vst.msk [vmem:[%s5 + $0x8] sm:$0xff] %vm3682, %v3619
    %3685 = vst.msk [vmem:[%s5 + $0x10] sm:$0xff] %vm3682, %v3620
    %3686 = vst.msk [vmem:[%s5 + $0x18] sm:$0xff] %vm3682, %v3621
    %3687 = vst.msk [vmem:[%s5 + $0x20] sm:$0xff] %vm3682, %v3622
    %3688 = vst.msk [vmem:[%s5 + $0x28] sm:$0xff] %vm3682, %v3623
    %3689 = vst.msk [vmem:[%s5 + $0x30] sm:$0xff] %vm3682, %v3624
    %3690 = vst.msk [vmem:[%s5 + $0x38] sm:$0xff] %vm3682, %v3625
    %3691 = vst.msk [vmem:[%s5 + $0x40] sm:$0xff] %vm3682, %v3626
    %3692 = vst.msk [vmem:[%s5 + $0x48] sm:$0xff] %vm3682, %v3627
    %3693 = vst.msk [vmem:[%s5 + $0x50] sm:$0xff] %vm3682, %v3628
    %3694 = vst.msk [vmem:[%s5 + $0x58] sm:$0xff] %vm3682, %v3629
    %3695 = vst.msk [vmem:[%s5 + $0x60] sm:$0xff] %vm3682, %v3630
    %3696 = vst.msk [vmem:[%s5 + $0x68] sm:$0xff] %vm3682, %v3631
    %3697 = vst.msk [vmem:[%s5 + $0x70] sm:$0xff] %vm3682, %v3632
    %3698 = vst.msk [vmem:[%s5 + $0x78] sm:$0xff] %vm3682, %v3633
    %3699 = vst.msk [vmem:[%s5 + $0x80] sm:$0xff] %vm3682, %v3634
    %3700 = vst.msk [vmem:[%s5 + $0x88] sm:$0xff] %vm3682, %v3635
    %3701 = vst.msk [vmem:[%s5 + $0x90] sm:$0xff] %vm3682, %v3636
    %3702 = vst.msk [vmem:[%s5 + $0x98] sm:$0xff] %vm3682, %v3637
    %3703 = vst.msk [vmem:[%s5 + $0xa0] sm:$0xff] %vm3682, %v3638
    %3704 = vst.msk [vmem:[%s5 + $0xa8] sm:$0xff] %vm3682, %v3639
    %3705 = vst.msk [vmem:[%s5 + $0xb0] sm:$0xff] %vm3682, %v3640
    %3706 = vst.msk [vmem:[%s5 + $0xb8] sm:$0xff] %vm3682, %v3641
    %3707 = vst.msk [vmem:[%s5 + $0xc0] sm:$0xff] %vm3682, %v3642
    %3708 = vst.msk [vmem:[%s5 + $0xc8] sm:$0xff] %vm3682, %v3643
    %3709 = vst.msk [vmem:[%s5 + $0xd0] sm:$0xff] %vm3682, %v3644
    %3710 = vst.msk [vmem:[%s5 + $0xd8] sm:$0xff] %vm3682, %v3645
    %3711 = vst.msk [vmem:[%s5 + $0xe0] sm:$0xff] %vm3682, %v3646
    %3712 = vst.msk [vmem:[%s5 + $0xe8] sm:$0xff] %vm3682, %v3647
    %3713 = vst.msk [vmem:[%s5 + $0xf0] sm:$0xff] %vm3682, %v3648
    %3714 = vst.msk [vmem:[%s5 + $0xf8] sm:$0xff] %vm3682, %v3649
    %3715 = vst.msk [vmem:[%s5 + $0x100] sm:$0xff] %vm3682, %v3650
    %3716 = vst.msk [vmem:[%s5 + $0x108] sm:$0xff] %vm3682, %v3651
    %3717 = vst.msk [vmem:[%s5 + $0x110] sm:$0xff] %vm3682, %v3652
    %3718 = vst.msk [vmem:[%s5 + $0x118] sm:$0xff] %vm3682, %v3653
    %3719 = vst.msk [vmem:[%s5 + $0x120] sm:$0xff] %vm3682, %v3654
    %3720 = vst.msk [vmem:[%s5 + $0x128] sm:$0xff] %vm3682, %v3655
    %3721 = vst.msk [vmem:[%s5 + $0x130] sm:$0xff] %vm3682, %v3656
    %3722 = vst.msk [vmem:[%s5 + $0x138] sm:$0xff] %vm3682, %v3657
    %3723 = vst.msk [vmem:[%s5 + $0x140] sm:$0xff] %vm3682, %v3658
    %3724 = vst.msk [vmem:[%s5 + $0x148] sm:$0xff] %vm3682, %v3659
    %3725 = vst.msk [vmem:[%s5 + $0x150] sm:$0xff] %vm3682, %v3660
    %3726 = vst.msk [vmem:[%s5 + $0x158] sm:$0xff] %vm3682, %v3661
    %3727 = vst.msk [vmem:[%s5 + $0x160] sm:$0xff] %vm3682, %v3662
    %3728 = vst.msk [vmem:[%s5 + $0x168] sm:$0xff] %vm3682, %v3663
    %3729 = vst.msk [vmem:[%s5 + $0x170] sm:$0xff] %vm3682, %v3664
    %3730 = vst.msk [vmem:[%s5 + $0x178] sm:$0xff] %vm3682, %v3665
    %3731 = vst.msk [vmem:[%s5 + $0x180] sm:$0xff] %vm3682, %v3666
    %3732 = vst.msk [vmem:[%s5 + $0x188] sm:$0xff] %vm3682, %v3667
    %3733 = vst.msk [vmem:[%s5 + $0x190] sm:$0xff] %vm3682, %v3668
    %3734 = vst.msk [vmem:[%s5 + $0x198] sm:$0xff] %vm3682, %v3669
    %3735 = vst.msk [vmem:[%s5 + $0x1a0] sm:$0xff] %vm3682, %v3670
    %3736 = vst.msk [vmem:[%s5 + $0x1a8] sm:$0xff] %vm3682, %v3671
    %3737 = vst.msk [vmem:[%s5 + $0x1b0] sm:$0xff] %vm3682, %v3672
    %3738 = vst.msk [vmem:[%s5 + $0x1b8] sm:$0xff] %vm3682, %v3673
    %3739 = vst.msk [vmem:[%s5 + $0x1c0] sm:$0xff] %vm3682, %v3674
    %3740 = vst.msk [vmem:[%s5 + $0x1c8] sm:$0xff] %vm3682, %v3675
    %3741 = vst.msk [vmem:[%s5 + $0x1d0] sm:$0xff] %vm3682, %v3676
    %3742 = vst.msk [vmem:[%s5 + $0x1d8] sm:$0xff] %vm3682, %v3677
    %3743 = vst.msk [vmem:[%s5 + $0x1e0] sm:$0xff] %vm3682, %v3678
    %3744 = vst.msk [vmem:[%s5 + $0x1e8] sm:$0xff] %vm3682, %v3679
    %3745 = vst.msk [vmem:[%s5 + $0x1f0] sm:$0xff] %vm3682, %v3680
    %3746 = vst.msk [vmem:[%s5 + $0x1f8] sm:$0xff] %vm3682, %v3681
    %v3747 = vadd.f32 %v3618, %v3620
    %v3748 = vadd.f32 %v3619, %v3621
    %v3749 = vadd.f32 %v3622, %v3624
    %v3750 = vadd.f32 %v3623, %v3625
    %v3751 = vadd.f32 %v3626, %v3628
    %v3752 = vadd.f32 %v3627, %v3629
    %v3753 = vadd.f32 %v3630, %v3632
    %v3754 = vadd.f32 %v3631, %v3633
    %v3755 = vadd.f32 %v3634, %v3636
    %v3756 = vadd.f32 %v3635, %v3637
    %v3757 = vadd.f32 %v3638, %v3640
    %v3758 = vadd.f32 %v3639, %v3641
    %v3759 = vadd.f32 %v3642, %v3644
    %v3760 = vadd.f32 %v3643, %v3645
    %v3761 = vadd.f32 %v3646, %v3648
    %v3762 = vadd.f32 %v3647, %v3649
    %v3763 = vadd.f32 %v3650, %v3652
    %v3764 = vadd.f32 %v3651, %v3653
    %v3765 = vadd.f32 %v3654, %v3656
    %v3766 = vadd.f32 %v3655, %v3657
    %v3767 = vadd.f32 %v3658, %v3660
    %v3768 = vadd.f32 %v3659, %v3661
    %v3769 = vadd.f32 %v3662, %v3664
    %v3770 = vadd.f32 %v3663, %v3665
    %v3771 = vadd.f32 %v3666, %v3668
    %v3772 = vadd.f32 %v3667, %v3669
    %v3773 = vadd.f32 %v3670, %v3672
    %v3774 = vadd.f32 %v3671, %v3673
    %v3775 = vadd.f32 %v3674, %v3676
    %v3776 = vadd.f32 %v3675, %v3677
    %v3777 = vadd.f32 %v3678, %v3680
    %v3778 = vadd.f32 %v3679, %v3681
    %v3811 = vcombine.high %v3747, %v3747
    %v3813 = vunpack.c.l.s4 1983009808
    %v3814 = vunpack.c.0.s8 %v3813
    %v3815 = vlaneseq
    %v3816 = vshrl.u32 %v3815, 7
    %v3817 = vsub.s32 %v3814, %v3816
    %v3818 = vrot.slane %v3747, %v3817
    %v3820 = vunpack.c.l.s4 1983009808
    %v3821 = vunpack.c.0.s8 %v3820
    %v3822 = vlaneseq
    %v3823 = vshrl.u32 %v3822, 7
    %v3824 = vsub.s32 %v3821, %v3823
    %v3825 = vrot.slane %v3811, %v3824
    %v3826 = vcombine.high %v3818, %v3818
    %v3827 = vcombine.high %v3825, %v3825
    %v3828 = vcombine.high %v3748, %v3748
    %v3830 = vunpack.c.l.s4 1983009808
    %v3831 = vunpack.c.0.s8 %v3830
    %v3832 = vlaneseq
    %v3833 = vshrl.u32 %v3832, 7
    %v3834 = vsub.s32 %v3831, %v3833
    %v3835 = vrot.slane %v3748, %v3834
    %v3837 = vunpack.c.l.s4 1983009808
    %v3838 = vunpack.c.0.s8 %v3837
    %v3839 = vlaneseq
    %v3840 = vshrl.u32 %v3839, 7
    %v3841 = vsub.s32 %v3838, %v3840
    %v3842 = vrot.slane %v3828, %v3841
    %v3843 = vcombine.high %v3835, %v3835
    %v3844 = vcombine.high %v3842, %v3842
    %v3845 = vcombine.high %v3749, %v3749
    %v3847 = vunpack.c.l.s4 1983009808
    %v3848 = vunpack.c.0.s8 %v3847
    %v3849 = vlaneseq
    %v3850 = vshrl.u32 %v3849, 7
    %v3851 = vsub.s32 %v3848, %v3850
    %v3852 = vrot.slane %v3749, %v3851
    %v3854 = vunpack.c.l.s4 1983009808
    %v3855 = vunpack.c.0.s8 %v3854
    %v3856 = vlaneseq
    %v3857 = vshrl.u32 %v3856, 7
    %v3858 = vsub.s32 %v3855, %v3857
    %v3859 = vrot.slane %v3845, %v3858
    %v3860 = vcombine.high %v3852, %v3852
    %v3861 = vcombine.high %v3859, %v3859
    %v3862 = vcombine.high %v3750, %v3750
    %v3864 = vunpack.c.l.s4 1983009808
    %v3865 = vunpack.c.0.s8 %v3864
    %v3866 = vlaneseq
    %v3867 = vshrl.u32 %v3866, 7
    %v3868 = vsub.s32 %v3865, %v3867
    %v3869 = vrot.slane %v3750, %v3868
    %v3871 = vunpack.c.l.s4 1983009808
    %v3872 = vunpack.c.0.s8 %v3871
    %v3873 = vlaneseq
    %v3874 = vshrl.u32 %v3873, 7
    %v3875 = vsub.s32 %v3872, %v3874
    %v3876 = vrot.slane %v3862, %v3875
    %v3877 = vcombine.high %v3869, %v3869
    %v3878 = vcombine.high %v3876, %v3876
    %v3879 = vcombine.high %v3751, %v3751
    %v3881 = vunpack.c.l.s4 1983009808
    %v3882 = vunpack.c.0.s8 %v3881
    %v3883 = vlaneseq
    %v3884 = vshrl.u32 %v3883, 7
    %v3885 = vsub.s32 %v3882, %v3884
    %v3886 = vrot.slane %v3751, %v3885
    %v3888 = vunpack.c.l.s4 1983009808
    %v3889 = vunpack.c.0.s8 %v3888
    %v3890 = vlaneseq
    %v3891 = vshrl.u32 %v3890, 7
    %v3892 = vsub.s32 %v3889, %v3891
    %v3893 = vrot.slane %v3879, %v3892
    %v3894 = vcombine.high %v3886, %v3886
    %v3895 = vcombine.high %v3893, %v3893
    %v3896 = vcombine.high %v3752, %v3752
    %v3898 = vunpack.c.l.s4 1983009808
    %v3899 = vunpack.c.0.s8 %v3898
    %v3900 = vlaneseq
    %v3901 = vshrl.u32 %v3900, 7
    %v3902 = vsub.s32 %v3899, %v3901
    %v3903 = vrot.slane %v3752, %v3902
    %v3905 = vunpack.c.l.s4 1983009808
    %v3906 = vunpack.c.0.s8 %v3905
    %v3907 = vlaneseq
    %v3908 = vshrl.u32 %v3907, 7
    %v3909 = vsub.s32 %v3906, %v3908
    %v3910 = vrot.slane %v3896, %v3909
    %v3911 = vcombine.high %v3903, %v3903
    %v3912 = vcombine.high %v3910, %v3910
    %v3913 = vcombine.high %v3753, %v3753
    %v3915 = vunpack.c.l.s4 1983009808
    %v3916 = vunpack.c.0.s8 %v3915
    %v3917 = vlaneseq
    %v3918 = vshrl.u32 %v3917, 7
    %v3919 = vsub.s32 %v3916, %v3918
    %v3920 = vrot.slane %v3753, %v3919
    %v3922 = vunpack.c.l.s4 1983009808
    %v3923 = vunpack.c.0.s8 %v3922
    %v3924 = vlaneseq
    %v3925 = vshrl.u32 %v3924, 7
    %v3926 = vsub.s32 %v3923, %v3925
    %v3927 = vrot.slane %v3913, %v3926
    %v3928 = vcombine.high %v3920, %v3920
    %v3929 = vcombine.high %v3927, %v3927
    %v3930 = vcombine.high %v3754, %v3754
    %v3932 = vunpack.c.l.s4 1983009808
    %v3933 = vunpack.c.0.s8 %v3932
    %v3934 = vlaneseq
    %v3935 = vshrl.u32 %v3934, 7
    %v3936 = vsub.s32 %v3933, %v3935
    %v3937 = vrot.slane %v3754, %v3936
    %v3939 = vunpack.c.l.s4 1983009808
    %v3940 = vunpack.c.0.s8 %v3939
    %v3941 = vlaneseq
    %v3942 = vshrl.u32 %v3941, 7
    %v3943 = vsub.s32 %v3940, %v3942
    %v3944 = vrot.slane %v3930, %v3943
    %v3945 = vcombine.high %v3937, %v3937
    %v3946 = vcombine.high %v3944, %v3944
    %v3947 = vcombine.high %v3755, %v3755
    %v3949 = vunpack.c.l.s4 1983009808
    %v3950 = vunpack.c.0.s8 %v3949
    %v3951 = vlaneseq
    %v3952 = vshrl.u32 %v3951, 7
    %v3953 = vsub.s32 %v3950, %v3952
    %v3954 = vrot.slane %v3755, %v3953
    %v3956 = vunpack.c.l.s4 1983009808
    %v3957 = vunpack.c.0.s8 %v3956
    %v3958 = vlaneseq
    %v3959 = vshrl.u32 %v3958, 7
    %v3960 = vsub.s32 %v3957, %v3959
    %v3961 = vrot.slane %v3947, %v3960
    %v3962 = vcombine.high %v3954, %v3954
    %v3963 = vcombine.high %v3961, %v3961
    %v3964 = vcombine.high %v3756, %v3756
    %v3966 = vunpack.c.l.s4 1983009808
    %v3967 = vunpack.c.0.s8 %v3966
    %v3968 = vlaneseq
    %v3969 = vshrl.u32 %v3968, 7
    %v3970 = vsub.s32 %v3967, %v3969
    %v3971 = vrot.slane %v3756, %v3970
    %v3973 = vunpack.c.l.s4 1983009808
    %v3974 = vunpack.c.0.s8 %v3973
    %v3975 = vlaneseq
    %v3976 = vshrl.u32 %v3975, 7
    %v3977 = vsub.s32 %v3974, %v3976
    %v3978 = vrot.slane %v3964, %v3977
    %v3979 = vcombine.high %v3971, %v3971
    %v3980 = vcombine.high %v3978, %v3978
    %v3981 = vcombine.high %v3757, %v3757
    %v3983 = vunpack.c.l.s4 1983009808
    %v3984 = vunpack.c.0.s8 %v3983
    %v3985 = vlaneseq
    %v3986 = vshrl.u32 %v3985, 7
    %v3987 = vsub.s32 %v3984, %v3986
    %v3988 = vrot.slane %v3757, %v3987
    %v3990 = vunpack.c.l.s4 1983009808
    %v3991 = vunpack.c.0.s8 %v3990
    %v3992 = vlaneseq
    %v3993 = vshrl.u32 %v3992, 7
    %v3994 = vsub.s32 %v3991, %v3993
    %v3995 = vrot.slane %v3981, %v3994
    %v3996 = vcombine.high %v3988, %v3988
    %v3997 = vcombine.high %v3995, %v3995
    %v3998 = vcombine.high %v3758, %v3758
    %v4000 = vunpack.c.l.s4 1983009808
    %v4001 = vunpack.c.0.s8 %v4000
    %v4002 = vlaneseq
    %v4003 = vshrl.u32 %v4002, 7
    %v4004 = vsub.s32 %v4001, %v4003
    %v4005 = vrot.slane %v3758, %v4004
    %v4007 = vunpack.c.l.s4 1983009808
    %v4008 = vunpack.c.0.s8 %v4007
    %v4009 = vlaneseq
    %v4010 = vshrl.u32 %v4009, 7
    %v4011 = vsub.s32 %v4008, %v4010
    %v4012 = vrot.slane %v3998, %v4011
    %v4013 = vcombine.high %v4005, %v4005
    %v4014 = vcombine.high %v4012, %v4012
    %v4015 = vcombine.high %v3759, %v3759
    %v4017 = vunpack.c.l.s4 1983009808
    %v4018 = vunpack.c.0.s8 %v4017
    %v4019 = vlaneseq
    %v4020 = vshrl.u32 %v4019, 7
    %v4021 = vsub.s32 %v4018, %v4020
    %v4022 = vrot.slane %v3759, %v4021
    %v4024 = vunpack.c.l.s4 1983009808
    %v4025 = vunpack.c.0.s8 %v4024
    %v4026 = vlaneseq
    %v4027 = vshrl.u32 %v4026, 7
    %v4028 = vsub.s32 %v4025, %v4027
    %v4029 = vrot.slane %v4015, %v4028
    %v4030 = vcombine.high %v4022, %v4022
    %v4031 = vcombine.high %v4029, %v4029
    %v4032 = vcombine.high %v3760, %v3760
    %v4034 = vunpack.c.l.s4 1983009808
    %v4035 = vunpack.c.0.s8 %v4034
    %v4036 = vlaneseq
    %v4037 = vshrl.u32 %v4036, 7
    %v4038 = vsub.s32 %v4035, %v4037
    %v4039 = vrot.slane %v3760, %v4038
    %v4041 = vunpack.c.l.s4 1983009808
    %v4042 = vunpack.c.0.s8 %v4041
    %v4043 = vlaneseq
    %v4044 = vshrl.u32 %v4043, 7
    %v4045 = vsub.s32 %v4042, %v4044
    %v4046 = vrot.slane %v4032, %v4045
    %v4047 = vcombine.high %v4039, %v4039
    %v4048 = vcombine.high %v4046, %v4046
    %v4049 = vcombine.high %v3761, %v3761
    %v4051 = vunpack.c.l.s4 1983009808
    %v4052 = vunpack.c.0.s8 %v4051
    %v4053 = vlaneseq
    %v4054 = vshrl.u32 %v4053, 7
    %v4055 = vsub.s32 %v4052, %v4054
    %v4056 = vrot.slane %v3761, %v4055
    %v4058 = vunpack.c.l.s4 1983009808
    %v4059 = vunpack.c.0.s8 %v4058
    %v4060 = vlaneseq
    %v4061 = vshrl.u32 %v4060, 7
    %v4062 = vsub.s32 %v4059, %v4061
    %v4063 = vrot.slane %v4049, %v4062
    %v4064 = vcombine.high %v4056, %v4056
    %v4065 = vcombine.high %v4063, %v4063
    %v4066 = vcombine.high %v3762, %v3762
    %v4068 = vunpack.c.l.s4 1983009808
    %v4069 = vunpack.c.0.s8 %v4068
    %v4070 = vlaneseq
    %v4071 = vshrl.u32 %v4070, 7
    %v4072 = vsub.s32 %v4069, %v4071
    %v4073 = vrot.slane %v3762, %v4072
    %v4075 = vunpack.c.l.s4 1983009808
    %v4076 = vunpack.c.0.s8 %v4075
    %v4077 = vlaneseq
    %v4078 = vshrl.u32 %v4077, 7
    %v4079 = vsub.s32 %v4076, %v4078
    %v4080 = vrot.slane %v4066, %v4079
    %v4081 = vcombine.high %v4073, %v4073
    %v4082 = vcombine.high %v4080, %v4080
    %v4083 = vcombine.high %v3763, %v3763
    %v4085 = vunpack.c.l.s4 1983009808
    %v4086 = vunpack.c.0.s8 %v4085
    %v4087 = vlaneseq
    %v4088 = vshrl.u32 %v4087, 7
    %v4089 = vsub.s32 %v4086, %v4088
    %v4090 = vrot.slane %v3763, %v4089
    %v4092 = vunpack.c.l.s4 1983009808
    %v4093 = vunpack.c.0.s8 %v4092
    %v4094 = vlaneseq
    %v4095 = vshrl.u32 %v4094, 7
    %v4096 = vsub.s32 %v4093, %v4095
    %v4097 = vrot.slane %v4083, %v4096
    %v4098 = vcombine.high %v4090, %v4090
    %v4099 = vcombine.high %v4097, %v4097
    %v4100 = vcombine.high %v3764, %v3764
    %v4102 = vunpack.c.l.s4 1983009808
    %v4103 = vunpack.c.0.s8 %v4102
    %v4104 = vlaneseq
    %v4105 = vshrl.u32 %v4104, 7
    %v4106 = vsub.s32 %v4103, %v4105
    %v4107 = vrot.slane %v3764, %v4106
    %v4109 = vunpack.c.l.s4 1983009808
    %v4110 = vunpack.c.0.s8 %v4109
    %v4111 = vlaneseq
    %v4112 = vshrl.u32 %v4111, 7
    %v4113 = vsub.s32 %v4110, %v4112
    %v4114 = vrot.slane %v4100, %v4113
    %v4115 = vcombine.high %v4107, %v4107
    %v4116 = vcombine.high %v4114, %v4114
    %v4117 = vcombine.high %v3765, %v3765
    %v4119 = vunpack.c.l.s4 1983009808
    %v4120 = vunpack.c.0.s8 %v4119
    %v4121 = vlaneseq
    %v4122 = vshrl.u32 %v4121, 7
    %v4123 = vsub.s32 %v4120, %v4122
    %v4124 = vrot.slane %v3765, %v4123
    %v4126 = vunpack.c.l.s4 1983009808
    %v4127 = vunpack.c.0.s8 %v4126
    %v4128 = vlaneseq
    %v4129 = vshrl.u32 %v4128, 7
    %v4130 = vsub.s32 %v4127, %v4129
    %v4131 = vrot.slane %v4117, %v4130
    %v4132 = vcombine.high %v4124, %v4124
    %v4133 = vcombine.high %v4131, %v4131
    %v4134 = vcombine.high %v3766, %v3766
    %v4136 = vunpack.c.l.s4 1983009808
    %v4137 = vunpack.c.0.s8 %v4136
    %v4138 = vlaneseq
    %v4139 = vshrl.u32 %v4138, 7
    %v4140 = vsub.s32 %v4137, %v4139
    %v4141 = vrot.slane %v3766, %v4140
    %v4143 = vunpack.c.l.s4 1983009808
    %v4144 = vunpack.c.0.s8 %v4143
    %v4145 = vlaneseq
    %v4146 = vshrl.u32 %v4145, 7
    %v4147 = vsub.s32 %v4144, %v4146
    %v4148 = vrot.slane %v4134, %v4147
    %v4149 = vcombine.high %v4141, %v4141
    %v4150 = vcombine.high %v4148, %v4148
    %v4151 = vcombine.high %v3767, %v3767
    %v4153 = vunpack.c.l.s4 1983009808
    %v4154 = vunpack.c.0.s8 %v4153
    %v4155 = vlaneseq
    %v4156 = vshrl.u32 %v4155, 7
    %v4157 = vsub.s32 %v4154, %v4156
    %v4158 = vrot.slane %v3767, %v4157
    %v4160 = vunpack.c.l.s4 1983009808
    %v4161 = vunpack.c.0.s8 %v4160
    %v4162 = vlaneseq
    %v4163 = vshrl.u32 %v4162, 7
    %v4164 = vsub.s32 %v4161, %v4163
    %v4165 = vrot.slane %v4151, %v4164
    %v4166 = vcombine.high %v4158, %v4158
    %v4167 = vcombine.high %v4165, %v4165
    %v4168 = vcombine.high %v3768, %v3768
    %v4170 = vunpack.c.l.s4 1983009808
    %v4171 = vunpack.c.0.s8 %v4170
    %v4172 = vlaneseq
    %v4173 = vshrl.u32 %v4172, 7
    %v4174 = vsub.s32 %v4171, %v4173
    %v4175 = vrot.slane %v3768, %v4174
    %v4177 = vunpack.c.l.s4 1983009808
    %v4178 = vunpack.c.0.s8 %v4177
    %v4179 = vlaneseq
    %v4180 = vshrl.u32 %v4179, 7
    %v4181 = vsub.s32 %v4178, %v4180
    %v4182 = vrot.slane %v4168, %v4181
    %v4183 = vcombine.high %v4175, %v4175
    %v4184 = vcombine.high %v4182, %v4182
    %v4185 = vcombine.high %v3769, %v3769
    %v4187 = vunpack.c.l.s4 1983009808
    %v4188 = vunpack.c.0.s8 %v4187
    %v4189 = vlaneseq
    %v4190 = vshrl.u32 %v4189, 7
    %v4191 = vsub.s32 %v4188, %v4190
    %v4192 = vrot.slane %v3769, %v4191
    %v4194 = vunpack.c.l.s4 1983009808
    %v4195 = vunpack.c.0.s8 %v4194
    %v4196 = vlaneseq
    %v4197 = vshrl.u32 %v4196, 7
    %v4198 = vsub.s32 %v4195, %v4197
    %v4199 = vrot.slane %v4185, %v4198
    %v4200 = vcombine.high %v4192, %v4192
    %v4201 = vcombine.high %v4199, %v4199
    %v4202 = vcombine.high %v3770, %v3770
    %v4204 = vunpack.c.l.s4 1983009808
    %v4205 = vunpack.c.0.s8 %v4204
    %v4206 = vlaneseq
    %v4207 = vshrl.u32 %v4206, 7
    %v4208 = vsub.s32 %v4205, %v4207
    %v4209 = vrot.slane %v3770, %v4208
    %v4211 = vunpack.c.l.s4 1983009808
    %v4212 = vunpack.c.0.s8 %v4211
    %v4213 = vlaneseq
    %v4214 = vshrl.u32 %v4213, 7
    %v4215 = vsub.s32 %v4212, %v4214
    %v4216 = vrot.slane %v4202, %v4215
    %v4217 = vcombine.high %v4209, %v4209
    %v4218 = vcombine.high %v4216, %v4216
    %v4219 = vcombine.high %v3771, %v3771
    %v4221 = vunpack.c.l.s4 1983009808
    %v4222 = vunpack.c.0.s8 %v4221
    %v4223 = vlaneseq
    %v4224 = vshrl.u32 %v4223, 7
    %v4225 = vsub.s32 %v4222, %v4224
    %v4226 = vrot.slane %v3771, %v4225
    %v4228 = vunpack.c.l.s4 1983009808
    %v4229 = vunpack.c.0.s8 %v4228
    %v4230 = vlaneseq
    %v4231 = vshrl.u32 %v4230, 7
    %v4232 = vsub.s32 %v4229, %v4231
    %v4233 = vrot.slane %v4219, %v4232
    %v4234 = vcombine.high %v4226, %v4226
    %v4235 = vcombine.high %v4233, %v4233
    %v4236 = vcombine.high %v3772, %v3772
    %v4238 = vunpack.c.l.s4 1983009808
    %v4239 = vunpack.c.0.s8 %v4238
    %v4240 = vlaneseq
    %v4241 = vshrl.u32 %v4240, 7
    %v4242 = vsub.s32 %v4239, %v4241
    %v4243 = vrot.slane %v3772, %v4242
    %v4245 = vunpack.c.l.s4 1983009808
    %v4246 = vunpack.c.0.s8 %v4245
    %v4247 = vlaneseq
    %v4248 = vshrl.u32 %v4247, 7
    %v4249 = vsub.s32 %v4246, %v4248
    %v4250 = vrot.slane %v4236, %v4249
    %v4251 = vcombine.high %v4243, %v4243
    %v4252 = vcombine.high %v4250, %v4250
    %v4253 = vcombine.high %v3773, %v3773
    %v4255 = vunpack.c.l.s4 1983009808
    %v4256 = vunpack.c.0.s8 %v4255
    %v4257 = vlaneseq
    %v4258 = vshrl.u32 %v4257, 7
    %v4259 = vsub.s32 %v4256, %v4258
    %v4260 = vrot.slane %v3773, %v4259
    %v4262 = vunpack.c.l.s4 1983009808
    %v4263 = vunpack.c.0.s8 %v4262
    %v4264 = vlaneseq
    %v4265 = vshrl.u32 %v4264, 7
    %v4266 = vsub.s32 %v4263, %v4265
    %v4267 = vrot.slane %v4253, %v4266
    %v4268 = vcombine.high %v4260, %v4260
    %v4269 = vcombine.high %v4267, %v4267
    %v4270 = vcombine.high %v3774, %v3774
    %v4272 = vunpack.c.l.s4 1983009808
    %v4273 = vunpack.c.0.s8 %v4272
    %v4274 = vlaneseq
    %v4275 = vshrl.u32 %v4274, 7
    %v4276 = vsub.s32 %v4273, %v4275
    %v4277 = vrot.slane %v3774, %v4276
    %v4279 = vunpack.c.l.s4 1983009808
    %v4280 = vunpack.c.0.s8 %v4279
    %v4281 = vlaneseq
    %v4282 = vshrl.u32 %v4281, 7
    %v4283 = vsub.s32 %v4280, %v4282
    %v4284 = vrot.slane %v4270, %v4283
    %v4285 = vcombine.high %v4277, %v4277
    %v4286 = vcombine.high %v4284, %v4284
    %v4287 = vcombine.high %v3775, %v3775
    %v4289 = vunpack.c.l.s4 1983009808
    %v4290 = vunpack.c.0.s8 %v4289
    %v4291 = vlaneseq
    %v4292 = vshrl.u32 %v4291, 7
    %v4293 = vsub.s32 %v4290, %v4292
    %v4294 = vrot.slane %v3775, %v4293
    %v4296 = vunpack.c.l.s4 1983009808
    %v4297 = vunpack.c.0.s8 %v4296
    %v4298 = vlaneseq
    %v4299 = vshrl.u32 %v4298, 7
    %v4300 = vsub.s32 %v4297, %v4299
    %v4301 = vrot.slane %v4287, %v4300
    %v4302 = vcombine.high %v4294, %v4294
    %v4303 = vcombine.high %v4301, %v4301
    %v4304 = vcombine.high %v3776, %v3776
    %v4306 = vunpack.c.l.s4 1983009808
    %v4307 = vunpack.c.0.s8 %v4306
    %v4308 = vlaneseq
    %v4309 = vshrl.u32 %v4308, 7
    %v4310 = vsub.s32 %v4307, %v4309
    %v4311 = vrot.slane %v3776, %v4310
    %v4313 = vunpack.c.l.s4 1983009808
    %v4314 = vunpack.c.0.s8 %v4313
    %v4315 = vlaneseq
    %v4316 = vshrl.u32 %v4315, 7
    %v4317 = vsub.s32 %v4314, %v4316
    %v4318 = vrot.slane %v4304, %v4317
    %v4319 = vcombine.high %v4311, %v4311
    %v4320 = vcombine.high %v4318, %v4318
    %v4321 = vcombine.high %v3777, %v3777
    %v4323 = vunpack.c.l.s4 1983009808
    %v4324 = vunpack.c.0.s8 %v4323
    %v4325 = vlaneseq
    %v4326 = vshrl.u32 %v4325, 7
    %v4327 = vsub.s32 %v4324, %v4326
    %v4328 = vrot.slane %v3777, %v4327
    %v4330 = vunpack.c.l.s4 1983009808
    %v4331 = vunpack.c.0.s8 %v4330
    %v4332 = vlaneseq
    %v4333 = vshrl.u32 %v4332, 7
    %v4334 = vsub.s32 %v4331, %v4333
    %v4335 = vrot.slane %v4321, %v4334
    %v4336 = vcombine.high %v4328, %v4328
    %v4337 = vcombine.high %v4335, %v4335
    %v4338 = vcombine.high %v3778, %v3778
    %v4340 = vunpack.c.l.s4 1983009808
    %v4341 = vunpack.c.0.s8 %v4340
    %v4342 = vlaneseq
    %v4343 = vshrl.u32 %v4342, 7
    %v4344 = vsub.s32 %v4341, %v4343
    %v4345 = vrot.slane %v3778, %v4344
    %v4347 = vunpack.c.l.s4 1983009808
    %v4348 = vunpack.c.0.s8 %v4347
    %v4349 = vlaneseq
    %v4350 = vshrl.u32 %v4349, 7
    %v4351 = vsub.s32 %v4348, %v4350
    %v4352 = vrot.slane %v4338, %v4351
    %v4353 = vcombine.high %v4345, %v4345
    %v4354 = vcombine.high %v4352, %v4352
    %v4483 = vrot.slane %v3818, 7
    %v4484 = vrot.slane %v4483, 2
    %v4485 = vrot.slane %v3826, 7
    %v4486 = vrot.slane %v4485, 2
    %v4487 = vrot.slane %v3825, 7
    %v4488 = vrot.slane %v4487, 2
    %v4489 = vrot.slane %v3827, 7
    %v4490 = vrot.slane %v4489, 2
    %v4491 = vrot.slane %v3835, 7
    %v4492 = vrot.slane %v4491, 2
    %v4493 = vrot.slane %v3843, 7
    %v4494 = vrot.slane %v4493, 2
    %v4495 = vrot.slane %v3842, 7
    %v4496 = vrot.slane %v4495, 2
    %v4497 = vrot.slane %v3844, 7
    %v4498 = vrot.slane %v4497, 2
    %v4499 = vrot.slane %v3852, 7
    %v4500 = vrot.slane %v4499, 2
    %v4501 = vrot.slane %v3860, 7
    %v4502 = vrot.slane %v4501, 2
    %v4503 = vrot.slane %v3859, 7
    %v4504 = vrot.slane %v4503, 2
    %v4505 = vrot.slane %v3861, 7
    %v4506 = vrot.slane %v4505, 2
    %v4507 = vrot.slane %v3869, 7
    %v4508 = vrot.slane %v4507, 2
    %v4509 = vrot.slane %v3877, 7
    %v4510 = vrot.slane %v4509, 2
    %v4511 = vrot.slane %v3876, 7
    %v4512 = vrot.slane %v4511, 2
    %v4513 = vrot.slane %v3878, 7
    %v4514 = vrot.slane %v4513, 2
    %v4515 = vrot.slane %v3886, 7
    %v4516 = vrot.slane %v4515, 2
    %v4517 = vrot.slane %v3894, 7
    %v4518 = vrot.slane %v4517, 2
    %v4519 = vrot.slane %v3893, 7
    %v4520 = vrot.slane %v4519, 2
    %v4521 = vrot.slane %v3895, 7
    %v4522 = vrot.slane %v4521, 2
    %v4523 = vrot.slane %v3903, 7
    %v4524 = vrot.slane %v4523, 2
    %v4525 = vrot.slane %v3911, 7
    %v4526 = vrot.slane %v4525, 2
    %v4527 = vrot.slane %v3910, 7
    %v4528 = vrot.slane %v4527, 2
    %v4529 = vrot.slane %v3912, 7
    %v4530 = vrot.slane %v4529, 2
    %v4531 = vrot.slane %v3920, 7
    %v4532 = vrot.slane %v4531, 2
    %v4533 = vrot.slane %v3928, 7
    %v4534 = vrot.slane %v4533, 2
    %v4535 = vrot.slane %v3927, 7
    %v4536 = vrot.slane %v4535, 2
    %v4537 = vrot.slane %v3929, 7
    %v4538 = vrot.slane %v4537, 2
    %v4539 = vrot.slane %v3937, 7
    %v4540 = vrot.slane %v4539, 2
    %v4541 = vrot.slane %v3945, 7
    %v4542 = vrot.slane %v4541, 2
    %v4543 = vrot.slane %v3944, 7
    %v4544 = vrot.slane %v4543, 2
    %v4545 = vrot.slane %v3946, 7
    %v4546 = vrot.slane %v4545, 2
    %v4547 = vrot.slane %v3954, 7
    %v4548 = vrot.slane %v4547, 2
    %v4549 = vrot.slane %v3962, 7
    %v4550 = vrot.slane %v4549, 2
    %v4551 = vrot.slane %v3961, 7
    %v4552 = vrot.slane %v4551, 2
    %v4553 = vrot.slane %v3963, 7
    %v4554 = vrot.slane %v4553, 2
    %v4555 = vrot.slane %v3971, 7
    %v4556 = vrot.slane %v4555, 2
    %v4557 = vrot.slane %v3979, 7
    %v4558 = vrot.slane %v4557, 2
    %v4559 = vrot.slane %v3978, 7
    %v4560 = vrot.slane %v4559, 2
    %v4561 = vrot.slane %v3980, 7
    %v4562 = vrot.slane %v4561, 2
    %v4563 = vrot.slane %v3988, 7
    %v4564 = vrot.slane %v4563, 2
    %v4565 = vrot.slane %v3996, 7
    %v4566 = vrot.slane %v4565, 2
    %v4567 = vrot.slane %v3995, 7
    %v4568 = vrot.slane %v4567, 2
    %v4569 = vrot.slane %v3997, 7
    %v4570 = vrot.slane %v4569, 2
    %v4571 = vrot.slane %v4005, 7
    %v4572 = vrot.slane %v4571, 2
    %v4573 = vrot.slane %v4013, 7
    %v4574 = vrot.slane %v4573, 2
    %v4575 = vrot.slane %v4012, 7
    %v4576 = vrot.slane %v4575, 2
    %v4577 = vrot.slane %v4014, 7
    %v4578 = vrot.slane %v4577, 2
    %v4579 = vrot.slane %v4022, 7
    %v4580 = vrot.slane %v4579, 2
    %v4581 = vrot.slane %v4030, 7
    %v4582 = vrot.slane %v4581, 2
    %v4583 = vrot.slane %v4029, 7
    %v4584 = vrot.slane %v4583, 2
    %v4585 = vrot.slane %v4031, 7
    %v4586 = vrot.slane %v4585, 2
    %v4587 = vrot.slane %v4039, 7
    %v4588 = vrot.slane %v4587, 2
    %v4589 = vrot.slane %v4047, 7
    %v4590 = vrot.slane %v4589, 2
    %v4591 = vrot.slane %v4046, 7
    %v4592 = vrot.slane %v4591, 2
    %v4593 = vrot.slane %v4048, 7
    %v4594 = vrot.slane %v4593, 2
    %v4595 = vrot.slane %v4056, 7
    %v4596 = vrot.slane %v4595, 2
    %v4597 = vrot.slane %v4064, 7
    %v4598 = vrot.slane %v4597, 2
    %v4599 = vrot.slane %v4063, 7
    %v4600 = vrot.slane %v4599, 2
    %v4601 = vrot.slane %v4065, 7
    %v4602 = vrot.slane %v4601, 2
    %v4603 = vrot.slane %v4073, 7
    %v4604 = vrot.slane %v4603, 2
    %v4605 = vrot.slane %v4081, 7
    %v4606 = vrot.slane %v4605, 2
    %v4607 = vrot.slane %v4080, 7
    %v4608 = vrot.slane %v4607, 2
    %v4609 = vrot.slane %v4082, 7
    %v4610 = vrot.slane %v4609, 2
    %v4611 = vrot.slane %v4090, 7
    %v4612 = vrot.slane %v4611, 2
    %v4613 = vrot.slane %v4098, 7
    %v4614 = vrot.slane %v4613, 2
    %v4615 = vrot.slane %v4097, 7
    %v4616 = vrot.slane %v4615, 2
    %v4617 = vrot.slane %v4099, 7
    %v4618 = vrot.slane %v4617, 2
    %v4619 = vrot.slane %v4107, 7
    %v4620 = vrot.slane %v4619, 2
    %v4621 = vrot.slane %v4115, 7
    %v4622 = vrot.slane %v4621, 2
    %v4623 = vrot.slane %v4114, 7
    %v4624 = vrot.slane %v4623, 2
    %v4625 = vrot.slane %v4116, 7
    %v4626 = vrot.slane %v4625, 2
    %v4627 = vrot.slane %v4124, 7
    %v4628 = vrot.slane %v4627, 2
    %v4629 = vrot.slane %v4132, 7
    %v4630 = vrot.slane %v4629, 2
    %v4631 = vrot.slane %v4131, 7
    %v4632 = vrot.slane %v4631, 2
    %v4633 = vrot.slane %v4133, 7
    %v4634 = vrot.slane %v4633, 2
    %v4635 = vrot.slane %v4141, 7
    %v4636 = vrot.slane %v4635, 2
    %v4637 = vrot.slane %v4149, 7
    %v4638 = vrot.slane %v4637, 2
    %v4639 = vrot.slane %v4148, 7
    %v4640 = vrot.slane %v4639, 2
    %v4641 = vrot.slane %v4150, 7
    %v4642 = vrot.slane %v4641, 2
    %v4643 = vrot.slane %v4158, 7
    %v4644 = vrot.slane %v4643, 2
    %v4645 = vrot.slane %v4166, 7
    %v4646 = vrot.slane %v4645, 2
    %v4647 = vrot.slane %v4165, 7
    %v4648 = vrot.slane %v4647, 2
    %v4649 = vrot.slane %v4167, 7
    %v4650 = vrot.slane %v4649, 2
    %v4651 = vrot.slane %v4175, 7
    %v4652 = vrot.slane %v4651, 2
    %v4653 = vrot.slane %v4183, 7
    %v4654 = vrot.slane %v4653, 2
    %v4655 = vrot.slane %v4182, 7
    %v4656 = vrot.slane %v4655, 2
    %v4657 = vrot.slane %v4184, 7
    %v4658 = vrot.slane %v4657, 2
    %v4659 = vrot.slane %v4192, 7
    %v4660 = vrot.slane %v4659, 2
    %v4661 = vrot.slane %v4200, 7
    %v4662 = vrot.slane %v4661, 2
    %v4663 = vrot.slane %v4199, 7
    %v4664 = vrot.slane %v4663, 2
    %v4665 = vrot.slane %v4201, 7
    %v4666 = vrot.slane %v4665, 2
    %v4667 = vrot.slane %v4209, 7
    %v4668 = vrot.slane %v4667, 2
    %v4669 = vrot.slane %v4217, 7
    %v4670 = vrot.slane %v4669, 2
    %v4671 = vrot.slane %v4216, 7
    %v4672 = vrot.slane %v4671, 2
    %v4673 = vrot.slane %v4218, 7
    %v4674 = vrot.slane %v4673, 2
    %v4675 = vrot.slane %v4226, 7
    %v4676 = vrot.slane %v4675, 2
    %v4677 = vrot.slane %v4234, 7
    %v4678 = vrot.slane %v4677, 2
    %v4679 = vrot.slane %v4233, 7
    %v4680 = vrot.slane %v4679, 2
    %v4681 = vrot.slane %v4235, 7
    %v4682 = vrot.slane %v4681, 2
    %v4683 = vrot.slane %v4243, 7
    %v4684 = vrot.slane %v4683, 2
    %v4685 = vrot.slane %v4251, 7
    %v4686 = vrot.slane %v4685, 2
    %v4687 = vrot.slane %v4250, 7
    %v4688 = vrot.slane %v4687, 2
    %v4689 = vrot.slane %v4252, 7
    %v4690 = vrot.slane %v4689, 2
    %v4691 = vrot.slane %v4260, 7
    %v4692 = vrot.slane %v4691, 2
    %v4693 = vrot.slane %v4268, 7
    %v4694 = vrot.slane %v4693, 2
    %v4695 = vrot.slane %v4267, 7
    %v4696 = vrot.slane %v4695, 2
    %v4697 = vrot.slane %v4269, 7
    %v4698 = vrot.slane %v4697, 2
    %v4699 = vrot.slane %v4277, 7
    %v4700 = vrot.slane %v4699, 2
    %v4701 = vrot.slane %v4285, 7
    %v4702 = vrot.slane %v4701, 2
    %v4703 = vrot.slane %v4284, 7
    %v4704 = vrot.slane %v4703, 2
    %v4705 = vrot.slane %v4286, 7
    %v4706 = vrot.slane %v4705, 2
    %v4707 = vrot.slane %v4294, 7
    %v4708 = vrot.slane %v4707, 2
    %v4709 = vrot.slane %v4302, 7
    %v4710 = vrot.slane %v4709, 2
    %v4711 = vrot.slane %v4301, 7
    %v4712 = vrot.slane %v4711, 2
    %v4713 = vrot.slane %v4303, 7
    %v4714 = vrot.slane %v4713, 2
    %v4715 = vrot.slane %v4311, 7
    %v4716 = vrot.slane %v4715, 2
    %v4717 = vrot.slane %v4319, 7
    %v4718 = vrot.slane %v4717, 2
    %v4719 = vrot.slane %v4318, 7
    %v4720 = vrot.slane %v4719, 2
    %v4721 = vrot.slane %v4320, 7
    %v4722 = vrot.slane %v4721, 2
    %v4723 = vrot.slane %v4328, 7
    %v4724 = vrot.slane %v4723, 2
    %v4725 = vrot.slane %v4336, 7
    %v4726 = vrot.slane %v4725, 2
    %v4727 = vrot.slane %v4335, 7
    %v4728 = vrot.slane %v4727, 2
    %v4729 = vrot.slane %v4337, 7
    %v4730 = vrot.slane %v4729, 2
    %v4731 = vrot.slane %v4345, 7
    %v4732 = vrot.slane %v4731, 2
    %v4733 = vrot.slane %v4353, 7
    %v4734 = vrot.slane %v4733, 2
    %v4735 = vrot.slane %v4352, 7
    %v4736 = vrot.slane %v4735, 2
    %v4737 = vrot.slane %v4354, 7
    %v4738 = vrot.slane %v4737, 2
    %v4867 = vadd.f32 %v3818, %v4484
    %v4868 = vadd.f32 %v3826, %v4486
    %v4869 = vadd.f32 %v3825, %v4488
    %v4870 = vadd.f32 %v3827, %v4490
    %v4871 = vadd.f32 %v3835, %v4492
    %v4872 = vadd.f32 %v3843, %v4494
    %v4873 = vadd.f32 %v3842, %v4496
    %v4874 = vadd.f32 %v3844, %v4498
    %v4875 = vadd.f32 %v3852, %v4500
    %v4876 = vadd.f32 %v3860, %v4502
    %v4877 = vadd.f32 %v3859, %v4504
    %v4878 = vadd.f32 %v3861, %v4506
    %v4879 = vadd.f32 %v3869, %v4508
    %v4880 = vadd.f32 %v3877, %v4510
    %v4881 = vadd.f32 %v3876, %v4512
    %v4882 = vadd.f32 %v3878, %v4514
    %v4883 = vadd.f32 %v3886, %v4516
    %v4884 = vadd.f32 %v3894, %v4518
    %v4885 = vadd.f32 %v3893, %v4520
    %v4886 = vadd.f32 %v3895, %v4522
    %v4887 = vadd.f32 %v3903, %v4524
    %v4888 = vadd.f32 %v3911, %v4526
    %v4889 = vadd.f32 %v3910, %v4528
    %v4890 = vadd.f32 %v3912, %v4530
    %v4891 = vadd.f32 %v3920, %v4532
    %v4892 = vadd.f32 %v3928, %v4534
    %v4893 = vadd.f32 %v3927, %v4536
    %v4894 = vadd.f32 %v3929, %v4538
    %v4895 = vadd.f32 %v3937, %v4540
    %v4896 = vadd.f32 %v3945, %v4542
    %v4897 = vadd.f32 %v3944, %v4544
    %v4898 = vadd.f32 %v3946, %v4546
    %v4899 = vadd.f32 %v3954, %v4548
    %v4900 = vadd.f32 %v3962, %v4550
    %v4901 = vadd.f32 %v3961, %v4552
    %v4902 = vadd.f32 %v3963, %v4554
    %v4903 = vadd.f32 %v3971, %v4556
    %v4904 = vadd.f32 %v3979, %v4558
    %v4905 = vadd.f32 %v3978, %v4560
    %v4906 = vadd.f32 %v3980, %v4562
    %v4907 = vadd.f32 %v3988, %v4564
    %v4908 = vadd.f32 %v3996, %v4566
    %v4909 = vadd.f32 %v3995, %v4568
    %v4910 = vadd.f32 %v3997, %v4570
    %v4911 = vadd.f32 %v4005, %v4572
    %v4912 = vadd.f32 %v4013, %v4574
    %v4913 = vadd.f32 %v4012, %v4576
    %v4914 = vadd.f32 %v4014, %v4578
    %v4915 = vadd.f32 %v4022, %v4580
    %v4916 = vadd.f32 %v4030, %v4582
    %v4917 = vadd.f32 %v4029, %v4584
    %v4918 = vadd.f32 %v4031, %v4586
    %v4919 = vadd.f32 %v4039, %v4588
    %v4920 = vadd.f32 %v4047, %v4590
    %v4921 = vadd.f32 %v4046, %v4592
    %v4922 = vadd.f32 %v4048, %v4594
    %v4923 = vadd.f32 %v4056, %v4596
    %v4924 = vadd.f32 %v4064, %v4598
    %v4925 = vadd.f32 %v4063, %v4600
    %v4926 = vadd.f32 %v4065, %v4602
    %v4927 = vadd.f32 %v4073, %v4604
    %v4928 = vadd.f32 %v4081, %v4606
    %v4929 = vadd.f32 %v4080, %v4608
    %v4930 = vadd.f32 %v4082, %v4610
    %v4931 = vadd.f32 %v4090, %v4612
    %v4932 = vadd.f32 %v4098, %v4614
    %v4933 = vadd.f32 %v4097, %v4616
    %v4934 = vadd.f32 %v4099, %v4618
    %v4935 = vadd.f32 %v4107, %v4620
    %v4936 = vadd.f32 %v4115, %v4622
    %v4937 = vadd.f32 %v4114, %v4624
    %v4938 = vadd.f32 %v4116, %v4626
    %v4939 = vadd.f32 %v4124, %v4628
    %v4940 = vadd.f32 %v4132, %v4630
    %v4941 = vadd.f32 %v4131, %v4632
    %v4942 = vadd.f32 %v4133, %v4634
    %v4943 = vadd.f32 %v4141, %v4636
    %v4944 = vadd.f32 %v4149, %v4638
    %v4945 = vadd.f32 %v4148, %v4640
    %v4946 = vadd.f32 %v4150, %v4642
    %v4947 = vadd.f32 %v4158, %v4644
    %v4948 = vadd.f32 %v4166, %v4646
    %v4949 = vadd.f32 %v4165, %v4648
    %v4950 = vadd.f32 %v4167, %v4650
    %v4951 = vadd.f32 %v4175, %v4652
    %v4952 = vadd.f32 %v4183, %v4654
    %v4953 = vadd.f32 %v4182, %v4656
    %v4954 = vadd.f32 %v4184, %v4658
    %v4955 = vadd.f32 %v4192, %v4660
    %v4956 = vadd.f32 %v4200, %v4662
    %v4957 = vadd.f32 %v4199, %v4664
    %v4958 = vadd.f32 %v4201, %v4666
    %v4959 = vadd.f32 %v4209, %v4668
    %v4960 = vadd.f32 %v4217, %v4670
    %v4961 = vadd.f32 %v4216, %v4672
    %v4962 = vadd.f32 %v4218, %v4674
    %v4963 = vadd.f32 %v4226, %v4676
    %v4964 = vadd.f32 %v4234, %v4678
    %v4965 = vadd.f32 %v4233, %v4680
    %v4966 = vadd.f32 %v4235, %v4682
    %v4967 = vadd.f32 %v4243, %v4684
    %v4968 = vadd.f32 %v4251, %v4686
    %v4969 = vadd.f32 %v4250, %v4688
    %v4970 = vadd.f32 %v4252, %v4690
    %v4971 = vadd.f32 %v4260, %v4692
    %v4972 = vadd.f32 %v4268, %v4694
    %v4973 = vadd.f32 %v4267, %v4696
    %v4974 = vadd.f32 %v4269, %v4698
    %v4975 = vadd.f32 %v4277, %v4700
    %v4976 = vadd.f32 %v4285, %v4702
    %v4977 = vadd.f32 %v4284, %v4704
    %v4978 = vadd.f32 %v4286, %v4706
    %v4979 = vadd.f32 %v4294, %v4708
    %v4980 = vadd.f32 %v4302, %v4710
    %v4981 = vadd.f32 %v4301, %v4712
    %v4982 = vadd.f32 %v4303, %v4714
    %v4983 = vadd.f32 %v4311, %v4716
    %v4984 = vadd.f32 %v4319, %v4718
    %v4985 = vadd.f32 %v4318, %v4720
    %v4986 = vadd.f32 %v4320, %v4722
    %v4987 = vadd.f32 %v4328, %v4724
    %v4988 = vadd.f32 %v4336, %v4726
    %v4989 = vadd.f32 %v4335, %v4728
    %v4990 = vadd.f32 %v4337, %v4730
    %v4991 = vadd.f32 %v4345, %v4732
    %v4992 = vadd.f32 %v4353, %v4734
    %v4993 = vadd.f32 %v4352, %v4736
    %v4994 = vadd.f32 %v4354, %v4738
    %v4995 = vmul.f32 %v4867, 0.25
    %v4996 = vmul.f32 %v4868, 0.25
    %v4997 = vmul.f32 %v4869, 0.25
    %v4998 = vmul.f32 %v4870, 0.25
    %v4999 = vmul.f32 %v4871, 0.25
    %v5000 = vmul.f32 %v4872, 0.25
    %v5001 = vmul.f32 %v4873, 0.25
    %v5002 = vmul.f32 %v4874, 0.25
    %v5003 = vmul.f32 %v4875, 0.25
    %v5004 = vmul.f32 %v4876, 0.25
    %v5005 = vmul.f32 %v4877, 0.25
    %v5006 = vmul.f32 %v4878, 0.25
    %v5007 = vmul.f32 %v4879, 0.25
    %v5008 = vmul.f32 %v4880, 0.25
    %v5009 = vmul.f32 %v4881, 0.25
    %v5010 = vmul.f32 %v4882, 0.25
    %v5011 = vmul.f32 %v4883, 0.25
    %v5012 = vmul.f32 %v4884, 0.25
    %v5013 = vmul.f32 %v4885, 0.25
    %v5014 = vmul.f32 %v4886, 0.25
    %v5015 = vmul.f32 %v4887, 0.25
    %v5016 = vmul.f32 %v4888, 0.25
    %v5017 = vmul.f32 %v4889, 0.25
    %v5018 = vmul.f32 %v4890, 0.25
    %v5019 = vmul.f32 %v4891, 0.25
    %v5020 = vmul.f32 %v4892, 0.25
    %v5021 = vmul.f32 %v4893, 0.25
    %v5022 = vmul.f32 %v4894, 0.25
    %v5023 = vmul.f32 %v4895, 0.25
    %v5024 = vmul.f32 %v4896, 0.25
    %v5025 = vmul.f32 %v4897, 0.25
    %v5026 = vmul.f32 %v4898, 0.25
    %v5027 = vmul.f32 %v4899, 0.25
    %v5028 = vmul.f32 %v4900, 0.25
    %v5029 = vmul.f32 %v4901, 0.25
    %v5030 = vmul.f32 %v4902, 0.25
    %v5031 = vmul.f32 %v4903, 0.25
    %v5032 = vmul.f32 %v4904, 0.25
    %v5033 = vmul.f32 %v4905, 0.25
    %v5034 = vmul.f32 %v4906, 0.25
    %v5035 = vmul.f32 %v4907, 0.25
    %v5036 = vmul.f32 %v4908, 0.25
    %v5037 = vmul.f32 %v4909, 0.25
    %v5038 = vmul.f32 %v4910, 0.25
    %v5039 = vmul.f32 %v4911, 0.25
    %v5040 = vmul.f32 %v4912, 0.25
    %v5041 = vmul.f32 %v4913, 0.25
    %v5042 = vmul.f32 %v4914, 0.25
    %v5043 = vmul.f32 %v4915, 0.25
    %v5044 = vmul.f32 %v4916, 0.25
    %v5045 = vmul.f32 %v4917, 0.25
    %v5046 = vmul.f32 %v4918, 0.25
    %v5047 = vmul.f32 %v4919, 0.25
    %v5048 = vmul.f32 %v4920, 0.25
    %v5049 = vmul.f32 %v4921, 0.25
    %v5050 = vmul.f32 %v4922, 0.25
    %v5051 = vmul.f32 %v4923, 0.25
    %v5052 = vmul.f32 %v4924, 0.25
    %v5053 = vmul.f32 %v4925, 0.25
    %v5054 = vmul.f32 %v4926, 0.25
    %v5055 = vmul.f32 %v4927, 0.25
    %v5056 = vmul.f32 %v4928, 0.25
    %v5057 = vmul.f32 %v4929, 0.25
    %v5058 = vmul.f32 %v4930, 0.25
    %v5059 = vmul.f32 %v4931, 0.25
    %v5060 = vmul.f32 %v4932, 0.25
    %v5061 = vmul.f32 %v4933, 0.25
    %v5062 = vmul.f32 %v4934, 0.25
    %v5063 = vmul.f32 %v4935, 0.25
    %v5064 = vmul.f32 %v4936, 0.25
    %v5065 = vmul.f32 %v4937, 0.25
    %v5066 = vmul.f32 %v4938, 0.25
    %v5067 = vmul.f32 %v4939, 0.25
    %v5068 = vmul.f32 %v4940, 0.25
    %v5069 = vmul.f32 %v4941, 0.25
    %v5070 = vmul.f32 %v4942, 0.25
    %v5071 = vmul.f32 %v4943, 0.25
    %v5072 = vmul.f32 %v4944, 0.25
    %v5073 = vmul.f32 %v4945, 0.25
    %v5074 = vmul.f32 %v4946, 0.25
    %v5075 = vmul.f32 %v4947, 0.25
    %v5076 = vmul.f32 %v4948, 0.25
    %v5077 = vmul.f32 %v4949, 0.25
    %v5078 = vmul.f32 %v4950, 0.25
    %v5079 = vmul.f32 %v4951, 0.25
    %v5080 = vmul.f32 %v4952, 0.25
    %v5081 = vmul.f32 %v4953, 0.25
    %v5082 = vmul.f32 %v4954, 0.25
    %v5083 = vmul.f32 %v4955, 0.25
    %v5084 = vmul.f32 %v4956, 0.25
    %v5085 = vmul.f32 %v4957, 0.25
    %v5086 = vmul.f32 %v4958, 0.25
    %v5087 = vmul.f32 %v4959, 0.25
    %v5088 = vmul.f32 %v4960, 0.25
    %v5089 = vmul.f32 %v4961, 0.25
    %v5090 = vmul.f32 %v4962, 0.25
    %v5091 = vmul.f32 %v4963, 0.25
    %v5092 = vmul.f32 %v4964, 0.25
    %v5093 = vmul.f32 %v4965, 0.25
    %v5094 = vmul.f32 %v4966, 0.25
    %v5095 = vmul.f32 %v4967, 0.25
    %v5096 = vmul.f32 %v4968, 0.25
    %v5097 = vmul.f32 %v4969, 0.25
    %v5098 = vmul.f32 %v4970, 0.25
    %v5099 = vmul.f32 %v4971, 0.25
    %v5100 = vmul.f32 %v4972, 0.25
    %v5101 = vmul.f32 %v4973, 0.25
    %v5102 = vmul.f32 %v4974, 0.25
    %v5103 = vmul.f32 %v4975, 0.25
    %v5104 = vmul.f32 %v4976, 0.25
    %v5105 = vmul.f32 %v4977, 0.25
    %v5106 = vmul.f32 %v4978, 0.25
    %v5107 = vmul.f32 %v4979, 0.25
    %v5108 = vmul.f32 %v4980, 0.25
    %v5109 = vmul.f32 %v4981, 0.25
    %v5110 = vmul.f32 %v4982, 0.25
    %v5111 = vmul.f32 %v4983, 0.25
    %v5112 = vmul.f32 %v4984, 0.25
    %v5113 = vmul.f32 %v4985, 0.25
    %v5114 = vmul.f32 %v4986, 0.25
    %v5115 = vmul.f32 %v4987, 0.25
    %v5116 = vmul.f32 %v4988, 0.25
    %v5117 = vmul.f32 %v4989, 0.25
    %v5118 = vmul.f32 %v4990, 0.25
    %v5119 = vmul.f32 %v4991, 0.25
    %v5120 = vmul.f32 %v4992, 0.25
    %v5121 = vmul.f32 %v4993, 0.25
    %v5122 = vmul.f32 %v4994, 0.25
    %vm5125 = vcmask 1044484
    %v5126 = vsel %vm5125, %v4995, %v4995
    %vm5127 = vcmask 1046534
    %v5128 = vsel %vm5127, %v4995, %v5126
    %v5129 = vrot.slane %v5059, 7
    %vm5130 = vcmask 1041409
    %v5131 = vsel %vm5130, %v5129, %v5128
    %vm5132 = vcmask 1043459
    %v5133 = vsel %vm5132, %v5129, %v5131
    %vm5134 = vcmask 1045509
    %v5135 = vsel %vm5134, %v5129, %v5133
    %vm5136 = vcmask 1047559
    %v5137 = vsel %vm5136, %v5129, %v5135
    %vm5139 = vcmask 58368
    %5140 = vst.msk [vmem:[#allocation4] sm:$0x3] %vm5139, %v5137
    %v5143 = vsel %vm5125, %v4996, %v4996
    %v5144 = vsel %vm5127, %v4996, %v5143
    %v5145 = vrot.slane %v5060, 7
    %v5146 = vsel %vm5130, %v5145, %v5144
    %v5147 = vsel %vm5132, %v5145, %v5146
    %v5148 = vsel %vm5134, %v5145, %v5147
    %v5149 = vsel %vm5136, %v5145, %v5148
    %5150 = vrot.lane.b32.xlu0 %v5149, 8
    %v5151 = vpop.permute.xlu0 %5150
    %vm5153 = vcmask 123968
    %5154 = vst.msk [vmem:[#allocation4] sm:$0x3] %vm5153, %v5151
    %v5157 = vsel %vm5125, %v4997, %v4997
    %v5158 = vsel %vm5127, %v4997, %v5157
    %v5159 = vrot.slane %v5061, 7
    %v5160 = vsel %vm5130, %v5159, %v5158
    %v5161 = vsel %vm5132, %v5159, %v5160
    %v5162 = vsel %vm5134, %v5159, %v5161
    %v5163 = vsel %vm5136, %v5159, %v5162
    %5164 = vrot.lane.b32.xlu0 %v5163, 16
    %v5165 = vpop.permute.xlu0 %5164
    %vm5167 = vcmask 189568
    %5168 = vst.msk [vmem:[#allocation4] sm:$0x3] %vm5167, %v5165
    %v5171 = vsel %vm5125, %v4998, %v4998
    %v5172 = vsel %vm5127, %v4998, %v5171
    %v5173 = vrot.slane %v5062, 7
    %v5174 = vsel %vm5130, %v5173, %v5172
    %v5175 = vsel %vm5132, %v5173, %v5174
    %v5176 = vsel %vm5134, %v5173, %v5175
    %v5177 = vsel %vm5136, %v5173, %v5176
    %5178 = vrot.lane.b32.xlu0 %v5177, 24
    %v5179 = vpop.permute.xlu0 %5178
    %vm5181 = vcmask 255168
    %5182 = vst.msk [vmem:[#allocation4] sm:$0x3] %vm5181, %v5179
    %v5185 = vsel %vm5125, %v4999, %v4999
    %v5186 = vsel %vm5127, %v4999, %v5185
    %v5187 = vrot.slane %v5063, 7
    %v5188 = vsel %vm5130, %v5187, %v5186
    %v5189 = vsel %vm5132, %v5187, %v5188
    %v5190 = vsel %vm5134, %v5187, %v5189
    %v5191 = vsel %vm5136, %v5187, %v5190
    %5192 = vrot.lane.b32.xlu0 %v5191, 32
    %v5193 = vpop.permute.xlu0 %5192
    %vm5195 = vcmask 320768
    %5196 = vst.msk [vmem:[#allocation4] sm:$0x3] %vm5195, %v5193
    %v5199 = vsel %vm5125, %v5000, %v5000
    %v5200 = vsel %vm5127, %v5000, %v5199
    %v5201 = vrot.slane %v5064, 7
    %v5202 = vsel %vm5130, %v5201, %v5200
    %v5203 = vsel %vm5132, %v5201, %v5202
    %v5204 = vsel %vm5134, %v5201, %v5203
    %v5205 = vsel %vm5136, %v5201, %v5204
    %5206 = vrot.lane.b32.xlu0 %v5205, 40
    %v5207 = vpop.permute.xlu0 %5206
    %vm5209 = vcmask 386368
    %5210 = vst.msk [vmem:[#allocation4] sm:$0x3] %vm5209, %v5207
    %v5213 = vsel %vm5125, %v5001, %v5001
    %v5214 = vsel %vm5127, %v5001, %v5213
    %v5215 = vrot.slane %v5065, 7
    %v5216 = vsel %vm5130, %v5215, %v5214
    %v5217 = vsel %vm5132, %v5215, %v5216
    %v5218 = vsel %vm5134, %v5215, %v5217
    %v5219 = vsel %vm5136, %v5215, %v5218
    %5220 = vrot.lane.b32.xlu0 %v5219, 48
    %v5221 = vpop.permute.xlu0 %5220
    %vm5223 = vcmask 451968
    %5224 = vst.msk [vmem:[#allocation4] sm:$0x3] %vm5223, %v5221
    %v5227 = vsel %vm5125, %v5002, %v5002
    %v5228 = vsel %vm5127, %v5002, %v5227
    %v5229 = vrot.slane %v5066, 7
    %v5230 = vsel %vm5130, %v5229, %v5228
    %v5231 = vsel %vm5132, %v5229, %v5230
    %v5232 = vsel %vm5134, %v5229, %v5231
    %v5233 = vsel %vm5136, %v5229, %v5232
    %5234 = vrot.lane.b32.xlu0 %v5233, 56
    %v5235 = vpop.permute.xlu0 %5234
    %vm5237 = vcmask 517568
    %5238 = vst.msk [vmem:[#allocation4] sm:$0x3] %vm5237, %v5235
    %v5241 = vsel %vm5125, %v5003, %v5003
    %v5242 = vsel %vm5127, %v5003, %v5241
    %v5243 = vrot.slane %v5067, 7
    %v5244 = vsel %vm5130, %v5243, %v5242
    %v5245 = vsel %vm5132, %v5243, %v5244
    %v5246 = vsel %vm5134, %v5243, %v5245
    %v5247 = vsel %vm5136, %v5243, %v5246
    %5248 = vrot.lane.b32.xlu0 %v5247, 64
    %v5249 = vpop.permute.xlu0 %5248
    %vm5251 = vcmask 583168
    %5252 = vst.msk [vmem:[#allocation4] sm:$0x3] %vm5251, %v5249
    %v5255 = vsel %vm5125, %v5004, %v5004
    %v5256 = vsel %vm5127, %v5004, %v5255
    %v5257 = vrot.slane %v5068, 7
    %v5258 = vsel %vm5130, %v5257, %v5256
    %v5259 = vsel %vm5132, %v5257, %v5258
    %v5260 = vsel %vm5134, %v5257, %v5259
    %v5261 = vsel %vm5136, %v5257, %v5260
    %5262 = vrot.lane.b32.xlu0 %v5261, 72
    %v5263 = vpop.permute.xlu0 %5262
    %vm5265 = vcmask 648768
    %5266 = vst.msk [vmem:[#allocation4] sm:$0x3] %vm5265, %v5263
    %v5269 = vsel %vm5125, %v5005, %v5005
    %v5270 = vsel %vm5127, %v5005, %v5269
    %v5271 = vrot.slane %v5069, 7
    %v5272 = vsel %vm5130, %v5271, %v5270
    %v5273 = vsel %vm5132, %v5271, %v5272
    %v5274 = vsel %vm5134, %v5271, %v5273
    %v5275 = vsel %vm5136, %v5271, %v5274
    %5276 = vrot.lane.b32.xlu0 %v5275, 80
    %v5277 = vpop.permute.xlu0 %5276
    %vm5279 = vcmask 714368
    %5280 = vst.msk [vmem:[#allocation4] sm:$0x3] %vm5279, %v5277
    %v5283 = vsel %vm5125, %v5006, %v5006
    %v5284 = vsel %vm5127, %v5006, %v5283
    %v5285 = vrot.slane %v5070, 7
    %v5286 = vsel %vm5130, %v5285, %v5284
    %v5287 = vsel %vm5132, %v5285, %v5286
    %v5288 = vsel %vm5134, %v5285, %v5287
    %v5289 = vsel %vm5136, %v5285, %v5288
    %5290 = vrot.lane.b32.xlu0 %v5289, 88
    %v5291 = vpop.permute.xlu0 %5290
    %vm5293 = vcmask 779968
    %5294 = vst.msk [vmem:[#allocation4] sm:$0x3] %vm5293, %v5291
    %v5297 = vsel %vm5125, %v5007, %v5007
    %v5298 = vsel %vm5127, %v5007, %v5297
    %v5299 = vrot.slane %v5071, 7
    %v5300 = vsel %vm5130, %v5299, %v5298
    %v5301 = vsel %vm5132, %v5299, %v5300
    %v5302 = vsel %vm5134, %v5299, %v5301
    %v5303 = vsel %vm5136, %v5299, %v5302
    %5304 = vrot.lane.b32.xlu0 %v5303, 96
    %v5305 = vpop.permute.xlu0 %5304
    %vm5307 = vcmask 845568
    %5308 = vst.msk [vmem:[#allocation4] sm:$0x3] %vm5307, %v5305
    %v5311 = vsel %vm5125, %v5008, %v5008
    %v5312 = vsel %vm5127, %v5008, %v5311
    %v5313 = vrot.slane %v5072, 7
    %v5314 = vsel %vm5130, %v5313, %v5312
    %v5315 = vsel %vm5132, %v5313, %v5314
    %v5316 = vsel %vm5134, %v5313, %v5315
    %v5317 = vsel %vm5136, %v5313, %v5316
    %5318 = vrot.lane.b32.xlu0 %v5317, 104
    %v5319 = vpop.permute.xlu0 %5318
    %vm5321 = vcmask 911168
    %5322 = vst.msk [vmem:[#allocation4] sm:$0x3] %vm5321, %v5319
    %v5325 = vsel %vm5125, %v5009, %v5009
    %v5326 = vsel %vm5127, %v5009, %v5325
    %v5327 = vrot.slane %v5073, 7
    %v5328 = vsel %vm5130, %v5327, %v5326
    %v5329 = vsel %vm5132, %v5327, %v5328
    %v5330 = vsel %vm5134, %v5327, %v5329
    %v5331 = vsel %vm5136, %v5327, %v5330
    %5332 = vrot.lane.b32.xlu0 %v5331, 112
    %v5333 = vpop.permute.xlu0 %5332
    %vm5335 = vcmask 976768
    %5336 = vst.msk [vmem:[#allocation4] sm:$0x3] %vm5335, %v5333
    %v5339 = vsel %vm5125, %v5010, %v5010
    %v5340 = vsel %vm5127, %v5010, %v5339
    %v5341 = vrot.slane %v5074, 7
    %v5342 = vsel %vm5130, %v5341, %v5340
    %v5343 = vsel %vm5132, %v5341, %v5342
    %v5344 = vsel %vm5134, %v5341, %v5343
    %v5345 = vsel %vm5136, %v5341, %v5344
    %5346 = vrot.lane.b32.xlu0 %v5345, 120
    %v5347 = vpop.permute.xlu0 %5346
    %vm5349 = vcmask 1042368
    %5350 = vst.msk [vmem:[#allocation4] sm:$0x3] %vm5349, %v5347
    %v5353 = vsel %vm5125, %v5011, %v5011
    %v5354 = vsel %vm5127, %v5011, %v5353
    %v5355 = vrot.slane %v5075, 7
    %v5356 = vsel %vm5130, %v5355, %v5354
    %v5357 = vsel %vm5132, %v5355, %v5356
    %v5358 = vsel %vm5134, %v5355, %v5357
    %v5359 = vsel %vm5136, %v5355, %v5358
    %5361 = vst.msk [vmem:[#allocation4 + $0x2] sm:$0x3] %vm5139, %v5359
    %v5364 = vsel %vm5125, %v5012, %v5012
    %v5365 = vsel %vm5127, %v5012, %v5364
    %v5366 = vrot.slane %v5076, 7
    %v5367 = vsel %vm5130, %v5366, %v5365
    %v5368 = vsel %vm5132, %v5366, %v5367
    %v5369 = vsel %vm5134, %v5366, %v5368
    %v5370 = vsel %vm5136, %v5366, %v5369
    %5371 = vrot.lane.b32.xlu0 %v5370, 8
    %v5372 = vpop.permute.xlu0 %5371
    %5374 = vst.msk [vmem:[#allocation4 + $0x2] sm:$0x3] %vm5153, %v5372
    %v5377 = vsel %vm5125, %v5013, %v5013
    %v5378 = vsel %vm5127, %v5013, %v5377
    %v5379 = vrot.slane %v5077, 7
    %v5380 = vsel %vm5130, %v5379, %v5378
    %v5381 = vsel %vm5132, %v5379, %v5380
    %v5382 = vsel %vm5134, %v5379, %v5381
    %v5383 = vsel %vm5136, %v5379, %v5382
    %5384 = vrot.lane.b32.xlu0 %v5383, 16
    %v5385 = vpop.permute.xlu0 %5384
    %5387 = vst.msk [vmem:[#allocation4 + $0x2] sm:$0x3] %vm5167, %v5385
    %v5390 = vsel %vm5125, %v5014, %v5014
    %v5391 = vsel %vm5127, %v5014, %v5390
    %v5392 = vrot.slane %v5078, 7
    %v5393 = vsel %vm5130, %v5392, %v5391
    %v5394 = vsel %vm5132, %v5392, %v5393
    %v5395 = vsel %vm5134, %v5392, %v5394
    %v5396 = vsel %vm5136, %v5392, %v5395
    %5397 = vrot.lane.b32.xlu0 %v5396, 24
    %v5398 = vpop.permute.xlu0 %5397
    %5400 = vst.msk [vmem:[#allocation4 + $0x2] sm:$0x3] %vm5181, %v5398
    %v5403 = vsel %vm5125, %v5015, %v5015
    %v5404 = vsel %vm5127, %v5015, %v5403
    %v5405 = vrot.slane %v5079, 7
    %v5406 = vsel %vm5130, %v5405, %v5404
    %v5407 = vsel %vm5132, %v5405, %v5406
    %v5408 = vsel %vm5134, %v5405, %v5407
    %v5409 = vsel %vm5136, %v5405, %v5408
    %5410 = vrot.lane.b32.xlu0 %v5409, 32
    %v5411 = vpop.permute.xlu0 %5410
    %5413 = vst.msk [vmem:[#allocation4 + $0x2] sm:$0x3] %vm5195, %v5411
    %v5416 = vsel %vm5125, %v5016, %v5016
    %v5417 = vsel %vm5127, %v5016, %v5416
    %v5418 = vrot.slane %v5080, 7
    %v5419 = vsel %vm5130, %v5418, %v5417
    %v5420 = vsel %vm5132, %v5418, %v5419
    %v5421 = vsel %vm5134, %v5418, %v5420
    %v5422 = vsel %vm5136, %v5418, %v5421
    %5423 = vrot.lane.b32.xlu0 %v5422, 40
    %v5424 = vpop.permute.xlu0 %5423
    %5426 = vst.msk [vmem:[#allocation4 + $0x2] sm:$0x3] %vm5209, %v5424
    %v5429 = vsel %vm5125, %v5017, %v5017
    %v5430 = vsel %vm5127, %v5017, %v5429
    %v5431 = vrot.slane %v5081, 7
    %v5432 = vsel %vm5130, %v5431, %v5430
    %v5433 = vsel %vm5132, %v5431, %v5432
    %v5434 = vsel %vm5134, %v5431, %v5433
    %v5435 = vsel %vm5136, %v5431, %v5434
    %5436 = vrot.lane.b32.xlu0 %v5435, 48
    %v5437 = vpop.permute.xlu0 %5436
    %5439 = vst.msk [vmem:[#allocation4 + $0x2] sm:$0x3] %vm5223, %v5437
    %v5442 = vsel %vm5125, %v5018, %v5018
    %v5443 = vsel %vm5127, %v5018, %v5442
    %v5444 = vrot.slane %v5082, 7
    %v5445 = vsel %vm5130, %v5444, %v5443
    %v5446 = vsel %vm5132, %v5444, %v5445
    %v5447 = vsel %vm5134, %v5444, %v5446
    %v5448 = vsel %vm5136, %v5444, %v5447
    %5449 = vrot.lane.b32.xlu0 %v5448, 56
    %v5450 = vpop.permute.xlu0 %5449
    %5452 = vst.msk [vmem:[#allocation4 + $0x2] sm:$0x3] %vm5237, %v5450
    %v5455 = vsel %vm5125, %v5019, %v5019
    %v5456 = vsel %vm5127, %v5019, %v5455
    %v5457 = vrot.slane %v5083, 7
    %v5458 = vsel %vm5130, %v5457, %v5456
    %v5459 = vsel %vm5132, %v5457, %v5458
    %v5460 = vsel %vm5134, %v5457, %v5459
    %v5461 = vsel %vm5136, %v5457, %v5460
    %5462 = vrot.lane.b32.xlu0 %v5461, 64
    %v5463 = vpop.permute.xlu0 %5462
    %5465 = vst.msk [vmem:[#allocation4 + $0x2] sm:$0x3] %vm5251, %v5463
    %v5468 = vsel %vm5125, %v5020, %v5020
    %v5469 = vsel %vm5127, %v5020, %v5468
    %v5470 = vrot.slane %v5084, 7
    %v5471 = vsel %vm5130, %v5470, %v5469
    %v5472 = vsel %vm5132, %v5470, %v5471
    %v5473 = vsel %vm5134, %v5470, %v5472
    %v5474 = vsel %vm5136, %v5470, %v5473
    %5475 = vrot.lane.b32.xlu0 %v5474, 72
    %v5476 = vpop.permute.xlu0 %5475
    %5478 = vst.msk [vmem:[#allocation4 + $0x2] sm:$0x3] %vm5265, %v5476
    %v5481 = vsel %vm5125, %v5021, %v5021
    %v5482 = vsel %vm5127, %v5021, %v5481
    %v5483 = vrot.slane %v5085, 7
    %v5484 = vsel %vm5130, %v5483, %v5482
    %v5485 = vsel %vm5132, %v5483, %v5484
    %v5486 = vsel %vm5134, %v5483, %v5485
    %v5487 = vsel %vm5136, %v5483, %v5486
    %5488 = vrot.lane.b32.xlu0 %v5487, 80
    %v5489 = vpop.permute.xlu0 %5488
    %5491 = vst.msk [vmem:[#allocation4 + $0x2] sm:$0x3] %vm5279, %v5489
    %v5494 = vsel %vm5125, %v5022, %v5022
    %v5495 = vsel %vm5127, %v5022, %v5494
    %v5496 = vrot.slane %v5086, 7
    %v5497 = vsel %vm5130, %v5496, %v5495
    %v5498 = vsel %vm5132, %v5496, %v5497
    %v5499 = vsel %vm5134, %v5496, %v5498
    %v5500 = vsel %vm5136, %v5496, %v5499
    %5501 = vrot.lane.b32.xlu0 %v5500, 88
    %v5502 = vpop.permute.xlu0 %5501
    %5504 = vst.msk [vmem:[#allocation4 + $0x2] sm:$0x3] %vm5293, %v5502
    %v5507 = vsel %vm5125, %v5023, %v5023
    %v5508 = vsel %vm5127, %v5023, %v5507
    %v5509 = vrot.slane %v5087, 7
    %v5510 = vsel %vm5130, %v5509, %v5508
    %v5511 = vsel %vm5132, %v5509, %v5510
    %v5512 = vsel %vm5134, %v5509, %v5511
    %v5513 = vsel %vm5136, %v5509, %v5512
    %5514 = vrot.lane.b32.xlu0 %v5513, 96
    %v5515 = vpop.permute.xlu0 %5514
    %5517 = vst.msk [vmem:[#allocation4 + $0x2] sm:$0x3] %vm5307, %v5515
    %v5520 = vsel %vm5125, %v5024, %v5024
    %v5521 = vsel %vm5127, %v5024, %v5520
    %v5522 = vrot.slane %v5088, 7
    %v5523 = vsel %vm5130, %v5522, %v5521
    %v5524 = vsel %vm5132, %v5522, %v5523
    %v5525 = vsel %vm5134, %v5522, %v5524
    %v5526 = vsel %vm5136, %v5522, %v5525
    %5527 = vrot.lane.b32.xlu0 %v5526, 104
    %v5528 = vpop.permute.xlu0 %5527
    %5530 = vst.msk [vmem:[#allocation4 + $0x2] sm:$0x3] %vm5321, %v5528
    %v5533 = vsel %vm5125, %v5025, %v5025
    %v5534 = vsel %vm5127, %v5025, %v5533
    %v5535 = vrot.slane %v5089, 7
    %v5536 = vsel %vm5130, %v5535, %v5534
    %v5537 = vsel %vm5132, %v5535, %v5536
    %v5538 = vsel %vm5134, %v5535, %v5537
    %v5539 = vsel %vm5136, %v5535, %v5538
    %5540 = vrot.lane.b32.xlu0 %v5539, 112
    %v5541 = vpop.permute.xlu0 %5540
    %5543 = vst.msk [vmem:[#allocation4 + $0x2] sm:$0x3] %vm5335, %v5541
    %v5546 = vsel %vm5125, %v5026, %v5026
    %v5547 = vsel %vm5127, %v5026, %v5546
    %v5548 = vrot.slane %v5090, 7
    %v5549 = vsel %vm5130, %v5548, %v5547
    %v5550 = vsel %vm5132, %v5548, %v5549
    %v5551 = vsel %vm5134, %v5548, %v5550
    %v5552 = vsel %vm5136, %v5548, %v5551
    %5553 = vrot.lane.b32.xlu0 %v5552, 120
    %v5554 = vpop.permute.xlu0 %5553
    %5556 = vst.msk [vmem:[#allocation4 + $0x2] sm:$0x3] %vm5349, %v5554
    %v5559 = vsel %vm5125, %v5027, %v5027
    %v5560 = vsel %vm5127, %v5027, %v5559
    %v5561 = vrot.slane %v5091, 7
    %v5562 = vsel %vm5130, %v5561, %v5560
    %v5563 = vsel %vm5132, %v5561, %v5562
    %v5564 = vsel %vm5134, %v5561, %v5563
    %v5565 = vsel %vm5136, %v5561, %v5564
    %5567 = vst.msk [vmem:[#allocation4 + $0x4] sm:$0x3] %vm5139, %v5565
    %v5570 = vsel %vm5125, %v5028, %v5028
    %v5571 = vsel %vm5127, %v5028, %v5570
    %v5572 = vrot.slane %v5092, 7
    %v5573 = vsel %vm5130, %v5572, %v5571
    %v5574 = vsel %vm5132, %v5572, %v5573
    %v5575 = vsel %vm5134, %v5572, %v5574
    %v5576 = vsel %vm5136, %v5572, %v5575
    %5577 = vrot.lane.b32.xlu0 %v5576, 8
    %v5578 = vpop.permute.xlu0 %5577
    %5580 = vst.msk [vmem:[#allocation4 + $0x4] sm:$0x3] %vm5153, %v5578
    %v5583 = vsel %vm5125, %v5029, %v5029
    %v5584 = vsel %vm5127, %v5029, %v5583
    %v5585 = vrot.slane %v5093, 7
    %v5586 = vsel %vm5130, %v5585, %v5584
    %v5587 = vsel %vm5132, %v5585, %v5586
    %v5588 = vsel %vm5134, %v5585, %v5587
    %v5589 = vsel %vm5136, %v5585, %v5588
    %5590 = vrot.lane.b32.xlu0 %v5589, 16
    %v5591 = vpop.permute.xlu0 %5590
    %5593 = vst.msk [vmem:[#allocation4 + $0x4] sm:$0x3] %vm5167, %v5591
    %v5596 = vsel %vm5125, %v5030, %v5030
    %v5597 = vsel %vm5127, %v5030, %v5596
    %v5598 = vrot.slane %v5094, 7
    %v5599 = vsel %vm5130, %v5598, %v5597
    %v5600 = vsel %vm5132, %v5598, %v5599
    %v5601 = vsel %vm5134, %v5598, %v5600
    %v5602 = vsel %vm5136, %v5598, %v5601
    %5603 = vrot.lane.b32.xlu0 %v5602, 24
    %v5604 = vpop.permute.xlu0 %5603
    %5606 = vst.msk [vmem:[#allocation4 + $0x4] sm:$0x3] %vm5181, %v5604
    %v5609 = vsel %vm5125, %v5031, %v5031
    %v5610 = vsel %vm5127, %v5031, %v5609
    %v5611 = vrot.slane %v5095, 7
    %v5612 = vsel %vm5130, %v5611, %v5610
    %v5613 = vsel %vm5132, %v5611, %v5612
    %v5614 = vsel %vm5134, %v5611, %v5613
    %v5615 = vsel %vm5136, %v5611, %v5614
    %5616 = vrot.lane.b32.xlu0 %v5615, 32
    %v5617 = vpop.permute.xlu0 %5616
    %5619 = vst.msk [vmem:[#allocation4 + $0x4] sm:$0x3] %vm5195, %v5617
    %v5622 = vsel %vm5125, %v5032, %v5032
    %v5623 = vsel %vm5127, %v5032, %v5622
    %v5624 = vrot.slane %v5096, 7
    %v5625 = vsel %vm5130, %v5624, %v5623
    %v5626 = vsel %vm5132, %v5624, %v5625
    %v5627 = vsel %vm5134, %v5624, %v5626
    %v5628 = vsel %vm5136, %v5624, %v5627
    %5629 = vrot.lane.b32.xlu0 %v5628, 40
    %v5630 = vpop.permute.xlu0 %5629
    %5632 = vst.msk [vmem:[#allocation4 + $0x4] sm:$0x3] %vm5209, %v5630
    %v5635 = vsel %vm5125, %v5033, %v5033
    %v5636 = vsel %vm5127, %v5033, %v5635
    %v5637 = vrot.slane %v5097, 7
    %v5638 = vsel %vm5130, %v5637, %v5636
    %v5639 = vsel %vm5132, %v5637, %v5638
    %v5640 = vsel %vm5134, %v5637, %v5639
    %v5641 = vsel %vm5136, %v5637, %v5640
    %5642 = vrot.lane.b32.xlu0 %v5641, 48
    %v5643 = vpop.permute.xlu0 %5642
    %5645 = vst.msk [vmem:[#allocation4 + $0x4] sm:$0x3] %vm5223, %v5643
    %v5648 = vsel %vm5125, %v5034, %v5034
    %v5649 = vsel %vm5127, %v5034, %v5648
    %v5650 = vrot.slane %v5098, 7
    %v5651 = vsel %vm5130, %v5650, %v5649
    %v5652 = vsel %vm5132, %v5650, %v5651
    %v5653 = vsel %vm5134, %v5650, %v5652
    %v5654 = vsel %vm5136, %v5650, %v5653
    %5655 = vrot.lane.b32.xlu0 %v5654, 56
    %v5656 = vpop.permute.xlu0 %5655
    %5658 = vst.msk [vmem:[#allocation4 + $0x4] sm:$0x3] %vm5237, %v5656
    %v5661 = vsel %vm5125, %v5035, %v5035
    %v5662 = vsel %vm5127, %v5035, %v5661
    %v5663 = vrot.slane %v5099, 7
    %v5664 = vsel %vm5130, %v5663, %v5662
    %v5665 = vsel %vm5132, %v5663, %v5664
    %v5666 = vsel %vm5134, %v5663, %v5665
    %v5667 = vsel %vm5136, %v5663, %v5666
    %5668 = vrot.lane.b32.xlu0 %v5667, 64
    %v5669 = vpop.permute.xlu0 %5668
    %5671 = vst.msk [vmem:[#allocation4 + $0x4] sm:$0x3] %vm5251, %v5669
    %v5674 = vsel %vm5125, %v5036, %v5036
    %v5675 = vsel %vm5127, %v5036, %v5674
    %v5676 = vrot.slane %v5100, 7
    %v5677 = vsel %vm5130, %v5676, %v5675
    %v5678 = vsel %vm5132, %v5676, %v5677
    %v5679 = vsel %vm5134, %v5676, %v5678
    %v5680 = vsel %vm5136, %v5676, %v5679
    %5681 = vrot.lane.b32.xlu0 %v5680, 72
    %v5682 = vpop.permute.xlu0 %5681
    %5684 = vst.msk [vmem:[#allocation4 + $0x4] sm:$0x3] %vm5265, %v5682
    %v5687 = vsel %vm5125, %v5037, %v5037
    %v5688 = vsel %vm5127, %v5037, %v5687
    %v5689 = vrot.slane %v5101, 7
    %v5690 = vsel %vm5130, %v5689, %v5688
    %v5691 = vsel %vm5132, %v5689, %v5690
    %v5692 = vsel %vm5134, %v5689, %v5691
    %v5693 = vsel %vm5136, %v5689, %v5692
    %5694 = vrot.lane.b32.xlu0 %v5693, 80
    %v5695 = vpop.permute.xlu0 %5694
    %5697 = vst.msk [vmem:[#allocation4 + $0x4] sm:$0x3] %vm5279, %v5695
    %v5700 = vsel %vm5125, %v5038, %v5038
    %v5701 = vsel %vm5127, %v5038, %v5700
    %v5702 = vrot.slane %v5102, 7
    %v5703 = vsel %vm5130, %v5702, %v5701
    %v5704 = vsel %vm5132, %v5702, %v5703
    %v5705 = vsel %vm5134, %v5702, %v5704
    %v5706 = vsel %vm5136, %v5702, %v5705
    %5707 = vrot.lane.b32.xlu0 %v5706, 88
    %v5708 = vpop.permute.xlu0 %5707
    %5710 = vst.msk [vmem:[#allocation4 + $0x4] sm:$0x3] %vm5293, %v5708
    %v5713 = vsel %vm5125, %v5039, %v5039
    %v5714 = vsel %vm5127, %v5039, %v5713
    %v5715 = vrot.slane %v5103, 7
    %v5716 = vsel %vm5130, %v5715, %v5714
    %v5717 = vsel %vm5132, %v5715, %v5716
    %v5718 = vsel %vm5134, %v5715, %v5717
    %v5719 = vsel %vm5136, %v5715, %v5718
    %5720 = vrot.lane.b32.xlu0 %v5719, 96
    %v5721 = vpop.permute.xlu0 %5720
    %5723 = vst.msk [vmem:[#allocation4 + $0x4] sm:$0x3] %vm5307, %v5721
    %v5726 = vsel %vm5125, %v5040, %v5040
    %v5727 = vsel %vm5127, %v5040, %v5726
    %v5728 = vrot.slane %v5104, 7
    %v5729 = vsel %vm5130, %v5728, %v5727
    %v5730 = vsel %vm5132, %v5728, %v5729
    %v5731 = vsel %vm5134, %v5728, %v5730
    %v5732 = vsel %vm5136, %v5728, %v5731
    %5733 = vrot.lane.b32.xlu0 %v5732, 104
    %v5734 = vpop.permute.xlu0 %5733
    %5736 = vst.msk [vmem:[#allocation4 + $0x4] sm:$0x3] %vm5321, %v5734
    %v5739 = vsel %vm5125, %v5041, %v5041
    %v5740 = vsel %vm5127, %v5041, %v5739
    %v5741 = vrot.slane %v5105, 7
    %v5742 = vsel %vm5130, %v5741, %v5740
    %v5743 = vsel %vm5132, %v5741, %v5742
    %v5744 = vsel %vm5134, %v5741, %v5743
    %v5745 = vsel %vm5136, %v5741, %v5744
    %5746 = vrot.lane.b32.xlu0 %v5745, 112
    %v5747 = vpop.permute.xlu0 %5746
    %5749 = vst.msk [vmem:[#allocation4 + $0x4] sm:$0x3] %vm5335, %v5747
    %v5752 = vsel %vm5125, %v5042, %v5042
    %v5753 = vsel %vm5127, %v5042, %v5752
    %v5754 = vrot.slane %v5106, 7
    %v5755 = vsel %vm5130, %v5754, %v5753
    %v5756 = vsel %vm5132, %v5754, %v5755
    %v5757 = vsel %vm5134, %v5754, %v5756
    %v5758 = vsel %vm5136, %v5754, %v5757
    %5759 = vrot.lane.b32.xlu0 %v5758, 120
    %v5760 = vpop.permute.xlu0 %5759
    %5762 = vst.msk [vmem:[#allocation4 + $0x4] sm:$0x3] %vm5349, %v5760
    %v5765 = vsel %vm5125, %v5043, %v5043
    %v5766 = vsel %vm5127, %v5043, %v5765
    %v5767 = vrot.slane %v5107, 7
    %v5768 = vsel %vm5130, %v5767, %v5766
    %v5769 = vsel %vm5132, %v5767, %v5768
    %v5770 = vsel %vm5134, %v5767, %v5769
    %v5771 = vsel %vm5136, %v5767, %v5770
    %5773 = vst.msk [vmem:[#allocation4 + $0x6] sm:$0x3] %vm5139, %v5771
    %v5776 = vsel %vm5125, %v5044, %v5044
    %v5777 = vsel %vm5127, %v5044, %v5776
    %v5778 = vrot.slane %v5108, 7
    %v5779 = vsel %vm5130, %v5778, %v5777
    %v5780 = vsel %vm5132, %v5778, %v5779
    %v5781 = vsel %vm5134, %v5778, %v5780
    %v5782 = vsel %vm5136, %v5778, %v5781
    %5783 = vrot.lane.b32.xlu0 %v5782, 8
    %v5784 = vpop.permute.xlu0 %5783
    %5786 = vst.msk [vmem:[#allocation4 + $0x6] sm:$0x3] %vm5153, %v5784
    %v5789 = vsel %vm5125, %v5045, %v5045
    %v5790 = vsel %vm5127, %v5045, %v5789
    %v5791 = vrot.slane %v5109, 7
    %v5792 = vsel %vm5130, %v5791, %v5790
    %v5793 = vsel %vm5132, %v5791, %v5792
    %v5794 = vsel %vm5134, %v5791, %v5793
    %v5795 = vsel %vm5136, %v5791, %v5794
    %5796 = vrot.lane.b32.xlu0 %v5795, 16
    %v5797 = vpop.permute.xlu0 %5796
    %5799 = vst.msk [vmem:[#allocation4 + $0x6] sm:$0x3] %vm5167, %v5797
    %v5802 = vsel %vm5125, %v5046, %v5046
    %v5803 = vsel %vm5127, %v5046, %v5802
    %v5804 = vrot.slane %v5110, 7
    %v5805 = vsel %vm5130, %v5804, %v5803
    %v5806 = vsel %vm5132, %v5804, %v5805
    %v5807 = vsel %vm5134, %v5804, %v5806
    %v5808 = vsel %vm5136, %v5804, %v5807
    %5809 = vrot.lane.b32.xlu0 %v5808, 24
    %v5810 = vpop.permute.xlu0 %5809
    %5812 = vst.msk [vmem:[#allocation4 + $0x6] sm:$0x3] %vm5181, %v5810
    %v5815 = vsel %vm5125, %v5047, %v5047
    %v5816 = vsel %vm5127, %v5047, %v5815
    %v5817 = vrot.slane %v5111, 7
    %v5818 = vsel %vm5130, %v5817, %v5816
    %v5819 = vsel %vm5132, %v5817, %v5818
    %v5820 = vsel %vm5134, %v5817, %v5819
    %v5821 = vsel %vm5136, %v5817, %v5820
    %5822 = vrot.lane.b32.xlu0 %v5821, 32
    %v5823 = vpop.permute.xlu0 %5822
    %5825 = vst.msk [vmem:[#allocation4 + $0x6] sm:$0x3] %vm5195, %v5823
    %v5828 = vsel %vm5125, %v5048, %v5048
    %v5829 = vsel %vm5127, %v5048, %v5828
    %v5830 = vrot.slane %v5112, 7
    %v5831 = vsel %vm5130, %v5830, %v5829
    %v5832 = vsel %vm5132, %v5830, %v5831
    %v5833 = vsel %vm5134, %v5830, %v5832
    %v5834 = vsel %vm5136, %v5830, %v5833
    %5835 = vrot.lane.b32.xlu0 %v5834, 40
    %v5836 = vpop.permute.xlu0 %5835
    %5838 = vst.msk [vmem:[#allocation4 + $0x6] sm:$0x3] %vm5209, %v5836
    %v5841 = vsel %vm5125, %v5049, %v5049
    %v5842 = vsel %vm5127, %v5049, %v5841
    %v5843 = vrot.slane %v5113, 7
    %v5844 = vsel %vm5130, %v5843, %v5842
    %v5845 = vsel %vm5132, %v5843, %v5844
    %v5846 = vsel %vm5134, %v5843, %v5845
    %v5847 = vsel %vm5136, %v5843, %v5846
    %5848 = vrot.lane.b32.xlu0 %v5847, 48
    %v5849 = vpop.permute.xlu0 %5848
    %5851 = vst.msk [vmem:[#allocation4 + $0x6] sm:$0x3] %vm5223, %v5849
    %v5854 = vsel %vm5125, %v5050, %v5050
    %v5855 = vsel %vm5127, %v5050, %v5854
    %v5856 = vrot.slane %v5114, 7
    %v5857 = vsel %vm5130, %v5856, %v5855
    %v5858 = vsel %vm5132, %v5856, %v5857
    %v5859 = vsel %vm5134, %v5856, %v5858
    %v5860 = vsel %vm5136, %v5856, %v5859
    %5861 = vrot.lane.b32.xlu0 %v5860, 56
    %v5862 = vpop.permute.xlu0 %5861
    %5864 = vst.msk [vmem:[#allocation4 + $0x6] sm:$0x3] %vm5237, %v5862
    %v5867 = vsel %vm5125, %v5051, %v5051
    %v5868 = vsel %vm5127, %v5051, %v5867
    %v5869 = vrot.slane %v5115, 7
    %v5870 = vsel %vm5130, %v5869, %v5868
    %v5871 = vsel %vm5132, %v5869, %v5870
    %v5872 = vsel %vm5134, %v5869, %v5871
    %v5873 = vsel %vm5136, %v5869, %v5872
    %5874 = vrot.lane.b32.xlu0 %v5873, 64
    %v5875 = vpop.permute.xlu0 %5874
    %5877 = vst.msk [vmem:[#allocation4 + $0x6] sm:$0x3] %vm5251, %v5875
    %v5880 = vsel %vm5125, %v5052, %v5052
    %v5881 = vsel %vm5127, %v5052, %v5880
    %v5882 = vrot.slane %v5116, 7
    %v5883 = vsel %vm5130, %v5882, %v5881
    %v5884 = vsel %vm5132, %v5882, %v5883
    %v5885 = vsel %vm5134, %v5882, %v5884
    %v5886 = vsel %vm5136, %v5882, %v5885
    %5887 = vrot.lane.b32.xlu0 %v5886, 72
    %v5888 = vpop.permute.xlu0 %5887
    %5890 = vst.msk [vmem:[#allocation4 + $0x6] sm:$0x3] %vm5265, %v5888
    %v5893 = vsel %vm5125, %v5053, %v5053
    %v5894 = vsel %vm5127, %v5053, %v5893
    %v5895 = vrot.slane %v5117, 7
    %v5896 = vsel %vm5130, %v5895, %v5894
    %v5897 = vsel %vm5132, %v5895, %v5896
    %v5898 = vsel %vm5134, %v5895, %v5897
    %v5899 = vsel %vm5136, %v5895, %v5898
    %5900 = vrot.lane.b32.xlu0 %v5899, 80
    %v5901 = vpop.permute.xlu0 %5900
    %5903 = vst.msk [vmem:[#allocation4 + $0x6] sm:$0x3] %vm5279, %v5901
    %v5906 = vsel %vm5125, %v5054, %v5054
    %v5907 = vsel %vm5127, %v5054, %v5906
    %v5908 = vrot.slane %v5118, 7
    %v5909 = vsel %vm5130, %v5908, %v5907
    %v5910 = vsel %vm5132, %v5908, %v5909
    %v5911 = vsel %vm5134, %v5908, %v5910
    %v5912 = vsel %vm5136, %v5908, %v5911
    %5913 = vrot.lane.b32.xlu0 %v5912, 88
    %v5914 = vpop.permute.xlu0 %5913
    %5916 = vst.msk [vmem:[#allocation4 + $0x6] sm:$0x3] %vm5293, %v5914
    %v5919 = vsel %vm5125, %v5055, %v5055
    %v5920 = vsel %vm5127, %v5055, %v5919
    %v5921 = vrot.slane %v5119, 7
    %v5922 = vsel %vm5130, %v5921, %v5920
    %v5923 = vsel %vm5132, %v5921, %v5922
    %v5924 = vsel %vm5134, %v5921, %v5923
    %v5925 = vsel %vm5136, %v5921, %v5924
    %5926 = vrot.lane.b32.xlu0 %v5925, 96
    %v5927 = vpop.permute.xlu0 %5926
    %5929 = vst.msk [vmem:[#allocation4 + $0x6] sm:$0x3] %vm5307, %v5927
    %v5932 = vsel %vm5125, %v5056, %v5056
    %v5933 = vsel %vm5127, %v5056, %v5932
    %v5934 = vrot.slane %v5120, 7
    %v5935 = vsel %vm5130, %v5934, %v5933
    %v5936 = vsel %vm5132, %v5934, %v5935
    %v5937 = vsel %vm5134, %v5934, %v5936
    %v5938 = vsel %vm5136, %v5934, %v5937
    %5939 = vrot.lane.b32.xlu0 %v5938, 104
    %v5940 = vpop.permute.xlu0 %5939
    %5942 = vst.msk [vmem:[#allocation4 + $0x6] sm:$0x3] %vm5321, %v5940
    %v5945 = vsel %vm5125, %v5057, %v5057
    %v5946 = vsel %vm5127, %v5057, %v5945
    %v5947 = vrot.slane %v5121, 7
    %v5948 = vsel %vm5130, %v5947, %v5946
    %v5949 = vsel %vm5132, %v5947, %v5948
    %v5950 = vsel %vm5134, %v5947, %v5949
    %v5951 = vsel %vm5136, %v5947, %v5950
    %5952 = vrot.lane.b32.xlu0 %v5951, 112
    %v5953 = vpop.permute.xlu0 %5952
    %5955 = vst.msk [vmem:[#allocation4 + $0x6] sm:$0x3] %vm5335, %v5953
    %v5958 = vsel %vm5125, %v5058, %v5058
    %v5959 = vsel %vm5127, %v5058, %v5958
    %v5960 = vrot.slane %v5122, 7
    %v5961 = vsel %vm5130, %v5960, %v5959
    %v5962 = vsel %vm5132, %v5960, %v5961
    %v5963 = vsel %vm5134, %v5960, %v5962
    %v5964 = vsel %vm5136, %v5960, %v5963
    %5965 = vrot.lane.b32.xlu0 %v5964, 120
    %v5966 = vpop.permute.xlu0 %5965
    %5968 = vst.msk [vmem:[#allocation4 + $0x6] sm:$0x3] %vm5349, %v5966
    %v5969 = vld [vmem:[#allocation4] sm:$0xff]
    %v5970 = vld [vmem:[%s3] sm:$0xff]
    %v5971 = vld [vmem:[%s3 + $0x8] sm:$0xff]
    %v5972 = vld [vmem:[%s3 + $0x10] sm:$0xff]
    %v5973 = vld [vmem:[%s3 + $0x18] sm:$0xff]
    %v5974 = vld [vmem:[%s3 + $0x20] sm:$0xff]
    %v5975 = vld [vmem:[%s3 + $0x28] sm:$0xff]
    %v5976 = vld [vmem:[%s3 + $0x30] sm:$0xff]
    %v5977 = vld [vmem:[%s3 + $0x38] sm:$0xff]
    %v5978 = vld [vmem:[%s3 + $0x40] sm:$0xff]
    %v5979 = vld [vmem:[%s3 + $0x48] sm:$0xff]
    %v5980 = vld [vmem:[%s3 + $0x50] sm:$0xff]
    %v5981 = vld [vmem:[%s3 + $0x58] sm:$0xff]
    %v5982 = vld [vmem:[%s3 + $0x60] sm:$0xff]
    %v5983 = vld [vmem:[%s3 + $0x68] sm:$0xff]
    %v5984 = vld [vmem:[%s3 + $0x70] sm:$0xff]
    %v5985 = vld [vmem:[%s3 + $0x78] sm:$0xff]
    %v5986 = vld [vmem:[%s3 + $0x80] sm:$0xff]
    %v5987 = vld [vmem:[%s3 + $0x88] sm:$0xff]
    %v5988 = vld [vmem:[%s3 + $0x90] sm:$0xff]
    %v5989 = vld [vmem:[%s3 + $0x98] sm:$0xff]
    %v5990 = vld [vmem:[%s3 + $0xa0] sm:$0xff]
    %v5991 = vld [vmem:[%s3 + $0xa8] sm:$0xff]
    %v5992 = vld [vmem:[%s3 + $0xb0] sm:$0xff]
    %v5993 = vld [vmem:[%s3 + $0xb8] sm:$0xff]
    %v5994 = vld [vmem:[%s3 + $0xc0] sm:$0xff]
    %v5995 = vld [vmem:[%s3 + $0xc8] sm:$0xff]
    %v5996 = vld [vmem:[%s3 + $0xd0] sm:$0xff]
    %v5997 = vld [vmem:[%s3 + $0xd8] sm:$0xff]
    %v5998 = vld [vmem:[%s3 + $0xe0] sm:$0xff]
    %v5999 = vld [vmem:[%s3 + $0xe8] sm:$0xff]
    %v6000 = vld [vmem:[%s3 + $0xf0] sm:$0xff]
    %v6001 = vld [vmem:[%s3 + $0xf8] sm:$0xff]
    %v6002 = vld [vmem:[%s3 + $0x100] sm:$0xff]
    %v6003 = vld [vmem:[%s3 + $0x108] sm:$0xff]
    %v6004 = vld [vmem:[%s3 + $0x110] sm:$0xff]
    %v6005 = vld [vmem:[%s3 + $0x118] sm:$0xff]
    %v6006 = vld [vmem:[%s3 + $0x120] sm:$0xff]
    %v6007 = vld [vmem:[%s3 + $0x128] sm:$0xff]
    %v6008 = vld [vmem:[%s3 + $0x130] sm:$0xff]
    %v6009 = vld [vmem:[%s3 + $0x138] sm:$0xff]
    %v6010 = vld [vmem:[%s3 + $0x140] sm:$0xff]
    %v6011 = vld [vmem:[%s3 + $0x148] sm:$0xff]
    %v6012 = vld [vmem:[%s3 + $0x150] sm:$0xff]
    %v6013 = vld [vmem:[%s3 + $0x158] sm:$0xff]
    %v6014 = vld [vmem:[%s3 + $0x160] sm:$0xff]
    %v6015 = vld [vmem:[%s3 + $0x168] sm:$0xff]
    %v6016 = vld [vmem:[%s3 + $0x170] sm:$0xff]
    %v6017 = vld [vmem:[%s3 + $0x178] sm:$0xff]
    %v6018 = vld [vmem:[%s3 + $0x180] sm:$0xff]
    %v6019 = vld [vmem:[%s3 + $0x188] sm:$0xff]
    %v6020 = vld [vmem:[%s3 + $0x190] sm:$0xff]
    %v6021 = vld [vmem:[%s3 + $0x198] sm:$0xff]
    %v6022 = vld [vmem:[%s3 + $0x1a0] sm:$0xff]
    %v6023 = vld [vmem:[%s3 + $0x1a8] sm:$0xff]
    %v6024 = vld [vmem:[%s3 + $0x1b0] sm:$0xff]
    %v6025 = vld [vmem:[%s3 + $0x1b8] sm:$0xff]
    %v6026 = vld [vmem:[%s3 + $0x1c0] sm:$0xff]
    %v6027 = vld [vmem:[%s3 + $0x1c8] sm:$0xff]
    %v6028 = vld [vmem:[%s3 + $0x1d0] sm:$0xff]
    %v6029 = vld [vmem:[%s3 + $0x1d8] sm:$0xff]
    %v6030 = vld [vmem:[%s3 + $0x1e0] sm:$0xff]
    %v6031 = vld [vmem:[%s3 + $0x1e8] sm:$0xff]
    %v6032 = vld [vmem:[%s3 + $0x1f0] sm:$0xff]
    %v6033 = vld [vmem:[%s3 + $0x1f8] sm:$0xff]
    %v6034 = vld [vmem:[%s4] sm:$0x1]
    %v6036 = vlaneseq
    %v6037 = vshrl.u32 %v6036, 7
    %v6038 = vsub.s32 0, %v6037
    %v6039 = vrot.slane %v6034, %v6038
    %v6042 = vcombine.high %v5969, %v5969
    %v6044 = vunpack.c.l.s4 1983009808
    %v6045 = vunpack.c.0.s8 %v6044
    %v6046 = vlaneseq
    %v6047 = vshrl.u32 %v6046, 7
    %v6048 = vsub.s32 %v6045, %v6047
    %v6049 = vrot.slane %v5969, %v6048
    %v6051 = vunpack.c.l.s4 1983009808
    %v6052 = vunpack.c.0.s8 %v6051
    %v6053 = vlaneseq
    %v6054 = vshrl.u32 %v6053, 7
    %v6055 = vsub.s32 %v6052, %v6054
    %v6056 = vrot.slane %v6042, %v6055
    %v6057 = vcombine.high %v6049, %v6049
    %v6058 = vcombine.high %v6056, %v6056
    %6063 = vmatprep.subr.mxu0 0.0
    %6064 = vmatpush1.msra.mxu0 %v5970
    %6065 = vmatprep.subr.mxu0 0.0
    %6066 = vmatpush1.msra.mxu0 %v5971
    %6067 = vmatprep.subr.mxu0 0.0
    %6068 = vmatpush1.msra.mxu0 %v5972
    %6069 = vmatprep.subr.mxu0 0.0
    %6070 = vmatpush1.msra.mxu0 %v5973
    %6071 = vmatprep.subr.mxu0 0.0
    %6072 = vmatpush1.msra.mxu0 %v5974
    %6073 = vmatprep.subr.mxu0 0.0
    %6074 = vmatpush1.msra.mxu0 %v5975
    %6075 = vmatprep.subr.mxu0 0.0
    %6076 = vmatpush1.msra.mxu0 %v5976
    %6077 = vmatprep.subr.mxu0 0.0
    %6078 = vmatpush1.msra.mxu0 %v5977
    %6079 = vmatprep.subr.mxu0 0.0
    %6080 = vmatpush1.msra.mxu0 %v5978
    %6081 = vmatprep.subr.mxu0 0.0
    %6082 = vmatpush1.msra.mxu0 %v5979
    %6083 = vmatprep.subr.mxu0 0.0
    %6084 = vmatpush1.msra.mxu0 %v5980
    %6085 = vmatprep.subr.mxu0 0.0
    %6086 = vmatpush1.msra.mxu0 %v5981
    %6087 = vmatprep.subr.mxu0 0.0
    %6088 = vmatpush1.msra.mxu0 %v5982
    %6089 = vmatprep.subr.mxu0 0.0
    %6090 = vmatpush1.msra.mxu0 %v5983
    %6091 = vmatprep.subr.mxu0 0.0
    %6092 = vmatpush1.msra.mxu0 %v5984
    %6093 = vmatprep.subr.mxu0 0.0
    %6094 = vmatpush1.msra.mxu0 %v5985
    %6095 = vmatprep.subr.mxu0 0.0
    %6096 = vmatpush1.msra.mxu0 %v5986
    %6097 = vmatprep.subr.mxu0 0.0
    %6098 = vmatpush1.msra.mxu0 %v5987
    %6099 = vmatprep.subr.mxu0 0.0
    %6100 = vmatpush1.msra.mxu0 %v5988
    %6101 = vmatprep.subr.mxu0 0.0
    %6102 = vmatpush1.msra.mxu0 %v5989
    %6103 = vmatprep.subr.mxu0 0.0
    %6104 = vmatpush1.msra.mxu0 %v5990
    %6105 = vmatprep.subr.mxu0 0.0
    %6106 = vmatpush1.msra.mxu0 %v5991
    %6107 = vmatprep.subr.mxu0 0.0
    %6108 = vmatpush1.msra.mxu0 %v5992
    %6109 = vmatprep.subr.mxu0 0.0
    %6110 = vmatpush1.msra.mxu0 %v5993
    %6111 = vmatprep.subr.mxu0 0.0
    %6112 = vmatpush1.msra.mxu0 %v5994
    %6113 = vmatprep.subr.mxu0 0.0
    %6114 = vmatpush1.msra.mxu0 %v5995
    %6115 = vmatprep.subr.mxu0 0.0
    %6116 = vmatpush1.msra.mxu0 %v5996
    %6117 = vmatprep.subr.mxu0 0.0
    %6118 = vmatpush1.msra.mxu0 %v5997
    %6119 = vmatprep.subr.mxu0 0.0
    %6120 = vmatpush1.msra.mxu0 %v5998
    %6121 = vmatprep.subr.mxu0 0.0
    %6122 = vmatpush1.msra.mxu0 %v5999
    %6123 = vmatprep.subr.mxu0 0.0
    %6124 = vmatpush1.msra.mxu0 %v6000
    %6125 = vmatprep.subr.mxu0 0.0
    %6126 = vmatpush1.msra.mxu0 %v6001
    %6127 = vmatprep.mubr.f32.mxu0 %v6057
    %6128 = vmatmul.mubr.f32.gmra.mrb[0].mxu0 %v6049
    %v6129 = vpop.f32.mrb[0].mxu0
    %v6130 = vadd.f32 %v6039, %v6129
    %v6131 = vpop.f32.mrb[0].mxu0
    %6132 = vdwg.mxu0
    %6133 = vmatprep.subr.mxu0 0.0
    %6134 = vmatpush1.msra.mxu0 %v6002
    %6135 = vmatprep.subr.mxu0 0.0
    %6136 = vmatpush1.msra.mxu0 %v6003
    %6137 = vmatprep.subr.mxu0 0.0
    %6138 = vmatpush1.msra.mxu0 %v6004
    %6139 = vmatprep.subr.mxu0 0.0
    %6140 = vmatpush1.msra.mxu0 %v6005
    %6141 = vmatprep.subr.mxu0 0.0
    %6142 = vmatpush1.msra.mxu0 %v6006
    %6143 = vmatprep.subr.mxu0 0.0
    %6144 = vmatpush1.msra.mxu0 %v6007
    %6145 = vmatprep.subr.mxu0 0.0
    %6146 = vmatpush1.msra.mxu0 %v6008
    %6147 = vmatprep.subr.mxu0 0.0
    %6148 = vmatpush1.msra.mxu0 %v6009
    %6149 = vmatprep.subr.mxu0 0.0
    %6150 = vmatpush1.msra.mxu0 %v6010
    %6151 = vmatprep.subr.mxu0 0.0
    %6152 = vmatpush1.msra.mxu0 %v6011
    %6153 = vmatprep.subr.mxu0 0.0
    %6154 = vmatpush1.msra.mxu0 %v6012
    %6155 = vmatprep.subr.mxu0 0.0
    %6156 = vmatpush1.msra.mxu0 %v6013
    %6157 = vmatprep.subr.mxu0 0.0
    %6158 = vmatpush1.msra.mxu0 %v6014
    %6159 = vmatprep.subr.mxu0 0.0
    %6160 = vmatpush1.msra.mxu0 %v6015
    %6161 = vmatprep.subr.mxu0 0.0
    %6162 = vmatpush1.msra.mxu0 %v6016
    %6163 = vmatprep.subr.mxu0 0.0
    %6164 = vmatpush1.msra.mxu0 %v6017
    %6165 = vmatprep.subr.mxu0 0.0
    %6166 = vmatpush1.msra.mxu0 %v6018
    %6167 = vmatprep.subr.mxu0 0.0
    %6168 = vmatpush1.msra.mxu0 %v6019
    %6169 = vmatprep.subr.mxu0 0.0
    %6170 = vmatpush1.msra.mxu0 %v6020
    %6171 = vmatprep.subr.mxu0 0.0
    %6172 = vmatpush1.msra.mxu0 %v6021
    %6173 = vmatprep.subr.mxu0 0.0
    %6174 = vmatpush1.msra.mxu0 %v6022
    %6175 = vmatprep.subr.mxu0 0.0
    %6176 = vmatpush1.msra.mxu0 %v6023
    %6177 = vmatprep.subr.mxu0 0.0
    %6178 = vmatpush1.msra.mxu0 %v6024
    %6179 = vmatprep.subr.mxu0 0.0
    %6180 = vmatpush1.msra.mxu0 %v6025
    %6181 = vmatprep.subr.mxu0 0.0
    %6182 = vmatpush1.msra.mxu0 %v6026
    %6183 = vmatprep.subr.mxu0 0.0
    %6184 = vmatpush1.msra.mxu0 %v6027
    %6185 = vmatprep.subr.mxu0 0.0
    %6186 = vmatpush1.msra.mxu0 %v6028
    %6187 = vmatprep.subr.mxu0 0.0
    %6188 = vmatpush1.msra.mxu0 %v6029
    %6189 = vmatprep.subr.mxu0 0.0
    %6190 = vmatpush1.msra.mxu0 %v6030
    %6191 = vmatprep.subr.mxu0 0.0
    %6192 = vmatpush1.msra.mxu0 %v6031
    %6193 = vmatprep.subr.mxu0 0.0
    %6194 = vmatpush1.msra.mxu0 %v6032
    %6195 = vmatprep.subr.mxu0 0.0
    %6196 = vmatpush1.msra.mxu0 %v6033
    %6197 = vmatprep.mubr.f32.mxu0 %v6058
    %6198 = vmatmul.mubr.f32.gmra.mrb[0].mxu0 %v6056
    %v6199 = vpop.f32.mrb[0].mxu0
    %v6200 = vadd.f32 %v6130, %v6199
    %v6201 = vpop.f32.mrb[0].mxu0
    %6202 = vdwg.mxu0
    %vm6203 = vcmask 254976
    %6204 = vst.msk [vmem:[#allocation5] sm:$0x3] %vm6203, %v6200
    // Predicated region
    $region22: #{_forward.1} parent=1 // pred_check
      _
    $region23: #{_forward.1} parent=1 // pred_check_branch
      %6206 = sbr.rel (0) target = $region25
    $region24: #{_forward.1} parent=1 // pred_region
      _
    $region25: #{_forward.1} parent=1 // pred_fallthru
      _
    // Predicated region
    $region26: #{_forward.1} parent=1 // pred_check
      _
    $region27: #{_forward.1} parent=1 // pred_check_branch
      %6208 = sbr.rel (0) target = $region29
    $region28: #{_forward.1} parent=1 // pred_region
      %s6210 = ssub.s32 32, 32
      %6211 = vsyncadd [#allocation6], %s6210
      %s6213 = sshll.u32 [#allocation5], 4
      %s6214 = int_to_ptr.vmem [resolvable:$true] %s6213
      %6216 = dma.vmem_to_hbm [thread:$0]  %s6214, 32, %s6, [#allocation6]
    $region29: #{_forward.1} parent=1 // pred_fallthru
      _
    // Predicated region
    $region30: #{_forward.1} parent=1 // pred_check
      _
    $region31: #{_forward.1} parent=1 // pred_check_branch
      %6218 = sbr.rel (0) target = $region33
    $region32: #{_forward.1} parent=1 // pred_region
      _
    $region33: #{_forward.1} parent=1 // pred_fallthru
      _
    // Predicated region
    $region34: #{_forward.1} parent=1 // pred_check
      _
    $region35: #{_forward.1} parent=1 // pred_check_branch
      %6220 = sbr.rel (0) target = $region37
    $region36: #{_forward.1} parent=1 // pred_region
      %6221 = dma.done [#allocation6], 32
    $region37: #{_forward.1} parent=1 // pred_fallthru
      _
    %6222 = vsyncpa [#allocation6], 1

</llo_original>
